<compile_context>
chip_gen: v5e
topology: v5e:2x2
jax: 0.10.0
libtpu: 0.0.40
codegen_flags: <defaults>
</compile_context>

<pallas_src>
import functools
import math

import jax
import jax.numpy as jnp
from jax.experimental import pallas as pl
from jax.experimental.pallas import tpu as pltpu


LANE = 128


# ----------------------------------------------------------------------------
# Fully fused forward kernel: all layers, both directions, + (BN-folded) Linear.
# ----------------------------------------------------------------------------
def _make_fused_kernel(T, B, Hp, num_layers, has_scratch):
    H4 = 4 * Hp

    def kernel(*refs):
        it = iter(refs)
        x_ref = next(it)            # (T*B, I0p)  bf16 time-major flattened embeddings
        mask_ref = next(it)         # (T*B, Hp)   f32  1.0 where t < length[b]
        layers = [tuple(next(it) for _ in range(4)) for _ in range(num_layers)]
        w_head_ref = next(it)       # (2*Hp, Op)  bf16 BN-folded linear weight
        b_head_ref = next(it)       # (1, Op)     f32  BN-folded linear bias
        out_ref = next(it)          # (B, Op)     f32
        seq_ref = next(it) if has_scratch else None   # (T*B, 2*Hp) f32 scratch

        # Hoisted validity masks: one full-width compare for ALL steps/layers.
        valid_all = mask_ref[...] > 0.0                       # (T*B, Hp) bool

        def cell(gx, h, c, whh_bf, valid):
            # gx: (B, 4Hp) f32 precomputed input projection; h,c f32; whh_bf bf16.
            gates = gx + jnp.dot(h.astype(jnp.bfloat16), whh_bf,
                                 preferred_element_type=jnp.float32)
            i_g = jax.nn.sigmoid(gates[:, 0 * Hp:1 * Hp])
            f_g = jax.nn.sigmoid(gates[:, 1 * Hp:2 * Hp])
            g_g = jnp.tanh(gates[:, 2 * Hp:3 * Hp])
            o_g = jax.nn.sigmoid(gates[:, 3 * Hp:4 * Hp])
            c_new = f_g * c + i_g * g_g
            h_new = o_g * jnp.tanh(c_new)
            # pack_padded_sequence semantics: freeze state where t >= length[b]
            return jnp.where(valid, h_new, h), jnp.where(valid, c_new, c)

        x2 = x_ref[...]                                       # bf16 (T*B, I)
        h_f = h_b = None
        for li, (wih_ref, bias_ref, whhf_ref, whhb_ref) in enumerate(layers):
            last = li == num_layers - 1

            # Merged fwd+bwd input projection: ONE GEMM over the whole sequence,
            # off the serial h-dependency chain.  bf16 operands, f32 accumulate.
            gx = (jnp.dot(x2, wih_ref[...], preferred_element_type=jnp.float32)
                  + bias_ref[...])                            # (T*B, 8*Hp) f32

            whhf = whhf_ref[...]                              # bf16 (Hp, 4Hp)
            whhb = whhb_ref[...]
            h_f = c_f = h_b = c_b = jnp.zeros((B, Hp), jnp.float32)

            # Interleaved fwd/bwd recurrence, fully unrolled (T small & static):
            # two independent chains keep the MXU busy while each waits on its h.
            for s in range(T):
                tf, tb = s, T - 1 - s
                rf, rb = tf * B, tb * B
                h_f, c_f = cell(gx[rf:rf + B, :H4], h_f, c_f, whhf,
                                valid_all[rf:rf + B])
                h_b, c_b = cell(gx[rb:rb + B, H4:], h_b, c_b, whhb,
                                valid_all[rb:rb + B])
                if not last:
                    # Direct lane-aligned stores of the inter-layer activations.
                    seq_ref[rf:rf + B, :Hp] = h_f
                    seq_ref[rb:rb + B, Hp:] = h_b

            if not last:
                x2 = seq_ref[...].astype(jnp.bfloat16)        # next layer input

        # Head epilogue: cat(h_fwd_final, h_bwd_final) -> (BatchNorm folded) Linear.
        feat = jnp.concatenate([h_f, h_b], axis=-1).astype(jnp.bfloat16)   # (B, 2Hp)
        out_ref[...] = (jnp.dot(feat, w_head_ref[...],
                                preferred_element_type=jnp.float32)
                        + b_head_ref[...])

    return kernel


# ----------------------------------------------------------------------------
# Wrapper helpers: BN folding and zero-padding to lane-aligned layouts.
# ----------------------------------------------------------------------------
def _fold_bn_into_linear(gamma, beta, mean, var, w_t, b, eps=1e-5):
    a = gamma * jax.lax.rsqrt(var + eps)           # (1, 2H)
    w_eff = w_t * a[0][:, None]                    # (2H, O)
    b_eff = b + jnp.dot(beta - mean * a, w_t)      # (1, O)
    return w_eff, b_eff


def _pad_cols_per_gate(w, H, Hp):
    """(..., 4H) -> (..., 4Hp): each gate block g placed at column offset g*Hp, rest 0."""
    parts = []
    for g in range(4):
        blk = w[..., g * H:(g + 1) * H]
        parts.append(jnp.pad(blk, [(0, 0)] * (blk.ndim - 1) + [(0, Hp - H)]))
    return jnp.concatenate(parts, axis=-1)


def _scatter_rows(w, row_map, new_rows):
    """Place original row blocks into new (zero) row positions."""
    out = jnp.zeros((new_rows,) + w.shape[1:], w.dtype)
    for src, dst, cnt in row_map:
        out = out.at[dst:dst + cnt].set(w[src:src + cnt])
    return out


def _round_up(n, m):
    return ((n + m - 1) // m) * m


# ----------------------------------------------------------------------------
# Wrapper: pad/merge weights, fold BN, build masks, launch the single kernel.
# ----------------------------------------------------------------------------
@jax.jit
def bilstm_forward(embed, lengths, params):
    """embed: (B, T, E) f32 batch-first (PyTorch batch_first=True); lengths: (B,) i32."""
    B, T, E = embed.shape
    H = params["lstm"][0]["fwd"]["whh_t"].shape[0]
    L = len(params["lstm"])
    O = params["lin_w_t"].shape[1]

    Hp = _round_up(max(H, LANE), LANE)
    Ep = _round_up(E, LANE)
    Op = _round_up(O, LANE)

    # ---- head: fold eval-mode BatchNorm into Linear, pad rows/cols, bf16 weight ----
    w_eff, b_eff = _fold_bn_into_linear(params["bn_gamma"], params["bn_beta"],
                                        params["bn_mean"], params["bn_var"],
                                        params["lin_w_t"], params["lin_b"])
    w_head = _scatter_rows(w_eff, [(0, 0, H), (H, Hp, H)], 2 * Hp)
    w_head = jnp.pad(w_head, [(0, 0), (0, Op - O)]).astype(jnp.bfloat16)
    b_head = jnp.pad(b_eff, [(0, 0), (0, Op - O)])

    # ---- input: batch-first -> time-major, pad E, flatten, bf16 ----
    x_tm = jnp.swapaxes(embed.astype(jnp.float32), 0, 1)                  # (T, B, E)
    x_tm = jnp.pad(x_tm, [(0, 0), (0, 0), (0, Ep - E)])
    x_flat = x_tm.reshape(T * B, Ep).astype(jnp.bfloat16)

    # ---- full-width validity masks, built once in XLA ----
    len_i = lengths.astype(jnp.int32)
    t_ids = jnp.arange(T, dtype=jnp.int32)[:, None]                       # (T, 1)
    mask = (len_i[None, :] > t_ids)                                       # (T, B)
    mask_full = jnp.broadcast_to(mask[:, :, None], (T, B, Hp))
    mask_full = mask_full.reshape(T * B, Hp).astype(jnp.float32)

    inputs = [x_flat, mask_full]

    # ---- LSTM weights: pad gates to Hp, scatter input rows, merge fwd+bwd wih ----
    for li, layer in enumerate(params["lstm"]):
        if li == 0:
            row_map, rows_pad = [(0, 0, E)], Ep
        else:
            row_map, rows_pad = [(0, 0, H), (H, Hp, H)], 2 * Hp
        wih_dirs, bias_dirs = [], []
        for d in ("fwd", "bwd"):
            wih = _pad_cols_per_gate(layer[d]["wih_t"], H, Hp)            # (in, 4Hp)
            wih_dirs.append(_scatter_rows(wih, row_map, rows_pad))        # (rows_pad, 4Hp)
            bias_dirs.append(_pad_cols_per_gate(layer[d]["bias"], H, Hp)) # (1, 4Hp)
        wih_merged = jnp.concatenate(wih_dirs, axis=1).astype(jnp.bfloat16)   # (rows_pad, 8Hp)
        bias_merged = jnp.concatenate(bias_dirs, axis=1)                      # (1, 8Hp) f32
        whh_f = _scatter_rows(_pad_cols_per_gate(layer["fwd"]["whh_t"], H, Hp),
                              [(0, 0, H)], Hp).astype(jnp.bfloat16)           # (Hp, 4Hp)
        whh_b = _scatter_rows(_pad_cols_per_gate(layer["bwd"]["whh_t"], H, Hp),
                              [(0, 0, H)], Hp).astype(jnp.bfloat16)
        inputs += [wih_merged, bias_merged, whh_f, whh_b]

    inputs += [w_head, b_head]

    vmem = pl.BlockSpec(memory_space=pltpu.MemorySpace.VMEM)
    scratch = [pltpu.VMEM((T * B, 2 * Hp), jnp.float32)] if L > 1 else []
    out = pl.pallas_call(
        _make_fused_kernel(T, B, Hp, L, L > 1),
        out_shape=jax.ShapeDtypeStruct((B, Op), jnp.float32),
        in_specs=[vmem] * len(inputs),
        out_specs=vmem,
        scratch_shapes=scratch,
    )(*inputs)
    return out[:, :O]


# ----------------------------------------------------------------------------
# Parameters (PyTorch nn.LSTM / BatchNorm1d / Linear layouts, pre-transposed).
# ----------------------------------------------------------------------------
def init_params(key, embedding_dim, hidden_size, num_layers, output_size):
    params = {"lstm": []}
    k = 1.0 / math.sqrt(hidden_size)
    in_size = embedding_dim
    for _ in range(num_layers):
        layer = {}
        for name in ("fwd", "bwd"):
            key, k0, k1, k2, k3 = jax.random.split(key, 5)
            wih = jax.random.uniform(k0, (4 * hidden_size, in_size), minval=-k, maxval=k)
            whh = jax.random.uniform(k1, (4 * hidden_size, hidden_size), minval=-k, maxval=k)
            bih = jax.random.uniform(k2, (4 * hidden_size,), minval=-k, maxval=k)
            bhh = jax.random.uniform(k3, (4 * hidden_size,), minval=-k, maxval=k)
            layer[name] = dict(wih_t=wih.T, whh_t=whh.T, bias=(bih + bhh)[None, :])
        params["lstm"].append(layer)
        in_size = 2 * hidden_size

    H2 = 2 * hidden_size
    params["bn_gamma"] = jnp.ones((1, H2), jnp.float32)
    params["bn_beta"] = jnp.zeros((1, H2), jnp.float32)
    params["bn_mean"] = jnp.zeros((1, H2), jnp.float32)
    params["bn_var"] = jnp.ones((1, H2), jnp.float32)

    key, kw, kb = jax.random.split(key, 3)
    kl = 1.0 / math.sqrt(H2)
    w = jax.random.uniform(kw, (output_size, H2), minval=-kl, maxval=kl)
    b = jax.random.uniform(kb, (output_size,), minval=-kl, maxval=kl)
    params["lin_w_t"] = w.T
    params["lin_b"] = b[None, :]
    return params


# ----------------------------------------------------------------------------
# Pure-JAX reference (same packed-LSTM masking semantics, full f32) for checks.
# ----------------------------------------------------------------------------
def _ref_forward(embed, lengths, params):
    hi = jax.lax.Precision.HIGHEST
    x = jnp.swapaxes(embed.astype(jnp.float32), 0, 1)          # (T, B, E)
    T, B, _ = x.shape
    H = params["lstm"][0]["fwd"]["whh_t"].shape[0]
    len_col = lengths.astype(jnp.int32)[:, None]

    def run_dir(x_tm, w, reverse):
        h = c = jnp.zeros((B, H), jnp.float32)
        outs = [None] * T
        order = range(T - 1, -1, -1) if reverse else range(T)
        for t in order:
            g = (jnp.dot(x_tm[t], w["wih_t"], precision=hi)
                 + jnp.dot(h, w["whh_t"], precision=hi) + w["bias"])
            i = jax.nn.sigmoid(g[:, :H]); f = jax.nn.sigmoid(g[:, H:2 * H])
            gg = jnp.tanh(g[:, 2 * H:3 * H]); o = jax.nn.sigmoid(g[:, 3 * H:])
            c_new = f * c + i * gg
            h_new = o * jnp.tanh(c_new)
            valid = len_col > t
            h = jnp.where(valid, h_new, h)
            c = jnp.where(valid, c_new, c)
            outs[t] = h
        return jnp.stack(outs, 0), h

    h_f = h_b = None
    for layer in params["lstm"]:
        of, h_f = run_dir(x, layer["fwd"], False)
        ob, h_b = run_dir(x, layer["bwd"], True)
        x = jnp.concatenate([of, ob], axis=-1)
    feat = jnp.concatenate([h_f, h_b], axis=-1)
    xn = ((feat - params["bn_mean"]) * jax.lax.rsqrt(params["bn_var"] + 1e-5)
          * params["bn_gamma"] + params["bn_beta"])
    return jnp.dot(xn, params["lin_w_t"], precision=hi) + params["lin_b"]


# ----------------------------------------------------------------------------
# Example run
# ----------------------------------------------------------------------------
if __name__ == "__main__":
    B, T, E, H, L, O = 8, 8, 64, 32, 2, 1
    VOCAB, TYPE_VOCAB = 100, 8

    key = jax.random.PRNGKey(0)
    key, kc, kt, ke1, ke2, kp = jax.random.split(key, 6)

    # ---- Embeddings glue (plain JAX gathers) ----
    concept_ids = jax.random.randint(kc, (B, T), 0, VOCAB)
    type_ids = jax.random.randint(kt, (B, T), 0, TYPE_VOCAB)
    lengths = jnp.array([8, 7, 6, 6, 5, 4, 3, 2], dtype=jnp.int32)  # sorted (pack_padded)

    concept_emb = 0.02 * jax.random.normal(ke1, (VOCAB, E), jnp.float32)
    type_emb = 0.02 * jax.random.normal(ke2, (TYPE_VOCAB, E), jnp.float32)
    embed = concept_emb[concept_ids] + type_emb[type_ids]            # (B, T, E)

    params = init_params(kp, embedding_dim=E, hidden_size=H,
                         num_layers=L, output_size=O)

    out = jax.block_until_ready(bilstm_forward(embed, lengths, params))   # (B, O)
    ref = jax.block_until_ready(_ref_forward(embed, lengths, params))

    assert out.shape == (B, O)
    assert bool(jnp.all(jnp.isfinite(out)))
    assert bool(jnp.allclose(out, ref, atol=2e-2, rtol=2e-2)), (
        f"max abs err = {float(jnp.max(jnp.abs(out - ref)))}")
    print("KERNEL_OK")
</pallas_src>

<mosaic_0001>
module attributes {stable_mosaic.version = 11 : i64} {
  func.func @kernel(%arg0: memref<64x128xbf16, #tpu.memory_space<vmem>>, %arg1: memref<64x128xf32, #tpu.memory_space<vmem>>, %arg2: memref<128x1024xbf16, #tpu.memory_space<vmem>>, %arg3: memref<1x1024xf32, #tpu.memory_space<vmem>>, %arg4: memref<128x512xbf16, #tpu.memory_space<vmem>>, %arg5: memref<128x512xbf16, #tpu.memory_space<vmem>>, %arg6: memref<256x1024xbf16, #tpu.memory_space<vmem>>, %arg7: memref<1x1024xf32, #tpu.memory_space<vmem>>, %arg8: memref<128x512xbf16, #tpu.memory_space<vmem>>, %arg9: memref<128x512xbf16, #tpu.memory_space<vmem>>, %arg10: memref<256x128xbf16, #tpu.memory_space<vmem>>, %arg11: memref<1x128xf32, #tpu.memory_space<vmem>>, %arg12: memref<8x128xf32, #tpu.memory_space<vmem>>, %arg13: memref<64x256xf32, #tpu.memory_space<vmem>>) attributes {dimension_semantics = [], scalar_prefetch = 0 : i64, scratch_operands = 1 : i64, tpu.core_type = #tpu.core_type<tc>} {
    %c0 = arith.constant 0 : index
    %c0_0 = arith.constant 0 : index
    %0 = vector.load %arg1[%c0, %c0_0] : memref<64x128xf32, #tpu.memory_space<vmem>>, vector<64x128xf32>
    %cst = arith.constant 0.000000e+00 : f32
    %1 = vector.broadcast %cst : f32 to vector<64x128xf32>
    %2 = arith.cmpf ogt, %0, %1 : vector<64x128xf32>
    %c0_1 = arith.constant 0 : index
    %c0_2 = arith.constant 0 : index
    %3 = vector.load %arg0[%c0_1, %c0_2] : memref<64x128xbf16, #tpu.memory_space<vmem>>, vector<64x128xbf16>
    %c0_3 = arith.constant 0 : index
    %c0_4 = arith.constant 0 : index
    %4 = vector.load %arg2[%c0_3, %c0_4] : memref<128x1024xbf16, #tpu.memory_space<vmem>>, vector<128x1024xbf16>
    %cst_5 = arith.constant dense<0.000000e+00> : vector<64x1024xf32>
    %5 = tpu.matmul %3, %4, %cst_5 {dimension_numbers = #tpu.dot_dimension_numbers<[1], [0], [0], [1], [0, 0, 1, 1], [], []>} : vector<64x128xbf16>, vector<128x1024xbf16>, vector<64x1024xf32> -> vector<64x1024xf32>
    %c0_6 = arith.constant 0 : index
    %c0_7 = arith.constant 0 : index
    %6 = vector.load %arg3[%c0_6, %c0_7] : memref<1x1024xf32, #tpu.memory_space<vmem>>, vector<1x1024xf32>
    %7 = vector.broadcast %6 : vector<1x1024xf32> to vector<64x1024xf32>
    %8 = arith.addf %5, %7 : vector<64x1024xf32>
    %c0_8 = arith.constant 0 : index
    %c0_9 = arith.constant 0 : index
    %9 = vector.load %arg4[%c0_8, %c0_9] : memref<128x512xbf16, #tpu.memory_space<vmem>>, vector<128x512xbf16>
    %c0_10 = arith.constant 0 : index
    %c0_11 = arith.constant 0 : index
    %10 = vector.load %arg5[%c0_10, %c0_11] : memref<128x512xbf16, #tpu.memory_space<vmem>>, vector<128x512xbf16>
    %cst_12 = arith.constant 0.000000e+00 : f32
    %11 = vector.broadcast %cst_12 : f32 to vector<8x128xf32>
    %12 = vector.extract_strided_slice %8 {offsets = [0, 0], sizes = [8, 512], strides = [1, 1]} : vector<64x1024xf32> to vector<8x512xf32>
    %13 = vector.extract_strided_slice %2 {offsets = [0, 0], sizes = [8, 128], strides = [1, 1]} : vector<64x128xi1> to vector<8x128xi1>
    %14 = arith.truncf %11 : vector<8x128xf32> to vector<8x128xbf16>
    %cst_13 = arith.constant dense<0.000000e+00> : vector<8x512xf32>
    %15 = tpu.matmul %14, %9, %cst_13 {dimension_numbers = #tpu.dot_dimension_numbers<[1], [0], [0], [1], [0, 0, 1, 1], [], []>} : vector<8x128xbf16>, vector<128x512xbf16>, vector<8x512xf32> -> vector<8x512xf32>
    %16 = arith.addf %12, %15 : vector<8x512xf32>
    %17 = vector.extract_strided_slice %16 {offsets = [0, 0], sizes = [8, 128], strides = [1, 1]} : vector<8x512xf32> to vector<8x128xf32>
    %18 = arith.negf %17 : vector<8x128xf32>
    %19 = math.exp %18 : vector<8x128xf32>
    %cst_14 = arith.constant 1.000000e+00 : f32
    %20 = vector.broadcast %cst_14 : f32 to vector<8x128xf32>
    %21 = arith.addf %20, %19 : vector<8x128xf32>
    %22 = arith.divf %20, %21 : vector<8x128xf32>
    %23 = vector.extract_strided_slice %16 {offsets = [0, 128], sizes = [8, 128], strides = [1, 1]} : vector<8x512xf32> to vector<8x128xf32>
    %24 = arith.negf %23 : vector<8x128xf32>
    %25 = math.exp %24 : vector<8x128xf32>
    %cst_15 = arith.constant 1.000000e+00 : f32
    %26 = vector.broadcast %cst_15 : f32 to vector<8x128xf32>
    %27 = arith.addf %26, %25 : vector<8x128xf32>
    %28 = arith.divf %26, %27 : vector<8x128xf32>
    %29 = vector.extract_strided_slice %16 {offsets = [0, 256], sizes = [8, 128], strides = [1, 1]} : vector<8x512xf32> to vector<8x128xf32>
    %30 = math.tanh %29 : vector<8x128xf32>
    %31 = vector.extract_strided_slice %16 {offsets = [0, 384], sizes = [8, 128], strides = [1, 1]} : vector<8x512xf32> to vector<8x128xf32>
    %32 = arith.negf %31 : vector<8x128xf32>
    %33 = math.exp %32 : vector<8x128xf32>
    %cst_16 = arith.constant 1.000000e+00 : f32
    %34 = vector.broadcast %cst_16 : f32 to vector<8x128xf32>
    %35 = arith.addf %34, %33 : vector<8x128xf32>
    %36 = arith.divf %34, %35 : vector<8x128xf32>
    %37 = arith.mulf %28, %11 : vector<8x128xf32>
    %38 = arith.mulf %22, %30 : vector<8x128xf32>
    %39 = arith.addf %37, %38 : vector<8x128xf32>
    %40 = math.tanh %39 : vector<8x128xf32>
    %41 = arith.mulf %36, %40 : vector<8x128xf32>
    %42 = arith.select %13, %41, %11 : vector<8x128xi1>, vector<8x128xf32>
    %43 = arith.select %13, %39, %11 : vector<8x128xi1>, vector<8x128xf32>
    %44 = vector.extract_strided_slice %8 {offsets = [56, 512], sizes = [8, 512], strides = [1, 1]} : vector<64x1024xf32> to vector<8x512xf32>
    %45 = vector.extract_strided_slice %2 {offsets = [56, 0], sizes = [8, 128], strides = [1, 1]} : vector<64x128xi1> to vector<8x128xi1>
    %46 = arith.truncf %11 : vector<8x128xf32> to vector<8x128xbf16>
    %cst_17 = arith.constant dense<0.000000e+00> : vector<8x512xf32>
    %47 = tpu.matmul %46, %10, %cst_17 {dimension_numbers = #tpu.dot_dimension_numbers<[1], [0], [0], [1], [0, 0, 1, 1], [], []>} : vector<8x128xbf16>, vector<128x512xbf16>, vector<8x512xf32> -> vector<8x512xf32>
    %48 = arith.addf %44, %47 : vector<8x512xf32>
    %49 = vector.extract_strided_slice %48 {offsets = [0, 0], sizes = [8, 128], strides = [1, 1]} : vector<8x512xf32> to vector<8x128xf32>
    %50 = arith.negf %49 : vector<8x128xf32>
    %51 = math.exp %50 : vector<8x128xf32>
    %cst_18 = arith.constant 1.000000e+00 : f32
    %52 = vector.broadcast %cst_18 : f32 to vector<8x128xf32>
    %53 = arith.addf %52, %51 : vector<8x128xf32>
    %54 = arith.divf %52, %53 : vector<8x128xf32>
    %55 = vector.extract_strided_slice %48 {offsets = [0, 128], sizes = [8, 128], strides = [1, 1]} : vector<8x512xf32> to vector<8x128xf32>
    %56 = arith.negf %55 : vector<8x128xf32>
    %57 = math.exp %56 : vector<8x128xf32>
    %cst_19 = arith.constant 1.000000e+00 : f32
    %58 = vector.broadcast %cst_19 : f32 to vector<8x128xf32>
    %59 = arith.addf %58, %57 : vector<8x128xf32>
    %60 = arith.divf %58, %59 : vector<8x128xf32>
    %61 = vector.extract_strided_slice %48 {offsets = [0, 256], sizes = [8, 128], strides = [1, 1]} : vector<8x512xf32> to vector<8x128xf32>
    %62 = math.tanh %61 : vector<8x128xf32>
    %63 = vector.extract_strided_slice %48 {offsets = [0, 384], sizes = [8, 128], strides = [1, 1]} : vector<8x512xf32> to vector<8x128xf32>
    %64 = arith.negf %63 : vector<8x128xf32>
    %65 = math.exp %64 : vector<8x128xf32>
    %cst_20 = arith.constant 1.000000e+00 : f32
    %66 = vector.broadcast %cst_20 : f32 to vector<8x128xf32>
    %67 = arith.addf %66, %65 : vector<8x128xf32>
    %68 = arith.divf %66, %67 : vector<8x128xf32>
    %69 = arith.mulf %60, %11 : vector<8x128xf32>
    %70 = arith.mulf %54, %62 : vector<8x128xf32>
    %71 = arith.addf %69, %70 : vector<8x128xf32>
    %72 = math.tanh %71 : vector<8x128xf32>
    %73 = arith.mulf %68, %72 : vector<8x128xf32>
    %74 = arith.select %45, %73, %11 : vector<8x128xi1>, vector<8x128xf32>
    %75 = arith.select %45, %71, %11 : vector<8x128xi1>, vector<8x128xf32>
    %c0_21 = arith.constant 0 : index
    %c0_22 = arith.constant 0 : index
    %76 = vector.load %arg13[%c0_21, %c0_22] : memref<64x256xf32, #tpu.memory_space<vmem>>, vector<8x128xf32>
    tpu.vector_store %arg13[%c0_21, %c0_22], %42 {strides = array<i32>} : memref<64x256xf32, #tpu.memory_space<vmem>>, vector<8x128xf32>,
    %c56 = arith.constant 56 : index
    %c128 = arith.constant 128 : index
    %77 = vector.load %arg13[%c56, %c128] : memref<64x256xf32, #tpu.memory_space<vmem>>, vector<8x128xf32>
    tpu.vector_store %arg13[%c56, %c128], %74 {strides = array<i32>} : memref<64x256xf32, #tpu.memory_space<vmem>>, vector<8x128xf32>,
    %78 = vector.extract_strided_slice %8 {offsets = [8, 0], sizes = [8, 512], strides = [1, 1]} : vector<64x1024xf32> to vector<8x512xf32>
    %79 = vector.extract_strided_slice %2 {offsets = [8, 0], sizes = [8, 128], strides = [1, 1]} : vector<64x128xi1> to vector<8x128xi1>
    %80 = arith.truncf %42 : vector<8x128xf32> to vector<8x128xbf16>
    %cst_23 = arith.constant dense<0.000000e+00> : vector<8x512xf32>
    %81 = tpu.matmul %80, %9, %cst_23 {dimension_numbers = #tpu.dot_dimension_numbers<[1], [0], [0], [1], [0, 0, 1, 1], [], []>} : vector<8x128xbf16>, vector<128x512xbf16>, vector<8x512xf32> -> vector<8x512xf32>
    %82 = arith.addf %78, %81 : vector<8x512xf32>
    %83 = vector.extract_strided_slice %82 {offsets = [0, 0], sizes = [8, 128], strides = [1, 1]} : vector<8x512xf32> to vector<8x128xf32>
    %84 = arith.negf %83 : vector<8x128xf32>
    %85 = math.exp %84 : vector<8x128xf32>
    %cst_24 = arith.constant 1.000000e+00 : f32
    %86 = vector.broadcast %cst_24 : f32 to vector<8x128xf32>
    %87 = arith.addf %86, %85 : vector<8x128xf32>
    %88 = arith.divf %86, %87 : vector<8x128xf32>
    %89 = vector.extract_strided_slice %82 {offsets = [0, 128], sizes = [8, 128], strides = [1, 1]} : vector<8x512xf32> to vector<8x128xf32>
    %90 = arith.negf %89 : vector<8x128xf32>
    %91 = math.exp %90 : vector<8x128xf32>
    %cst_25 = arith.constant 1.000000e+00 : f32
    %92 = vector.broadcast %cst_25 : f32 to vector<8x128xf32>
    %93 = arith.addf %92, %91 : vector<8x128xf32>
    %94 = arith.divf %92, %93 : vector<8x128xf32>
    %95 = vector.extract_strided_slice %82 {offsets = [0, 256], sizes = [8, 128], strides = [1, 1]} : vector<8x512xf32> to vector<8x128xf32>
    %96 = math.tanh %95 : vector<8x128xf32>
    %97 = vector.extract_strided_slice %82 {offsets = [0, 384], sizes = [8, 128], strides = [1, 1]} : vector<8x512xf32> to vector<8x128xf32>
    %98 = arith.negf %97 : vector<8x128xf32>
    %99 = math.exp %98 : vector<8x128xf32>
    %cst_26 = arith.constant 1.000000e+00 : f32
    %100 = vector.broadcast %cst_26 : f32 to vector<8x128xf32>
    %101 = arith.addf %100, %99 : vector<8x128xf32>
    %102 = arith.divf %100, %101 : vector<8x128xf32>
    %103 = arith.mulf %94, %43 : vector<8x128xf32>
    %104 = arith.mulf %88, %96 : vector<8x128xf32>
    %105 = arith.addf %103, %104 : vector<8x128xf32>
    %106 = math.tanh %105 : vector<8x128xf32>
    %107 = arith.mulf %102, %106 : vector<8x128xf32>
    %108 = arith.select %79, %107, %42 : vector<8x128xi1>, vector<8x128xf32>
    %109 = arith.select %79, %105, %43 : vector<8x128xi1>, vector<8x128xf32>
    %110 = vector.extract_strided_slice %8 {offsets = [48, 512], sizes = [8, 512], strides = [1, 1]} : vector<64x1024xf32> to vector<8x512xf32>
    %111 = vector.extract_strided_slice %2 {offsets = [48, 0], sizes = [8, 128], strides = [1, 1]} : vector<64x128xi1> to vector<8x128xi1>
    %112 = arith.truncf %74 : vector<8x128xf32> to vector<8x128xbf16>
    %cst_27 = arith.constant dense<0.000000e+00> : vector<8x512xf32>
    %113 = tpu.matmul %112, %10, %cst_27 {dimension_numbers = #tpu.dot_dimension_numbers<[1], [0], [0], [1], [0, 0, 1, 1], [], []>} : vector<8x128xbf16>, vector<128x512xbf16>, vector<8x512xf32> -> vector<8x512xf32>
    %114 = arith.addf %110, %113 : vector<8x512xf32>
    %115 = vector.extract_strided_slice %114 {offsets = [0, 0], sizes = [8, 128], strides = [1, 1]} : vector<8x512xf32> to vector<8x128xf32>
    %116 = arith.negf %115 : vector<8x128xf32>
    %117 = math.exp %116 : vector<8x128xf32>
    %cst_28 = arith.constant 1.000000e+00 : f32
    %118 = vector.broadcast %cst_28 : f32 to vector<8x128xf32>
    %119 = arith.addf %118, %117 : vector<8x128xf32>
    %120 = arith.divf %118, %119 : vector<8x128xf32>
    %121 = vector.extract_strided_slice %114 {offsets = [0, 128], sizes = [8, 128], strides = [1, 1]} : vector<8x512xf32> to vector<8x128xf32>
    %122 = arith.negf %121 : vector<8x128xf32>
    %123 = math.exp %122 : vector<8x128xf32>
    %cst_29 = arith.constant 1.000000e+00 : f32
    %124 = vector.broadcast %cst_29 : f32 to vector<8x128xf32>
    %125 = arith.addf %124, %123 : vector<8x128xf32>
    %126 = arith.divf %124, %125 : vector<8x128xf32>
    %127 = vector.extract_strided_slice %114 {offsets = [0, 256], sizes = [8, 128], strides = [1, 1]} : vector<8x512xf32> to vector<8x128xf32>
    %128 = math.tanh %127 : vector<8x128xf32>
    %129 = vector.extract_strided_slice %114 {offsets = [0, 384], sizes = [8, 128], strides = [1, 1]} : vector<8x512xf32> to vector<8x128xf32>
    %130 = arith.negf %129 : vector<8x128xf32>
    %131 = math.exp %130 : vector<8x128xf32>
    %cst_30 = arith.constant 1.000000e+00 : f32
    %132 = vector.broadcast %cst_30 : f32 to vector<8x128xf32>
    %133 = arith.addf %132, %131 : vector<8x128xf32>
    %134 = arith.divf %132, %133 : vector<8x128xf32>
    %135 = arith.mulf %126, %75 : vector<8x128xf32>
    %136 = arith.mulf %120, %128 : vector<8x128xf32>
    %137 = arith.addf %135, %136 : vector<8x128xf32>
    %138 = math.tanh %137 : vector<8x128xf32>
    %139 = arith.mulf %134, %138 : vector<8x128xf32>
    %140 = arith.select %111, %139, %74 : vector<8x128xi1>, vector<8x128xf32>
    %141 = arith.select %111, %137, %75 : vector<8x128xi1>, vector<8x128xf32>
    %c8 = arith.constant 8 : index
    %c0_31 = arith.constant 0 : index
    %142 = vector.load %arg13[%c8, %c0_31] : memref<64x256xf32, #tpu.memory_space<vmem>>, vector<8x128xf32>
    tpu.vector_store %arg13[%c8, %c0_31], %108 {strides = array<i32>} : memref<64x256xf32, #tpu.memory_space<vmem>>, vector<8x128xf32>,
    %c48 = arith.constant 48 : index
    %c128_32 = arith.constant 128 : index
    %143 = vector.load %arg13[%c48, %c128_32] : memref<64x256xf32, #tpu.memory_space<vmem>>, vector<8x128xf32>
    tpu.vector_store %arg13[%c48, %c128_32], %140 {strides = array<i32>} : memref<64x256xf32, #tpu.memory_space<vmem>>, vector<8x128xf32>,
    %144 = vector.extract_strided_slice %8 {offsets = [16, 0], sizes = [8, 512], strides = [1, 1]} : vector<64x1024xf32> to vector<8x512xf32>
    %145 = vector.extract_strided_slice %2 {offsets = [16, 0], sizes = [8, 128], strides = [1, 1]} : vector<64x128xi1> to vector<8x128xi1>
    %146 = arith.truncf %108 : vector<8x128xf32> to vector<8x128xbf16>
    %cst_33 = arith.constant dense<0.000000e+00> : vector<8x512xf32>
    %147 = tpu.matmul %146, %9, %cst_33 {dimension_numbers = #tpu.dot_dimension_numbers<[1], [0], [0], [1], [0, 0, 1, 1], [], []>} : vector<8x128xbf16>, vector<128x512xbf16>, vector<8x512xf32> -> vector<8x512xf32>
    %148 = arith.addf %144, %147 : vector<8x512xf32>
    %149 = vector.extract_strided_slice %148 {offsets = [0, 0], sizes = [8, 128], strides = [1, 1]} : vector<8x512xf32> to vector<8x128xf32>
    %150 = arith.negf %149 : vector<8x128xf32>
    %151 = math.exp %150 : vector<8x128xf32>
    %cst_34 = arith.constant 1.000000e+00 : f32
    %152 = vector.broadcast %cst_34 : f32 to vector<8x128xf32>
    %153 = arith.addf %152, %151 : vector<8x128xf32>
    %154 = arith.divf %152, %153 : vector<8x128xf32>
    %155 = vector.extract_strided_slice %148 {offsets = [0, 128], sizes = [8, 128], strides = [1, 1]} : vector<8x512xf32> to vector<8x128xf32>
    %156 = arith.negf %155 : vector<8x128xf32>
    %157 = math.exp %156 : vector<8x128xf32>
    %cst_35 = arith.constant 1.000000e+00 : f32
    %158 = vector.broadcast %cst_35 : f32 to vector<8x128xf32>
    %159 = arith.addf %158, %157 : vector<8x128xf32>
    %160 = arith.divf %158, %159 : vector<8x128xf32>
    %161 = vector.extract_strided_slice %148 {offsets = [0, 256], sizes = [8, 128], strides = [1, 1]} : vector<8x512xf32> to vector<8x128xf32>
    %162 = math.tanh %161 : vector<8x128xf32>
    %163 = vector.extract_strided_slice %148 {offsets = [0, 384], sizes = [8, 128], strides = [1, 1]} : vector<8x512xf32> to vector<8x128xf32>
    %164 = arith.negf %163 : vector<8x128xf32>
    %165 = math.exp %164 : vector<8x128xf32>
    %cst_36 = arith.constant 1.000000e+00 : f32
    %166 = vector.broadcast %cst_36 : f32 to vector<8x128xf32>
    %167 = arith.addf %166, %165 : vector<8x128xf32>
    %168 = arith.divf %166, %167 : vector<8x128xf32>
    %169 = arith.mulf %160, %109 : vector<8x128xf32>
    %170 = arith.mulf %154, %162 : vector<8x128xf32>
    %171 = arith.addf %169, %170 : vector<8x128xf32>
    %172 = math.tanh %171 : vector<8x128xf32>
    %173 = arith.mulf %168, %172 : vector<8x128xf32>
    %174 = arith.select %145, %173, %108 : vector<8x128xi1>, vector<8x128xf32>
    %175 = arith.select %145, %171, %109 : vector<8x128xi1>, vector<8x128xf32>
    %176 = vector.extract_strided_slice %8 {offsets = [40, 512], sizes = [8, 512], strides = [1, 1]} : vector<64x1024xf32> to vector<8x512xf32>
    %177 = vector.extract_strided_slice %2 {offsets = [40, 0], sizes = [8, 128], strides = [1, 1]} : vector<64x128xi1> to vector<8x128xi1>
    %178 = arith.truncf %140 : vector<8x128xf32> to vector<8x128xbf16>
    %cst_37 = arith.constant dense<0.000000e+00> : vector<8x512xf32>
    %179 = tpu.matmul %178, %10, %cst_37 {dimension_numbers = #tpu.dot_dimension_numbers<[1], [0], [0], [1], [0, 0, 1, 1], [], []>} : vector<8x128xbf16>, vector<128x512xbf16>, vector<8x512xf32> -> vector<8x512xf32>
    %180 = arith.addf %176, %179 : vector<8x512xf32>
    %181 = vector.extract_strided_slice %180 {offsets = [0, 0], sizes = [8, 128], strides = [1, 1]} : vector<8x512xf32> to vector<8x128xf32>
    %182 = arith.negf %181 : vector<8x128xf32>
    %183 = math.exp %182 : vector<8x128xf32>
    %cst_38 = arith.constant 1.000000e+00 : f32
    %184 = vector.broadcast %cst_38 : f32 to vector<8x128xf32>
    %185 = arith.addf %184, %183 : vector<8x128xf32>
    %186 = arith.divf %184, %185 : vector<8x128xf32>
    %187 = vector.extract_strided_slice %180 {offsets = [0, 128], sizes = [8, 128], strides = [1, 1]} : vector<8x512xf32> to vector<8x128xf32>
    %188 = arith.negf %187 : vector<8x128xf32>
    %189 = math.exp %188 : vector<8x128xf32>
    %cst_39 = arith.constant 1.000000e+00 : f32
    %190 = vector.broadcast %cst_39 : f32 to vector<8x128xf32>
    %191 = arith.addf %190, %189 : vector<8x128xf32>
    %192 = arith.divf %190, %191 : vector<8x128xf32>
    %193 = vector.extract_strided_slice %180 {offsets = [0, 256], sizes = [8, 128], strides = [1, 1]} : vector<8x512xf32> to vector<8x128xf32>
    %194 = math.tanh %193 : vector<8x128xf32>
    %195 = vector.extract_strided_slice %180 {offsets = [0, 384], sizes = [8, 128], strides = [1, 1]} : vector<8x512xf32> to vector<8x128xf32>
    %196 = arith.negf %195 : vector<8x128xf32>
    %197 = math.exp %196 : vector<8x128xf32>
    %cst_40 = arith.constant 1.000000e+00 : f32
    %198 = vector.broadcast %cst_40 : f32 to vector<8x128xf32>
    %199 = arith.addf %198, %197 : vector<8x128xf32>
    %200 = arith.divf %198, %199 : vector<8x128xf32>
    %201 = arith.mulf %192, %141 : vector<8x128xf32>
    %202 = arith.mulf %186, %194 : vector<8x128xf32>
    %203 = arith.addf %201, %202 : vector<8x128xf32>
    %204 = math.tanh %203 : vector<8x128xf32>
    %205 = arith.mulf %200, %204 : vector<8x128xf32>
    %206 = arith.select %177, %205, %140 : vector<8x128xi1>, vector<8x128xf32>
    %207 = arith.select %177, %203, %141 : vector<8x128xi1>, vector<8x128xf32>
    %c16 = arith.constant 16 : index
    %c0_41 = arith.constant 0 : index
    %208 = vector.load %arg13[%c16, %c0_41] : memref<64x256xf32, #tpu.memory_space<vmem>>, vector<8x128xf32>
    tpu.vector_store %arg13[%c16, %c0_41], %174 {strides = array<i32>} : memref<64x256xf32, #tpu.memory_space<vmem>>, vector<8x128xf32>,
    %c40 = arith.constant 40 : index
    %c128_42 = arith.constant 128 : index
    %209 = vector.load %arg13[%c40, %c128_42] : memref<64x256xf32, #tpu.memory_space<vmem>>, vector<8x128xf32>
    tpu.vector_store %arg13[%c40, %c128_42], %206 {strides = array<i32>} : memref<64x256xf32, #tpu.memory_space<vmem>>, vector<8x128xf32>,
    %210 = vector.extract_strided_slice %8 {offsets = [24, 0], sizes = [8, 512], strides = [1, 1]} : vector<64x1024xf32> to vector<8x512xf32>
    %211 = vector.extract_strided_slice %2 {offsets = [24, 0], sizes = [8, 128], strides = [1, 1]} : vector<64x128xi1> to vector<8x128xi1>
    %212 = arith.truncf %174 : vector<8x128xf32> to vector<8x128xbf16>
    %cst_43 = arith.constant dense<0.000000e+00> : vector<8x512xf32>
    %213 = tpu.matmul %212, %9, %cst_43 {dimension_numbers = #tpu.dot_dimension_numbers<[1], [0], [0], [1], [0, 0, 1, 1], [], []>} : vector<8x128xbf16>, vector<128x512xbf16>, vector<8x512xf32> -> vector<8x512xf32>
    %214 = arith.addf %210, %213 : vector<8x512xf32>
    %215 = vector.extract_strided_slice %214 {offsets = [0, 0], sizes = [8, 128], strides = [1, 1]} : vector<8x512xf32> to vector<8x128xf32>
    %216 = arith.negf %215 : vector<8x128xf32>
    %217 = math.exp %216 : vector<8x128xf32>
    %cst_44 = arith.constant 1.000000e+00 : f32
    %218 = vector.broadcast %cst_44 : f32 to vector<8x128xf32>
    %219 = arith.addf %218, %217 : vector<8x128xf32>
    %220 = arith.divf %218, %219 : vector<8x128xf32>
    %221 = vector.extract_strided_slice %214 {offsets = [0, 128], sizes = [8, 128], strides = [1, 1]} : vector<8x512xf32> to vector<8x128xf32>
    %222 = arith.negf %221 : vector<8x128xf32>
    %223 = math.exp %222 : vector<8x128xf32>
    %cst_45 = arith.constant 1.000000e+00 : f32
    %224 = vector.broadcast %cst_45 : f32 to vector<8x128xf32>
    %225 = arith.addf %224, %223 : vector<8x128xf32>
    %226 = arith.divf %224, %225 : vector<8x128xf32>
    %227 = vector.extract_strided_slice %214 {offsets = [0, 256], sizes = [8, 128], strides = [1, 1]} : vector<8x512xf32> to vector<8x128xf32>
    %228 = math.tanh %227 : vector<8x128xf32>
    %229 = vector.extract_strided_slice %214 {offsets = [0, 384], sizes = [8, 128], strides = [1, 1]} : vector<8x512xf32> to vector<8x128xf32>
    %230 = arith.negf %229 : vector<8x128xf32>
    %231 = math.exp %230 : vector<8x128xf32>
    %cst_46 = arith.constant 1.000000e+00 : f32
    %232 = vector.broadcast %cst_46 : f32 to vector<8x128xf32>
    %233 = arith.addf %232, %231 : vector<8x128xf32>
    %234 = arith.divf %232, %233 : vector<8x128xf32>
    %235 = arith.mulf %226, %175 : vector<8x128xf32>
    %236 = arith.mulf %220, %228 : vector<8x128xf32>
    %237 = arith.addf %235, %236 : vector<8x128xf32>
    %238 = math.tanh %237 : vector<8x128xf32>
    %239 = arith.mulf %234, %238 : vector<8x128xf32>
    %240 = arith.select %211, %239, %174 : vector<8x128xi1>, vector<8x128xf32>
    %241 = arith.select %211, %237, %175 : vector<8x128xi1>, vector<8x128xf32>
    %242 = vector.extract_strided_slice %8 {offsets = [32, 512], sizes = [8, 512], strides = [1, 1]} : vector<64x1024xf32> to vector<8x512xf32>
    %243 = vector.extract_strided_slice %2 {offsets = [32, 0], sizes = [8, 128], strides = [1, 1]} : vector<64x128xi1> to vector<8x128xi1>
    %244 = arith.truncf %206 : vector<8x128xf32> to vector<8x128xbf16>
    %cst_47 = arith.constant dense<0.000000e+00> : vector<8x512xf32>
    %245 = tpu.matmul %244, %10, %cst_47 {dimension_numbers = #tpu.dot_dimension_numbers<[1], [0], [0], [1], [0, 0, 1, 1], [], []>} : vector<8x128xbf16>, vector<128x512xbf16>, vector<8x512xf32> -> vector<8x512xf32>
    %246 = arith.addf %242, %245 : vector<8x512xf32>
    %247 = vector.extract_strided_slice %246 {offsets = [0, 0], sizes = [8, 128], strides = [1, 1]} : vector<8x512xf32> to vector<8x128xf32>
    %248 = arith.negf %247 : vector<8x128xf32>
    %249 = math.exp %248 : vector<8x128xf32>
    %cst_48 = arith.constant 1.000000e+00 : f32
    %250 = vector.broadcast %cst_48 : f32 to vector<8x128xf32>
    %251 = arith.addf %250, %249 : vector<8x128xf32>
    %252 = arith.divf %250, %251 : vector<8x128xf32>
    %253 = vector.extract_strided_slice %246 {offsets = [0, 128], sizes = [8, 128], strides = [1, 1]} : vector<8x512xf32> to vector<8x128xf32>
    %254 = arith.negf %253 : vector<8x128xf32>
    %255 = math.exp %254 : vector<8x128xf32>
    %cst_49 = arith.constant 1.000000e+00 : f32
    %256 = vector.broadcast %cst_49 : f32 to vector<8x128xf32>
    %257 = arith.addf %256, %255 : vector<8x128xf32>
    %258 = arith.divf %256, %257 : vector<8x128xf32>
    %259 = vector.extract_strided_slice %246 {offsets = [0, 256], sizes = [8, 128], strides = [1, 1]} : vector<8x512xf32> to vector<8x128xf32>
    %260 = math.tanh %259 : vector<8x128xf32>
    %261 = vector.extract_strided_slice %246 {offsets = [0, 384], sizes = [8, 128], strides = [1, 1]} : vector<8x512xf32> to vector<8x128xf32>
    %262 = arith.negf %261 : vector<8x128xf32>
    %263 = math.exp %262 : vector<8x128xf32>
    %cst_50 = arith.constant 1.000000e+00 : f32
    %264 = vector.broadcast %cst_50 : f32 to vector<8x128xf32>
    %265 = arith.addf %264, %263 : vector<8x128xf32>
    %266 = arith.divf %264, %265 : vector<8x128xf32>
    %267 = arith.mulf %258, %207 : vector<8x128xf32>
    %268 = arith.mulf %252, %260 : vector<8x128xf32>
    %269 = arith.addf %267, %268 : vector<8x128xf32>
    %270 = math.tanh %269 : vector<8x128xf32>
    %271 = arith.mulf %266, %270 : vector<8x128xf32>
    %272 = arith.select %243, %271, %206 : vector<8x128xi1>, vector<8x128xf32>
    %273 = arith.select %243, %269, %207 : vector<8x128xi1>, vector<8x128xf32>
    %c24 = arith.constant 24 : index
    %c0_51 = arith.constant 0 : index
    %274 = vector.load %arg13[%c24, %c0_51] : memref<64x256xf32, #tpu.memory_space<vmem>>, vector<8x128xf32>
    tpu.vector_store %arg13[%c24, %c0_51], %240 {strides = array<i32>} : memref<64x256xf32, #tpu.memory_space<vmem>>, vector<8x128xf32>,
    %c32 = arith.constant 32 : index
    %c128_52 = arith.constant 128 : index
    %275 = vector.load %arg13[%c32, %c128_52] : memref<64x256xf32, #tpu.memory_space<vmem>>, vector<8x128xf32>
    tpu.vector_store %arg13[%c32, %c128_52], %272 {strides = array<i32>} : memref<64x256xf32, #tpu.memory_space<vmem>>, vector<8x128xf32>,
    %276 = vector.extract_strided_slice %8 {offsets = [32, 0], sizes = [8, 512], strides = [1, 1]} : vector<64x1024xf32> to vector<8x512xf32>
    %277 = vector.extract_strided_slice %2 {offsets = [32, 0], sizes = [8, 128], strides = [1, 1]} : vector<64x128xi1> to vector<8x128xi1>
    %278 = arith.truncf %240 : vector<8x128xf32> to vector<8x128xbf16>
    %cst_53 = arith.constant dense<0.000000e+00> : vector<8x512xf32>
    %279 = tpu.matmul %278, %9, %cst_53 {dimension_numbers = #tpu.dot_dimension_numbers<[1], [0], [0], [1], [0, 0, 1, 1], [], []>} : vector<8x128xbf16>, vector<128x512xbf16>, vector<8x512xf32> -> vector<8x512xf32>
    %280 = arith.addf %276, %279 : vector<8x512xf32>
    %281 = vector.extract_strided_slice %280 {offsets = [0, 0], sizes = [8, 128], strides = [1, 1]} : vector<8x512xf32> to vector<8x128xf32>
    %282 = arith.negf %281 : vector<8x128xf32>
    %283 = math.exp %282 : vector<8x128xf32>
    %cst_54 = arith.constant 1.000000e+00 : f32
    %284 = vector.broadcast %cst_54 : f32 to vector<8x128xf32>
    %285 = arith.addf %284, %283 : vector<8x128xf32>
    %286 = arith.divf %284, %285 : vector<8x128xf32>
    %287 = vector.extract_strided_slice %280 {offsets = [0, 128], sizes = [8, 128], strides = [1, 1]} : vector<8x512xf32> to vector<8x128xf32>
    %288 = arith.negf %287 : vector<8x128xf32>
    %289 = math.exp %288 : vector<8x128xf32>
    %cst_55 = arith.constant 1.000000e+00 : f32
    %290 = vector.broadcast %cst_55 : f32 to vector<8x128xf32>
    %291 = arith.addf %290, %289 : vector<8x128xf32>
    %292 = arith.divf %290, %291 : vector<8x128xf32>
    %293 = vector.extract_strided_slice %280 {offsets = [0, 256], sizes = [8, 128], strides = [1, 1]} : vector<8x512xf32> to vector<8x128xf32>
    %294 = math.tanh %293 : vector<8x128xf32>
    %295 = vector.extract_strided_slice %280 {offsets = [0, 384], sizes = [8, 128], strides = [1, 1]} : vector<8x512xf32> to vector<8x128xf32>
    %296 = arith.negf %295 : vector<8x128xf32>
    %297 = math.exp %296 : vector<8x128xf32>
    %cst_56 = arith.constant 1.000000e+00 : f32
    %298 = vector.broadcast %cst_56 : f32 to vector<8x128xf32>
    %299 = arith.addf %298, %297 : vector<8x128xf32>
    %300 = arith.divf %298, %299 : vector<8x128xf32>
    %301 = arith.mulf %292, %241 : vector<8x128xf32>
    %302 = arith.mulf %286, %294 : vector<8x128xf32>
    %303 = arith.addf %301, %302 : vector<8x128xf32>
    %304 = math.tanh %303 : vector<8x128xf32>
    %305 = arith.mulf %300, %304 : vector<8x128xf32>
    %306 = arith.select %277, %305, %240 : vector<8x128xi1>, vector<8x128xf32>
    %307 = arith.select %277, %303, %241 : vector<8x128xi1>, vector<8x128xf32>
    %308 = vector.extract_strided_slice %8 {offsets = [24, 512], sizes = [8, 512], strides = [1, 1]} : vector<64x1024xf32> to vector<8x512xf32>
    %309 = vector.extract_strided_slice %2 {offsets = [24, 0], sizes = [8, 128], strides = [1, 1]} : vector<64x128xi1> to vector<8x128xi1>
    %310 = arith.truncf %272 : vector<8x128xf32> to vector<8x128xbf16>
    %cst_57 = arith.constant dense<0.000000e+00> : vector<8x512xf32>
    %311 = tpu.matmul %310, %10, %cst_57 {dimension_numbers = #tpu.dot_dimension_numbers<[1], [0], [0], [1], [0, 0, 1, 1], [], []>} : vector<8x128xbf16>, vector<128x512xbf16>, vector<8x512xf32> -> vector<8x512xf32>
    %312 = arith.addf %308, %311 : vector<8x512xf32>
    %313 = vector.extract_strided_slice %312 {offsets = [0, 0], sizes = [8, 128], strides = [1, 1]} : vector<8x512xf32> to vector<8x128xf32>
    %314 = arith.negf %313 : vector<8x128xf32>
    %315 = math.exp %314 : vector<8x128xf32>
    %cst_58 = arith.constant 1.000000e+00 : f32
    %316 = vector.broadcast %cst_58 : f32 to vector<8x128xf32>
    %317 = arith.addf %316, %315 : vector<8x128xf32>
    %318 = arith.divf %316, %317 : vector<8x128xf32>
    %319 = vector.extract_strided_slice %312 {offsets = [0, 128], sizes = [8, 128], strides = [1, 1]} : vector<8x512xf32> to vector<8x128xf32>
    %320 = arith.negf %319 : vector<8x128xf32>
    %321 = math.exp %320 : vector<8x128xf32>
    %cst_59 = arith.constant 1.000000e+00 : f32
    %322 = vector.broadcast %cst_59 : f32 to vector<8x128xf32>
    %323 = arith.addf %322, %321 : vector<8x128xf32>
    %324 = arith.divf %322, %323 : vector<8x128xf32>
    %325 = vector.extract_strided_slice %312 {offsets = [0, 256], sizes = [8, 128], strides = [1, 1]} : vector<8x512xf32> to vector<8x128xf32>
    %326 = math.tanh %325 : vector<8x128xf32>
    %327 = vector.extract_strided_slice %312 {offsets = [0, 384], sizes = [8, 128], strides = [1, 1]} : vector<8x512xf32> to vector<8x128xf32>
    %328 = arith.negf %327 : vector<8x128xf32>
    %329 = math.exp %328 : vector<8x128xf32>
    %cst_60 = arith.constant 1.000000e+00 : f32
    %330 = vector.broadcast %cst_60 : f32 to vector<8x128xf32>
    %331 = arith.addf %330, %329 : vector<8x128xf32>
    %332 = arith.divf %330, %331 : vector<8x128xf32>
    %333 = arith.mulf %324, %273 : vector<8x128xf32>
    %334 = arith.mulf %318, %326 : vector<8x128xf32>
    %335 = arith.addf %333, %334 : vector<8x128xf32>
    %336 = math.tanh %335 : vector<8x128xf32>
    %337 = arith.mulf %332, %336 : vector<8x128xf32>
    %338 = arith.select %309, %337, %272 : vector<8x128xi1>, vector<8x128xf32>
    %339 = arith.select %309, %335, %273 : vector<8x128xi1>, vector<8x128xf32>
    %c32_61 = arith.constant 32 : index
    %c0_62 = arith.constant 0 : index
    %340 = vector.load %arg13[%c32_61, %c0_62] : memref<64x256xf32, #tpu.memory_space<vmem>>, vector<8x128xf32>
    tpu.vector_store %arg13[%c32_61, %c0_62], %306 {strides = array<i32>} : memref<64x256xf32, #tpu.memory_space<vmem>>, vector<8x128xf32>,
    %c24_63 = arith.constant 24 : index
    %c128_64 = arith.constant 128 : index
    %341 = vector.load %arg13[%c24_63, %c128_64] : memref<64x256xf32, #tpu.memory_space<vmem>>, vector<8x128xf32>
    tpu.vector_store %arg13[%c24_63, %c128_64], %338 {strides = array<i32>} : memref<64x256xf32, #tpu.memory_space<vmem>>, vector<8x128xf32>,
    %342 = vector.extract_strided_slice %8 {offsets = [40, 0], sizes = [8, 512], strides = [1, 1]} : vector<64x1024xf32> to vector<8x512xf32>
    %343 = vector.extract_strided_slice %2 {offsets = [40, 0], sizes = [8, 128], strides = [1, 1]} : vector<64x128xi1> to vector<8x128xi1>
    %344 = arith.truncf %306 : vector<8x128xf32> to vector<8x128xbf16>
    %cst_65 = arith.constant dense<0.000000e+00> : vector<8x512xf32>
    %345 = tpu.matmul %344, %9, %cst_65 {dimension_numbers = #tpu.dot_dimension_numbers<[1], [0], [0], [1], [0, 0, 1, 1], [], []>} : vector<8x128xbf16>, vector<128x512xbf16>, vector<8x512xf32> -> vector<8x512xf32>
    %346 = arith.addf %342, %345 : vector<8x512xf32>
    %347 = vector.extract_strided_slice %346 {offsets = [0, 0], sizes = [8, 128], strides = [1, 1]} : vector<8x512xf32> to vector<8x128xf32>
    %348 = arith.negf %347 : vector<8x128xf32>
    %349 = math.exp %348 : vector<8x128xf32>
    %cst_66 = arith.constant 1.000000e+00 : f32
    %350 = vector.broadcast %cst_66 : f32 to vector<8x128xf32>
    %351 = arith.addf %350, %349 : vector<8x128xf32>
    %352 = arith.divf %350, %351 : vector<8x128xf32>
    %353 = vector.extract_strided_slice %346 {offsets = [0, 128], sizes = [8, 128], strides = [1, 1]} : vector<8x512xf32> to vector<8x128xf32>
    %354 = arith.negf %353 : vector<8x128xf32>
    %355 = math.exp %354 : vector<8x128xf32>
    %cst_67 = arith.constant 1.000000e+00 : f32
    %356 = vector.broadcast %cst_67 : f32 to vector<8x128xf32>
    %357 = arith.addf %356, %355 : vector<8x128xf32>
    %358 = arith.divf %356, %357 : vector<8x128xf32>
    %359 = vector.extract_strided_slice %346 {offsets = [0, 256], sizes = [8, 128], strides = [1, 1]} : vector<8x512xf32> to vector<8x128xf32>
    %360 = math.tanh %359 : vector<8x128xf32>
    %361 = vector.extract_strided_slice %346 {offsets = [0, 384], sizes = [8, 128], strides = [1, 1]} : vector<8x512xf32> to vector<8x128xf32>
    %362 = arith.negf %361 : vector<8x128xf32>
    %363 = math.exp %362 : vector<8x128xf32>
    %cst_68 = arith.constant 1.000000e+00 : f32
    %364 = vector.broadcast %cst_68 : f32 to vector<8x128xf32>
    %365 = arith.addf %364, %363 : vector<8x128xf32>
    %366 = arith.divf %364, %365 : vector<8x128xf32>
    %367 = arith.mulf %358, %307 : vector<8x128xf32>
    %368 = arith.mulf %352, %360 : vector<8x128xf32>
    %369 = arith.addf %367, %368 : vector<8x128xf32>
    %370 = math.tanh %369 : vector<8x128xf32>
    %371 = arith.mulf %366, %370 : vector<8x128xf32>
    %372 = arith.select %343, %371, %306 : vector<8x128xi1>, vector<8x128xf32>
    %373 = arith.select %343, %369, %307 : vector<8x128xi1>, vector<8x128xf32>
    %374 = vector.extract_strided_slice %8 {offsets = [16, 512], sizes = [8, 512], strides = [1, 1]} : vector<64x1024xf32> to vector<8x512xf32>
    %375 = vector.extract_strided_slice %2 {offsets = [16, 0], sizes = [8, 128], strides = [1, 1]} : vector<64x128xi1> to vector<8x128xi1>
    %376 = arith.truncf %338 : vector<8x128xf32> to vector<8x128xbf16>
    %cst_69 = arith.constant dense<0.000000e+00> : vector<8x512xf32>
    %377 = tpu.matmul %376, %10, %cst_69 {dimension_numbers = #tpu.dot_dimension_numbers<[1], [0], [0], [1], [0, 0, 1, 1], [], []>} : vector<8x128xbf16>, vector<128x512xbf16>, vector<8x512xf32> -> vector<8x512xf32>
    %378 = arith.addf %374, %377 : vector<8x512xf32>
    %379 = vector.extract_strided_slice %378 {offsets = [0, 0], sizes = [8, 128], strides = [1, 1]} : vector<8x512xf32> to vector<8x128xf32>
    %380 = arith.negf %379 : vector<8x128xf32>
    %381 = math.exp %380 : vector<8x128xf32>
    %cst_70 = arith.constant 1.000000e+00 : f32
    %382 = vector.broadcast %cst_70 : f32 to vector<8x128xf32>
    %383 = arith.addf %382, %381 : vector<8x128xf32>
    %384 = arith.divf %382, %383 : vector<8x128xf32>
    %385 = vector.extract_strided_slice %378 {offsets = [0, 128], sizes = [8, 128], strides = [1, 1]} : vector<8x512xf32> to vector<8x128xf32>
    %386 = arith.negf %385 : vector<8x128xf32>
    %387 = math.exp %386 : vector<8x128xf32>
    %cst_71 = arith.constant 1.000000e+00 : f32
    %388 = vector.broadcast %cst_71 : f32 to vector<8x128xf32>
    %389 = arith.addf %388, %387 : vector<8x128xf32>
    %390 = arith.divf %388, %389 : vector<8x128xf32>
    %391 = vector.extract_strided_slice %378 {offsets = [0, 256], sizes = [8, 128], strides = [1, 1]} : vector<8x512xf32> to vector<8x128xf32>
    %392 = math.tanh %391 : vector<8x128xf32>
    %393 = vector.extract_strided_slice %378 {offsets = [0, 384], sizes = [8, 128], strides = [1, 1]} : vector<8x512xf32> to vector<8x128xf32>
    %394 = arith.negf %393 : vector<8x128xf32>
    %395 = math.exp %394 : vector<8x128xf32>
    %cst_72 = arith.constant 1.000000e+00 : f32
    %396 = vector.broadcast %cst_72 : f32 to vector<8x128xf32>
    %397 = arith.addf %396, %395 : vector<8x128xf32>
    %398 = arith.divf %396, %397 : vector<8x128xf32>
    %399 = arith.mulf %390, %339 : vector<8x128xf32>
    %400 = arith.mulf %384, %392 : vector<8x128xf32>
    %401 = arith.addf %399, %400 : vector<8x128xf32>
    %402 = math.tanh %401 : vector<8x128xf32>
    %403 = arith.mulf %398, %402 : vector<8x128xf32>
    %404 = arith.select %375, %403, %338 : vector<8x128xi1>, vector<8x128xf32>
    %405 = arith.select %375, %401, %339 : vector<8x128xi1>, vector<8x128xf32>
    %c40_73 = arith.constant 40 : index
    %c0_74 = arith.constant 0 : index
    %406 = vector.load %arg13[%c40_73, %c0_74] : memref<64x256xf32, #tpu.memory_space<vmem>>, vector<8x128xf32>
    tpu.vector_store %arg13[%c40_73, %c0_74], %372 {strides = array<i32>} : memref<64x256xf32, #tpu.memory_space<vmem>>, vector<8x128xf32>,
    %c16_75 = arith.constant 16 : index
    %c128_76 = arith.constant 128 : index
    %407 = vector.load %arg13[%c16_75, %c128_76] : memref<64x256xf32, #tpu.memory_space<vmem>>, vector<8x128xf32>
    tpu.vector_store %arg13[%c16_75, %c128_76], %404 {strides = array<i32>} : memref<64x256xf32, #tpu.memory_space<vmem>>, vector<8x128xf32>,
    %408 = vector.extract_strided_slice %8 {offsets = [48, 0], sizes = [8, 512], strides = [1, 1]} : vector<64x1024xf32> to vector<8x512xf32>
    %409 = vector.extract_strided_slice %2 {offsets = [48, 0], sizes = [8, 128], strides = [1, 1]} : vector<64x128xi1> to vector<8x128xi1>
    %410 = arith.truncf %372 : vector<8x128xf32> to vector<8x128xbf16>
    %cst_77 = arith.constant dense<0.000000e+00> : vector<8x512xf32>
    %411 = tpu.matmul %410, %9, %cst_77 {dimension_numbers = #tpu.dot_dimension_numbers<[1], [0], [0], [1], [0, 0, 1, 1], [], []>} : vector<8x128xbf16>, vector<128x512xbf16>, vector<8x512xf32> -> vector<8x512xf32>
    %412 = arith.addf %408, %411 : vector<8x512xf32>
    %413 = vector.extract_strided_slice %412 {offsets = [0, 0], sizes = [8, 128], strides = [1, 1]} : vector<8x512xf32> to vector<8x128xf32>
    %414 = arith.negf %413 : vector<8x128xf32>
    %415 = math.exp %414 : vector<8x128xf32>
    %cst_78 = arith.constant 1.000000e+00 : f32
    %416 = vector.broadcast %cst_78 : f32 to vector<8x128xf32>
    %417 = arith.addf %416, %415 : vector<8x128xf32>
    %418 = arith.divf %416, %417 : vector<8x128xf32>
    %419 = vector.extract_strided_slice %412 {offsets = [0, 128], sizes = [8, 128], strides = [1, 1]} : vector<8x512xf32> to vector<8x128xf32>
    %420 = arith.negf %419 : vector<8x128xf32>
    %421 = math.exp %420 : vector<8x128xf32>
    %cst_79 = arith.constant 1.000000e+00 : f32
    %422 = vector.broadcast %cst_79 : f32 to vector<8x128xf32>
    %423 = arith.addf %422, %421 : vector<8x128xf32>
    %424 = arith.divf %422, %423 : vector<8x128xf32>
    %425 = vector.extract_strided_slice %412 {offsets = [0, 256], sizes = [8, 128], strides = [1, 1]} : vector<8x512xf32> to vector<8x128xf32>
    %426 = math.tanh %425 : vector<8x128xf32>
    %427 = vector.extract_strided_slice %412 {offsets = [0, 384], sizes = [8, 128], strides = [1, 1]} : vector<8x512xf32> to vector<8x128xf32>
    %428 = arith.negf %427 : vector<8x128xf32>
    %429 = math.exp %428 : vector<8x128xf32>
    %cst_80 = arith.constant 1.000000e+00 : f32
    %430 = vector.broadcast %cst_80 : f32 to vector<8x128xf32>
    %431 = arith.addf %430, %429 : vector<8x128xf32>
    %432 = arith.divf %430, %431 : vector<8x128xf32>
    %433 = arith.mulf %424, %373 : vector<8x128xf32>
    %434 = arith.mulf %418, %426 : vector<8x128xf32>
    %435 = arith.addf %433, %434 : vector<8x128xf32>
    %436 = math.tanh %435 : vector<8x128xf32>
    %437 = arith.mulf %432, %436 : vector<8x128xf32>
    %438 = arith.select %409, %437, %372 : vector<8x128xi1>, vector<8x128xf32>
    %439 = arith.select %409, %435, %373 : vector<8x128xi1>, vector<8x128xf32>
    %440 = vector.extract_strided_slice %8 {offsets = [8, 512], sizes = [8, 512], strides = [1, 1]} : vector<64x1024xf32> to vector<8x512xf32>
    %441 = vector.extract_strided_slice %2 {offsets = [8, 0], sizes = [8, 128], strides = [1, 1]} : vector<64x128xi1> to vector<8x128xi1>
    %442 = arith.truncf %404 : vector<8x128xf32> to vector<8x128xbf16>
    %cst_81 = arith.constant dense<0.000000e+00> : vector<8x512xf32>
    %443 = tpu.matmul %442, %10, %cst_81 {dimension_numbers = #tpu.dot_dimension_numbers<[1], [0], [0], [1], [0, 0, 1, 1], [], []>} : vector<8x128xbf16>, vector<128x512xbf16>, vector<8x512xf32> -> vector<8x512xf32>
    %444 = arith.addf %440, %443 : vector<8x512xf32>
    %445 = vector.extract_strided_slice %444 {offsets = [0, 0], sizes = [8, 128], strides = [1, 1]} : vector<8x512xf32> to vector<8x128xf32>
    %446 = arith.negf %445 : vector<8x128xf32>
    %447 = math.exp %446 : vector<8x128xf32>
    %cst_82 = arith.constant 1.000000e+00 : f32
    %448 = vector.broadcast %cst_82 : f32 to vector<8x128xf32>
    %449 = arith.addf %448, %447 : vector<8x128xf32>
    %450 = arith.divf %448, %449 : vector<8x128xf32>
    %451 = vector.extract_strided_slice %444 {offsets = [0, 128], sizes = [8, 128], strides = [1, 1]} : vector<8x512xf32> to vector<8x128xf32>
    %452 = arith.negf %451 : vector<8x128xf32>
    %453 = math.exp %452 : vector<8x128xf32>
    %cst_83 = arith.constant 1.000000e+00 : f32
    %454 = vector.broadcast %cst_83 : f32 to vector<8x128xf32>
    %455 = arith.addf %454, %453 : vector<8x128xf32>
    %456 = arith.divf %454, %455 : vector<8x128xf32>
    %457 = vector.extract_strided_slice %444 {offsets = [0, 256], sizes = [8, 128], strides = [1, 1]} : vector<8x512xf32> to vector<8x128xf32>
    %458 = math.tanh %457 : vector<8x128xf32>
    %459 = vector.extract_strided_slice %444 {offsets = [0, 384], sizes = [8, 128], strides = [1, 1]} : vector<8x512xf32> to vector<8x128xf32>
    %460 = arith.negf %459 : vector<8x128xf32>
    %461 = math.exp %460 : vector<8x128xf32>
    %cst_84 = arith.constant 1.000000e+00 : f32
    %462 = vector.broadcast %cst_84 : f32 to vector<8x128xf32>
    %463 = arith.addf %462, %461 : vector<8x128xf32>
    %464 = arith.divf %462, %463 : vector<8x128xf32>
    %465 = arith.mulf %456, %405 : vector<8x128xf32>
    %466 = arith.mulf %450, %458 : vector<8x128xf32>
    %467 = arith.addf %465, %466 : vector<8x128xf32>
    %468 = math.tanh %467 : vector<8x128xf32>
    %469 = arith.mulf %464, %468 : vector<8x128xf32>
    %470 = arith.select %441, %469, %404 : vector<8x128xi1>, vector<8x128xf32>
    %471 = arith.select %441, %467, %405 : vector<8x128xi1>, vector<8x128xf32>
    %c48_85 = arith.constant 48 : index
    %c0_86 = arith.constant 0 : index
    %472 = vector.load %arg13[%c48_85, %c0_86] : memref<64x256xf32, #tpu.memory_space<vmem>>, vector<8x128xf32>
    tpu.vector_store %arg13[%c48_85, %c0_86], %438 {strides = array<i32>} : memref<64x256xf32, #tpu.memory_space<vmem>>, vector<8x128xf32>,
    %c8_87 = arith.constant 8 : index
    %c128_88 = arith.constant 128 : index
    %473 = vector.load %arg13[%c8_87, %c128_88] : memref<64x256xf32, #tpu.memory_space<vmem>>, vector<8x128xf32>
    tpu.vector_store %arg13[%c8_87, %c128_88], %470 {strides = array<i32>} : memref<64x256xf32, #tpu.memory_space<vmem>>, vector<8x128xf32>,
    %474 = vector.extract_strided_slice %8 {offsets = [56, 0], sizes = [8, 512], strides = [1, 1]} : vector<64x1024xf32> to vector<8x512xf32>
    %475 = vector.extract_strided_slice %2 {offsets = [56, 0], sizes = [8, 128], strides = [1, 1]} : vector<64x128xi1> to vector<8x128xi1>
    %476 = arith.truncf %438 : vector<8x128xf32> to vector<8x128xbf16>
    %cst_89 = arith.constant dense<0.000000e+00> : vector<8x512xf32>
    %477 = tpu.matmul %476, %9, %cst_89 {dimension_numbers = #tpu.dot_dimension_numbers<[1], [0], [0], [1], [0, 0, 1, 1], [], []>} : vector<8x128xbf16>, vector<128x512xbf16>, vector<8x512xf32> -> vector<8x512xf32>
    %478 = arith.addf %474, %477 : vector<8x512xf32>
    %479 = vector.extract_strided_slice %478 {offsets = [0, 0], sizes = [8, 128], strides = [1, 1]} : vector<8x512xf32> to vector<8x128xf32>
    %480 = arith.negf %479 : vector<8x128xf32>
    %481 = math.exp %480 : vector<8x128xf32>
    %cst_90 = arith.constant 1.000000e+00 : f32
    %482 = vector.broadcast %cst_90 : f32 to vector<8x128xf32>
    %483 = arith.addf %482, %481 : vector<8x128xf32>
    %484 = arith.divf %482, %483 : vector<8x128xf32>
    %485 = vector.extract_strided_slice %478 {offsets = [0, 128], sizes = [8, 128], strides = [1, 1]} : vector<8x512xf32> to vector<8x128xf32>
    %486 = arith.negf %485 : vector<8x128xf32>
    %487 = math.exp %486 : vector<8x128xf32>
    %cst_91 = arith.constant 1.000000e+00 : f32
    %488 = vector.broadcast %cst_91 : f32 to vector<8x128xf32>
    %489 = arith.addf %488, %487 : vector<8x128xf32>
    %490 = arith.divf %488, %489 : vector<8x128xf32>
    %491 = vector.extract_strided_slice %478 {offsets = [0, 256], sizes = [8, 128], strides = [1, 1]} : vector<8x512xf32> to vector<8x128xf32>
    %492 = math.tanh %491 : vector<8x128xf32>
    %493 = vector.extract_strided_slice %478 {offsets = [0, 384], sizes = [8, 128], strides = [1, 1]} : vector<8x512xf32> to vector<8x128xf32>
    %494 = arith.negf %493 : vector<8x128xf32>
    %495 = math.exp %494 : vector<8x128xf32>
    %cst_92 = arith.constant 1.000000e+00 : f32
    %496 = vector.broadcast %cst_92 : f32 to vector<8x128xf32>
    %497 = arith.addf %496, %495 : vector<8x128xf32>
    %498 = arith.divf %496, %497 : vector<8x128xf32>
    %499 = arith.mulf %490, %439 : vector<8x128xf32>
    %500 = arith.mulf %484, %492 : vector<8x128xf32>
    %501 = arith.addf %499, %500 : vector<8x128xf32>
    %502 = math.tanh %501 : vector<8x128xf32>
    %503 = arith.mulf %498, %502 : vector<8x128xf32>
    %504 = arith.select %475, %503, %438 : vector<8x128xi1>, vector<8x128xf32>
    %505 = vector.extract_strided_slice %8 {offsets = [0, 512], sizes = [8, 512], strides = [1, 1]} : vector<64x1024xf32> to vector<8x512xf32>
    %506 = vector.extract_strided_slice %2 {offsets = [0, 0], sizes = [8, 128], strides = [1, 1]} : vector<64x128xi1> to vector<8x128xi1>
    %507 = arith.truncf %470 : vector<8x128xf32> to vector<8x128xbf16>
    %cst_93 = arith.constant dense<0.000000e+00> : vector<8x512xf32>
    %508 = tpu.matmul %507, %10, %cst_93 {dimension_numbers = #tpu.dot_dimension_numbers<[1], [0], [0], [1], [0, 0, 1, 1], [], []>} : vector<8x128xbf16>, vector<128x512xbf16>, vector<8x512xf32> -> vector<8x512xf32>
    %509 = arith.addf %505, %508 : vector<8x512xf32>
    %510 = vector.extract_strided_slice %509 {offsets = [0, 0], sizes = [8, 128], strides = [1, 1]} : vector<8x512xf32> to vector<8x128xf32>
    %511 = arith.negf %510 : vector<8x128xf32>
    %512 = math.exp %511 : vector<8x128xf32>
    %cst_94 = arith.constant 1.000000e+00 : f32
    %513 = vector.broadcast %cst_94 : f32 to vector<8x128xf32>
    %514 = arith.addf %513, %512 : vector<8x128xf32>
    %515 = arith.divf %513, %514 : vector<8x128xf32>
    %516 = vector.extract_strided_slice %509 {offsets = [0, 128], sizes = [8, 128], strides = [1, 1]} : vector<8x512xf32> to vector<8x128xf32>
    %517 = arith.negf %516 : vector<8x128xf32>
    %518 = math.exp %517 : vector<8x128xf32>
    %cst_95 = arith.constant 1.000000e+00 : f32
    %519 = vector.broadcast %cst_95 : f32 to vector<8x128xf32>
    %520 = arith.addf %519, %518 : vector<8x128xf32>
    %521 = arith.divf %519, %520 : vector<8x128xf32>
    %522 = vector.extract_strided_slice %509 {offsets = [0, 256], sizes = [8, 128], strides = [1, 1]} : vector<8x512xf32> to vector<8x128xf32>
    %523 = math.tanh %522 : vector<8x128xf32>
    %524 = vector.extract_strided_slice %509 {offsets = [0, 384], sizes = [8, 128], strides = [1, 1]} : vector<8x512xf32> to vector<8x128xf32>
    %525 = arith.negf %524 : vector<8x128xf32>
    %526 = math.exp %525 : vector<8x128xf32>
    %cst_96 = arith.constant 1.000000e+00 : f32
    %527 = vector.broadcast %cst_96 : f32 to vector<8x128xf32>
    %528 = arith.addf %527, %526 : vector<8x128xf32>
    %529 = arith.divf %527, %528 : vector<8x128xf32>
    %530 = arith.mulf %521, %471 : vector<8x128xf32>
    %531 = arith.mulf %515, %523 : vector<8x128xf32>
    %532 = arith.addf %530, %531 : vector<8x128xf32>
    %533 = math.tanh %532 : vector<8x128xf32>
    %534 = arith.mulf %529, %533 : vector<8x128xf32>
    %535 = arith.select %506, %534, %470 : vector<8x128xi1>, vector<8x128xf32>
    %c56_97 = arith.constant 56 : index
    %c0_98 = arith.constant 0 : index
    %536 = vector.load %arg13[%c56_97, %c0_98] : memref<64x256xf32, #tpu.memory_space<vmem>>, vector<8x128xf32>
    tpu.vector_store %arg13[%c56_97, %c0_98], %504 {strides = array<i32>} : memref<64x256xf32, #tpu.memory_space<vmem>>, vector<8x128xf32>,
    %c0_99 = arith.constant 0 : index
    %c128_100 = arith.constant 128 : index
    %537 = vector.load %arg13[%c0_99, %c128_100] : memref<64x256xf32, #tpu.memory_space<vmem>>, vector<8x128xf32>
    tpu.vector_store %arg13[%c0_99, %c128_100], %535 {strides = array<i32>} : memref<64x256xf32, #tpu.memory_space<vmem>>, vector<8x128xf32>,
    %c0_101 = arith.constant 0 : index
    %c0_102 = arith.constant 0 : index
    %538 = vector.load %arg13[%c0_101, %c0_102] : memref<64x256xf32, #tpu.memory_space<vmem>>, vector<64x256xf32>
    %539 = arith.truncf %538 : vector<64x256xf32> to vector<64x256xbf16>
    %c0_103 = arith.constant 0 : index
    %c0_104 = arith.constant 0 : index
    %540 = vector.load %arg6[%c0_103, %c0_104] : memref<256x1024xbf16, #tpu.memory_space<vmem>>, vector<256x1024xbf16>
    %cst_105 = arith.constant dense<0.000000e+00> : vector<64x1024xf32>
    %541 = tpu.matmul %539, %540, %cst_105 {dimension_numbers = #tpu.dot_dimension_numbers<[1], [0], [0], [1], [0, 0, 1, 1], [], []>} : vector<64x256xbf16>, vector<256x1024xbf16>, vector<64x1024xf32> -> vector<64x1024xf32>
    %c0_106 = arith.constant 0 : index
    %c0_107 = arith.constant 0 : index
    %542 = vector.load %arg7[%c0_106, %c0_107] : memref<1x1024xf32, #tpu.memory_space<vmem>>, vector<1x1024xf32>
    %543 = vector.broadcast %542 : vector<1x1024xf32> to vector<64x1024xf32>
    %544 = arith.addf %541, %543 : vector<64x1024xf32>
    %c0_108 = arith.constant 0 : index
    %c0_109 = arith.constant 0 : index
    %545 = vector.load %arg8[%c0_108, %c0_109] : memref<128x512xbf16, #tpu.memory_space<vmem>>, vector<128x512xbf16>
    %c0_110 = arith.constant 0 : index
    %c0_111 = arith.constant 0 : index
    %546 = vector.load %arg9[%c0_110, %c0_111] : memref<128x512xbf16, #tpu.memory_space<vmem>>, vector<128x512xbf16>
    %cst_112 = arith.constant 0.000000e+00 : f32
    %547 = vector.broadcast %cst_112 : f32 to vector<8x128xf32>
    %548 = vector.extract_strided_slice %544 {offsets = [0, 0], sizes = [8, 512], strides = [1, 1]} : vector<64x1024xf32> to vector<8x512xf32>
    %549 = vector.extract_strided_slice %2 {offsets = [0, 0], sizes = [8, 128], strides = [1, 1]} : vector<64x128xi1> to vector<8x128xi1>
    %550 = arith.truncf %547 : vector<8x128xf32> to vector<8x128xbf16>
    %cst_113 = arith.constant dense<0.000000e+00> : vector<8x512xf32>
    %551 = tpu.matmul %550, %545, %cst_113 {dimension_numbers = #tpu.dot_dimension_numbers<[1], [0], [0], [1], [0, 0, 1, 1], [], []>} : vector<8x128xbf16>, vector<128x512xbf16>, vector<8x512xf32> -> vector<8x512xf32>
    %552 = arith.addf %548, %551 : vector<8x512xf32>
    %553 = vector.extract_strided_slice %552 {offsets = [0, 0], sizes = [8, 128], strides = [1, 1]} : vector<8x512xf32> to vector<8x128xf32>
    %554 = arith.negf %553 : vector<8x128xf32>
    %555 = math.exp %554 : vector<8x128xf32>
    %cst_114 = arith.constant 1.000000e+00 : f32
    %556 = vector.broadcast %cst_114 : f32 to vector<8x128xf32>
    %557 = arith.addf %556, %555 : vector<8x128xf32>
    %558 = arith.divf %556, %557 : vector<8x128xf32>
    %559 = vector.extract_strided_slice %552 {offsets = [0, 128], sizes = [8, 128], strides = [1, 1]} : vector<8x512xf32> to vector<8x128xf32>
    %560 = arith.negf %559 : vector<8x128xf32>
    %561 = math.exp %560 : vector<8x128xf32>
    %cst_115 = arith.constant 1.000000e+00 : f32
    %562 = vector.broadcast %cst_115 : f32 to vector<8x128xf32>
    %563 = arith.addf %562, %561 : vector<8x128xf32>
    %564 = arith.divf %562, %563 : vector<8x128xf32>
    %565 = vector.extract_strided_slice %552 {offsets = [0, 256], sizes = [8, 128], strides = [1, 1]} : vector<8x512xf32> to vector<8x128xf32>
    %566 = math.tanh %565 : vector<8x128xf32>
    %567 = vector.extract_strided_slice %552 {offsets = [0, 384], sizes = [8, 128], strides = [1, 1]} : vector<8x512xf32> to vector<8x128xf32>
    %568 = arith.negf %567 : vector<8x128xf32>
    %569 = math.exp %568 : vector<8x128xf32>
    %cst_116 = arith.constant 1.000000e+00 : f32
    %570 = vector.broadcast %cst_116 : f32 to vector<8x128xf32>
    %571 = arith.addf %570, %569 : vector<8x128xf32>
    %572 = arith.divf %570, %571 : vector<8x128xf32>
    %573 = arith.mulf %564, %547 : vector<8x128xf32>
    %574 = arith.mulf %558, %566 : vector<8x128xf32>
    %575 = arith.addf %573, %574 : vector<8x128xf32>
    %576 = math.tanh %575 : vector<8x128xf32>
    %577 = arith.mulf %572, %576 : vector<8x128xf32>
    %578 = arith.select %549, %577, %547 : vector<8x128xi1>, vector<8x128xf32>
    %579 = arith.select %549, %575, %547 : vector<8x128xi1>, vector<8x128xf32>
    %580 = vector.extract_strided_slice %544 {offsets = [56, 512], sizes = [8, 512], strides = [1, 1]} : vector<64x1024xf32> to vector<8x512xf32>
    %581 = vector.extract_strided_slice %2 {offsets = [56, 0], sizes = [8, 128], strides = [1, 1]} : vector<64x128xi1> to vector<8x128xi1>
    %582 = arith.truncf %547 : vector<8x128xf32> to vector<8x128xbf16>
    %cst_117 = arith.constant dense<0.000000e+00> : vector<8x512xf32>
    %583 = tpu.matmul %582, %546, %cst_117 {dimension_numbers = #tpu.dot_dimension_numbers<[1], [0], [0], [1], [0, 0, 1, 1], [], []>} : vector<8x128xbf16>, vector<128x512xbf16>, vector<8x512xf32> -> vector<8x512xf32>
    %584 = arith.addf %580, %583 : vector<8x512xf32>
    %585 = vector.extract_strided_slice %584 {offsets = [0, 0], sizes = [8, 128], strides = [1, 1]} : vector<8x512xf32> to vector<8x128xf32>
    %586 = arith.negf %585 : vector<8x128xf32>
    %587 = math.exp %586 : vector<8x128xf32>
    %cst_118 = arith.constant 1.000000e+00 : f32
    %588 = vector.broadcast %cst_118 : f32 to vector<8x128xf32>
    %589 = arith.addf %588, %587 : vector<8x128xf32>
    %590 = arith.divf %588, %589 : vector<8x128xf32>
    %591 = vector.extract_strided_slice %584 {offsets = [0, 128], sizes = [8, 128], strides = [1, 1]} : vector<8x512xf32> to vector<8x128xf32>
    %592 = arith.negf %591 : vector<8x128xf32>
    %593 = math.exp %592 : vector<8x128xf32>
    %cst_119 = arith.constant 1.000000e+00 : f32
    %594 = vector.broadcast %cst_119 : f32 to vector<8x128xf32>
    %595 = arith.addf %594, %593 : vector<8x128xf32>
    %596 = arith.divf %594, %595 : vector<8x128xf32>
    %597 = vector.extract_strided_slice %584 {offsets = [0, 256], sizes = [8, 128], strides = [1, 1]} : vector<8x512xf32> to vector<8x128xf32>
    %598 = math.tanh %597 : vector<8x128xf32>
    %599 = vector.extract_strided_slice %584 {offsets = [0, 384], sizes = [8, 128], strides = [1, 1]} : vector<8x512xf32> to vector<8x128xf32>
    %600 = arith.negf %599 : vector<8x128xf32>
    %601 = math.exp %600 : vector<8x128xf32>
    %cst_120 = arith.constant 1.000000e+00 : f32
    %602 = vector.broadcast %cst_120 : f32 to vector<8x128xf32>
    %603 = arith.addf %602, %601 : vector<8x128xf32>
    %604 = arith.divf %602, %603 : vector<8x128xf32>
    %605 = arith.mulf %596, %547 : vector<8x128xf32>
    %606 = arith.mulf %590, %598 : vector<8x128xf32>
    %607 = arith.addf %605, %606 : vector<8x128xf32>
    %608 = math.tanh %607 : vector<8x128xf32>
    %609 = arith.mulf %604, %608 : vector<8x128xf32>
    %610 = arith.select %581, %609, %547 : vector<8x128xi1>, vector<8x128xf32>
    %611 = arith.select %581, %607, %547 : vector<8x128xi1>, vector<8x128xf32>
    %612 = vector.extract_strided_slice %544 {offsets = [8, 0], sizes = [8, 512], strides = [1, 1]} : vector<64x1024xf32> to vector<8x512xf32>
    %613 = vector.extract_strided_slice %2 {offsets = [8, 0], sizes = [8, 128], strides = [1, 1]} : vector<64x128xi1> to vector<8x128xi1>
    %614 = arith.truncf %578 : vector<8x128xf32> to vector<8x128xbf16>
    %cst_121 = arith.constant dense<0.000000e+00> : vector<8x512xf32>
    %615 = tpu.matmul %614, %545, %cst_121 {dimension_numbers = #tpu.dot_dimension_numbers<[1], [0], [0], [1], [0, 0, 1, 1], [], []>} : vector<8x128xbf16>, vector<128x512xbf16>, vector<8x512xf32> -> vector<8x512xf32>
    %616 = arith.addf %612, %615 : vector<8x512xf32>
    %617 = vector.extract_strided_slice %616 {offsets = [0, 0], sizes = [8, 128], strides = [1, 1]} : vector<8x512xf32> to vector<8x128xf32>
    %618 = arith.negf %617 : vector<8x128xf32>
    %619 = math.exp %618 : vector<8x128xf32>
    %cst_122 = arith.constant 1.000000e+00 : f32
    %620 = vector.broadcast %cst_122 : f32 to vector<8x128xf32>
    %621 = arith.addf %620, %619 : vector<8x128xf32>
    %622 = arith.divf %620, %621 : vector<8x128xf32>
    %623 = vector.extract_strided_slice %616 {offsets = [0, 128], sizes = [8, 128], strides = [1, 1]} : vector<8x512xf32> to vector<8x128xf32>
    %624 = arith.negf %623 : vector<8x128xf32>
    %625 = math.exp %624 : vector<8x128xf32>
    %cst_123 = arith.constant 1.000000e+00 : f32
    %626 = vector.broadcast %cst_123 : f32 to vector<8x128xf32>
    %627 = arith.addf %626, %625 : vector<8x128xf32>
    %628 = arith.divf %626, %627 : vector<8x128xf32>
    %629 = vector.extract_strided_slice %616 {offsets = [0, 256], sizes = [8, 128], strides = [1, 1]} : vector<8x512xf32> to vector<8x128xf32>
    %630 = math.tanh %629 : vector<8x128xf32>
    %631 = vector.extract_strided_slice %616 {offsets = [0, 384], sizes = [8, 128], strides = [1, 1]} : vector<8x512xf32> to vector<8x128xf32>
    %632 = arith.negf %631 : vector<8x128xf32>
    %633 = math.exp %632 : vector<8x128xf32>
    %cst_124 = arith.constant 1.000000e+00 : f32
    %634 = vector.broadcast %cst_124 : f32 to vector<8x128xf32>
    %635 = arith.addf %634, %633 : vector<8x128xf32>
    %636 = arith.divf %634, %635 : vector<8x128xf32>
    %637 = arith.mulf %628, %579 : vector<8x128xf32>
    %638 = arith.mulf %622, %630 : vector<8x128xf32>
    %639 = arith.addf %637, %638 : vector<8x128xf32>
    %640 = math.tanh %639 : vector<8x128xf32>
    %641 = arith.mulf %636, %640 : vector<8x128xf32>
    %642 = arith.select %613, %641, %578 : vector<8x128xi1>, vector<8x128xf32>
    %643 = arith.select %613, %639, %579 : vector<8x128xi1>, vector<8x128xf32>
    %644 = vector.extract_strided_slice %544 {offsets = [48, 512], sizes = [8, 512], strides = [1, 1]} : vector<64x1024xf32> to vector<8x512xf32>
    %645 = vector.extract_strided_slice %2 {offsets = [48, 0], sizes = [8, 128], strides = [1, 1]} : vector<64x128xi1> to vector<8x128xi1>
    %646 = arith.truncf %610 : vector<8x128xf32> to vector<8x128xbf16>
    %cst_125 = arith.constant dense<0.000000e+00> : vector<8x512xf32>
    %647 = tpu.matmul %646, %546, %cst_125 {dimension_numbers = #tpu.dot_dimension_numbers<[1], [0], [0], [1], [0, 0, 1, 1], [], []>} : vector<8x128xbf16>, vector<128x512xbf16>, vector<8x512xf32> -> vector<8x512xf32>
    %648 = arith.addf %644, %647 : vector<8x512xf32>
    %649 = vector.extract_strided_slice %648 {offsets = [0, 0], sizes = [8, 128], strides = [1, 1]} : vector<8x512xf32> to vector<8x128xf32>
    %650 = arith.negf %649 : vector<8x128xf32>
    %651 = math.exp %650 : vector<8x128xf32>
    %cst_126 = arith.constant 1.000000e+00 : f32
    %652 = vector.broadcast %cst_126 : f32 to vector<8x128xf32>
    %653 = arith.addf %652, %651 : vector<8x128xf32>
    %654 = arith.divf %652, %653 : vector<8x128xf32>
    %655 = vector.extract_strided_slice %648 {offsets = [0, 128], sizes = [8, 128], strides = [1, 1]} : vector<8x512xf32> to vector<8x128xf32>
    %656 = arith.negf %655 : vector<8x128xf32>
    %657 = math.exp %656 : vector<8x128xf32>
    %cst_127 = arith.constant 1.000000e+00 : f32
    %658 = vector.broadcast %cst_127 : f32 to vector<8x128xf32>
    %659 = arith.addf %658, %657 : vector<8x128xf32>
    %660 = arith.divf %658, %659 : vector<8x128xf32>
    %661 = vector.extract_strided_slice %648 {offsets = [0, 256], sizes = [8, 128], strides = [1, 1]} : vector<8x512xf32> to vector<8x128xf32>
    %662 = math.tanh %661 : vector<8x128xf32>
    %663 = vector.extract_strided_slice %648 {offsets = [0, 384], sizes = [8, 128], strides = [1, 1]} : vector<8x512xf32> to vector<8x128xf32>
    %664 = arith.negf %663 : vector<8x128xf32>
    %665 = math.exp %664 : vector<8x128xf32>
    %cst_128 = arith.constant 1.000000e+00 : f32
    %666 = vector.broadcast %cst_128 : f32 to vector<8x128xf32>
    %667 = arith.addf %666, %665 : vector<8x128xf32>
    %668 = arith.divf %666, %667 : vector<8x128xf32>
    %669 = arith.mulf %660, %611 : vector<8x128xf32>
    %670 = arith.mulf %654, %662 : vector<8x128xf32>
    %671 = arith.addf %669, %670 : vector<8x128xf32>
    %672 = math.tanh %671 : vector<8x128xf32>
    %673 = arith.mulf %668, %672 : vector<8x128xf32>
    %674 = arith.select %645, %673, %610 : vector<8x128xi1>, vector<8x128xf32>
    %675 = arith.select %645, %671, %611 : vector<8x128xi1>, vector<8x128xf32>
    %676 = vector.extract_strided_slice %544 {offsets = [16, 0], sizes = [8, 512], strides = [1, 1]} : vector<64x1024xf32> to vector<8x512xf32>
    %677 = vector.extract_strided_slice %2 {offsets = [16, 0], sizes = [8, 128], strides = [1, 1]} : vector<64x128xi1> to vector<8x128xi1>
    %678 = arith.truncf %642 : vector<8x128xf32> to vector<8x128xbf16>
    %cst_129 = arith.constant dense<0.000000e+00> : vector<8x512xf32>
    %679 = tpu.matmul %678, %545, %cst_129 {dimension_numbers = #tpu.dot_dimension_numbers<[1], [0], [0], [1], [0, 0, 1, 1], [], []>} : vector<8x128xbf16>, vector<128x512xbf16>, vector<8x512xf32> -> vector<8x512xf32>
    %680 = arith.addf %676, %679 : vector<8x512xf32>
    %681 = vector.extract_strided_slice %680 {offsets = [0, 0], sizes = [8, 128], strides = [1, 1]} : vector<8x512xf32> to vector<8x128xf32>
    %682 = arith.negf %681 : vector<8x128xf32>
    %683 = math.exp %682 : vector<8x128xf32>
    %cst_130 = arith.constant 1.000000e+00 : f32
    %684 = vector.broadcast %cst_130 : f32 to vector<8x128xf32>
    %685 = arith.addf %684, %683 : vector<8x128xf32>
    %686 = arith.divf %684, %685 : vector<8x128xf32>
    %687 = vector.extract_strided_slice %680 {offsets = [0, 128], sizes = [8, 128], strides = [1, 1]} : vector<8x512xf32> to vector<8x128xf32>
    %688 = arith.negf %687 : vector<8x128xf32>
    %689 = math.exp %688 : vector<8x128xf32>
    %cst_131 = arith.constant 1.000000e+00 : f32
    %690 = vector.broadcast %cst_131 : f32 to vector<8x128xf32>
    %691 = arith.addf %690, %689 : vector<8x128xf32>
    %692 = arith.divf %690, %691 : vector<8x128xf32>
    %693 = vector.extract_strided_slice %680 {offsets = [0, 256], sizes = [8, 128], strides = [1, 1]} : vector<8x512xf32> to vector<8x128xf32>
    %694 = math.tanh %693 : vector<8x128xf32>
    %695 = vector.extract_strided_slice %680 {offsets = [0, 384], sizes = [8, 128], strides = [1, 1]} : vector<8x512xf32> to vector<8x128xf32>
    %696 = arith.negf %695 : vector<8x128xf32>
    %697 = math.exp %696 : vector<8x128xf32>
    %cst_132 = arith.constant 1.000000e+00 : f32
    %698 = vector.broadcast %cst_132 : f32 to vector<8x128xf32>
    %699 = arith.addf %698, %697 : vector<8x128xf32>
    %700 = arith.divf %698, %699 : vector<8x128xf32>
    %701 = arith.mulf %692, %643 : vector<8x128xf32>
    %702 = arith.mulf %686, %694 : vector<8x128xf32>
    %703 = arith.addf %701, %702 : vector<8x128xf32>
    %704 = math.tanh %703 : vector<8x128xf32>
    %705 = arith.mulf %700, %704 : vector<8x128xf32>
    %706 = arith.select %677, %705, %642 : vector<8x128xi1>, vector<8x128xf32>
    %707 = arith.select %677, %703, %643 : vector<8x128xi1>, vector<8x128xf32>
    %708 = vector.extract_strided_slice %544 {offsets = [40, 512], sizes = [8, 512], strides = [1, 1]} : vector<64x1024xf32> to vector<8x512xf32>
    %709 = vector.extract_strided_slice %2 {offsets = [40, 0], sizes = [8, 128], strides = [1, 1]} : vector<64x128xi1> to vector<8x128xi1>
    %710 = arith.truncf %674 : vector<8x128xf32> to vector<8x128xbf16>
    %cst_133 = arith.constant dense<0.000000e+00> : vector<8x512xf32>
    %711 = tpu.matmul %710, %546, %cst_133 {dimension_numbers = #tpu.dot_dimension_numbers<[1], [0], [0], [1], [0, 0, 1, 1], [], []>} : vector<8x128xbf16>, vector<128x512xbf16>, vector<8x512xf32> -> vector<8x512xf32>
    %712 = arith.addf %708, %711 : vector<8x512xf32>
    %713 = vector.extract_strided_slice %712 {offsets = [0, 0], sizes = [8, 128], strides = [1, 1]} : vector<8x512xf32> to vector<8x128xf32>
    %714 = arith.negf %713 : vector<8x128xf32>
    %715 = math.exp %714 : vector<8x128xf32>
    %cst_134 = arith.constant 1.000000e+00 : f32
    %716 = vector.broadcast %cst_134 : f32 to vector<8x128xf32>
    %717 = arith.addf %716, %715 : vector<8x128xf32>
    %718 = arith.divf %716, %717 : vector<8x128xf32>
    %719 = vector.extract_strided_slice %712 {offsets = [0, 128], sizes = [8, 128], strides = [1, 1]} : vector<8x512xf32> to vector<8x128xf32>
    %720 = arith.negf %719 : vector<8x128xf32>
    %721 = math.exp %720 : vector<8x128xf32>
    %cst_135 = arith.constant 1.000000e+00 : f32
    %722 = vector.broadcast %cst_135 : f32 to vector<8x128xf32>
    %723 = arith.addf %722, %721 : vector<8x128xf32>
    %724 = arith.divf %722, %723 : vector<8x128xf32>
    %725 = vector.extract_strided_slice %712 {offsets = [0, 256], sizes = [8, 128], strides = [1, 1]} : vector<8x512xf32> to vector<8x128xf32>
    %726 = math.tanh %725 : vector<8x128xf32>
    %727 = vector.extract_strided_slice %712 {offsets = [0, 384], sizes = [8, 128], strides = [1, 1]} : vector<8x512xf32> to vector<8x128xf32>
    %728 = arith.negf %727 : vector<8x128xf32>
    %729 = math.exp %728 : vector<8x128xf32>
    %cst_136 = arith.constant 1.000000e+00 : f32
    %730 = vector.broadcast %cst_136 : f32 to vector<8x128xf32>
    %731 = arith.addf %730, %729 : vector<8x128xf32>
    %732 = arith.divf %730, %731 : vector<8x128xf32>
    %733 = arith.mulf %724, %675 : vector<8x128xf32>
    %734 = arith.mulf %718, %726 : vector<8x128xf32>
    %735 = arith.addf %733, %734 : vector<8x128xf32>
    %736 = math.tanh %735 : vector<8x128xf32>
    %737 = arith.mulf %732, %736 : vector<8x128xf32>
    %738 = arith.select %709, %737, %674 : vector<8x128xi1>, vector<8x128xf32>
    %739 = arith.select %709, %735, %675 : vector<8x128xi1>, vector<8x128xf32>
    %740 = vector.extract_strided_slice %544 {offsets = [24, 0], sizes = [8, 512], strides = [1, 1]} : vector<64x1024xf32> to vector<8x512xf32>
    %741 = vector.extract_strided_slice %2 {offsets = [24, 0], sizes = [8, 128], strides = [1, 1]} : vector<64x128xi1> to vector<8x128xi1>
    %742 = arith.truncf %706 : vector<8x128xf32> to vector<8x128xbf16>
    %cst_137 = arith.constant dense<0.000000e+00> : vector<8x512xf32>
    %743 = tpu.matmul %742, %545, %cst_137 {dimension_numbers = #tpu.dot_dimension_numbers<[1], [0], [0], [1], [0, 0, 1, 1], [], []>} : vector<8x128xbf16>, vector<128x512xbf16>, vector<8x512xf32> -> vector<8x512xf32>
    %744 = arith.addf %740, %743 : vector<8x512xf32>
    %745 = vector.extract_strided_slice %744 {offsets = [0, 0], sizes = [8, 128], strides = [1, 1]} : vector<8x512xf32> to vector<8x128xf32>
    %746 = arith.negf %745 : vector<8x128xf32>
    %747 = math.exp %746 : vector<8x128xf32>
    %cst_138 = arith.constant 1.000000e+00 : f32
    %748 = vector.broadcast %cst_138 : f32 to vector<8x128xf32>
    %749 = arith.addf %748, %747 : vector<8x128xf32>
    %750 = arith.divf %748, %749 : vector<8x128xf32>
    %751 = vector.extract_strided_slice %744 {offsets = [0, 128], sizes = [8, 128], strides = [1, 1]} : vector<8x512xf32> to vector<8x128xf32>
    %752 = arith.negf %751 : vector<8x128xf32>
    %753 = math.exp %752 : vector<8x128xf32>
    %cst_139 = arith.constant 1.000000e+00 : f32
    %754 = vector.broadcast %cst_139 : f32 to vector<8x128xf32>
    %755 = arith.addf %754, %753 : vector<8x128xf32>
    %756 = arith.divf %754, %755 : vector<8x128xf32>
    %757 = vector.extract_strided_slice %744 {offsets = [0, 256], sizes = [8, 128], strides = [1, 1]} : vector<8x512xf32> to vector<8x128xf32>
    %758 = math.tanh %757 : vector<8x128xf32>
    %759 = vector.extract_strided_slice %744 {offsets = [0, 384], sizes = [8, 128], strides = [1, 1]} : vector<8x512xf32> to vector<8x128xf32>
    %760 = arith.negf %759 : vector<8x128xf32>
    %761 = math.exp %760 : vector<8x128xf32>
    %cst_140 = arith.constant 1.000000e+00 : f32
    %762 = vector.broadcast %cst_140 : f32 to vector<8x128xf32>
    %763 = arith.addf %762, %761 : vector<8x128xf32>
    %764 = arith.divf %762, %763 : vector<8x128xf32>
    %765 = arith.mulf %756, %707 : vector<8x128xf32>
    %766 = arith.mulf %750, %758 : vector<8x128xf32>
    %767 = arith.addf %765, %766 : vector<8x128xf32>
    %768 = math.tanh %767 : vector<8x128xf32>
    %769 = arith.mulf %764, %768 : vector<8x128xf32>
    %770 = arith.select %741, %769, %706 : vector<8x128xi1>, vector<8x128xf32>
    %771 = arith.select %741, %767, %707 : vector<8x128xi1>, vector<8x128xf32>
    %772 = vector.extract_strided_slice %544 {offsets = [32, 512], sizes = [8, 512], strides = [1, 1]} : vector<64x1024xf32> to vector<8x512xf32>
    %773 = vector.extract_strided_slice %2 {offsets = [32, 0], sizes = [8, 128], strides = [1, 1]} : vector<64x128xi1> to vector<8x128xi1>
    %774 = arith.truncf %738 : vector<8x128xf32> to vector<8x128xbf16>
    %cst_141 = arith.constant dense<0.000000e+00> : vector<8x512xf32>
    %775 = tpu.matmul %774, %546, %cst_141 {dimension_numbers = #tpu.dot_dimension_numbers<[1], [0], [0], [1], [0, 0, 1, 1], [], []>} : vector<8x128xbf16>, vector<128x512xbf16>, vector<8x512xf32> -> vector<8x512xf32>
    %776 = arith.addf %772, %775 : vector<8x512xf32>
    %777 = vector.extract_strided_slice %776 {offsets = [0, 0], sizes = [8, 128], strides = [1, 1]} : vector<8x512xf32> to vector<8x128xf32>
    %778 = arith.negf %777 : vector<8x128xf32>
    %779 = math.exp %778 : vector<8x128xf32>
    %cst_142 = arith.constant 1.000000e+00 : f32
    %780 = vector.broadcast %cst_142 : f32 to vector<8x128xf32>
    %781 = arith.addf %780, %779 : vector<8x128xf32>
    %782 = arith.divf %780, %781 : vector<8x128xf32>
    %783 = vector.extract_strided_slice %776 {offsets = [0, 128], sizes = [8, 128], strides = [1, 1]} : vector<8x512xf32> to vector<8x128xf32>
    %784 = arith.negf %783 : vector<8x128xf32>
    %785 = math.exp %784 : vector<8x128xf32>
    %cst_143 = arith.constant 1.000000e+00 : f32
    %786 = vector.broadcast %cst_143 : f32 to vector<8x128xf32>
    %787 = arith.addf %786, %785 : vector<8x128xf32>
    %788 = arith.divf %786, %787 : vector<8x128xf32>
    %789 = vector.extract_strided_slice %776 {offsets = [0, 256], sizes = [8, 128], strides = [1, 1]} : vector<8x512xf32> to vector<8x128xf32>
    %790 = math.tanh %789 : vector<8x128xf32>
    %791 = vector.extract_strided_slice %776 {offsets = [0, 384], sizes = [8, 128], strides = [1, 1]} : vector<8x512xf32> to vector<8x128xf32>
    %792 = arith.negf %791 : vector<8x128xf32>
    %793 = math.exp %792 : vector<8x128xf32>
    %cst_144 = arith.constant 1.000000e+00 : f32
    %794 = vector.broadcast %cst_144 : f32 to vector<8x128xf32>
    %795 = arith.addf %794, %793 : vector<8x128xf32>
    %796 = arith.divf %794, %795 : vector<8x128xf32>
    %797 = arith.mulf %788, %739 : vector<8x128xf32>
    %798 = arith.mulf %782, %790 : vector<8x128xf32>
    %799 = arith.addf %797, %798 : vector<8x128xf32>
    %800 = math.tanh %799 : vector<8x128xf32>
    %801 = arith.mulf %796, %800 : vector<8x128xf32>
    %802 = arith.select %773, %801, %738 : vector<8x128xi1>, vector<8x128xf32>
    %803 = arith.select %773, %799, %739 : vector<8x128xi1>, vector<8x128xf32>
    %804 = vector.extract_strided_slice %544 {offsets = [32, 0], sizes = [8, 512], strides = [1, 1]} : vector<64x1024xf32> to vector<8x512xf32>
    %805 = vector.extract_strided_slice %2 {offsets = [32, 0], sizes = [8, 128], strides = [1, 1]} : vector<64x128xi1> to vector<8x128xi1>
    %806 = arith.truncf %770 : vector<8x128xf32> to vector<8x128xbf16>
    %cst_145 = arith.constant dense<0.000000e+00> : vector<8x512xf32>
    %807 = tpu.matmul %806, %545, %cst_145 {dimension_numbers = #tpu.dot_dimension_numbers<[1], [0], [0], [1], [0, 0, 1, 1], [], []>} : vector<8x128xbf16>, vector<128x512xbf16>, vector<8x512xf32> -> vector<8x512xf32>
    %808 = arith.addf %804, %807 : vector<8x512xf32>
    %809 = vector.extract_strided_slice %808 {offsets = [0, 0], sizes = [8, 128], strides = [1, 1]} : vector<8x512xf32> to vector<8x128xf32>
    %810 = arith.negf %809 : vector<8x128xf32>
    %811 = math.exp %810 : vector<8x128xf32>
    %cst_146 = arith.constant 1.000000e+00 : f32
    %812 = vector.broadcast %cst_146 : f32 to vector<8x128xf32>
    %813 = arith.addf %812, %811 : vector<8x128xf32>
    %814 = arith.divf %812, %813 : vector<8x128xf32>
    %815 = vector.extract_strided_slice %808 {offsets = [0, 128], sizes = [8, 128], strides = [1, 1]} : vector<8x512xf32> to vector<8x128xf32>
    %816 = arith.negf %815 : vector<8x128xf32>
    %817 = math.exp %816 : vector<8x128xf32>
    %cst_147 = arith.constant 1.000000e+00 : f32
    %818 = vector.broadcast %cst_147 : f32 to vector<8x128xf32>
    %819 = arith.addf %818, %817 : vector<8x128xf32>
    %820 = arith.divf %818, %819 : vector<8x128xf32>
    %821 = vector.extract_strided_slice %808 {offsets = [0, 256], sizes = [8, 128], strides = [1, 1]} : vector<8x512xf32> to vector<8x128xf32>
    %822 = math.tanh %821 : vector<8x128xf32>
    %823 = vector.extract_strided_slice %808 {offsets = [0, 384], sizes = [8, 128], strides = [1, 1]} : vector<8x512xf32> to vector<8x128xf32>
    %824 = arith.negf %823 : vector<8x128xf32>
    %825 = math.exp %824 : vector<8x128xf32>
    %cst_148 = arith.constant 1.000000e+00 : f32
    %826 = vector.broadcast %cst_148 : f32 to vector<8x128xf32>
    %827 = arith.addf %826, %825 : vector<8x128xf32>
    %828 = arith.divf %826, %827 : vector<8x128xf32>
    %829 = arith.mulf %820, %771 : vector<8x128xf32>
    %830 = arith.mulf %814, %822 : vector<8x128xf32>
    %831 = arith.addf %829, %830 : vector<8x128xf32>
    %832 = math.tanh %831 : vector<8x128xf32>
    %833 = arith.mulf %828, %832 : vector<8x128xf32>
    %834 = arith.select %805, %833, %770 : vector<8x128xi1>, vector<8x128xf32>
    %835 = arith.select %805, %831, %771 : vector<8x128xi1>, vector<8x128xf32>
    %836 = vector.extract_strided_slice %544 {offsets = [24, 512], sizes = [8, 512], strides = [1, 1]} : vector<64x1024xf32> to vector<8x512xf32>
    %837 = vector.extract_strided_slice %2 {offsets = [24, 0], sizes = [8, 128], strides = [1, 1]} : vector<64x128xi1> to vector<8x128xi1>
    %838 = arith.truncf %802 : vector<8x128xf32> to vector<8x128xbf16>
    %cst_149 = arith.constant dense<0.000000e+00> : vector<8x512xf32>
    %839 = tpu.matmul %838, %546, %cst_149 {dimension_numbers = #tpu.dot_dimension_numbers<[1], [0], [0], [1], [0, 0, 1, 1], [], []>} : vector<8x128xbf16>, vector<128x512xbf16>, vector<8x512xf32> -> vector<8x512xf32>
    %840 = arith.addf %836, %839 : vector<8x512xf32>
    %841 = vector.extract_strided_slice %840 {offsets = [0, 0], sizes = [8, 128], strides = [1, 1]} : vector<8x512xf32> to vector<8x128xf32>
    %842 = arith.negf %841 : vector<8x128xf32>
    %843 = math.exp %842 : vector<8x128xf32>
    %cst_150 = arith.constant 1.000000e+00 : f32
    %844 = vector.broadcast %cst_150 : f32 to vector<8x128xf32>
    %845 = arith.addf %844, %843 : vector<8x128xf32>
    %846 = arith.divf %844, %845 : vector<8x128xf32>
    %847 = vector.extract_strided_slice %840 {offsets = [0, 128], sizes = [8, 128], strides = [1, 1]} : vector<8x512xf32> to vector<8x128xf32>
    %848 = arith.negf %847 : vector<8x128xf32>
    %849 = math.exp %848 : vector<8x128xf32>
    %cst_151 = arith.constant 1.000000e+00 : f32
    %850 = vector.broadcast %cst_151 : f32 to vector<8x128xf32>
    %851 = arith.addf %850, %849 : vector<8x128xf32>
    %852 = arith.divf %850, %851 : vector<8x128xf32>
    %853 = vector.extract_strided_slice %840 {offsets = [0, 256], sizes = [8, 128], strides = [1, 1]} : vector<8x512xf32> to vector<8x128xf32>
    %854 = math.tanh %853 : vector<8x128xf32>
    %855 = vector.extract_strided_slice %840 {offsets = [0, 384], sizes = [8, 128], strides = [1, 1]} : vector<8x512xf32> to vector<8x128xf32>
    %856 = arith.negf %855 : vector<8x128xf32>
    %857 = math.exp %856 : vector<8x128xf32>
    %cst_152 = arith.constant 1.000000e+00 : f32
    %858 = vector.broadcast %cst_152 : f32 to vector<8x128xf32>
    %859 = arith.addf %858, %857 : vector<8x128xf32>
    %860 = arith.divf %858, %859 : vector<8x128xf32>
    %861 = arith.mulf %852, %803 : vector<8x128xf32>
    %862 = arith.mulf %846, %854 : vector<8x128xf32>
    %863 = arith.addf %861, %862 : vector<8x128xf32>
    %864 = math.tanh %863 : vector<8x128xf32>
    %865 = arith.mulf %860, %864 : vector<8x128xf32>
    %866 = arith.select %837, %865, %802 : vector<8x128xi1>, vector<8x128xf32>
    %867 = arith.select %837, %863, %803 : vector<8x128xi1>, vector<8x128xf32>
    %868 = vector.extract_strided_slice %544 {offsets = [40, 0], sizes = [8, 512], strides = [1, 1]} : vector<64x1024xf32> to vector<8x512xf32>
    %869 = vector.extract_strided_slice %2 {offsets = [40, 0], sizes = [8, 128], strides = [1, 1]} : vector<64x128xi1> to vector<8x128xi1>
    %870 = arith.truncf %834 : vector<8x128xf32> to vector<8x128xbf16>
    %cst_153 = arith.constant dense<0.000000e+00> : vector<8x512xf32>
    %871 = tpu.matmul %870, %545, %cst_153 {dimension_numbers = #tpu.dot_dimension_numbers<[1], [0], [0], [1], [0, 0, 1, 1], [], []>} : vector<8x128xbf16>, vector<128x512xbf16>, vector<8x512xf32> -> vector<8x512xf32>
    %872 = arith.addf %868, %871 : vector<8x512xf32>
    %873 = vector.extract_strided_slice %872 {offsets = [0, 0], sizes = [8, 128], strides = [1, 1]} : vector<8x512xf32> to vector<8x128xf32>
    %874 = arith.negf %873 : vector<8x128xf32>
    %875 = math.exp %874 : vector<8x128xf32>
    %cst_154 = arith.constant 1.000000e+00 : f32
    %876 = vector.broadcast %cst_154 : f32 to vector<8x128xf32>
    %877 = arith.addf %876, %875 : vector<8x128xf32>
    %878 = arith.divf %876, %877 : vector<8x128xf32>
    %879 = vector.extract_strided_slice %872 {offsets = [0, 128], sizes = [8, 128], strides = [1, 1]} : vector<8x512xf32> to vector<8x128xf32>
    %880 = arith.negf %879 : vector<8x128xf32>
    %881 = math.exp %880 : vector<8x128xf32>
    %cst_155 = arith.constant 1.000000e+00 : f32
    %882 = vector.broadcast %cst_155 : f32 to vector<8x128xf32>
    %883 = arith.addf %882, %881 : vector<8x128xf32>
    %884 = arith.divf %882, %883 : vector<8x128xf32>
    %885 = vector.extract_strided_slice %872 {offsets = [0, 256], sizes = [8, 128], strides = [1, 1]} : vector<8x512xf32> to vector<8x128xf32>
    %886 = math.tanh %885 : vector<8x128xf32>
    %887 = vector.extract_strided_slice %872 {offsets = [0, 384], sizes = [8, 128], strides = [1, 1]} : vector<8x512xf32> to vector<8x128xf32>
    %888 = arith.negf %887 : vector<8x128xf32>
    %889 = math.exp %888 : vector<8x128xf32>
    %cst_156 = arith.constant 1.000000e+00 : f32
    %890 = vector.broadcast %cst_156 : f32 to vector<8x128xf32>
    %891 = arith.addf %890, %889 : vector<8x128xf32>
    %892 = arith.divf %890, %891 : vector<8x128xf32>
    %893 = arith.mulf %884, %835 : vector<8x128xf32>
    %894 = arith.mulf %878, %886 : vector<8x128xf32>
    %895 = arith.addf %893, %894 : vector<8x128xf32>
    %896 = math.tanh %895 : vector<8x128xf32>
    %897 = arith.mulf %892, %896 : vector<8x128xf32>
    %898 = arith.select %869, %897, %834 : vector<8x128xi1>, vector<8x128xf32>
    %899 = arith.select %869, %895, %835 : vector<8x128xi1>, vector<8x128xf32>
    %900 = vector.extract_strided_slice %544 {offsets = [16, 512], sizes = [8, 512], strides = [1, 1]} : vector<64x1024xf32> to vector<8x512xf32>
    %901 = vector.extract_strided_slice %2 {offsets = [16, 0], sizes = [8, 128], strides = [1, 1]} : vector<64x128xi1> to vector<8x128xi1>
    %902 = arith.truncf %866 : vector<8x128xf32> to vector<8x128xbf16>
    %cst_157 = arith.constant dense<0.000000e+00> : vector<8x512xf32>
    %903 = tpu.matmul %902, %546, %cst_157 {dimension_numbers = #tpu.dot_dimension_numbers<[1], [0], [0], [1], [0, 0, 1, 1], [], []>} : vector<8x128xbf16>, vector<128x512xbf16>, vector<8x512xf32> -> vector<8x512xf32>
    %904 = arith.addf %900, %903 : vector<8x512xf32>
    %905 = vector.extract_strided_slice %904 {offsets = [0, 0], sizes = [8, 128], strides = [1, 1]} : vector<8x512xf32> to vector<8x128xf32>
    %906 = arith.negf %905 : vector<8x128xf32>
    %907 = math.exp %906 : vector<8x128xf32>
    %cst_158 = arith.constant 1.000000e+00 : f32
    %908 = vector.broadcast %cst_158 : f32 to vector<8x128xf32>
    %909 = arith.addf %908, %907 : vector<8x128xf32>
    %910 = arith.divf %908, %909 : vector<8x128xf32>
    %911 = vector.extract_strided_slice %904 {offsets = [0, 128], sizes = [8, 128], strides = [1, 1]} : vector<8x512xf32> to vector<8x128xf32>
    %912 = arith.negf %911 : vector<8x128xf32>
    %913 = math.exp %912 : vector<8x128xf32>
    %cst_159 = arith.constant 1.000000e+00 : f32
    %914 = vector.broadcast %cst_159 : f32 to vector<8x128xf32>
    %915 = arith.addf %914, %913 : vector<8x128xf32>
    %916 = arith.divf %914, %915 : vector<8x128xf32>
    %917 = vector.extract_strided_slice %904 {offsets = [0, 256], sizes = [8, 128], strides = [1, 1]} : vector<8x512xf32> to vector<8x128xf32>
    %918 = math.tanh %917 : vector<8x128xf32>
    %919 = vector.extract_strided_slice %904 {offsets = [0, 384], sizes = [8, 128], strides = [1, 1]} : vector<8x512xf32> to vector<8x128xf32>
    %920 = arith.negf %919 : vector<8x128xf32>
    %921 = math.exp %920 : vector<8x128xf32>
    %cst_160 = arith.constant 1.000000e+00 : f32
    %922 = vector.broadcast %cst_160 : f32 to vector<8x128xf32>
    %923 = arith.addf %922, %921 : vector<8x128xf32>
    %924 = arith.divf %922, %923 : vector<8x128xf32>
    %925 = arith.mulf %916, %867 : vector<8x128xf32>
    %926 = arith.mulf %910, %918 : vector<8x128xf32>
    %927 = arith.addf %925, %926 : vector<8x128xf32>
    %928 = math.tanh %927 : vector<8x128xf32>
    %929 = arith.mulf %924, %928 : vector<8x128xf32>
    %930 = arith.select %901, %929, %866 : vector<8x128xi1>, vector<8x128xf32>
    %931 = arith.select %901, %927, %867 : vector<8x128xi1>, vector<8x128xf32>
    %932 = vector.extract_strided_slice %544 {offsets = [48, 0], sizes = [8, 512], strides = [1, 1]} : vector<64x1024xf32> to vector<8x512xf32>
    %933 = vector.extract_strided_slice %2 {offsets = [48, 0], sizes = [8, 128], strides = [1, 1]} : vector<64x128xi1> to vector<8x128xi1>
    %934 = arith.truncf %898 : vector<8x128xf32> to vector<8x128xbf16>
    %cst_161 = arith.constant dense<0.000000e+00> : vector<8x512xf32>
    %935 = tpu.matmul %934, %545, %cst_161 {dimension_numbers = #tpu.dot_dimension_numbers<[1], [0], [0], [1], [0, 0, 1, 1], [], []>} : vector<8x128xbf16>, vector<128x512xbf16>, vector<8x512xf32> -> vector<8x512xf32>
    %936 = arith.addf %932, %935 : vector<8x512xf32>
    %937 = vector.extract_strided_slice %936 {offsets = [0, 0], sizes = [8, 128], strides = [1, 1]} : vector<8x512xf32> to vector<8x128xf32>
    %938 = arith.negf %937 : vector<8x128xf32>
    %939 = math.exp %938 : vector<8x128xf32>
    %cst_162 = arith.constant 1.000000e+00 : f32
    %940 = vector.broadcast %cst_162 : f32 to vector<8x128xf32>
    %941 = arith.addf %940, %939 : vector<8x128xf32>
    %942 = arith.divf %940, %941 : vector<8x128xf32>
    %943 = vector.extract_strided_slice %936 {offsets = [0, 128], sizes = [8, 128], strides = [1, 1]} : vector<8x512xf32> to vector<8x128xf32>
    %944 = arith.negf %943 : vector<8x128xf32>
    %945 = math.exp %944 : vector<8x128xf32>
    %cst_163 = arith.constant 1.000000e+00 : f32
    %946 = vector.broadcast %cst_163 : f32 to vector<8x128xf32>
    %947 = arith.addf %946, %945 : vector<8x128xf32>
    %948 = arith.divf %946, %947 : vector<8x128xf32>
    %949 = vector.extract_strided_slice %936 {offsets = [0, 256], sizes = [8, 128], strides = [1, 1]} : vector<8x512xf32> to vector<8x128xf32>
    %950 = math.tanh %949 : vector<8x128xf32>
    %951 = vector.extract_strided_slice %936 {offsets = [0, 384], sizes = [8, 128], strides = [1, 1]} : vector<8x512xf32> to vector<8x128xf32>
    %952 = arith.negf %951 : vector<8x128xf32>
    %953 = math.exp %952 : vector<8x128xf32>
    %cst_164 = arith.constant 1.000000e+00 : f32
    %954 = vector.broadcast %cst_164 : f32 to vector<8x128xf32>
    %955 = arith.addf %954, %953 : vector<8x128xf32>
    %956 = arith.divf %954, %955 : vector<8x128xf32>
    %957 = arith.mulf %948, %899 : vector<8x128xf32>
    %958 = arith.mulf %942, %950 : vector<8x128xf32>
    %959 = arith.addf %957, %958 : vector<8x128xf32>
    %960 = math.tanh %959 : vector<8x128xf32>
    %961 = arith.mulf %956, %960 : vector<8x128xf32>
    %962 = arith.select %933, %961, %898 : vector<8x128xi1>, vector<8x128xf32>
    %963 = arith.select %933, %959, %899 : vector<8x128xi1>, vector<8x128xf32>
    %964 = vector.extract_strided_slice %544 {offsets = [8, 512], sizes = [8, 512], strides = [1, 1]} : vector<64x1024xf32> to vector<8x512xf32>
    %965 = vector.extract_strided_slice %2 {offsets = [8, 0], sizes = [8, 128], strides = [1, 1]} : vector<64x128xi1> to vector<8x128xi1>
    %966 = arith.truncf %930 : vector<8x128xf32> to vector<8x128xbf16>
    %cst_165 = arith.constant dense<0.000000e+00> : vector<8x512xf32>
    %967 = tpu.matmul %966, %546, %cst_165 {dimension_numbers = #tpu.dot_dimension_numbers<[1], [0], [0], [1], [0, 0, 1, 1], [], []>} : vector<8x128xbf16>, vector<128x512xbf16>, vector<8x512xf32> -> vector<8x512xf32>
    %968 = arith.addf %964, %967 : vector<8x512xf32>
    %969 = vector.extract_strided_slice %968 {offsets = [0, 0], sizes = [8, 128], strides = [1, 1]} : vector<8x512xf32> to vector<8x128xf32>
    %970 = arith.negf %969 : vector<8x128xf32>
    %971 = math.exp %970 : vector<8x128xf32>
    %cst_166 = arith.constant 1.000000e+00 : f32
    %972 = vector.broadcast %cst_166 : f32 to vector<8x128xf32>
    %973 = arith.addf %972, %971 : vector<8x128xf32>
    %974 = arith.divf %972, %973 : vector<8x128xf32>
    %975 = vector.extract_strided_slice %968 {offsets = [0, 128], sizes = [8, 128], strides = [1, 1]} : vector<8x512xf32> to vector<8x128xf32>
    %976 = arith.negf %975 : vector<8x128xf32>
    %977 = math.exp %976 : vector<8x128xf32>
    %cst_167 = arith.constant 1.000000e+00 : f32
    %978 = vector.broadcast %cst_167 : f32 to vector<8x128xf32>
    %979 = arith.addf %978, %977 : vector<8x128xf32>
    %980 = arith.divf %978, %979 : vector<8x128xf32>
    %981 = vector.extract_strided_slice %968 {offsets = [0, 256], sizes = [8, 128], strides = [1, 1]} : vector<8x512xf32> to vector<8x128xf32>
    %982 = math.tanh %981 : vector<8x128xf32>
    %983 = vector.extract_strided_slice %968 {offsets = [0, 384], sizes = [8, 128], strides = [1, 1]} : vector<8x512xf32> to vector<8x128xf32>
    %984 = arith.negf %983 : vector<8x128xf32>
    %985 = math.exp %984 : vector<8x128xf32>
    %cst_168 = arith.constant 1.000000e+00 : f32
    %986 = vector.broadcast %cst_168 : f32 to vector<8x128xf32>
    %987 = arith.addf %986, %985 : vector<8x128xf32>
    %988 = arith.divf %986, %987 : vector<8x128xf32>
    %989 = arith.mulf %980, %931 : vector<8x128xf32>
    %990 = arith.mulf %974, %982 : vector<8x128xf32>
    %991 = arith.addf %989, %990 : vector<8x128xf32>
    %992 = math.tanh %991 : vector<8x128xf32>
    %993 = arith.mulf %988, %992 : vector<8x128xf32>
    %994 = arith.select %965, %993, %930 : vector<8x128xi1>, vector<8x128xf32>
    %995 = arith.select %965, %991, %931 : vector<8x128xi1>, vector<8x128xf32>
    %996 = vector.extract_strided_slice %544 {offsets = [56, 0], sizes = [8, 512], strides = [1, 1]} : vector<64x1024xf32> to vector<8x512xf32>
    %997 = vector.extract_strided_slice %2 {offsets = [56, 0], sizes = [8, 128], strides = [1, 1]} : vector<64x128xi1> to vector<8x128xi1>
    %998 = arith.truncf %962 : vector<8x128xf32> to vector<8x128xbf16>
    %cst_169 = arith.constant dense<0.000000e+00> : vector<8x512xf32>
    %999 = tpu.matmul %998, %545, %cst_169 {dimension_numbers = #tpu.dot_dimension_numbers<[1], [0], [0], [1], [0, 0, 1, 1], [], []>} : vector<8x128xbf16>, vector<128x512xbf16>, vector<8x512xf32> -> vector<8x512xf32>
    %1000 = arith.addf %996, %999 : vector<8x512xf32>
    %1001 = vector.extract_strided_slice %1000 {offsets = [0, 0], sizes = [8, 128], strides = [1, 1]} : vector<8x512xf32> to vector<8x128xf32>
    %1002 = arith.negf %1001 : vector<8x128xf32>
    %1003 = math.exp %1002 : vector<8x128xf32>
    %cst_170 = arith.constant 1.000000e+00 : f32
    %1004 = vector.broadcast %cst_170 : f32 to vector<8x128xf32>
    %1005 = arith.addf %1004, %1003 : vector<8x128xf32>
    %1006 = arith.divf %1004, %1005 : vector<8x128xf32>
    %1007 = vector.extract_strided_slice %1000 {offsets = [0, 128], sizes = [8, 128], strides = [1, 1]} : vector<8x512xf32> to vector<8x128xf32>
    %1008 = arith.negf %1007 : vector<8x128xf32>
    %1009 = math.exp %1008 : vector<8x128xf32>
    %cst_171 = arith.constant 1.000000e+00 : f32
    %1010 = vector.broadcast %cst_171 : f32 to vector<8x128xf32>
    %1011 = arith.addf %1010, %1009 : vector<8x128xf32>
    %1012 = arith.divf %1010, %1011 : vector<8x128xf32>
    %1013 = vector.extract_strided_slice %1000 {offsets = [0, 256], sizes = [8, 128], strides = [1, 1]} : vector<8x512xf32> to vector<8x128xf32>
    %1014 = math.tanh %1013 : vector<8x128xf32>
    %1015 = vector.extract_strided_slice %1000 {offsets = [0, 384], sizes = [8, 128], strides = [1, 1]} : vector<8x512xf32> to vector<8x128xf32>
    %1016 = arith.negf %1015 : vector<8x128xf32>
    %1017 = math.exp %1016 : vector<8x128xf32>
    %cst_172 = arith.constant 1.000000e+00 : f32
    %1018 = vector.broadcast %cst_172 : f32 to vector<8x128xf32>
    %1019 = arith.addf %1018, %1017 : vector<8x128xf32>
    %1020 = arith.divf %1018, %1019 : vector<8x128xf32>
    %1021 = arith.mulf %1012, %963 : vector<8x128xf32>
    %1022 = arith.mulf %1006, %1014 : vector<8x128xf32>
    %1023 = arith.addf %1021, %1022 : vector<8x128xf32>
    %1024 = math.tanh %1023 : vector<8x128xf32>
    %1025 = arith.mulf %1020, %1024 : vector<8x128xf32>
    %1026 = arith.select %997, %1025, %962 : vector<8x128xi1>, vector<8x128xf32>
    %1027 = vector.extract_strided_slice %544 {offsets = [0, 512], sizes = [8, 512], strides = [1, 1]} : vector<64x1024xf32> to vector<8x512xf32>
    %1028 = vector.extract_strided_slice %2 {offsets = [0, 0], sizes = [8, 128], strides = [1, 1]} : vector<64x128xi1> to vector<8x128xi1>
    %1029 = arith.truncf %994 : vector<8x128xf32> to vector<8x128xbf16>
    %cst_173 = arith.constant dense<0.000000e+00> : vector<8x512xf32>
    %1030 = tpu.matmul %1029, %546, %cst_173 {dimension_numbers = #tpu.dot_dimension_numbers<[1], [0], [0], [1], [0, 0, 1, 1], [], []>} : vector<8x128xbf16>, vector<128x512xbf16>, vector<8x512xf32> -> vector<8x512xf32>
    %1031 = arith.addf %1027, %1030 : vector<8x512xf32>
    %1032 = vector.extract_strided_slice %1031 {offsets = [0, 0], sizes = [8, 128], strides = [1, 1]} : vector<8x512xf32> to vector<8x128xf32>
    %1033 = arith.negf %1032 : vector<8x128xf32>
    %1034 = math.exp %1033 : vector<8x128xf32>
    %cst_174 = arith.constant 1.000000e+00 : f32
    %1035 = vector.broadcast %cst_174 : f32 to vector<8x128xf32>
    %1036 = arith.addf %1035, %1034 : vector<8x128xf32>
    %1037 = arith.divf %1035, %1036 : vector<8x128xf32>
    %1038 = vector.extract_strided_slice %1031 {offsets = [0, 128], sizes = [8, 128], strides = [1, 1]} : vector<8x512xf32> to vector<8x128xf32>
    %1039 = arith.negf %1038 : vector<8x128xf32>
    %1040 = math.exp %1039 : vector<8x128xf32>
    %cst_175 = arith.constant 1.000000e+00 : f32
    %1041 = vector.broadcast %cst_175 : f32 to vector<8x128xf32>
    %1042 = arith.addf %1041, %1040 : vector<8x128xf32>
    %1043 = arith.divf %1041, %1042 : vector<8x128xf32>
    %1044 = vector.extract_strided_slice %1031 {offsets = [0, 256], sizes = [8, 128], strides = [1, 1]} : vector<8x512xf32> to vector<8x128xf32>
    %1045 = math.tanh %1044 : vector<8x128xf32>
    %1046 = vector.extract_strided_slice %1031 {offsets = [0, 384], sizes = [8, 128], strides = [1, 1]} : vector<8x512xf32> to vector<8x128xf32>
    %1047 = arith.negf %1046 : vector<8x128xf32>
    %1048 = math.exp %1047 : vector<8x128xf32>
    %cst_176 = arith.constant 1.000000e+00 : f32
    %1049 = vector.broadcast %cst_176 : f32 to vector<8x128xf32>
    %1050 = arith.addf %1049, %1048 : vector<8x128xf32>
    %1051 = arith.divf %1049, %1050 : vector<8x128xf32>
    %1052 = arith.mulf %1043, %995 : vector<8x128xf32>
    %1053 = arith.mulf %1037, %1045 : vector<8x128xf32>
    %1054 = arith.addf %1052, %1053 : vector<8x128xf32>
    %1055 = math.tanh %1054 : vector<8x128xf32>
    %1056 = arith.mulf %1051, %1055 : vector<8x128xf32>
    %1057 = arith.select %1028, %1056, %994 : vector<8x128xi1>, vector<8x128xf32>
    %1058 = tpu.concatenate %1026, %1057 in 1 : vector<8x128xf32>, vector<8x128xf32> -> vector<8x256xf32>
    %1059 = arith.truncf %1058 : vector<8x256xf32> to vector<8x256xbf16>
    %c0_177 = arith.constant 0 : index
    %c0_178 = arith.constant 0 : index
    %1060 = vector.load %arg10[%c0_177, %c0_178] : memref<256x128xbf16, #tpu.memory_space<vmem>>, vector<256x128xbf16>
    %cst_179 = arith.constant dense<0.000000e+00> : vector<8x128xf32>
    %1061 = tpu.matmul %1059, %1060, %cst_179 {dimension_numbers = #tpu.dot_dimension_numbers<[1], [0], [0], [1], [0, 0, 1, 1], [], []>} : vector<8x256xbf16>, vector<256x128xbf16>, vector<8x128xf32> -> vector<8x128xf32>
    %c0_180 = arith.constant 0 : index
    %c0_181 = arith.constant 0 : index
    %1062 = vector.load %arg11[%c0_180, %c0_181] : memref<1x128xf32, #tpu.memory_space<vmem>>, vector<1x128xf32>
    %1063 = vector.broadcast %1062 : vector<1x128xf32> to vector<8x128xf32>
    %1064 = arith.addf %1061, %1063 : vector<8x128xf32>
    %c0_182 = arith.constant 0 : index
    %c0_183 = arith.constant 0 : index
    %1065 = vector.load %arg12[%c0_182, %c0_183] : memref<8x128xf32, #tpu.memory_space<vmem>>, vector<8x128xf32>
    tpu.vector_store %arg12[%c0_182, %c0_183], %1064 {strides = array<i32>} : memref<8x128xf32, #tpu.memory_space<vmem>>, vector<8x128xf32>,
    return
  }
}

</mosaic_0001>

<llo_original>
// kernel: bilstm_forward.1
$region0: #{bilstm_forward.1}
  #allocation0 [shape = 'u32[]', space=smem, size = 0x4, offset = 0x4, fixed_abs, tag = 'smem constant byte address 0x4 - core index']
  #allocation1 [shape = 'u32[72,128]{1,0:T(1,128)}', space=vmem, size = 0x9000, scoped, tag = 'internal scratch']
  #allocation2 [shape = 'f32[64,256]{1,0:T(8,128)}', space=vmem, size = 0x10000, scoped, tag = 'scratch operand']
  %s0 = inlined_call_operand.vmem [shape: bf16[64,128], index: 0, kind: input, shape index: {}]
  %s1 = inlined_call_operand.vmem [shape: f32[64,128], index: 1, kind: input, shape index: {}]
  %s2 = inlined_call_operand.vmem [shape: bf16[128,1024], index: 2, kind: input, shape index: {}]
  %s3 = inlined_call_operand.vmem [shape: f32[1,1024], index: 3, kind: input, shape index: {}]
  %s4 = inlined_call_operand.vmem [shape: bf16[128,512], index: 4, kind: input, shape index: {}]
  %s5 = inlined_call_operand.vmem [shape: bf16[128,512], index: 5, kind: input, shape index: {}]
  %s6 = inlined_call_operand.vmem [shape: bf16[256,1024], index: 6, kind: input, shape index: {}]
  %s7 = inlined_call_operand.vmem [shape: f32[1,1024], index: 7, kind: input, shape index: {}]
  %s8 = inlined_call_operand.vmem [shape: bf16[128,512], index: 8, kind: input, shape index: {}]
  %s9 = inlined_call_operand.vmem [shape: bf16[128,512], index: 9, kind: input, shape index: {}]
  %s10 = inlined_call_operand.vmem [shape: bf16[256,128], index: 10, kind: input, shape index: {}]
  %s11 = inlined_call_operand.vmem [shape: f32[1,128], index: 11, kind: input, shape index: {}]
  %s12 = inlined_call_operand.vmem [shape: f32[8,128], index: 12, kind: output, shape index: {}]
  %s13 = sld [smem:[#allocation0]]
  $region58: #{bilstm_forward.1} parent=0
    _
  %s15 = ssub.s32 1, %s13
  %s16 = scalar_select 0, %s15, %s13
  // Predicated region
  $region2: #{bilstm_forward.1} parent=0 // pred_check
    _
  $region3: #{bilstm_forward.1} parent=0 // pred_check_branch
    %18 = sbr.rel (0) target = $region5
  $region4: #{bilstm_forward.1} parent=0 // pred_region
    _
  $region5: #{bilstm_forward.1} parent=0 // pred_fallthru
    _
  // Predicated region
  $region6: #{bilstm_forward.1} parent=0 // pred_check
    _
  $region7: #{bilstm_forward.1} parent=0 // pred_check_branch
    %20 = sbr.rel (0) target = $region9
  $region8: #{bilstm_forward.1} parent=0 // pred_region
    _
  $region9: #{bilstm_forward.1} parent=0 // pred_fallthru
    _
  // Predicated region
  $region10: #{bilstm_forward.1} parent=0 // pred_check
    _
  $region11: #{bilstm_forward.1} parent=0 // pred_check_branch
    %22 = sbr.rel (0) target = $region13
  $region12: #{bilstm_forward.1} parent=0 // pred_region
    _
  $region13: #{bilstm_forward.1} parent=0 // pred_fallthru
    _
  // Predicated region
  $region14: #{bilstm_forward.1} parent=0 // pred_check
    _
  $region15: #{bilstm_forward.1} parent=0 // pred_check_branch
    %24 = sbr.rel (0) target = $region17
  $region16: #{bilstm_forward.1} parent=0 // pred_region
    _
  $region17: #{bilstm_forward.1} parent=0 // pred_fallthru
    _
  // Predicated region
  $region18: #{bilstm_forward.1} parent=0 // pred_check
    _
  $region19: #{bilstm_forward.1} parent=0 // pred_check_branch
    %26 = sbr.rel (0) target = $region21
  $region20: #{bilstm_forward.1} parent=0 // pred_region
    _
  $region21: #{bilstm_forward.1} parent=0 // pred_fallthru
    _
  // Predicated region
  $region22: #{bilstm_forward.1} parent=0 // pred_check
    _
  $region23: #{bilstm_forward.1} parent=0 // pred_check_branch
    %28 = sbr.rel (0) target = $region25
  $region24: #{bilstm_forward.1} parent=0 // pred_region
    _
  $region25: #{bilstm_forward.1} parent=0 // pred_fallthru
    _
  // Predicated region
  $region26: #{bilstm_forward.1} parent=0 // pred_check
    _
  $region27: #{bilstm_forward.1} parent=0 // pred_check_branch
    %30 = sbr.rel (0) target = $region29
  $region28: #{bilstm_forward.1} parent=0 // pred_region
    _
  $region29: #{bilstm_forward.1} parent=0 // pred_fallthru
    _
  // Predicated region
  $region30: #{bilstm_forward.1} parent=0 // pred_check
    _
  $region31: #{bilstm_forward.1} parent=0 // pred_check_branch
    %32 = sbr.rel (0) target = $region33
  $region32: #{bilstm_forward.1} parent=0 // pred_region
    _
  $region33: #{bilstm_forward.1} parent=0 // pred_fallthru
    _
  // Predicated region
  $region34: #{bilstm_forward.1} parent=0 // pred_check
    _
  $region35: #{bilstm_forward.1} parent=0 // pred_check_branch
    %34 = sbr.rel (0) target = $region37
  $region36: #{bilstm_forward.1} parent=0 // pred_region
    _
  $region37: #{bilstm_forward.1} parent=0 // pred_fallthru
    _
  // Predicated region
  $region38: #{bilstm_forward.1} parent=0 // pred_check
    _
  $region39: #{bilstm_forward.1} parent=0 // pred_check_branch
    %36 = sbr.rel (0) target = $region41
  $region40: #{bilstm_forward.1} parent=0 // pred_region
    _
  $region41: #{bilstm_forward.1} parent=0 // pred_fallthru
    _
  // Predicated region
  $region42: #{bilstm_forward.1} parent=0 // pred_check
    _
  $region43: #{bilstm_forward.1} parent=0 // pred_check_branch
    %38 = sbr.rel (0) target = $region45
  $region44: #{bilstm_forward.1} parent=0 // pred_region
    _
  $region45: #{bilstm_forward.1} parent=0 // pred_fallthru
    _
  // Predicated region
  $region46: #{bilstm_forward.1} parent=0 // pred_check
    _
  $region47: #{bilstm_forward.1} parent=0 // pred_check_branch
    %40 = sbr.rel (0) target = $region49
  $region48: #{bilstm_forward.1} parent=0 // pred_region
    _
  $region49: #{bilstm_forward.1} parent=0 // pred_fallthru
    _
  %v42 = vld [vmem:[%s1] sm:$0xff]
  %v43 = vld [vmem:[%s1 + $0x8] sm:$0xff]
  %v44 = vld [vmem:[%s1 + $0x10] sm:$0xff]
  %v45 = vld [vmem:[%s1 + $0x18] sm:$0xff]
  %v46 = vld [vmem:[%s1 + $0x20] sm:$0xff]
  %v47 = vld [vmem:[%s1 + $0x28] sm:$0xff]
  %v48 = vld [vmem:[%s1 + $0x30] sm:$0xff]
  %v49 = vld [vmem:[%s1 + $0x38] sm:$0xff]
  %vm50 = vcmp.gt.f32.partialorder %v42, 0.0
  %vm51 = vcmp.gt.f32.partialorder %v43, 0.0
  %vm52 = vcmp.gt.f32.partialorder %v44, 0.0
  %vm53 = vcmp.gt.f32.partialorder %v45, 0.0
  %vm54 = vcmp.gt.f32.partialorder %v46, 0.0
  %vm55 = vcmp.gt.f32.partialorder %v47, 0.0
  %vm56 = vcmp.gt.f32.partialorder %v48, 0.0
  %vm57 = vcmp.gt.f32.partialorder %v49, 0.0
  %v58 = vld [vmem:[%s0] sm:$0xf]
  %v59 = vld [vmem:[%s0 + $0x4] sm:$0xf]
  %v60 = vld [vmem:[%s0 + $0x8] sm:$0xf]
  %v61 = vld [vmem:[%s0 + $0xc] sm:$0xf]
  %v62 = vld [vmem:[%s0 + $0x10] sm:$0xf]
  %v63 = vld [vmem:[%s0 + $0x14] sm:$0xf]
  %v64 = vld [vmem:[%s0 + $0x18] sm:$0xf]
  %v65 = vld [vmem:[%s0 + $0x1c] sm:$0xf]
  %v66 = vld [vmem:[%s2] sm:$0xff]
  %v67 = vld [vmem:[%s2 + $0x8] sm:$0xff]
  %v68 = vld [vmem:[%s2 + $0x10] sm:$0xff]
  %v69 = vld [vmem:[%s2 + $0x18] sm:$0xff]
  %v70 = vld [vmem:[%s2 + $0x20] sm:$0xff]
  %v71 = vld [vmem:[%s2 + $0x28] sm:$0xff]
  %v72 = vld [vmem:[%s2 + $0x30] sm:$0xff]
  %v73 = vld [vmem:[%s2 + $0x38] sm:$0xff]
  %v74 = vld [vmem:[%s2 + $0x40] sm:$0xff]
  %v75 = vld [vmem:[%s2 + $0x48] sm:$0xff]
  %v76 = vld [vmem:[%s2 + $0x50] sm:$0xff]
  %v77 = vld [vmem:[%s2 + $0x58] sm:$0xff]
  %v78 = vld [vmem:[%s2 + $0x60] sm:$0xff]
  %v79 = vld [vmem:[%s2 + $0x68] sm:$0xff]
  %v80 = vld [vmem:[%s2 + $0x70] sm:$0xff]
  %v81 = vld [vmem:[%s2 + $0x78] sm:$0xff]
  %v82 = vld [vmem:[%s2 + $0x80] sm:$0xff]
  %v83 = vld [vmem:[%s2 + $0x88] sm:$0xff]
  %v84 = vld [vmem:[%s2 + $0x90] sm:$0xff]
  %v85 = vld [vmem:[%s2 + $0x98] sm:$0xff]
  %v86 = vld [vmem:[%s2 + $0xa0] sm:$0xff]
  %v87 = vld [vmem:[%s2 + $0xa8] sm:$0xff]
  %v88 = vld [vmem:[%s2 + $0xb0] sm:$0xff]
  %v89 = vld [vmem:[%s2 + $0xb8] sm:$0xff]
  %v90 = vld [vmem:[%s2 + $0xc0] sm:$0xff]
  %v91 = vld [vmem:[%s2 + $0xc8] sm:$0xff]
  %v92 = vld [vmem:[%s2 + $0xd0] sm:$0xff]
  %v93 = vld [vmem:[%s2 + $0xd8] sm:$0xff]
  %v94 = vld [vmem:[%s2 + $0xe0] sm:$0xff]
  %v95 = vld [vmem:[%s2 + $0xe8] sm:$0xff]
  %v96 = vld [vmem:[%s2 + $0xf0] sm:$0xff]
  %v97 = vld [vmem:[%s2 + $0xf8] sm:$0xff]
  %v98 = vld [vmem:[%s2 + $0x100] sm:$0xff]
  %v99 = vld [vmem:[%s2 + $0x108] sm:$0xff]
  %v100 = vld [vmem:[%s2 + $0x110] sm:$0xff]
  %v101 = vld [vmem:[%s2 + $0x118] sm:$0xff]
  %v102 = vld [vmem:[%s2 + $0x120] sm:$0xff]
  %v103 = vld [vmem:[%s2 + $0x128] sm:$0xff]
  %v104 = vld [vmem:[%s2 + $0x130] sm:$0xff]
  %v105 = vld [vmem:[%s2 + $0x138] sm:$0xff]
  %v106 = vld [vmem:[%s2 + $0x140] sm:$0xff]
  %v107 = vld [vmem:[%s2 + $0x148] sm:$0xff]
  %v108 = vld [vmem:[%s2 + $0x150] sm:$0xff]
  %v109 = vld [vmem:[%s2 + $0x158] sm:$0xff]
  %v110 = vld [vmem:[%s2 + $0x160] sm:$0xff]
  %v111 = vld [vmem:[%s2 + $0x168] sm:$0xff]
  %v112 = vld [vmem:[%s2 + $0x170] sm:$0xff]
  %v113 = vld [vmem:[%s2 + $0x178] sm:$0xff]
  %v114 = vld [vmem:[%s2 + $0x180] sm:$0xff]
  %v115 = vld [vmem:[%s2 + $0x188] sm:$0xff]
  %v116 = vld [vmem:[%s2 + $0x190] sm:$0xff]
  %v117 = vld [vmem:[%s2 + $0x198] sm:$0xff]
  %v118 = vld [vmem:[%s2 + $0x1a0] sm:$0xff]
  %v119 = vld [vmem:[%s2 + $0x1a8] sm:$0xff]
  %v120 = vld [vmem:[%s2 + $0x1b0] sm:$0xff]
  %v121 = vld [vmem:[%s2 + $0x1b8] sm:$0xff]
  %v122 = vld [vmem:[%s2 + $0x1c0] sm:$0xff]
  %v123 = vld [vmem:[%s2 + $0x1c8] sm:$0xff]
  %v124 = vld [vmem:[%s2 + $0x1d0] sm:$0xff]
  %v125 = vld [vmem:[%s2 + $0x1d8] sm:$0xff]
  %v126 = vld [vmem:[%s2 + $0x1e0] sm:$0xff]
  %v127 = vld [vmem:[%s2 + $0x1e8] sm:$0xff]
  %v128 = vld [vmem:[%s2 + $0x1f0] sm:$0xff]
  %v129 = vld [vmem:[%s2 + $0x1f8] sm:$0xff]
  %v130 = vld [vmem:[%s3] sm:$0xff]
  %v132 = vperm.slane %v130, 0
  %v133 = vperm.slane %v130, 1
  %v134 = vperm.slane %v130, 2
  %v135 = vperm.slane %v130, 3
  %v136 = vperm.slane %v130, 4
  %v137 = vperm.slane %v130, 5
  %v138 = vperm.slane %v130, 6
  %v139 = vperm.slane %v130, 7
  %v156 = vunpack.c.l.b16 %v58
  %v157 = vunpack.c.l.b16 %v59
  %v158 = vunpack.c.l.b16 %v60
  %v159 = vunpack.c.l.b16 %v61
  %v160 = vunpack.c.l.b16 %v62
  %v161 = vunpack.c.l.b16 %v63
  %v162 = vunpack.c.l.b16 %v64
  %v163 = vunpack.c.l.b16 %v65
  %v164 = vpack.c.b16 %v157, %v156
  %v165 = vpack.c.b16 %v159, %v158
  %v166 = vpack.c.b16 %v161, %v160
  %v167 = vpack.c.b16 %v163, %v162
  %v236 = vunpack.c.l.b16 %v66
  %v237 = vunpack.c.h.b16 %v66
  %v238 = vunpack.c.l.b16 %v67
  %v239 = vunpack.c.h.b16 %v67
  %v240 = vunpack.c.l.b16 %v68
  %v241 = vunpack.c.h.b16 %v68
  %v242 = vunpack.c.l.b16 %v69
  %v243 = vunpack.c.h.b16 %v69
  %v244 = vunpack.c.l.b16 %v70
  %v245 = vunpack.c.h.b16 %v70
  %v246 = vunpack.c.l.b16 %v71
  %v247 = vunpack.c.h.b16 %v71
  %v248 = vunpack.c.l.b16 %v72
  %v249 = vunpack.c.h.b16 %v72
  %v250 = vunpack.c.l.b16 %v73
  %v251 = vunpack.c.h.b16 %v73
  %v252 = vunpack.c.l.b16 %v74
  %v253 = vunpack.c.h.b16 %v74
  %v254 = vunpack.c.l.b16 %v75
  %v255 = vunpack.c.h.b16 %v75
  %v256 = vunpack.c.l.b16 %v76
  %v257 = vunpack.c.h.b16 %v76
  %v258 = vunpack.c.l.b16 %v77
  %v259 = vunpack.c.h.b16 %v77
  %v260 = vunpack.c.l.b16 %v78
  %v261 = vunpack.c.h.b16 %v78
  %v262 = vunpack.c.l.b16 %v79
  %v263 = vunpack.c.h.b16 %v79
  %v264 = vunpack.c.l.b16 %v80
  %v265 = vunpack.c.h.b16 %v80
  %v266 = vunpack.c.l.b16 %v81
  %v267 = vunpack.c.h.b16 %v81
  %v268 = vunpack.c.l.b16 %v82
  %v269 = vunpack.c.h.b16 %v82
  %v270 = vunpack.c.l.b16 %v83
  %v271 = vunpack.c.h.b16 %v83
  %v272 = vunpack.c.l.b16 %v84
  %v273 = vunpack.c.h.b16 %v84
  %v274 = vunpack.c.l.b16 %v85
  %v275 = vunpack.c.h.b16 %v85
  %v276 = vunpack.c.l.b16 %v86
  %v277 = vunpack.c.h.b16 %v86
  %v278 = vunpack.c.l.b16 %v87
  %v279 = vunpack.c.h.b16 %v87
  %v280 = vunpack.c.l.b16 %v88
  %v281 = vunpack.c.h.b16 %v88
  %v282 = vunpack.c.l.b16 %v89
  %v283 = vunpack.c.h.b16 %v89
  %v284 = vunpack.c.l.b16 %v90
  %v285 = vunpack.c.h.b16 %v90
  %v286 = vunpack.c.l.b16 %v91
  %v287 = vunpack.c.h.b16 %v91
  %v288 = vunpack.c.l.b16 %v92
  %v289 = vunpack.c.h.b16 %v92
  %v290 = vunpack.c.l.b16 %v93
  %v291 = vunpack.c.h.b16 %v93
  %v292 = vunpack.c.l.b16 %v94
  %v293 = vunpack.c.h.b16 %v94
  %v294 = vunpack.c.l.b16 %v95
  %v295 = vunpack.c.h.b16 %v95
  %v296 = vunpack.c.l.b16 %v96
  %v297 = vunpack.c.h.b16 %v96
  %v298 = vunpack.c.l.b16 %v97
  %v299 = vunpack.c.h.b16 %v97
  %v300 = vunpack.c.l.b16 %v98
  %v301 = vunpack.c.h.b16 %v98
  %v302 = vunpack.c.l.b16 %v99
  %v303 = vunpack.c.h.b16 %v99
  %v304 = vunpack.c.l.b16 %v100
  %v305 = vunpack.c.h.b16 %v100
  %v306 = vunpack.c.l.b16 %v101
  %v307 = vunpack.c.h.b16 %v101
  %v308 = vunpack.c.l.b16 %v102
  %v309 = vunpack.c.h.b16 %v102
  %v310 = vunpack.c.l.b16 %v103
  %v311 = vunpack.c.h.b16 %v103
  %v312 = vunpack.c.l.b16 %v104
  %v313 = vunpack.c.h.b16 %v104
  %v314 = vunpack.c.l.b16 %v105
  %v315 = vunpack.c.h.b16 %v105
  %v316 = vunpack.c.l.b16 %v106
  %v317 = vunpack.c.h.b16 %v106
  %v318 = vunpack.c.l.b16 %v107
  %v319 = vunpack.c.h.b16 %v107
  %v320 = vunpack.c.l.b16 %v108
  %v321 = vunpack.c.h.b16 %v108
  %v322 = vunpack.c.l.b16 %v109
  %v323 = vunpack.c.h.b16 %v109
  %v324 = vunpack.c.l.b16 %v110
  %v325 = vunpack.c.h.b16 %v110
  %v326 = vunpack.c.l.b16 %v111
  %v327 = vunpack.c.h.b16 %v111
  %v328 = vunpack.c.l.b16 %v112
  %v329 = vunpack.c.h.b16 %v112
  %v330 = vunpack.c.l.b16 %v113
  %v331 = vunpack.c.h.b16 %v113
  %v332 = vunpack.c.l.b16 %v114
  %v333 = vunpack.c.h.b16 %v114
  %v334 = vunpack.c.l.b16 %v115
  %v335 = vunpack.c.h.b16 %v115
  %v336 = vunpack.c.l.b16 %v116
  %v337 = vunpack.c.h.b16 %v116
  %v338 = vunpack.c.l.b16 %v117
  %v339 = vunpack.c.h.b16 %v117
  %v340 = vunpack.c.l.b16 %v118
  %v341 = vunpack.c.h.b16 %v118
  %v342 = vunpack.c.l.b16 %v119
  %v343 = vunpack.c.h.b16 %v119
  %v344 = vunpack.c.l.b16 %v120
  %v345 = vunpack.c.h.b16 %v120
  %v346 = vunpack.c.l.b16 %v121
  %v347 = vunpack.c.h.b16 %v121
  %v348 = vunpack.c.l.b16 %v122
  %v349 = vunpack.c.h.b16 %v122
  %v350 = vunpack.c.l.b16 %v123
  %v351 = vunpack.c.h.b16 %v123
  %v352 = vunpack.c.l.b16 %v124
  %v353 = vunpack.c.h.b16 %v124
  %v354 = vunpack.c.l.b16 %v125
  %v355 = vunpack.c.h.b16 %v125
  %v356 = vunpack.c.l.b16 %v126
  %v357 = vunpack.c.h.b16 %v126
  %v358 = vunpack.c.l.b16 %v127
  %v359 = vunpack.c.h.b16 %v127
  %v360 = vunpack.c.l.b16 %v128
  %v361 = vunpack.c.h.b16 %v128
  %v362 = vunpack.c.l.b16 %v129
  %v363 = vunpack.c.h.b16 %v129
  %v364 = vpack.c.b16 %v244, %v236
  %v365 = vpack.c.b16 %v245, %v237
  %v366 = vpack.c.b16 %v246, %v238
  %v367 = vpack.c.b16 %v247, %v239
  %v368 = vpack.c.b16 %v248, %v240
  %v369 = vpack.c.b16 %v249, %v241
  %v370 = vpack.c.b16 %v250, %v242
  %v371 = vpack.c.b16 %v251, %v243
  %v372 = vpack.c.b16 %v260, %v252
  %v373 = vpack.c.b16 %v261, %v253
  %v374 = vpack.c.b16 %v262, %v254
  %v375 = vpack.c.b16 %v263, %v255
  %v376 = vpack.c.b16 %v264, %v256
  %v377 = vpack.c.b16 %v265, %v257
  %v378 = vpack.c.b16 %v266, %v258
  %v379 = vpack.c.b16 %v267, %v259
  %v380 = vpack.c.b16 %v276, %v268
  %v381 = vpack.c.b16 %v277, %v269
  %v382 = vpack.c.b16 %v278, %v270
  %v383 = vpack.c.b16 %v279, %v271
  %v384 = vpack.c.b16 %v280, %v272
  %v385 = vpack.c.b16 %v281, %v273
  %v386 = vpack.c.b16 %v282, %v274
  %v387 = vpack.c.b16 %v283, %v275
  %v388 = vpack.c.b16 %v292, %v284
  %v389 = vpack.c.b16 %v293, %v285
  %v390 = vpack.c.b16 %v294, %v286
  %v391 = vpack.c.b16 %v295, %v287
  %v392 = vpack.c.b16 %v296, %v288
  %v393 = vpack.c.b16 %v297, %v289
  %v394 = vpack.c.b16 %v298, %v290
  %v395 = vpack.c.b16 %v299, %v291
  %v396 = vpack.c.b16 %v308, %v300
  %v397 = vpack.c.b16 %v309, %v301
  %v398 = vpack.c.b16 %v310, %v302
  %v399 = vpack.c.b16 %v311, %v303
  %v400 = vpack.c.b16 %v312, %v304
  %v401 = vpack.c.b16 %v313, %v305
  %v402 = vpack.c.b16 %v314, %v306
  %v403 = vpack.c.b16 %v315, %v307
  %v404 = vpack.c.b16 %v324, %v316
  %v405 = vpack.c.b16 %v325, %v317
  %v406 = vpack.c.b16 %v326, %v318
  %v407 = vpack.c.b16 %v327, %v319
  %v408 = vpack.c.b16 %v328, %v320
  %v409 = vpack.c.b16 %v329, %v321
  %v410 = vpack.c.b16 %v330, %v322
  %v411 = vpack.c.b16 %v331, %v323
  %v412 = vpack.c.b16 %v340, %v332
  %v413 = vpack.c.b16 %v341, %v333
  %v414 = vpack.c.b16 %v342, %v334
  %v415 = vpack.c.b16 %v343, %v335
  %v416 = vpack.c.b16 %v344, %v336
  %v417 = vpack.c.b16 %v345, %v337
  %v418 = vpack.c.b16 %v346, %v338
  %v419 = vpack.c.b16 %v347, %v339
  %v420 = vpack.c.b16 %v356, %v348
  %v421 = vpack.c.b16 %v357, %v349
  %v422 = vpack.c.b16 %v358, %v350
  %v423 = vpack.c.b16 %v359, %v351
  %v424 = vpack.c.b16 %v360, %v352
  %v425 = vpack.c.b16 %v361, %v353
  %v426 = vpack.c.b16 %v362, %v354
  %v427 = vpack.c.b16 %v363, %v355
  %492 = vmatpush.bf16.msra.mxu0 %v420
  %493 = vmatpush.bf16.msra.mxu0 %v412
  %494 = vmatpush.bf16.msra.mxu0 %v404
  %495 = vmatpush.bf16.msra.mxu0 %v396
  %496 = vmatpush.bf16.msra.mxu0 %v388
  %497 = vmatpush.bf16.msra.mxu0 %v380
  %498 = vmatpush.bf16.msra.mxu0 %v372
  %499 = vmatpush.bf16.msra.mxu0 %v364
  %500 = vmatmul.bf16.gmra.mxu0 %v164
  %v501 = vpop.f32.mrf.mxu0
  %v502 = vadd.f32 %v132, %v501
  %v503 = vpop.f32.mrf.mxu0
  %v504 = vadd.f32 %v132, %v503
  %505 = vmatmul.bf16.gmra.mxu0 %v165
  %v506 = vpop.f32.mrf.mxu0
  %v507 = vadd.f32 %v132, %v506
  %v508 = vpop.f32.mrf.mxu0
  %v509 = vadd.f32 %v132, %v508
  %510 = vmatmul.bf16.gmra.mxu0 %v166
  %v511 = vpop.f32.mrf.mxu0
  %v512 = vadd.f32 %v132, %v511
  %v513 = vpop.f32.mrf.mxu0
  %v514 = vadd.f32 %v132, %v513
  %515 = vmatmul.bf16.gmra.mxu0 %v167
  %v516 = vpop.f32.mrf.mxu0
  %v517 = vadd.f32 %v132, %v516
  %v518 = vpop.f32.mrf.mxu0
  %v519 = vadd.f32 %v132, %v518
  %520 = vdwg.mxu0
  %521 = vmatpush.bf16.msra.mxu0 %v421
  %522 = vmatpush.bf16.msra.mxu0 %v413
  %523 = vmatpush.bf16.msra.mxu0 %v405
  %524 = vmatpush.bf16.msra.mxu0 %v397
  %525 = vmatpush.bf16.msra.mxu0 %v389
  %526 = vmatpush.bf16.msra.mxu0 %v381
  %527 = vmatpush.bf16.msra.mxu0 %v373
  %528 = vmatpush.bf16.msra.mxu0 %v365
  %529 = vmatmul.bf16.gmra.mxu0 %v164
  %v530 = vpop.f32.mrf.mxu0
  %v531 = vadd.f32 %v133, %v530
  %v532 = vpop.f32.mrf.mxu0
  %v533 = vadd.f32 %v133, %v532
  %534 = vmatmul.bf16.gmra.mxu0 %v165
  %v535 = vpop.f32.mrf.mxu0
  %v536 = vadd.f32 %v133, %v535
  %v537 = vpop.f32.mrf.mxu0
  %v538 = vadd.f32 %v133, %v537
  %539 = vmatmul.bf16.gmra.mxu0 %v166
  %v540 = vpop.f32.mrf.mxu0
  %v541 = vadd.f32 %v133, %v540
  %v542 = vpop.f32.mrf.mxu0
  %v543 = vadd.f32 %v133, %v542
  %544 = vmatmul.bf16.gmra.mxu0 %v167
  %v545 = vpop.f32.mrf.mxu0
  %v546 = vadd.f32 %v133, %v545
  %v547 = vpop.f32.mrf.mxu0
  %v548 = vadd.f32 %v133, %v547
  %549 = vdwg.mxu0
  %550 = vmatpush.bf16.msra.mxu0 %v422
  %551 = vmatpush.bf16.msra.mxu0 %v414
  %552 = vmatpush.bf16.msra.mxu0 %v406
  %553 = vmatpush.bf16.msra.mxu0 %v398
  %554 = vmatpush.bf16.msra.mxu0 %v390
  %555 = vmatpush.bf16.msra.mxu0 %v382
  %556 = vmatpush.bf16.msra.mxu0 %v374
  %557 = vmatpush.bf16.msra.mxu0 %v366
  %558 = vmatmul.bf16.gmra.mxu0 %v164
  %v559 = vpop.f32.mrf.mxu0
  %v560 = vadd.f32 %v134, %v559
  %v561 = vpop.f32.mrf.mxu0
  %v562 = vadd.f32 %v134, %v561
  %563 = vmatmul.bf16.gmra.mxu0 %v165
  %v564 = vpop.f32.mrf.mxu0
  %v565 = vadd.f32 %v134, %v564
  %v566 = vpop.f32.mrf.mxu0
  %v567 = vadd.f32 %v134, %v566
  %568 = vmatmul.bf16.gmra.mxu0 %v166
  %v569 = vpop.f32.mrf.mxu0
  %v570 = vadd.f32 %v134, %v569
  %v571 = vpop.f32.mrf.mxu0
  %v572 = vadd.f32 %v134, %v571
  %573 = vmatmul.bf16.gmra.mxu0 %v167
  %v574 = vpop.f32.mrf.mxu0
  %v575 = vadd.f32 %v134, %v574
  %v576 = vpop.f32.mrf.mxu0
  %v577 = vadd.f32 %v134, %v576
  %578 = vdwg.mxu0
  %579 = vmatpush.bf16.msra.mxu0 %v423
  %580 = vmatpush.bf16.msra.mxu0 %v415
  %581 = vmatpush.bf16.msra.mxu0 %v407
  %582 = vmatpush.bf16.msra.mxu0 %v399
  %583 = vmatpush.bf16.msra.mxu0 %v391
  %584 = vmatpush.bf16.msra.mxu0 %v383
  %585 = vmatpush.bf16.msra.mxu0 %v375
  %586 = vmatpush.bf16.msra.mxu0 %v367
  %587 = vmatmul.bf16.gmra.mxu0 %v164
  %v588 = vpop.f32.mrf.mxu0
  %v589 = vadd.f32 %v135, %v588
  %v590 = vpop.f32.mrf.mxu0
  %v591 = vadd.f32 %v135, %v590
  %592 = vmatmul.bf16.gmra.mxu0 %v165
  %v593 = vpop.f32.mrf.mxu0
  %v594 = vadd.f32 %v135, %v593
  %v595 = vpop.f32.mrf.mxu0
  %v596 = vadd.f32 %v135, %v595
  %597 = vmatmul.bf16.gmra.mxu0 %v166
  %v598 = vpop.f32.mrf.mxu0
  %v599 = vadd.f32 %v135, %v598
  %v600 = vpop.f32.mrf.mxu0
  %v601 = vadd.f32 %v135, %v600
  %602 = vmatmul.bf16.gmra.mxu0 %v167
  %v603 = vpop.f32.mrf.mxu0
  %v604 = vadd.f32 %v135, %v603
  %v605 = vpop.f32.mrf.mxu0
  %v606 = vadd.f32 %v135, %v605
  %607 = vdwg.mxu0
  %608 = vmatpush.bf16.msra.mxu0 %v424
  %609 = vmatpush.bf16.msra.mxu0 %v416
  %610 = vmatpush.bf16.msra.mxu0 %v408
  %611 = vmatpush.bf16.msra.mxu0 %v400
  %612 = vmatpush.bf16.msra.mxu0 %v392
  %613 = vmatpush.bf16.msra.mxu0 %v384
  %614 = vmatpush.bf16.msra.mxu0 %v376
  %615 = vmatpush.bf16.msra.mxu0 %v368
  %616 = vmatmul.bf16.gmra.mxu0 %v164
  %v617 = vpop.f32.mrf.mxu0
  %v618 = vadd.f32 %v136, %v617
  %v619 = vpop.f32.mrf.mxu0
  %v620 = vadd.f32 %v136, %v619
  %621 = vmatmul.bf16.gmra.mxu0 %v165
  %v622 = vpop.f32.mrf.mxu0
  %v623 = vadd.f32 %v136, %v622
  %v624 = vpop.f32.mrf.mxu0
  %v625 = vadd.f32 %v136, %v624
  %626 = vmatmul.bf16.gmra.mxu0 %v166
  %v627 = vpop.f32.mrf.mxu0
  %v628 = vadd.f32 %v136, %v627
  %v629 = vpop.f32.mrf.mxu0
  %v630 = vadd.f32 %v136, %v629
  %631 = vmatmul.bf16.gmra.mxu0 %v167
  %v632 = vpop.f32.mrf.mxu0
  %v633 = vadd.f32 %v136, %v632
  %v634 = vpop.f32.mrf.mxu0
  %v635 = vadd.f32 %v136, %v634
  %636 = vdwg.mxu0
  %637 = vmatpush.bf16.msra.mxu0 %v425
  %638 = vmatpush.bf16.msra.mxu0 %v417
  %639 = vmatpush.bf16.msra.mxu0 %v409
  %640 = vmatpush.bf16.msra.mxu0 %v401
  %641 = vmatpush.bf16.msra.mxu0 %v393
  %642 = vmatpush.bf16.msra.mxu0 %v385
  %643 = vmatpush.bf16.msra.mxu0 %v377
  %644 = vmatpush.bf16.msra.mxu0 %v369
  %645 = vmatmul.bf16.gmra.mxu0 %v164
  %v646 = vpop.f32.mrf.mxu0
  %v647 = vadd.f32 %v137, %v646
  %v648 = vpop.f32.mrf.mxu0
  %v649 = vadd.f32 %v137, %v648
  %650 = vmatmul.bf16.gmra.mxu0 %v165
  %v651 = vpop.f32.mrf.mxu0
  %v652 = vadd.f32 %v137, %v651
  %v653 = vpop.f32.mrf.mxu0
  %v654 = vadd.f32 %v137, %v653
  %655 = vmatmul.bf16.gmra.mxu0 %v166
  %v656 = vpop.f32.mrf.mxu0
  %v657 = vadd.f32 %v137, %v656
  %v658 = vpop.f32.mrf.mxu0
  %v659 = vadd.f32 %v137, %v658
  %660 = vmatmul.bf16.gmra.mxu0 %v167
  %v661 = vpop.f32.mrf.mxu0
  %v662 = vadd.f32 %v137, %v661
  %v663 = vpop.f32.mrf.mxu0
  %v664 = vadd.f32 %v137, %v663
  %665 = vdwg.mxu0
  %666 = vmatpush.bf16.msra.mxu0 %v426
  %667 = vmatpush.bf16.msra.mxu0 %v418
  %668 = vmatpush.bf16.msra.mxu0 %v410
  %669 = vmatpush.bf16.msra.mxu0 %v402
  %670 = vmatpush.bf16.msra.mxu0 %v394
  %671 = vmatpush.bf16.msra.mxu0 %v386
  %672 = vmatpush.bf16.msra.mxu0 %v378
  %673 = vmatpush.bf16.msra.mxu0 %v370
  %674 = vmatmul.bf16.gmra.mxu0 %v164
  %v675 = vpop.f32.mrf.mxu0
  %v676 = vadd.f32 %v138, %v675
  %v677 = vpop.f32.mrf.mxu0
  %v678 = vadd.f32 %v138, %v677
  %679 = vmatmul.bf16.gmra.mxu0 %v165
  %v680 = vpop.f32.mrf.mxu0
  %v681 = vadd.f32 %v138, %v680
  %v682 = vpop.f32.mrf.mxu0
  %v683 = vadd.f32 %v138, %v682
  %684 = vmatmul.bf16.gmra.mxu0 %v166
  %v685 = vpop.f32.mrf.mxu0
  %v686 = vadd.f32 %v138, %v685
  %v687 = vpop.f32.mrf.mxu0
  %v688 = vadd.f32 %v138, %v687
  %689 = vmatmul.bf16.gmra.mxu0 %v167
  %v690 = vpop.f32.mrf.mxu0
  %v691 = vadd.f32 %v138, %v690
  %v692 = vpop.f32.mrf.mxu0
  %v693 = vadd.f32 %v138, %v692
  %694 = vdwg.mxu0
  %695 = vmatpush.bf16.msra.mxu0 %v427
  %696 = vmatpush.bf16.msra.mxu0 %v419
  %697 = vmatpush.bf16.msra.mxu0 %v411
  %698 = vmatpush.bf16.msra.mxu0 %v403
  %699 = vmatpush.bf16.msra.mxu0 %v395
  %700 = vmatpush.bf16.msra.mxu0 %v387
  %701 = vmatpush.bf16.msra.mxu0 %v379
  %702 = vmatpush.bf16.msra.mxu0 %v371
  %703 = vmatmul.bf16.gmra.mxu0 %v164
  %v704 = vpop.f32.mrf.mxu0
  %v705 = vadd.f32 %v139, %v704
  %v706 = vpop.f32.mrf.mxu0
  %v707 = vadd.f32 %v139, %v706
  %708 = vmatmul.bf16.gmra.mxu0 %v165
  %v709 = vpop.f32.mrf.mxu0
  %v710 = vadd.f32 %v139, %v709
  %v711 = vpop.f32.mrf.mxu0
  %v712 = vadd.f32 %v139, %v711
  %713 = vmatmul.bf16.gmra.mxu0 %v166
  %v714 = vpop.f32.mrf.mxu0
  %v715 = vadd.f32 %v139, %v714
  %v716 = vpop.f32.mrf.mxu0
  %v717 = vadd.f32 %v139, %v716
  %718 = vmatmul.bf16.gmra.mxu0 %v167
  %v719 = vpop.f32.mrf.mxu0
  %v720 = vadd.f32 %v139, %v719
  %v721 = vpop.f32.mrf.mxu0
  %v722 = vadd.f32 %v139, %v721
  %723 = vdwg.mxu0
  %v724 = vld [vmem:[%s4] sm:$0xff]
  %v725 = vld [vmem:[%s4 + $0x8] sm:$0xff]
  %v726 = vld [vmem:[%s4 + $0x10] sm:$0xff]
  %v727 = vld [vmem:[%s4 + $0x18] sm:$0xff]
  %v728 = vld [vmem:[%s4 + $0x20] sm:$0xff]
  %v729 = vld [vmem:[%s4 + $0x28] sm:$0xff]
  %v730 = vld [vmem:[%s4 + $0x30] sm:$0xff]
  %v731 = vld [vmem:[%s4 + $0x38] sm:$0xff]
  %v732 = vld [vmem:[%s4 + $0x40] sm:$0xff]
  %v733 = vld [vmem:[%s4 + $0x48] sm:$0xff]
  %v734 = vld [vmem:[%s4 + $0x50] sm:$0xff]
  %v735 = vld [vmem:[%s4 + $0x58] sm:$0xff]
  %v736 = vld [vmem:[%s4 + $0x60] sm:$0xff]
  %v737 = vld [vmem:[%s4 + $0x68] sm:$0xff]
  %v738 = vld [vmem:[%s4 + $0x70] sm:$0xff]
  %v739 = vld [vmem:[%s4 + $0x78] sm:$0xff]
  %v740 = vld [vmem:[%s4 + $0x80] sm:$0xff]
  %v741 = vld [vmem:[%s4 + $0x88] sm:$0xff]
  %v742 = vld [vmem:[%s4 + $0x90] sm:$0xff]
  %v743 = vld [vmem:[%s4 + $0x98] sm:$0xff]
  %v744 = vld [vmem:[%s4 + $0xa0] sm:$0xff]
  %v745 = vld [vmem:[%s4 + $0xa8] sm:$0xff]
  %v746 = vld [vmem:[%s4 + $0xb0] sm:$0xff]
  %v747 = vld [vmem:[%s4 + $0xb8] sm:$0xff]
  %v748 = vld [vmem:[%s4 + $0xc0] sm:$0xff]
  %v749 = vld [vmem:[%s4 + $0xc8] sm:$0xff]
  %v750 = vld [vmem:[%s4 + $0xd0] sm:$0xff]
  %v751 = vld [vmem:[%s4 + $0xd8] sm:$0xff]
  %v752 = vld [vmem:[%s4 + $0xe0] sm:$0xff]
  %v753 = vld [vmem:[%s4 + $0xe8] sm:$0xff]
  %v754 = vld [vmem:[%s4 + $0xf0] sm:$0xff]
  %v755 = vld [vmem:[%s4 + $0xf8] sm:$0xff]
  %v756 = vld [vmem:[%s5] sm:$0xff]
  %v757 = vld [vmem:[%s5 + $0x8] sm:$0xff]
  %v758 = vld [vmem:[%s5 + $0x10] sm:$0xff]
  %v759 = vld [vmem:[%s5 + $0x18] sm:$0xff]
  %v760 = vld [vmem:[%s5 + $0x20] sm:$0xff]
  %v761 = vld [vmem:[%s5 + $0x28] sm:$0xff]
  %v762 = vld [vmem:[%s5 + $0x30] sm:$0xff]
  %v763 = vld [vmem:[%s5 + $0x38] sm:$0xff]
  %v764 = vld [vmem:[%s5 + $0x40] sm:$0xff]
  %v765 = vld [vmem:[%s5 + $0x48] sm:$0xff]
  %v766 = vld [vmem:[%s5 + $0x50] sm:$0xff]
  %v767 = vld [vmem:[%s5 + $0x58] sm:$0xff]
  %v768 = vld [vmem:[%s5 + $0x60] sm:$0xff]
  %v769 = vld [vmem:[%s5 + $0x68] sm:$0xff]
  %v770 = vld [vmem:[%s5 + $0x70] sm:$0xff]
  %v771 = vld [vmem:[%s5 + $0x78] sm:$0xff]
  %v772 = vld [vmem:[%s5 + $0x80] sm:$0xff]
  %v773 = vld [vmem:[%s5 + $0x88] sm:$0xff]
  %v774 = vld [vmem:[%s5 + $0x90] sm:$0xff]
  %v775 = vld [vmem:[%s5 + $0x98] sm:$0xff]
  %v776 = vld [vmem:[%s5 + $0xa0] sm:$0xff]
  %v777 = vld [vmem:[%s5 + $0xa8] sm:$0xff]
  %v778 = vld [vmem:[%s5 + $0xb0] sm:$0xff]
  %v779 = vld [vmem:[%s5 + $0xb8] sm:$0xff]
  %v780 = vld [vmem:[%s5 + $0xc0] sm:$0xff]
  %v781 = vld [vmem:[%s5 + $0xc8] sm:$0xff]
  %v782 = vld [vmem:[%s5 + $0xd0] sm:$0xff]
  %v783 = vld [vmem:[%s5 + $0xd8] sm:$0xff]
  %v784 = vld [vmem:[%s5 + $0xe0] sm:$0xff]
  %v785 = vld [vmem:[%s5 + $0xe8] sm:$0xff]
  %v786 = vld [vmem:[%s5 + $0xf0] sm:$0xff]
  %v787 = vld [vmem:[%s5 + $0xf8] sm:$0xff]
  %v820 = vunpack.c.l.b16 %v724
  %v821 = vunpack.c.h.b16 %v724
  %v822 = vunpack.c.l.b16 %v725
  %v823 = vunpack.c.h.b16 %v725
  %v824 = vunpack.c.l.b16 %v726
  %v825 = vunpack.c.h.b16 %v726
  %v826 = vunpack.c.l.b16 %v727
  %v827 = vunpack.c.h.b16 %v727
  %v828 = vunpack.c.l.b16 %v728
  %v829 = vunpack.c.h.b16 %v728
  %v830 = vunpack.c.l.b16 %v729
  %v831 = vunpack.c.h.b16 %v729
  %v832 = vunpack.c.l.b16 %v730
  %v833 = vunpack.c.h.b16 %v730
  %v834 = vunpack.c.l.b16 %v731
  %v835 = vunpack.c.h.b16 %v731
  %v836 = vunpack.c.l.b16 %v732
  %v837 = vunpack.c.h.b16 %v732
  %v838 = vunpack.c.l.b16 %v733
  %v839 = vunpack.c.h.b16 %v733
  %v840 = vunpack.c.l.b16 %v734
  %v841 = vunpack.c.h.b16 %v734
  %v842 = vunpack.c.l.b16 %v735
  %v843 = vunpack.c.h.b16 %v735
  %v844 = vunpack.c.l.b16 %v736
  %v845 = vunpack.c.h.b16 %v736
  %v846 = vunpack.c.l.b16 %v737
  %v847 = vunpack.c.h.b16 %v737
  %v848 = vunpack.c.l.b16 %v738
  %v849 = vunpack.c.h.b16 %v738
  %v850 = vunpack.c.l.b16 %v739
  %v851 = vunpack.c.h.b16 %v739
  %v852 = vunpack.c.l.b16 %v740
  %v853 = vunpack.c.h.b16 %v740
  %v854 = vunpack.c.l.b16 %v741
  %v855 = vunpack.c.h.b16 %v741
  %v856 = vunpack.c.l.b16 %v742
  %v857 = vunpack.c.h.b16 %v742
  %v858 = vunpack.c.l.b16 %v743
  %v859 = vunpack.c.h.b16 %v743
  %v860 = vunpack.c.l.b16 %v744
  %v861 = vunpack.c.h.b16 %v744
  %v862 = vunpack.c.l.b16 %v745
  %v863 = vunpack.c.h.b16 %v745
  %v864 = vunpack.c.l.b16 %v746
  %v865 = vunpack.c.h.b16 %v746
  %v866 = vunpack.c.l.b16 %v747
  %v867 = vunpack.c.h.b16 %v747
  %v868 = vunpack.c.l.b16 %v748
  %v869 = vunpack.c.h.b16 %v748
  %v870 = vunpack.c.l.b16 %v749
  %v871 = vunpack.c.h.b16 %v749
  %v872 = vunpack.c.l.b16 %v750
  %v873 = vunpack.c.h.b16 %v750
  %v874 = vunpack.c.l.b16 %v751
  %v875 = vunpack.c.h.b16 %v751
  %v876 = vunpack.c.l.b16 %v752
  %v877 = vunpack.c.h.b16 %v752
  %v878 = vunpack.c.l.b16 %v753
  %v879 = vunpack.c.h.b16 %v753
  %v880 = vunpack.c.l.b16 %v754
  %v881 = vunpack.c.h.b16 %v754
  %v882 = vunpack.c.l.b16 %v755
  %v883 = vunpack.c.h.b16 %v755
  %v884 = vpack.c.b16 %v824, %v820
  %v885 = vpack.c.b16 %v825, %v821
  %v886 = vpack.c.b16 %v826, %v822
  %v887 = vpack.c.b16 %v827, %v823
  %v888 = vpack.c.b16 %v832, %v828
  %v889 = vpack.c.b16 %v833, %v829
  %v890 = vpack.c.b16 %v834, %v830
  %v891 = vpack.c.b16 %v835, %v831
  %v892 = vpack.c.b16 %v840, %v836
  %v893 = vpack.c.b16 %v841, %v837
  %v894 = vpack.c.b16 %v842, %v838
  %v895 = vpack.c.b16 %v843, %v839
  %v896 = vpack.c.b16 %v848, %v844
  %v897 = vpack.c.b16 %v849, %v845
  %v898 = vpack.c.b16 %v850, %v846
  %v899 = vpack.c.b16 %v851, %v847
  %v900 = vpack.c.b16 %v856, %v852
  %v901 = vpack.c.b16 %v857, %v853
  %v902 = vpack.c.b16 %v858, %v854
  %v903 = vpack.c.b16 %v859, %v855
  %v904 = vpack.c.b16 %v864, %v860
  %v905 = vpack.c.b16 %v865, %v861
  %v906 = vpack.c.b16 %v866, %v862
  %v907 = vpack.c.b16 %v867, %v863
  %v908 = vpack.c.b16 %v872, %v868
  %v909 = vpack.c.b16 %v873, %v869
  %v910 = vpack.c.b16 %v874, %v870
  %v911 = vpack.c.b16 %v875, %v871
  %v912 = vpack.c.b16 %v880, %v876
  %v913 = vpack.c.b16 %v881, %v877
  %v914 = vpack.c.b16 %v882, %v878
  %v915 = vpack.c.b16 %v883, %v879
  %948 = vmatpush.bf16.msra.mxu0 %v912
  %949 = vmatpush.bf16.msra.mxu0 %v908
  %950 = vmatpush.bf16.msra.mxu0 %v904
  %951 = vmatpush.bf16.msra.mxu0 %v900
  %952 = vmatpush.bf16.msra.mxu0 %v896
  %953 = vmatpush.bf16.msra.mxu0 %v892
  %954 = vmatpush.bf16.msra.mxu0 %v888
  %955 = vmatpush.bf16.msra.mxu0 %v884
  %956 = vmatmul.bf16.gmra.mxu0 0
  %v957 = vpop.f32.mrf.mxu0
  %v958 = vadd.f32 0.0, %v957
  %v959 = vpop.f32.mrf.mxu0
  %960 = vdwg.mxu0
  %961 = vmatpush.bf16.msra.mxu0 %v913
  %962 = vmatpush.bf16.msra.mxu0 %v909
  %963 = vmatpush.bf16.msra.mxu0 %v905
  %964 = vmatpush.bf16.msra.mxu0 %v901
  %965 = vmatpush.bf16.msra.mxu0 %v897
  %966 = vmatpush.bf16.msra.mxu0 %v893
  %967 = vmatpush.bf16.msra.mxu0 %v889
  %968 = vmatpush.bf16.msra.mxu0 %v885
  %969 = vmatmul.bf16.gmra.mxu0 0
  %v970 = vpop.f32.mrf.mxu0
  %v971 = vadd.f32 0.0, %v970
  %v972 = vpop.f32.mrf.mxu0
  %973 = vdwg.mxu0
  %974 = vmatpush.bf16.msra.mxu0 %v914
  %975 = vmatpush.bf16.msra.mxu0 %v910
  %976 = vmatpush.bf16.msra.mxu0 %v906
  %977 = vmatpush.bf16.msra.mxu0 %v902
  %978 = vmatpush.bf16.msra.mxu0 %v898
  %979 = vmatpush.bf16.msra.mxu0 %v894
  %980 = vmatpush.bf16.msra.mxu0 %v890
  %981 = vmatpush.bf16.msra.mxu0 %v886
  %982 = vmatmul.bf16.gmra.mxu0 0
  %v983 = vpop.f32.mrf.mxu0
  %v984 = vadd.f32 0.0, %v983
  %v985 = vpop.f32.mrf.mxu0
  %986 = vdwg.mxu0
  %987 = vmatpush.bf16.msra.mxu0 %v915
  %988 = vmatpush.bf16.msra.mxu0 %v911
  %989 = vmatpush.bf16.msra.mxu0 %v907
  %990 = vmatpush.bf16.msra.mxu0 %v903
  %991 = vmatpush.bf16.msra.mxu0 %v899
  %992 = vmatpush.bf16.msra.mxu0 %v895
  %993 = vmatpush.bf16.msra.mxu0 %v891
  %994 = vmatpush.bf16.msra.mxu0 %v887
  %995 = vmatmul.bf16.gmra.mxu0 0
  %v996 = vpop.f32.mrf.mxu0
  %v997 = vadd.f32 0.0, %v996
  %v998 = vpop.f32.mrf.mxu0
  %999 = vdwg.mxu0
  %v1000 = vadd.f32 %v502, %v958
  %v1001 = vadd.f32 %v531, %v971
  %v1002 = vadd.f32 %v560, %v984
  %v1003 = vadd.f32 %v589, %v997
  %v1004 = vxor.u32 %v1000, 2147483648
  %v1005 = vmul.f32 %v1004, 1.442695
  %v1006 = vpow.pop %v1005
  %v1007 = vadd.f32 %v1006, 1.0
  %v1008 = vrcp.pop %v1007
  %v1009 = vmul.f32 %v1007, %v1008
  %v1010 = vsub.f32 1.0, %v1009
  %v1011 = vmul.f32 %v1008, %v1010
  %v1012 = vadd.f32 %v1008, %v1011
  %vm1013 = vweird.f32 %v1007
  %vm1014 = vweird.f32 %v1008
  %vm1015 = vmor %vm1013, %vm1014
  %v1016 = vsel %vm1015, %v1008, %v1012
  %v1017 = vand.u32 2147483647, %v1007
  %vm1018 = vcmp.eq.f32.partialorder %v1017, 8.507059e+37
  %v1019 = vand.u32 %v1007, 2147483648
  %v1020 = vor.u32 1.1754944e-38, %v1019
  %v1021 = vsel %vm1018, %v1020, %v1016
  %v1022 = vmul.f32 1.0, %v1021
  %v1023 = vxor.u32 %v1001, 2147483648
  %v1024 = vmul.f32 %v1023, 1.442695
  %v1025 = vpow.pop %v1024
  %v1026 = vadd.f32 %v1025, 1.0
  %v1027 = vrcp.pop %v1026
  %v1028 = vmul.f32 %v1026, %v1027
  %v1029 = vsub.f32 1.0, %v1028
  %v1030 = vmul.f32 %v1027, %v1029
  %v1031 = vadd.f32 %v1027, %v1030
  %vm1032 = vweird.f32 %v1026
  %vm1033 = vweird.f32 %v1027
  %vm1034 = vmor %vm1032, %vm1033
  %v1035 = vsel %vm1034, %v1027, %v1031
  %v1036 = vand.u32 2147483647, %v1026
  %vm1037 = vcmp.eq.f32.partialorder %v1036, 8.507059e+37
  %v1038 = vand.u32 %v1026, 2147483648
  %v1039 = vor.u32 1.1754944e-38, %v1038
  %v1040 = vsel %vm1037, %v1039, %v1035
  %v1041 = vmul.f32 1.0, %v1040
  %v1042 = vtanh.pop %v1002
  %v1043 = vxor.u32 %v1003, 2147483648
  %v1044 = vmul.f32 %v1043, 1.442695
  %v1045 = vpow.pop %v1044
  %v1046 = vadd.f32 %v1045, 1.0
  %v1047 = vrcp.pop %v1046
  %v1048 = vmul.f32 %v1046, %v1047
  %v1049 = vsub.f32 1.0, %v1048
  %v1050 = vmul.f32 %v1047, %v1049
  %v1051 = vadd.f32 %v1047, %v1050
  %vm1052 = vweird.f32 %v1046
  %vm1053 = vweird.f32 %v1047
  %vm1054 = vmor %vm1052, %vm1053
  %v1055 = vsel %vm1054, %v1047, %v1051
  %v1056 = vand.u32 2147483647, %v1046
  %vm1057 = vcmp.eq.f32.partialorder %v1056, 8.507059e+37
  %v1058 = vand.u32 %v1046, 2147483648
  %v1059 = vor.u32 1.1754944e-38, %v1058
  %v1060 = vsel %vm1057, %v1059, %v1055
  %v1061 = vmul.f32 1.0, %v1060
  %v1062 = vmul.f32 %v1041, 0.0
  %v1063 = vmul.f32 %v1022, %v1042
  %v1064 = vadd.f32 %v1062, %v1063
  %v1065 = vtanh.pop %v1064
  %v1066 = vmul.f32 %v1061, %v1065
  %v1067 = vsel %vm50, %v1066, 0.0
  %v1068 = vsel %vm50, %v1064, 0.0
  %v1101 = vunpack.c.l.b16 %v756
  %v1102 = vunpack.c.h.b16 %v756
  %v1103 = vunpack.c.l.b16 %v757
  %v1104 = vunpack.c.h.b16 %v757
  %v1105 = vunpack.c.l.b16 %v758
  %v1106 = vunpack.c.h.b16 %v758
  %v1107 = vunpack.c.l.b16 %v759
  %v1108 = vunpack.c.h.b16 %v759
  %v1109 = vunpack.c.l.b16 %v760
  %v1110 = vunpack.c.h.b16 %v760
  %v1111 = vunpack.c.l.b16 %v761
  %v1112 = vunpack.c.h.b16 %v761
  %v1113 = vunpack.c.l.b16 %v762
  %v1114 = vunpack.c.h.b16 %v762
  %v1115 = vunpack.c.l.b16 %v763
  %v1116 = vunpack.c.h.b16 %v763
  %v1117 = vunpack.c.l.b16 %v764
  %v1118 = vunpack.c.h.b16 %v764
  %v1119 = vunpack.c.l.b16 %v765
  %v1120 = vunpack.c.h.b16 %v765
  %v1121 = vunpack.c.l.b16 %v766
  %v1122 = vunpack.c.h.b16 %v766
  %v1123 = vunpack.c.l.b16 %v767
  %v1124 = vunpack.c.h.b16 %v767
  %v1125 = vunpack.c.l.b16 %v768
  %v1126 = vunpack.c.h.b16 %v768
  %v1127 = vunpack.c.l.b16 %v769
  %v1128 = vunpack.c.h.b16 %v769
  %v1129 = vunpack.c.l.b16 %v770
  %v1130 = vunpack.c.h.b16 %v770
  %v1131 = vunpack.c.l.b16 %v771
  %v1132 = vunpack.c.h.b16 %v771
  %v1133 = vunpack.c.l.b16 %v772
  %v1134 = vunpack.c.h.b16 %v772
  %v1135 = vunpack.c.l.b16 %v773
  %v1136 = vunpack.c.h.b16 %v773
  %v1137 = vunpack.c.l.b16 %v774
  %v1138 = vunpack.c.h.b16 %v774
  %v1139 = vunpack.c.l.b16 %v775
  %v1140 = vunpack.c.h.b16 %v775
  %v1141 = vunpack.c.l.b16 %v776
  %v1142 = vunpack.c.h.b16 %v776
  %v1143 = vunpack.c.l.b16 %v777
  %v1144 = vunpack.c.h.b16 %v777
  %v1145 = vunpack.c.l.b16 %v778
  %v1146 = vunpack.c.h.b16 %v778
  %v1147 = vunpack.c.l.b16 %v779
  %v1148 = vunpack.c.h.b16 %v779
  %v1149 = vunpack.c.l.b16 %v780
  %v1150 = vunpack.c.h.b16 %v780
  %v1151 = vunpack.c.l.b16 %v781
  %v1152 = vunpack.c.h.b16 %v781
  %v1153 = vunpack.c.l.b16 %v782
  %v1154 = vunpack.c.h.b16 %v782
  %v1155 = vunpack.c.l.b16 %v783
  %v1156 = vunpack.c.h.b16 %v783
  %v1157 = vunpack.c.l.b16 %v784
  %v1158 = vunpack.c.h.b16 %v784
  %v1159 = vunpack.c.l.b16 %v785
  %v1160 = vunpack.c.h.b16 %v785
  %v1161 = vunpack.c.l.b16 %v786
  %v1162 = vunpack.c.h.b16 %v786
  %v1163 = vunpack.c.l.b16 %v787
  %v1164 = vunpack.c.h.b16 %v787
  %v1165 = vpack.c.b16 %v1105, %v1101
  %v1166 = vpack.c.b16 %v1106, %v1102
  %v1167 = vpack.c.b16 %v1107, %v1103
  %v1168 = vpack.c.b16 %v1108, %v1104
  %v1169 = vpack.c.b16 %v1113, %v1109
  %v1170 = vpack.c.b16 %v1114, %v1110
  %v1171 = vpack.c.b16 %v1115, %v1111
  %v1172 = vpack.c.b16 %v1116, %v1112
  %v1173 = vpack.c.b16 %v1121, %v1117
  %v1174 = vpack.c.b16 %v1122, %v1118
  %v1175 = vpack.c.b16 %v1123, %v1119
  %v1176 = vpack.c.b16 %v1124, %v1120
  %v1177 = vpack.c.b16 %v1129, %v1125
  %v1178 = vpack.c.b16 %v1130, %v1126
  %v1179 = vpack.c.b16 %v1131, %v1127
  %v1180 = vpack.c.b16 %v1132, %v1128
  %v1181 = vpack.c.b16 %v1137, %v1133
  %v1182 = vpack.c.b16 %v1138, %v1134
  %v1183 = vpack.c.b16 %v1139, %v1135
  %v1184 = vpack.c.b16 %v1140, %v1136
  %v1185 = vpack.c.b16 %v1145, %v1141
  %v1186 = vpack.c.b16 %v1146, %v1142
  %v1187 = vpack.c.b16 %v1147, %v1143
  %v1188 = vpack.c.b16 %v1148, %v1144
  %v1189 = vpack.c.b16 %v1153, %v1149
  %v1190 = vpack.c.b16 %v1154, %v1150
  %v1191 = vpack.c.b16 %v1155, %v1151
  %v1192 = vpack.c.b16 %v1156, %v1152
  %v1193 = vpack.c.b16 %v1161, %v1157
  %v1194 = vpack.c.b16 %v1162, %v1158
  %v1195 = vpack.c.b16 %v1163, %v1159
  %v1196 = vpack.c.b16 %v1164, %v1160
  %1229 = vmatpush.bf16.msra.mxu0 %v1193
  %1230 = vmatpush.bf16.msra.mxu0 %v1189
  %1231 = vmatpush.bf16.msra.mxu0 %v1185
  %1232 = vmatpush.bf16.msra.mxu0 %v1181
  %1233 = vmatpush.bf16.msra.mxu0 %v1177
  %1234 = vmatpush.bf16.msra.mxu0 %v1173
  %1235 = vmatpush.bf16.msra.mxu0 %v1169
  %1236 = vmatpush.bf16.msra.mxu0 %v1165
  %1237 = vmatmul.bf16.gmra.mxu0 0
  %v1238 = vpop.f32.mrf.mxu0
  %v1239 = vadd.f32 0.0, %v1238
  %v1240 = vpop.f32.mrf.mxu0
  %1241 = vdwg.mxu0
  %1242 = vmatpush.bf16.msra.mxu0 %v1194
  %1243 = vmatpush.bf16.msra.mxu0 %v1190
  %1244 = vmatpush.bf16.msra.mxu0 %v1186
  %1245 = vmatpush.bf16.msra.mxu0 %v1182
  %1246 = vmatpush.bf16.msra.mxu0 %v1178
  %1247 = vmatpush.bf16.msra.mxu0 %v1174
  %1248 = vmatpush.bf16.msra.mxu0 %v1170
  %1249 = vmatpush.bf16.msra.mxu0 %v1166
  %1250 = vmatmul.bf16.gmra.mxu0 0
  %v1251 = vpop.f32.mrf.mxu0
  %v1252 = vadd.f32 0.0, %v1251
  %v1253 = vpop.f32.mrf.mxu0
  %1254 = vdwg.mxu0
  %1255 = vmatpush.bf16.msra.mxu0 %v1195
  %1256 = vmatpush.bf16.msra.mxu0 %v1191
  %1257 = vmatpush.bf16.msra.mxu0 %v1187
  %1258 = vmatpush.bf16.msra.mxu0 %v1183
  %1259 = vmatpush.bf16.msra.mxu0 %v1179
  %1260 = vmatpush.bf16.msra.mxu0 %v1175
  %1261 = vmatpush.bf16.msra.mxu0 %v1171
  %1262 = vmatpush.bf16.msra.mxu0 %v1167
  %1263 = vmatmul.bf16.gmra.mxu0 0
  %v1264 = vpop.f32.mrf.mxu0
  %v1265 = vadd.f32 0.0, %v1264
  %v1266 = vpop.f32.mrf.mxu0
  %1267 = vdwg.mxu0
  %1268 = vmatpush.bf16.msra.mxu0 %v1196
  %1269 = vmatpush.bf16.msra.mxu0 %v1192
  %1270 = vmatpush.bf16.msra.mxu0 %v1188
  %1271 = vmatpush.bf16.msra.mxu0 %v1184
  %1272 = vmatpush.bf16.msra.mxu0 %v1180
  %1273 = vmatpush.bf16.msra.mxu0 %v1176
  %1274 = vmatpush.bf16.msra.mxu0 %v1172
  %1275 = vmatpush.bf16.msra.mxu0 %v1168
  %1276 = vmatmul.bf16.gmra.mxu0 0
  %v1277 = vpop.f32.mrf.mxu0
  %v1278 = vadd.f32 0.0, %v1277
  %v1279 = vpop.f32.mrf.mxu0
  %1280 = vdwg.mxu0
  %v1281 = vadd.f32 %v635, %v1239
  %v1282 = vadd.f32 %v664, %v1252
  %v1283 = vadd.f32 %v693, %v1265
  %v1284 = vadd.f32 %v722, %v1278
  %v1285 = vxor.u32 %v1281, 2147483648
  %v1286 = vmul.f32 %v1285, 1.442695
  %v1287 = vpow.pop %v1286
  %v1288 = vadd.f32 %v1287, 1.0
  %v1289 = vrcp.pop %v1288
  %v1290 = vmul.f32 %v1288, %v1289
  %v1291 = vsub.f32 1.0, %v1290
  %v1292 = vmul.f32 %v1289, %v1291
  %v1293 = vadd.f32 %v1289, %v1292
  %vm1294 = vweird.f32 %v1288
  %vm1295 = vweird.f32 %v1289
  %vm1296 = vmor %vm1294, %vm1295
  %v1297 = vsel %vm1296, %v1289, %v1293
  %v1298 = vand.u32 2147483647, %v1288
  %vm1299 = vcmp.eq.f32.partialorder %v1298, 8.507059e+37
  %v1300 = vand.u32 %v1288, 2147483648
  %v1301 = vor.u32 1.1754944e-38, %v1300
  %v1302 = vsel %vm1299, %v1301, %v1297
  %v1303 = vmul.f32 1.0, %v1302
  %v1304 = vxor.u32 %v1282, 2147483648
  %v1305 = vmul.f32 %v1304, 1.442695
  %v1306 = vpow.pop %v1305
  %v1307 = vadd.f32 %v1306, 1.0
  %v1308 = vrcp.pop %v1307
  %v1309 = vmul.f32 %v1307, %v1308
  %v1310 = vsub.f32 1.0, %v1309
  %v1311 = vmul.f32 %v1308, %v1310
  %v1312 = vadd.f32 %v1308, %v1311
  %vm1313 = vweird.f32 %v1307
  %vm1314 = vweird.f32 %v1308
  %vm1315 = vmor %vm1313, %vm1314
  %v1316 = vsel %vm1315, %v1308, %v1312
  %v1317 = vand.u32 2147483647, %v1307
  %vm1318 = vcmp.eq.f32.partialorder %v1317, 8.507059e+37
  %v1319 = vand.u32 %v1307, 2147483648
  %v1320 = vor.u32 1.1754944e-38, %v1319
  %v1321 = vsel %vm1318, %v1320, %v1316
  %v1322 = vmul.f32 1.0, %v1321
  %v1323 = vtanh.pop %v1283
  %v1324 = vxor.u32 %v1284, 2147483648
  %v1325 = vmul.f32 %v1324, 1.442695
  %v1326 = vpow.pop %v1325
  %v1327 = vadd.f32 %v1326, 1.0
  %v1328 = vrcp.pop %v1327
  %v1329 = vmul.f32 %v1327, %v1328
  %v1330 = vsub.f32 1.0, %v1329
  %v1331 = vmul.f32 %v1328, %v1330
  %v1332 = vadd.f32 %v1328, %v1331
  %vm1333 = vweird.f32 %v1327
  %vm1334 = vweird.f32 %v1328
  %vm1335 = vmor %vm1333, %vm1334
  %v1336 = vsel %vm1335, %v1328, %v1332
  %v1337 = vand.u32 2147483647, %v1327
  %vm1338 = vcmp.eq.f32.partialorder %v1337, 8.507059e+37
  %v1339 = vand.u32 %v1327, 2147483648
  %v1340 = vor.u32 1.1754944e-38, %v1339
  %v1341 = vsel %vm1338, %v1340, %v1336
  %v1342 = vmul.f32 1.0, %v1341
  %v1343 = vmul.f32 %v1322, 0.0
  %v1344 = vmul.f32 %v1303, %v1323
  %v1345 = vadd.f32 %v1343, %v1344
  %v1346 = vtanh.pop %v1345
  %v1347 = vmul.f32 %v1342, %v1346
  %v1348 = vsel %vm57, %v1347, 0.0
  %v1349 = vsel %vm57, %v1345, 0.0
  %1350 = vst [vmem:[#allocation2] sm:$0xff] %v1067
  %1351 = vst [vmem:[#allocation2 + $0x78] sm:$0xff] %v1348
  %v1352 = vpack.c.bf16 %v1067, %v1067
  %1353 = vmatpush.bf16.msra.mxu0 %v912
  %1354 = vmatpush.bf16.msra.mxu0 %v908
  %1355 = vmatpush.bf16.msra.mxu0 %v904
  %1356 = vmatpush.bf16.msra.mxu0 %v900
  %1357 = vmatpush.bf16.msra.mxu0 %v896
  %1358 = vmatpush.bf16.msra.mxu0 %v892
  %1359 = vmatpush.bf16.msra.mxu0 %v888
  %1360 = vmatpush.bf16.msra.mxu0 %v884
  %1361 = vmatmul.bf16.gmra.mxu0 %v1352
  %v1362 = vpop.f32.mrf.mxu0
  %v1363 = vadd.f32 0.0, %v1362
  %v1364 = vpop.f32.mrf.mxu0
  %1365 = vdwg.mxu0
  %1366 = vmatpush.bf16.msra.mxu0 %v913
  %1367 = vmatpush.bf16.msra.mxu0 %v909
  %1368 = vmatpush.bf16.msra.mxu0 %v905
  %1369 = vmatpush.bf16.msra.mxu0 %v901
  %1370 = vmatpush.bf16.msra.mxu0 %v897
  %1371 = vmatpush.bf16.msra.mxu0 %v893
  %1372 = vmatpush.bf16.msra.mxu0 %v889
  %1373 = vmatpush.bf16.msra.mxu0 %v885
  %1374 = vmatmul.bf16.gmra.mxu0 %v1352
  %v1375 = vpop.f32.mrf.mxu0
  %v1376 = vadd.f32 0.0, %v1375
  %v1377 = vpop.f32.mrf.mxu0
  %1378 = vdwg.mxu0
  %1379 = vmatpush.bf16.msra.mxu0 %v914
  %1380 = vmatpush.bf16.msra.mxu0 %v910
  %1381 = vmatpush.bf16.msra.mxu0 %v906
  %1382 = vmatpush.bf16.msra.mxu0 %v902
  %1383 = vmatpush.bf16.msra.mxu0 %v898
  %1384 = vmatpush.bf16.msra.mxu0 %v894
  %1385 = vmatpush.bf16.msra.mxu0 %v890
  %1386 = vmatpush.bf16.msra.mxu0 %v886
  %1387 = vmatmul.bf16.gmra.mxu0 %v1352
  %v1388 = vpop.f32.mrf.mxu0
  %v1389 = vadd.f32 0.0, %v1388
  %v1390 = vpop.f32.mrf.mxu0
  %1391 = vdwg.mxu0
  %1392 = vmatpush.bf16.msra.mxu0 %v915
  %1393 = vmatpush.bf16.msra.mxu0 %v911
  %1394 = vmatpush.bf16.msra.mxu0 %v907
  %1395 = vmatpush.bf16.msra.mxu0 %v903
  %1396 = vmatpush.bf16.msra.mxu0 %v899
  %1397 = vmatpush.bf16.msra.mxu0 %v895
  %1398 = vmatpush.bf16.msra.mxu0 %v891
  %1399 = vmatpush.bf16.msra.mxu0 %v887
  %1400 = vmatmul.bf16.gmra.mxu0 %v1352
  %v1401 = vpop.f32.mrf.mxu0
  %v1402 = vadd.f32 0.0, %v1401
  %v1403 = vpop.f32.mrf.mxu0
  %1404 = vdwg.mxu0
  %v1405 = vadd.f32 %v504, %v1363
  %v1406 = vadd.f32 %v533, %v1376
  %v1407 = vadd.f32 %v562, %v1389
  %v1408 = vadd.f32 %v591, %v1402
  %v1409 = vxor.u32 %v1405, 2147483648
  %v1410 = vmul.f32 %v1409, 1.442695
  %v1411 = vpow.pop %v1410
  %v1412 = vadd.f32 %v1411, 1.0
  %v1413 = vrcp.pop %v1412
  %v1414 = vmul.f32 %v1412, %v1413
  %v1415 = vsub.f32 1.0, %v1414
  %v1416 = vmul.f32 %v1413, %v1415
  %v1417 = vadd.f32 %v1413, %v1416
  %vm1418 = vweird.f32 %v1412
  %vm1419 = vweird.f32 %v1413
  %vm1420 = vmor %vm1418, %vm1419
  %v1421 = vsel %vm1420, %v1413, %v1417
  %v1422 = vand.u32 2147483647, %v1412
  %vm1423 = vcmp.eq.f32.partialorder %v1422, 8.507059e+37
  %v1424 = vand.u32 %v1412, 2147483648
  %v1425 = vor.u32 1.1754944e-38, %v1424
  %v1426 = vsel %vm1423, %v1425, %v1421
  %v1427 = vmul.f32 1.0, %v1426
  %v1428 = vxor.u32 %v1406, 2147483648
  %v1429 = vmul.f32 %v1428, 1.442695
  %v1430 = vpow.pop %v1429
  %v1431 = vadd.f32 %v1430, 1.0
  %v1432 = vrcp.pop %v1431
  %v1433 = vmul.f32 %v1431, %v1432
  %v1434 = vsub.f32 1.0, %v1433
  %v1435 = vmul.f32 %v1432, %v1434
  %v1436 = vadd.f32 %v1432, %v1435
  %vm1437 = vweird.f32 %v1431
  %vm1438 = vweird.f32 %v1432
  %vm1439 = vmor %vm1437, %vm1438
  %v1440 = vsel %vm1439, %v1432, %v1436
  %v1441 = vand.u32 2147483647, %v1431
  %vm1442 = vcmp.eq.f32.partialorder %v1441, 8.507059e+37
  %v1443 = vand.u32 %v1431, 2147483648
  %v1444 = vor.u32 1.1754944e-38, %v1443
  %v1445 = vsel %vm1442, %v1444, %v1440
  %v1446 = vmul.f32 1.0, %v1445
  %v1447 = vtanh.pop %v1407
  %v1448 = vxor.u32 %v1408, 2147483648
  %v1449 = vmul.f32 %v1448, 1.442695
  %v1450 = vpow.pop %v1449
  %v1451 = vadd.f32 %v1450, 1.0
  %v1452 = vrcp.pop %v1451
  %v1453 = vmul.f32 %v1451, %v1452
  %v1454 = vsub.f32 1.0, %v1453
  %v1455 = vmul.f32 %v1452, %v1454
  %v1456 = vadd.f32 %v1452, %v1455
  %vm1457 = vweird.f32 %v1451
  %vm1458 = vweird.f32 %v1452
  %vm1459 = vmor %vm1457, %vm1458
  %v1460 = vsel %vm1459, %v1452, %v1456
  %v1461 = vand.u32 2147483647, %v1451
  %vm1462 = vcmp.eq.f32.partialorder %v1461, 8.507059e+37
  %v1463 = vand.u32 %v1451, 2147483648
  %v1464 = vor.u32 1.1754944e-38, %v1463
  %v1465 = vsel %vm1462, %v1464, %v1460
  %v1466 = vmul.f32 1.0, %v1465
  %v1467 = vmul.f32 %v1446, %v1068
  %v1468 = vmul.f32 %v1427, %v1447
  %v1469 = vadd.f32 %v1467, %v1468
  %v1470 = vtanh.pop %v1469
  %v1471 = vmul.f32 %v1466, %v1470
  %v1472 = vsel %vm51, %v1471, %v1067
  %v1473 = vsel %vm51, %v1469, %v1068
  %v1474 = vpack.c.bf16 %v1348, %v1348
  %1475 = vmatpush.bf16.msra.mxu0 %v1193
  %1476 = vmatpush.bf16.msra.mxu0 %v1189
  %1477 = vmatpush.bf16.msra.mxu0 %v1185
  %1478 = vmatpush.bf16.msra.mxu0 %v1181
  %1479 = vmatpush.bf16.msra.mxu0 %v1177
  %1480 = vmatpush.bf16.msra.mxu0 %v1173
  %1481 = vmatpush.bf16.msra.mxu0 %v1169
  %1482 = vmatpush.bf16.msra.mxu0 %v1165
  %1483 = vmatmul.bf16.gmra.mxu0 %v1474
  %v1484 = vpop.f32.mrf.mxu0
  %v1485 = vadd.f32 0.0, %v1484
  %v1486 = vpop.f32.mrf.mxu0
  %1487 = vdwg.mxu0
  %1488 = vmatpush.bf16.msra.mxu0 %v1194
  %1489 = vmatpush.bf16.msra.mxu0 %v1190
  %1490 = vmatpush.bf16.msra.mxu0 %v1186
  %1491 = vmatpush.bf16.msra.mxu0 %v1182
  %1492 = vmatpush.bf16.msra.mxu0 %v1178
  %1493 = vmatpush.bf16.msra.mxu0 %v1174
  %1494 = vmatpush.bf16.msra.mxu0 %v1170
  %1495 = vmatpush.bf16.msra.mxu0 %v1166
  %1496 = vmatmul.bf16.gmra.mxu0 %v1474
  %v1497 = vpop.f32.mrf.mxu0
  %v1498 = vadd.f32 0.0, %v1497
  %v1499 = vpop.f32.mrf.mxu0
  %1500 = vdwg.mxu0
  %1501 = vmatpush.bf16.msra.mxu0 %v1195
  %1502 = vmatpush.bf16.msra.mxu0 %v1191
  %1503 = vmatpush.bf16.msra.mxu0 %v1187
  %1504 = vmatpush.bf16.msra.mxu0 %v1183
  %1505 = vmatpush.bf16.msra.mxu0 %v1179
  %1506 = vmatpush.bf16.msra.mxu0 %v1175
  %1507 = vmatpush.bf16.msra.mxu0 %v1171
  %1508 = vmatpush.bf16.msra.mxu0 %v1167
  %1509 = vmatmul.bf16.gmra.mxu0 %v1474
  %v1510 = vpop.f32.mrf.mxu0
  %v1511 = vadd.f32 0.0, %v1510
  %v1512 = vpop.f32.mrf.mxu0
  %1513 = vdwg.mxu0
  %1514 = vmatpush.bf16.msra.mxu0 %v1196
  %1515 = vmatpush.bf16.msra.mxu0 %v1192
  %1516 = vmatpush.bf16.msra.mxu0 %v1188
  %1517 = vmatpush.bf16.msra.mxu0 %v1184
  %1518 = vmatpush.bf16.msra.mxu0 %v1180
  %1519 = vmatpush.bf16.msra.mxu0 %v1176
  %1520 = vmatpush.bf16.msra.mxu0 %v1172
  %1521 = vmatpush.bf16.msra.mxu0 %v1168
  %1522 = vmatmul.bf16.gmra.mxu0 %v1474
  %v1523 = vpop.f32.mrf.mxu0
  %v1524 = vadd.f32 0.0, %v1523
  %v1525 = vpop.f32.mrf.mxu0
  %1526 = vdwg.mxu0
  %v1527 = vadd.f32 %v633, %v1485
  %v1528 = vadd.f32 %v662, %v1498
  %v1529 = vadd.f32 %v691, %v1511
  %v1530 = vadd.f32 %v720, %v1524
  %v1531 = vxor.u32 %v1527, 2147483648
  %v1532 = vmul.f32 %v1531, 1.442695
  %v1533 = vpow.pop %v1532
  %v1534 = vadd.f32 %v1533, 1.0
  %v1535 = vrcp.pop %v1534
  %v1536 = vmul.f32 %v1534, %v1535
  %v1537 = vsub.f32 1.0, %v1536
  %v1538 = vmul.f32 %v1535, %v1537
  %v1539 = vadd.f32 %v1535, %v1538
  %vm1540 = vweird.f32 %v1534
  %vm1541 = vweird.f32 %v1535
  %vm1542 = vmor %vm1540, %vm1541
  %v1543 = vsel %vm1542, %v1535, %v1539
  %v1544 = vand.u32 2147483647, %v1534
  %vm1545 = vcmp.eq.f32.partialorder %v1544, 8.507059e+37
  %v1546 = vand.u32 %v1534, 2147483648
  %v1547 = vor.u32 1.1754944e-38, %v1546
  %v1548 = vsel %vm1545, %v1547, %v1543
  %v1549 = vmul.f32 1.0, %v1548
  %v1550 = vxor.u32 %v1528, 2147483648
  %v1551 = vmul.f32 %v1550, 1.442695
  %v1552 = vpow.pop %v1551
  %v1553 = vadd.f32 %v1552, 1.0
  %v1554 = vrcp.pop %v1553
  %v1555 = vmul.f32 %v1553, %v1554
  %v1556 = vsub.f32 1.0, %v1555
  %v1557 = vmul.f32 %v1554, %v1556
  %v1558 = vadd.f32 %v1554, %v1557
  %vm1559 = vweird.f32 %v1553
  %vm1560 = vweird.f32 %v1554
  %vm1561 = vmor %vm1559, %vm1560
  %v1562 = vsel %vm1561, %v1554, %v1558
  %v1563 = vand.u32 2147483647, %v1553
  %vm1564 = vcmp.eq.f32.partialorder %v1563, 8.507059e+37
  %v1565 = vand.u32 %v1553, 2147483648
  %v1566 = vor.u32 1.1754944e-38, %v1565
  %v1567 = vsel %vm1564, %v1566, %v1562
  %v1568 = vmul.f32 1.0, %v1567
  %v1569 = vtanh.pop %v1529
  %v1570 = vxor.u32 %v1530, 2147483648
  %v1571 = vmul.f32 %v1570, 1.442695
  %v1572 = vpow.pop %v1571
  %v1573 = vadd.f32 %v1572, 1.0
  %v1574 = vrcp.pop %v1573
  %v1575 = vmul.f32 %v1573, %v1574
  %v1576 = vsub.f32 1.0, %v1575
  %v1577 = vmul.f32 %v1574, %v1576
  %v1578 = vadd.f32 %v1574, %v1577
  %vm1579 = vweird.f32 %v1573
  %vm1580 = vweird.f32 %v1574
  %vm1581 = vmor %vm1579, %vm1580
  %v1582 = vsel %vm1581, %v1574, %v1578
  %v1583 = vand.u32 2147483647, %v1573
  %vm1584 = vcmp.eq.f32.partialorder %v1583, 8.507059e+37
  %v1585 = vand.u32 %v1573, 2147483648
  %v1586 = vor.u32 1.1754944e-38, %v1585
  %v1587 = vsel %vm1584, %v1586, %v1582
  %v1588 = vmul.f32 1.0, %v1587
  %v1589 = vmul.f32 %v1568, %v1349
  %v1590 = vmul.f32 %v1549, %v1569
  %v1591 = vadd.f32 %v1589, %v1590
  %v1592 = vtanh.pop %v1591
  %v1593 = vmul.f32 %v1588, %v1592
  %v1594 = vsel %vm56, %v1593, %v1348
  %v1595 = vsel %vm56, %v1591, %v1349
  %1596 = vst [vmem:[#allocation2 + $0x10] sm:$0xff] %v1472
  %1597 = vst [vmem:[#allocation2 + $0x68] sm:$0xff] %v1594
  %v1598 = vpack.c.bf16 %v1472, %v1472
  %1599 = vmatpush.bf16.msra.mxu0 %v912
  %1600 = vmatpush.bf16.msra.mxu0 %v908
  %1601 = vmatpush.bf16.msra.mxu0 %v904
  %1602 = vmatpush.bf16.msra.mxu0 %v900
  %1603 = vmatpush.bf16.msra.mxu0 %v896
  %1604 = vmatpush.bf16.msra.mxu0 %v892
  %1605 = vmatpush.bf16.msra.mxu0 %v888
  %1606 = vmatpush.bf16.msra.mxu0 %v884
  %1607 = vmatmul.bf16.gmra.mxu0 %v1598
  %v1608 = vpop.f32.mrf.mxu0
  %v1609 = vadd.f32 0.0, %v1608
  %v1610 = vpop.f32.mrf.mxu0
  %1611 = vdwg.mxu0
  %1612 = vmatpush.bf16.msra.mxu0 %v913
  %1613 = vmatpush.bf16.msra.mxu0 %v909
  %1614 = vmatpush.bf16.msra.mxu0 %v905
  %1615 = vmatpush.bf16.msra.mxu0 %v901
  %1616 = vmatpush.bf16.msra.mxu0 %v897
  %1617 = vmatpush.bf16.msra.mxu0 %v893
  %1618 = vmatpush.bf16.msra.mxu0 %v889
  %1619 = vmatpush.bf16.msra.mxu0 %v885
  %1620 = vmatmul.bf16.gmra.mxu0 %v1598
  %v1621 = vpop.f32.mrf.mxu0
  %v1622 = vadd.f32 0.0, %v1621
  %v1623 = vpop.f32.mrf.mxu0
  %1624 = vdwg.mxu0
  %1625 = vmatpush.bf16.msra.mxu0 %v914
  %1626 = vmatpush.bf16.msra.mxu0 %v910
  %1627 = vmatpush.bf16.msra.mxu0 %v906
  %1628 = vmatpush.bf16.msra.mxu0 %v902
  %1629 = vmatpush.bf16.msra.mxu0 %v898
  %1630 = vmatpush.bf16.msra.mxu0 %v894
  %1631 = vmatpush.bf16.msra.mxu0 %v890
  %1632 = vmatpush.bf16.msra.mxu0 %v886
  %1633 = vmatmul.bf16.gmra.mxu0 %v1598
  %v1634 = vpop.f32.mrf.mxu0
  %v1635 = vadd.f32 0.0, %v1634
  %v1636 = vpop.f32.mrf.mxu0
  %1637 = vdwg.mxu0
  %1638 = vmatpush.bf16.msra.mxu0 %v915
  %1639 = vmatpush.bf16.msra.mxu0 %v911
  %1640 = vmatpush.bf16.msra.mxu0 %v907
  %1641 = vmatpush.bf16.msra.mxu0 %v903
  %1642 = vmatpush.bf16.msra.mxu0 %v899
  %1643 = vmatpush.bf16.msra.mxu0 %v895
  %1644 = vmatpush.bf16.msra.mxu0 %v891
  %1645 = vmatpush.bf16.msra.mxu0 %v887
  %1646 = vmatmul.bf16.gmra.mxu0 %v1598
  %v1647 = vpop.f32.mrf.mxu0
  %v1648 = vadd.f32 0.0, %v1647
  %v1649 = vpop.f32.mrf.mxu0
  %1650 = vdwg.mxu0
  %v1651 = vadd.f32 %v507, %v1609
  %v1652 = vadd.f32 %v536, %v1622
  %v1653 = vadd.f32 %v565, %v1635
  %v1654 = vadd.f32 %v594, %v1648
  %v1655 = vxor.u32 %v1651, 2147483648
  %v1656 = vmul.f32 %v1655, 1.442695
  %v1657 = vpow.pop %v1656
  %v1658 = vadd.f32 %v1657, 1.0
  %v1659 = vrcp.pop %v1658
  %v1660 = vmul.f32 %v1658, %v1659
  %v1661 = vsub.f32 1.0, %v1660
  %v1662 = vmul.f32 %v1659, %v1661
  %v1663 = vadd.f32 %v1659, %v1662
  %vm1664 = vweird.f32 %v1658
  %vm1665 = vweird.f32 %v1659
  %vm1666 = vmor %vm1664, %vm1665
  %v1667 = vsel %vm1666, %v1659, %v1663
  %v1668 = vand.u32 2147483647, %v1658
  %vm1669 = vcmp.eq.f32.partialorder %v1668, 8.507059e+37
  %v1670 = vand.u32 %v1658, 2147483648
  %v1671 = vor.u32 1.1754944e-38, %v1670
  %v1672 = vsel %vm1669, %v1671, %v1667
  %v1673 = vmul.f32 1.0, %v1672
  %v1674 = vxor.u32 %v1652, 2147483648
  %v1675 = vmul.f32 %v1674, 1.442695
  %v1676 = vpow.pop %v1675
  %v1677 = vadd.f32 %v1676, 1.0
  %v1678 = vrcp.pop %v1677
  %v1679 = vmul.f32 %v1677, %v1678
  %v1680 = vsub.f32 1.0, %v1679
  %v1681 = vmul.f32 %v1678, %v1680
  %v1682 = vadd.f32 %v1678, %v1681
  %vm1683 = vweird.f32 %v1677
  %vm1684 = vweird.f32 %v1678
  %vm1685 = vmor %vm1683, %vm1684
  %v1686 = vsel %vm1685, %v1678, %v1682
  %v1687 = vand.u32 2147483647, %v1677
  %vm1688 = vcmp.eq.f32.partialorder %v1687, 8.507059e+37
  %v1689 = vand.u32 %v1677, 2147483648
  %v1690 = vor.u32 1.1754944e-38, %v1689
  %v1691 = vsel %vm1688, %v1690, %v1686
  %v1692 = vmul.f32 1.0, %v1691
  %v1693 = vtanh.pop %v1653
  %v1694 = vxor.u32 %v1654, 2147483648
  %v1695 = vmul.f32 %v1694, 1.442695
  %v1696 = vpow.pop %v1695
  %v1697 = vadd.f32 %v1696, 1.0
  %v1698 = vrcp.pop %v1697
  %v1699 = vmul.f32 %v1697, %v1698
  %v1700 = vsub.f32 1.0, %v1699
  %v1701 = vmul.f32 %v1698, %v1700
  %v1702 = vadd.f32 %v1698, %v1701
  %vm1703 = vweird.f32 %v1697
  %vm1704 = vweird.f32 %v1698
  %vm1705 = vmor %vm1703, %vm1704
  %v1706 = vsel %vm1705, %v1698, %v1702
  %v1707 = vand.u32 2147483647, %v1697
  %vm1708 = vcmp.eq.f32.partialorder %v1707, 8.507059e+37
  %v1709 = vand.u32 %v1697, 2147483648
  %v1710 = vor.u32 1.1754944e-38, %v1709
  %v1711 = vsel %vm1708, %v1710, %v1706
  %v1712 = vmul.f32 1.0, %v1711
  %v1713 = vmul.f32 %v1692, %v1473
  %v1714 = vmul.f32 %v1673, %v1693
  %v1715 = vadd.f32 %v1713, %v1714
  %v1716 = vtanh.pop %v1715
  %v1717 = vmul.f32 %v1712, %v1716
  %v1718 = vsel %vm52, %v1717, %v1472
  %v1719 = vsel %vm52, %v1715, %v1473
  %v1720 = vpack.c.bf16 %v1594, %v1594
  %1721 = vmatpush.bf16.msra.mxu0 %v1193
  %1722 = vmatpush.bf16.msra.mxu0 %v1189
  %1723 = vmatpush.bf16.msra.mxu0 %v1185
  %1724 = vmatpush.bf16.msra.mxu0 %v1181
  %1725 = vmatpush.bf16.msra.mxu0 %v1177
  %1726 = vmatpush.bf16.msra.mxu0 %v1173
  %1727 = vmatpush.bf16.msra.mxu0 %v1169
  %1728 = vmatpush.bf16.msra.mxu0 %v1165
  %1729 = vmatmul.bf16.gmra.mxu0 %v1720
  %v1730 = vpop.f32.mrf.mxu0
  %v1731 = vadd.f32 0.0, %v1730
  %v1732 = vpop.f32.mrf.mxu0
  %1733 = vdwg.mxu0
  %1734 = vmatpush.bf16.msra.mxu0 %v1194
  %1735 = vmatpush.bf16.msra.mxu0 %v1190
  %1736 = vmatpush.bf16.msra.mxu0 %v1186
  %1737 = vmatpush.bf16.msra.mxu0 %v1182
  %1738 = vmatpush.bf16.msra.mxu0 %v1178
  %1739 = vmatpush.bf16.msra.mxu0 %v1174
  %1740 = vmatpush.bf16.msra.mxu0 %v1170
  %1741 = vmatpush.bf16.msra.mxu0 %v1166
  %1742 = vmatmul.bf16.gmra.mxu0 %v1720
  %v1743 = vpop.f32.mrf.mxu0
  %v1744 = vadd.f32 0.0, %v1743
  %v1745 = vpop.f32.mrf.mxu0
  %1746 = vdwg.mxu0
  %1747 = vmatpush.bf16.msra.mxu0 %v1195
  %1748 = vmatpush.bf16.msra.mxu0 %v1191
  %1749 = vmatpush.bf16.msra.mxu0 %v1187
  %1750 = vmatpush.bf16.msra.mxu0 %v1183
  %1751 = vmatpush.bf16.msra.mxu0 %v1179
  %1752 = vmatpush.bf16.msra.mxu0 %v1175
  %1753 = vmatpush.bf16.msra.mxu0 %v1171
  %1754 = vmatpush.bf16.msra.mxu0 %v1167
  %1755 = vmatmul.bf16.gmra.mxu0 %v1720
  %v1756 = vpop.f32.mrf.mxu0
  %v1757 = vadd.f32 0.0, %v1756
  %v1758 = vpop.f32.mrf.mxu0
  %1759 = vdwg.mxu0
  %1760 = vmatpush.bf16.msra.mxu0 %v1196
  %1761 = vmatpush.bf16.msra.mxu0 %v1192
  %1762 = vmatpush.bf16.msra.mxu0 %v1188
  %1763 = vmatpush.bf16.msra.mxu0 %v1184
  %1764 = vmatpush.bf16.msra.mxu0 %v1180
  %1765 = vmatpush.bf16.msra.mxu0 %v1176
  %1766 = vmatpush.bf16.msra.mxu0 %v1172
  %1767 = vmatpush.bf16.msra.mxu0 %v1168
  %1768 = vmatmul.bf16.gmra.mxu0 %v1720
  %v1769 = vpop.f32.mrf.mxu0
  %v1770 = vadd.f32 0.0, %v1769
  %v1771 = vpop.f32.mrf.mxu0
  %1772 = vdwg.mxu0
  %v1773 = vadd.f32 %v630, %v1731
  %v1774 = vadd.f32 %v659, %v1744
  %v1775 = vadd.f32 %v688, %v1757
  %v1776 = vadd.f32 %v717, %v1770
  %v1777 = vxor.u32 %v1773, 2147483648
  %v1778 = vmul.f32 %v1777, 1.442695
  %v1779 = vpow.pop %v1778
  %v1780 = vadd.f32 %v1779, 1.0
  %v1781 = vrcp.pop %v1780
  %v1782 = vmul.f32 %v1780, %v1781
  %v1783 = vsub.f32 1.0, %v1782
  %v1784 = vmul.f32 %v1781, %v1783
  %v1785 = vadd.f32 %v1781, %v1784
  %vm1786 = vweird.f32 %v1780
  %vm1787 = vweird.f32 %v1781
  %vm1788 = vmor %vm1786, %vm1787
  %v1789 = vsel %vm1788, %v1781, %v1785
  %v1790 = vand.u32 2147483647, %v1780
  %vm1791 = vcmp.eq.f32.partialorder %v1790, 8.507059e+37
  %v1792 = vand.u32 %v1780, 2147483648
  %v1793 = vor.u32 1.1754944e-38, %v1792
  %v1794 = vsel %vm1791, %v1793, %v1789
  %v1795 = vmul.f32 1.0, %v1794
  %v1796 = vxor.u32 %v1774, 2147483648
  %v1797 = vmul.f32 %v1796, 1.442695
  %v1798 = vpow.pop %v1797
  %v1799 = vadd.f32 %v1798, 1.0
  %v1800 = vrcp.pop %v1799
  %v1801 = vmul.f32 %v1799, %v1800
  %v1802 = vsub.f32 1.0, %v1801
  %v1803 = vmul.f32 %v1800, %v1802
  %v1804 = vadd.f32 %v1800, %v1803
  %vm1805 = vweird.f32 %v1799
  %vm1806 = vweird.f32 %v1800
  %vm1807 = vmor %vm1805, %vm1806
  %v1808 = vsel %vm1807, %v1800, %v1804
  %v1809 = vand.u32 2147483647, %v1799
  %vm1810 = vcmp.eq.f32.partialorder %v1809, 8.507059e+37
  %v1811 = vand.u32 %v1799, 2147483648
  %v1812 = vor.u32 1.1754944e-38, %v1811
  %v1813 = vsel %vm1810, %v1812, %v1808
  %v1814 = vmul.f32 1.0, %v1813
  %v1815 = vtanh.pop %v1775
  %v1816 = vxor.u32 %v1776, 2147483648
  %v1817 = vmul.f32 %v1816, 1.442695
  %v1818 = vpow.pop %v1817
  %v1819 = vadd.f32 %v1818, 1.0
  %v1820 = vrcp.pop %v1819
  %v1821 = vmul.f32 %v1819, %v1820
  %v1822 = vsub.f32 1.0, %v1821
  %v1823 = vmul.f32 %v1820, %v1822
  %v1824 = vadd.f32 %v1820, %v1823
  %vm1825 = vweird.f32 %v1819
  %vm1826 = vweird.f32 %v1820
  %vm1827 = vmor %vm1825, %vm1826
  %v1828 = vsel %vm1827, %v1820, %v1824
  %v1829 = vand.u32 2147483647, %v1819
  %vm1830 = vcmp.eq.f32.partialorder %v1829, 8.507059e+37
  %v1831 = vand.u32 %v1819, 2147483648
  %v1832 = vor.u32 1.1754944e-38, %v1831
  %v1833 = vsel %vm1830, %v1832, %v1828
  %v1834 = vmul.f32 1.0, %v1833
  %v1835 = vmul.f32 %v1814, %v1595
  %v1836 = vmul.f32 %v1795, %v1815
  %v1837 = vadd.f32 %v1835, %v1836
  %v1838 = vtanh.pop %v1837
  %v1839 = vmul.f32 %v1834, %v1838
  %v1840 = vsel %vm55, %v1839, %v1594
  %v1841 = vsel %vm55, %v1837, %v1595
  %1842 = vst [vmem:[#allocation2 + $0x20] sm:$0xff] %v1718
  %1843 = vst [vmem:[#allocation2 + $0x58] sm:$0xff] %v1840
  %v1844 = vpack.c.bf16 %v1718, %v1718
  %1845 = vmatpush.bf16.msra.mxu0 %v912
  %1846 = vmatpush.bf16.msra.mxu0 %v908
  %1847 = vmatpush.bf16.msra.mxu0 %v904
  %1848 = vmatpush.bf16.msra.mxu0 %v900
  %1849 = vmatpush.bf16.msra.mxu0 %v896
  %1850 = vmatpush.bf16.msra.mxu0 %v892
  %1851 = vmatpush.bf16.msra.mxu0 %v888
  %1852 = vmatpush.bf16.msra.mxu0 %v884
  %1853 = vmatmul.bf16.gmra.mxu0 %v1844
  %v1854 = vpop.f32.mrf.mxu0
  %v1855 = vadd.f32 0.0, %v1854
  %v1856 = vpop.f32.mrf.mxu0
  %1857 = vdwg.mxu0
  %1858 = vmatpush.bf16.msra.mxu0 %v913
  %1859 = vmatpush.bf16.msra.mxu0 %v909
  %1860 = vmatpush.bf16.msra.mxu0 %v905
  %1861 = vmatpush.bf16.msra.mxu0 %v901
  %1862 = vmatpush.bf16.msra.mxu0 %v897
  %1863 = vmatpush.bf16.msra.mxu0 %v893
  %1864 = vmatpush.bf16.msra.mxu0 %v889
  %1865 = vmatpush.bf16.msra.mxu0 %v885
  %1866 = vmatmul.bf16.gmra.mxu0 %v1844
  %v1867 = vpop.f32.mrf.mxu0
  %v1868 = vadd.f32 0.0, %v1867
  %v1869 = vpop.f32.mrf.mxu0
  %1870 = vdwg.mxu0
  %1871 = vmatpush.bf16.msra.mxu0 %v914
  %1872 = vmatpush.bf16.msra.mxu0 %v910
  %1873 = vmatpush.bf16.msra.mxu0 %v906
  %1874 = vmatpush.bf16.msra.mxu0 %v902
  %1875 = vmatpush.bf16.msra.mxu0 %v898
  %1876 = vmatpush.bf16.msra.mxu0 %v894
  %1877 = vmatpush.bf16.msra.mxu0 %v890
  %1878 = vmatpush.bf16.msra.mxu0 %v886
  %1879 = vmatmul.bf16.gmra.mxu0 %v1844
  %v1880 = vpop.f32.mrf.mxu0
  %v1881 = vadd.f32 0.0, %v1880
  %v1882 = vpop.f32.mrf.mxu0
  %1883 = vdwg.mxu0
  %1884 = vmatpush.bf16.msra.mxu0 %v915
  %1885 = vmatpush.bf16.msra.mxu0 %v911
  %1886 = vmatpush.bf16.msra.mxu0 %v907
  %1887 = vmatpush.bf16.msra.mxu0 %v903
  %1888 = vmatpush.bf16.msra.mxu0 %v899
  %1889 = vmatpush.bf16.msra.mxu0 %v895
  %1890 = vmatpush.bf16.msra.mxu0 %v891
  %1891 = vmatpush.bf16.msra.mxu0 %v887
  %1892 = vmatmul.bf16.gmra.mxu0 %v1844
  %v1893 = vpop.f32.mrf.mxu0
  %v1894 = vadd.f32 0.0, %v1893
  %v1895 = vpop.f32.mrf.mxu0
  %1896 = vdwg.mxu0
  %v1897 = vadd.f32 %v509, %v1855
  %v1898 = vadd.f32 %v538, %v1868
  %v1899 = vadd.f32 %v567, %v1881
  %v1900 = vadd.f32 %v596, %v1894
  %v1901 = vxor.u32 %v1897, 2147483648
  %v1902 = vmul.f32 %v1901, 1.442695
  %v1903 = vpow.pop %v1902
  %v1904 = vadd.f32 %v1903, 1.0
  %v1905 = vrcp.pop %v1904
  %v1906 = vmul.f32 %v1904, %v1905
  %v1907 = vsub.f32 1.0, %v1906
  %v1908 = vmul.f32 %v1905, %v1907
  %v1909 = vadd.f32 %v1905, %v1908
  %vm1910 = vweird.f32 %v1904
  %vm1911 = vweird.f32 %v1905
  %vm1912 = vmor %vm1910, %vm1911
  %v1913 = vsel %vm1912, %v1905, %v1909
  %v1914 = vand.u32 2147483647, %v1904
  %vm1915 = vcmp.eq.f32.partialorder %v1914, 8.507059e+37
  %v1916 = vand.u32 %v1904, 2147483648
  %v1917 = vor.u32 1.1754944e-38, %v1916
  %v1918 = vsel %vm1915, %v1917, %v1913
  %v1919 = vmul.f32 1.0, %v1918
  %v1920 = vxor.u32 %v1898, 2147483648
  %v1921 = vmul.f32 %v1920, 1.442695
  %v1922 = vpow.pop %v1921
  %v1923 = vadd.f32 %v1922, 1.0
  %v1924 = vrcp.pop %v1923
  %v1925 = vmul.f32 %v1923, %v1924
  %v1926 = vsub.f32 1.0, %v1925
  %v1927 = vmul.f32 %v1924, %v1926
  %v1928 = vadd.f32 %v1924, %v1927
  %vm1929 = vweird.f32 %v1923
  %vm1930 = vweird.f32 %v1924
  %vm1931 = vmor %vm1929, %vm1930
  %v1932 = vsel %vm1931, %v1924, %v1928
  %v1933 = vand.u32 2147483647, %v1923
  %vm1934 = vcmp.eq.f32.partialorder %v1933, 8.507059e+37
  %v1935 = vand.u32 %v1923, 2147483648
  %v1936 = vor.u32 1.1754944e-38, %v1935
  %v1937 = vsel %vm1934, %v1936, %v1932
  %v1938 = vmul.f32 1.0, %v1937
  %v1939 = vtanh.pop %v1899
  %v1940 = vxor.u32 %v1900, 2147483648
  %v1941 = vmul.f32 %v1940, 1.442695
  %v1942 = vpow.pop %v1941
  %v1943 = vadd.f32 %v1942, 1.0
  %v1944 = vrcp.pop %v1943
  %v1945 = vmul.f32 %v1943, %v1944
  %v1946 = vsub.f32 1.0, %v1945
  %v1947 = vmul.f32 %v1944, %v1946
  %v1948 = vadd.f32 %v1944, %v1947
  %vm1949 = vweird.f32 %v1943
  %vm1950 = vweird.f32 %v1944
  %vm1951 = vmor %vm1949, %vm1950
  %v1952 = vsel %vm1951, %v1944, %v1948
  %v1953 = vand.u32 2147483647, %v1943
  %vm1954 = vcmp.eq.f32.partialorder %v1953, 8.507059e+37
  %v1955 = vand.u32 %v1943, 2147483648
  %v1956 = vor.u32 1.1754944e-38, %v1955
  %v1957 = vsel %vm1954, %v1956, %v1952
  %v1958 = vmul.f32 1.0, %v1957
  %v1959 = vmul.f32 %v1938, %v1719
  %v1960 = vmul.f32 %v1919, %v1939
  %v1961 = vadd.f32 %v1959, %v1960
  %v1962 = vtanh.pop %v1961
  %v1963 = vmul.f32 %v1958, %v1962
  %v1964 = vsel %vm53, %v1963, %v1718
  %v1965 = vsel %vm53, %v1961, %v1719
  %v1966 = vpack.c.bf16 %v1840, %v1840
  %1967 = vmatpush.bf16.msra.mxu0 %v1193
  %1968 = vmatpush.bf16.msra.mxu0 %v1189
  %1969 = vmatpush.bf16.msra.mxu0 %v1185
  %1970 = vmatpush.bf16.msra.mxu0 %v1181
  %1971 = vmatpush.bf16.msra.mxu0 %v1177
  %1972 = vmatpush.bf16.msra.mxu0 %v1173
  %1973 = vmatpush.bf16.msra.mxu0 %v1169
  %1974 = vmatpush.bf16.msra.mxu0 %v1165
  %1975 = vmatmul.bf16.gmra.mxu0 %v1966
  %v1976 = vpop.f32.mrf.mxu0
  %v1977 = vadd.f32 0.0, %v1976
  %v1978 = vpop.f32.mrf.mxu0
  %1979 = vdwg.mxu0
  %1980 = vmatpush.bf16.msra.mxu0 %v1194
  %1981 = vmatpush.bf16.msra.mxu0 %v1190
  %1982 = vmatpush.bf16.msra.mxu0 %v1186
  %1983 = vmatpush.bf16.msra.mxu0 %v1182
  %1984 = vmatpush.bf16.msra.mxu0 %v1178
  %1985 = vmatpush.bf16.msra.mxu0 %v1174
  %1986 = vmatpush.bf16.msra.mxu0 %v1170
  %1987 = vmatpush.bf16.msra.mxu0 %v1166
  %1988 = vmatmul.bf16.gmra.mxu0 %v1966
  %v1989 = vpop.f32.mrf.mxu0
  %v1990 = vadd.f32 0.0, %v1989
  %v1991 = vpop.f32.mrf.mxu0
  %1992 = vdwg.mxu0
  %1993 = vmatpush.bf16.msra.mxu0 %v1195
  %1994 = vmatpush.bf16.msra.mxu0 %v1191
  %1995 = vmatpush.bf16.msra.mxu0 %v1187
  %1996 = vmatpush.bf16.msra.mxu0 %v1183
  %1997 = vmatpush.bf16.msra.mxu0 %v1179
  %1998 = vmatpush.bf16.msra.mxu0 %v1175
  %1999 = vmatpush.bf16.msra.mxu0 %v1171
  %2000 = vmatpush.bf16.msra.mxu0 %v1167
  %2001 = vmatmul.bf16.gmra.mxu0 %v1966
  %v2002 = vpop.f32.mrf.mxu0
  %v2003 = vadd.f32 0.0, %v2002
  %v2004 = vpop.f32.mrf.mxu0
  %2005 = vdwg.mxu0
  %2006 = vmatpush.bf16.msra.mxu0 %v1196
  %2007 = vmatpush.bf16.msra.mxu0 %v1192
  %2008 = vmatpush.bf16.msra.mxu0 %v1188
  %2009 = vmatpush.bf16.msra.mxu0 %v1184
  %2010 = vmatpush.bf16.msra.mxu0 %v1180
  %2011 = vmatpush.bf16.msra.mxu0 %v1176
  %2012 = vmatpush.bf16.msra.mxu0 %v1172
  %2013 = vmatpush.bf16.msra.mxu0 %v1168
  %2014 = vmatmul.bf16.gmra.mxu0 %v1966
  %v2015 = vpop.f32.mrf.mxu0
  %v2016 = vadd.f32 0.0, %v2015
  %v2017 = vpop.f32.mrf.mxu0
  %2018 = vdwg.mxu0
  %v2019 = vadd.f32 %v628, %v1977
  %v2020 = vadd.f32 %v657, %v1990
  %v2021 = vadd.f32 %v686, %v2003
  %v2022 = vadd.f32 %v715, %v2016
  %v2023 = vxor.u32 %v2019, 2147483648
  %v2024 = vmul.f32 %v2023, 1.442695
  %v2025 = vpow.pop %v2024
  %v2026 = vadd.f32 %v2025, 1.0
  %v2027 = vrcp.pop %v2026
  %v2028 = vmul.f32 %v2026, %v2027
  %v2029 = vsub.f32 1.0, %v2028
  %v2030 = vmul.f32 %v2027, %v2029
  %v2031 = vadd.f32 %v2027, %v2030
  %vm2032 = vweird.f32 %v2026
  %vm2033 = vweird.f32 %v2027
  %vm2034 = vmor %vm2032, %vm2033
  %v2035 = vsel %vm2034, %v2027, %v2031
  %v2036 = vand.u32 2147483647, %v2026
  %vm2037 = vcmp.eq.f32.partialorder %v2036, 8.507059e+37
  %v2038 = vand.u32 %v2026, 2147483648
  %v2039 = vor.u32 1.1754944e-38, %v2038
  %v2040 = vsel %vm2037, %v2039, %v2035
  %v2041 = vmul.f32 1.0, %v2040
  %v2042 = vxor.u32 %v2020, 2147483648
  %v2043 = vmul.f32 %v2042, 1.442695
  %v2044 = vpow.pop %v2043
  %v2045 = vadd.f32 %v2044, 1.0
  %v2046 = vrcp.pop %v2045
  %v2047 = vmul.f32 %v2045, %v2046
  %v2048 = vsub.f32 1.0, %v2047
  %v2049 = vmul.f32 %v2046, %v2048
  %v2050 = vadd.f32 %v2046, %v2049
  %vm2051 = vweird.f32 %v2045
  %vm2052 = vweird.f32 %v2046
  %vm2053 = vmor %vm2051, %vm2052
  %v2054 = vsel %vm2053, %v2046, %v2050
  %v2055 = vand.u32 2147483647, %v2045
  %vm2056 = vcmp.eq.f32.partialorder %v2055, 8.507059e+37
  %v2057 = vand.u32 %v2045, 2147483648
  %v2058 = vor.u32 1.1754944e-38, %v2057
  %v2059 = vsel %vm2056, %v2058, %v2054
  %v2060 = vmul.f32 1.0, %v2059
  %v2061 = vtanh.pop %v2021
  %v2062 = vxor.u32 %v2022, 2147483648
  %v2063 = vmul.f32 %v2062, 1.442695
  %v2064 = vpow.pop %v2063
  %v2065 = vadd.f32 %v2064, 1.0
  %v2066 = vrcp.pop %v2065
  %v2067 = vmul.f32 %v2065, %v2066
  %v2068 = vsub.f32 1.0, %v2067
  %v2069 = vmul.f32 %v2066, %v2068
  %v2070 = vadd.f32 %v2066, %v2069
  %vm2071 = vweird.f32 %v2065
  %vm2072 = vweird.f32 %v2066
  %vm2073 = vmor %vm2071, %vm2072
  %v2074 = vsel %vm2073, %v2066, %v2070
  %v2075 = vand.u32 2147483647, %v2065
  %vm2076 = vcmp.eq.f32.partialorder %v2075, 8.507059e+37
  %v2077 = vand.u32 %v2065, 2147483648
  %v2078 = vor.u32 1.1754944e-38, %v2077
  %v2079 = vsel %vm2076, %v2078, %v2074
  %v2080 = vmul.f32 1.0, %v2079
  %v2081 = vmul.f32 %v2060, %v1841
  %v2082 = vmul.f32 %v2041, %v2061
  %v2083 = vadd.f32 %v2081, %v2082
  %v2084 = vtanh.pop %v2083
  %v2085 = vmul.f32 %v2080, %v2084
  %v2086 = vsel %vm54, %v2085, %v1840
  %v2087 = vsel %vm54, %v2083, %v1841
  %2088 = vst [vmem:[#allocation2 + $0x30] sm:$0xff] %v1964
  %2089 = vst [vmem:[#allocation2 + $0x48] sm:$0xff] %v2086
  %v2090 = vpack.c.bf16 %v1964, %v1964
  %2091 = vmatpush.bf16.msra.mxu0 %v912
  %2092 = vmatpush.bf16.msra.mxu0 %v908
  %2093 = vmatpush.bf16.msra.mxu0 %v904
  %2094 = vmatpush.bf16.msra.mxu0 %v900
  %2095 = vmatpush.bf16.msra.mxu0 %v896
  %2096 = vmatpush.bf16.msra.mxu0 %v892
  %2097 = vmatpush.bf16.msra.mxu0 %v888
  %2098 = vmatpush.bf16.msra.mxu0 %v884
  %2099 = vmatmul.bf16.gmra.mxu0 %v2090
  %v2100 = vpop.f32.mrf.mxu0
  %v2101 = vadd.f32 0.0, %v2100
  %v2102 = vpop.f32.mrf.mxu0
  %2103 = vdwg.mxu0
  %2104 = vmatpush.bf16.msra.mxu0 %v913
  %2105 = vmatpush.bf16.msra.mxu0 %v909
  %2106 = vmatpush.bf16.msra.mxu0 %v905
  %2107 = vmatpush.bf16.msra.mxu0 %v901
  %2108 = vmatpush.bf16.msra.mxu0 %v897
  %2109 = vmatpush.bf16.msra.mxu0 %v893
  %2110 = vmatpush.bf16.msra.mxu0 %v889
  %2111 = vmatpush.bf16.msra.mxu0 %v885
  %2112 = vmatmul.bf16.gmra.mxu0 %v2090
  %v2113 = vpop.f32.mrf.mxu0
  %v2114 = vadd.f32 0.0, %v2113
  %v2115 = vpop.f32.mrf.mxu0
  %2116 = vdwg.mxu0
  %2117 = vmatpush.bf16.msra.mxu0 %v914
  %2118 = vmatpush.bf16.msra.mxu0 %v910
  %2119 = vmatpush.bf16.msra.mxu0 %v906
  %2120 = vmatpush.bf16.msra.mxu0 %v902
  %2121 = vmatpush.bf16.msra.mxu0 %v898
  %2122 = vmatpush.bf16.msra.mxu0 %v894
  %2123 = vmatpush.bf16.msra.mxu0 %v890
  %2124 = vmatpush.bf16.msra.mxu0 %v886
  %2125 = vmatmul.bf16.gmra.mxu0 %v2090
  %v2126 = vpop.f32.mrf.mxu0
  %v2127 = vadd.f32 0.0, %v2126
  %v2128 = vpop.f32.mrf.mxu0
  %2129 = vdwg.mxu0
  %2130 = vmatpush.bf16.msra.mxu0 %v915
  %2131 = vmatpush.bf16.msra.mxu0 %v911
  %2132 = vmatpush.bf16.msra.mxu0 %v907
  %2133 = vmatpush.bf16.msra.mxu0 %v903
  %2134 = vmatpush.bf16.msra.mxu0 %v899
  %2135 = vmatpush.bf16.msra.mxu0 %v895
  %2136 = vmatpush.bf16.msra.mxu0 %v891
  %2137 = vmatpush.bf16.msra.mxu0 %v887
  %2138 = vmatmul.bf16.gmra.mxu0 %v2090
  %v2139 = vpop.f32.mrf.mxu0
  %v2140 = vadd.f32 0.0, %v2139
  %v2141 = vpop.f32.mrf.mxu0
  %2142 = vdwg.mxu0
  %v2143 = vadd.f32 %v512, %v2101
  %v2144 = vadd.f32 %v541, %v2114
  %v2145 = vadd.f32 %v570, %v2127
  %v2146 = vadd.f32 %v599, %v2140
  %v2147 = vxor.u32 %v2143, 2147483648
  %v2148 = vmul.f32 %v2147, 1.442695
  %v2149 = vpow.pop %v2148
  %v2150 = vadd.f32 %v2149, 1.0
  %v2151 = vrcp.pop %v2150
  %v2152 = vmul.f32 %v2150, %v2151
  %v2153 = vsub.f32 1.0, %v2152
  %v2154 = vmul.f32 %v2151, %v2153
  %v2155 = vadd.f32 %v2151, %v2154
  %vm2156 = vweird.f32 %v2150
  %vm2157 = vweird.f32 %v2151
  %vm2158 = vmor %vm2156, %vm2157
  %v2159 = vsel %vm2158, %v2151, %v2155
  %v2160 = vand.u32 2147483647, %v2150
  %vm2161 = vcmp.eq.f32.partialorder %v2160, 8.507059e+37
  %v2162 = vand.u32 %v2150, 2147483648
  %v2163 = vor.u32 1.1754944e-38, %v2162
  %v2164 = vsel %vm2161, %v2163, %v2159
  %v2165 = vmul.f32 1.0, %v2164
  %v2166 = vxor.u32 %v2144, 2147483648
  %v2167 = vmul.f32 %v2166, 1.442695
  %v2168 = vpow.pop %v2167
  %v2169 = vadd.f32 %v2168, 1.0
  %v2170 = vrcp.pop %v2169
  %v2171 = vmul.f32 %v2169, %v2170
  %v2172 = vsub.f32 1.0, %v2171
  %v2173 = vmul.f32 %v2170, %v2172
  %v2174 = vadd.f32 %v2170, %v2173
  %vm2175 = vweird.f32 %v2169
  %vm2176 = vweird.f32 %v2170
  %vm2177 = vmor %vm2175, %vm2176
  %v2178 = vsel %vm2177, %v2170, %v2174
  %v2179 = vand.u32 2147483647, %v2169
  %vm2180 = vcmp.eq.f32.partialorder %v2179, 8.507059e+37
  %v2181 = vand.u32 %v2169, 2147483648
  %v2182 = vor.u32 1.1754944e-38, %v2181
  %v2183 = vsel %vm2180, %v2182, %v2178
  %v2184 = vmul.f32 1.0, %v2183
  %v2185 = vtanh.pop %v2145
  %v2186 = vxor.u32 %v2146, 2147483648
  %v2187 = vmul.f32 %v2186, 1.442695
  %v2188 = vpow.pop %v2187
  %v2189 = vadd.f32 %v2188, 1.0
  %v2190 = vrcp.pop %v2189
  %v2191 = vmul.f32 %v2189, %v2190
  %v2192 = vsub.f32 1.0, %v2191
  %v2193 = vmul.f32 %v2190, %v2192
  %v2194 = vadd.f32 %v2190, %v2193
  %vm2195 = vweird.f32 %v2189
  %vm2196 = vweird.f32 %v2190
  %vm2197 = vmor %vm2195, %vm2196
  %v2198 = vsel %vm2197, %v2190, %v2194
  %v2199 = vand.u32 2147483647, %v2189
  %vm2200 = vcmp.eq.f32.partialorder %v2199, 8.507059e+37
  %v2201 = vand.u32 %v2189, 2147483648
  %v2202 = vor.u32 1.1754944e-38, %v2201
  %v2203 = vsel %vm2200, %v2202, %v2198
  %v2204 = vmul.f32 1.0, %v2203
  %v2205 = vmul.f32 %v2184, %v1965
  %v2206 = vmul.f32 %v2165, %v2185
  %v2207 = vadd.f32 %v2205, %v2206
  %v2208 = vtanh.pop %v2207
  %v2209 = vmul.f32 %v2204, %v2208
  %v2210 = vsel %vm54, %v2209, %v1964
  %v2211 = vsel %vm54, %v2207, %v1965
  %v2212 = vpack.c.bf16 %v2086, %v2086
  %2213 = vmatpush.bf16.msra.mxu0 %v1193
  %2214 = vmatpush.bf16.msra.mxu0 %v1189
  %2215 = vmatpush.bf16.msra.mxu0 %v1185
  %2216 = vmatpush.bf16.msra.mxu0 %v1181
  %2217 = vmatpush.bf16.msra.mxu0 %v1177
  %2218 = vmatpush.bf16.msra.mxu0 %v1173
  %2219 = vmatpush.bf16.msra.mxu0 %v1169
  %2220 = vmatpush.bf16.msra.mxu0 %v1165
  %2221 = vmatmul.bf16.gmra.mxu0 %v2212
  %v2222 = vpop.f32.mrf.mxu0
  %v2223 = vadd.f32 0.0, %v2222
  %v2224 = vpop.f32.mrf.mxu0
  %2225 = vdwg.mxu0
  %2226 = vmatpush.bf16.msra.mxu0 %v1194
  %2227 = vmatpush.bf16.msra.mxu0 %v1190
  %2228 = vmatpush.bf16.msra.mxu0 %v1186
  %2229 = vmatpush.bf16.msra.mxu0 %v1182
  %2230 = vmatpush.bf16.msra.mxu0 %v1178
  %2231 = vmatpush.bf16.msra.mxu0 %v1174
  %2232 = vmatpush.bf16.msra.mxu0 %v1170
  %2233 = vmatpush.bf16.msra.mxu0 %v1166
  %2234 = vmatmul.bf16.gmra.mxu0 %v2212
  %v2235 = vpop.f32.mrf.mxu0
  %v2236 = vadd.f32 0.0, %v2235
  %v2237 = vpop.f32.mrf.mxu0
  %2238 = vdwg.mxu0
  %2239 = vmatpush.bf16.msra.mxu0 %v1195
  %2240 = vmatpush.bf16.msra.mxu0 %v1191
  %2241 = vmatpush.bf16.msra.mxu0 %v1187
  %2242 = vmatpush.bf16.msra.mxu0 %v1183
  %2243 = vmatpush.bf16.msra.mxu0 %v1179
  %2244 = vmatpush.bf16.msra.mxu0 %v1175
  %2245 = vmatpush.bf16.msra.mxu0 %v1171
  %2246 = vmatpush.bf16.msra.mxu0 %v1167
  %2247 = vmatmul.bf16.gmra.mxu0 %v2212
  %v2248 = vpop.f32.mrf.mxu0
  %v2249 = vadd.f32 0.0, %v2248
  %v2250 = vpop.f32.mrf.mxu0
  %2251 = vdwg.mxu0
  %2252 = vmatpush.bf16.msra.mxu0 %v1196
  %2253 = vmatpush.bf16.msra.mxu0 %v1192
  %2254 = vmatpush.bf16.msra.mxu0 %v1188
  %2255 = vmatpush.bf16.msra.mxu0 %v1184
  %2256 = vmatpush.bf16.msra.mxu0 %v1180
  %2257 = vmatpush.bf16.msra.mxu0 %v1176
  %2258 = vmatpush.bf16.msra.mxu0 %v1172
  %2259 = vmatpush.bf16.msra.mxu0 %v1168
  %2260 = vmatmul.bf16.gmra.mxu0 %v2212
  %v2261 = vpop.f32.mrf.mxu0
  %v2262 = vadd.f32 0.0, %v2261
  %v2263 = vpop.f32.mrf.mxu0
  %2264 = vdwg.mxu0
  %v2265 = vadd.f32 %v625, %v2223
  %v2266 = vadd.f32 %v654, %v2236
  %v2267 = vadd.f32 %v683, %v2249
  %v2268 = vadd.f32 %v712, %v2262
  %v2269 = vxor.u32 %v2265, 2147483648
  %v2270 = vmul.f32 %v2269, 1.442695
  %v2271 = vpow.pop %v2270
  %v2272 = vadd.f32 %v2271, 1.0
  %v2273 = vrcp.pop %v2272
  %v2274 = vmul.f32 %v2272, %v2273
  %v2275 = vsub.f32 1.0, %v2274
  %v2276 = vmul.f32 %v2273, %v2275
  %v2277 = vadd.f32 %v2273, %v2276
  %vm2278 = vweird.f32 %v2272
  %vm2279 = vweird.f32 %v2273
  %vm2280 = vmor %vm2278, %vm2279
  %v2281 = vsel %vm2280, %v2273, %v2277
  %v2282 = vand.u32 2147483647, %v2272
  %vm2283 = vcmp.eq.f32.partialorder %v2282, 8.507059e+37
  %v2284 = vand.u32 %v2272, 2147483648
  %v2285 = vor.u32 1.1754944e-38, %v2284
  %v2286 = vsel %vm2283, %v2285, %v2281
  %v2287 = vmul.f32 1.0, %v2286
  %v2288 = vxor.u32 %v2266, 2147483648
  %v2289 = vmul.f32 %v2288, 1.442695
  %v2290 = vpow.pop %v2289
  %v2291 = vadd.f32 %v2290, 1.0
  %v2292 = vrcp.pop %v2291
  %v2293 = vmul.f32 %v2291, %v2292
  %v2294 = vsub.f32 1.0, %v2293
  %v2295 = vmul.f32 %v2292, %v2294
  %v2296 = vadd.f32 %v2292, %v2295
  %vm2297 = vweird.f32 %v2291
  %vm2298 = vweird.f32 %v2292
  %vm2299 = vmor %vm2297, %vm2298
  %v2300 = vsel %vm2299, %v2292, %v2296
  %v2301 = vand.u32 2147483647, %v2291
  %vm2302 = vcmp.eq.f32.partialorder %v2301, 8.507059e+37
  %v2303 = vand.u32 %v2291, 2147483648
  %v2304 = vor.u32 1.1754944e-38, %v2303
  %v2305 = vsel %vm2302, %v2304, %v2300
  %v2306 = vmul.f32 1.0, %v2305
  %v2307 = vtanh.pop %v2267
  %v2308 = vxor.u32 %v2268, 2147483648
  %v2309 = vmul.f32 %v2308, 1.442695
  %v2310 = vpow.pop %v2309
  %v2311 = vadd.f32 %v2310, 1.0
  %v2312 = vrcp.pop %v2311
  %v2313 = vmul.f32 %v2311, %v2312
  %v2314 = vsub.f32 1.0, %v2313
  %v2315 = vmul.f32 %v2312, %v2314
  %v2316 = vadd.f32 %v2312, %v2315
  %vm2317 = vweird.f32 %v2311
  %vm2318 = vweird.f32 %v2312
  %vm2319 = vmor %vm2317, %vm2318
  %v2320 = vsel %vm2319, %v2312, %v2316
  %v2321 = vand.u32 2147483647, %v2311
  %vm2322 = vcmp.eq.f32.partialorder %v2321, 8.507059e+37
  %v2323 = vand.u32 %v2311, 2147483648
  %v2324 = vor.u32 1.1754944e-38, %v2323
  %v2325 = vsel %vm2322, %v2324, %v2320
  %v2326 = vmul.f32 1.0, %v2325
  %v2327 = vmul.f32 %v2306, %v2087
  %v2328 = vmul.f32 %v2287, %v2307
  %v2329 = vadd.f32 %v2327, %v2328
  %v2330 = vtanh.pop %v2329
  %v2331 = vmul.f32 %v2326, %v2330
  %v2332 = vsel %vm53, %v2331, %v2086
  %v2333 = vsel %vm53, %v2329, %v2087
  %2334 = vst [vmem:[#allocation2 + $0x40] sm:$0xff] %v2210
  %2335 = vst [vmem:[#allocation2 + $0x38] sm:$0xff] %v2332
  %v2336 = vpack.c.bf16 %v2210, %v2210
  %2337 = vmatpush.bf16.msra.mxu0 %v912
  %2338 = vmatpush.bf16.msra.mxu0 %v908
  %2339 = vmatpush.bf16.msra.mxu0 %v904
  %2340 = vmatpush.bf16.msra.mxu0 %v900
  %2341 = vmatpush.bf16.msra.mxu0 %v896
  %2342 = vmatpush.bf16.msra.mxu0 %v892
  %2343 = vmatpush.bf16.msra.mxu0 %v888
  %2344 = vmatpush.bf16.msra.mxu0 %v884
  %2345 = vmatmul.bf16.gmra.mxu0 %v2336
  %v2346 = vpop.f32.mrf.mxu0
  %v2347 = vadd.f32 0.0, %v2346
  %v2348 = vpop.f32.mrf.mxu0
  %2349 = vdwg.mxu0
  %2350 = vmatpush.bf16.msra.mxu0 %v913
  %2351 = vmatpush.bf16.msra.mxu0 %v909
  %2352 = vmatpush.bf16.msra.mxu0 %v905
  %2353 = vmatpush.bf16.msra.mxu0 %v901
  %2354 = vmatpush.bf16.msra.mxu0 %v897
  %2355 = vmatpush.bf16.msra.mxu0 %v893
  %2356 = vmatpush.bf16.msra.mxu0 %v889
  %2357 = vmatpush.bf16.msra.mxu0 %v885
  %2358 = vmatmul.bf16.gmra.mxu0 %v2336
  %v2359 = vpop.f32.mrf.mxu0
  %v2360 = vadd.f32 0.0, %v2359
  %v2361 = vpop.f32.mrf.mxu0
  %2362 = vdwg.mxu0
  %2363 = vmatpush.bf16.msra.mxu0 %v914
  %2364 = vmatpush.bf16.msra.mxu0 %v910
  %2365 = vmatpush.bf16.msra.mxu0 %v906
  %2366 = vmatpush.bf16.msra.mxu0 %v902
  %2367 = vmatpush.bf16.msra.mxu0 %v898
  %2368 = vmatpush.bf16.msra.mxu0 %v894
  %2369 = vmatpush.bf16.msra.mxu0 %v890
  %2370 = vmatpush.bf16.msra.mxu0 %v886
  %2371 = vmatmul.bf16.gmra.mxu0 %v2336
  %v2372 = vpop.f32.mrf.mxu0
  %v2373 = vadd.f32 0.0, %v2372
  %v2374 = vpop.f32.mrf.mxu0
  %2375 = vdwg.mxu0
  %2376 = vmatpush.bf16.msra.mxu0 %v915
  %2377 = vmatpush.bf16.msra.mxu0 %v911
  %2378 = vmatpush.bf16.msra.mxu0 %v907
  %2379 = vmatpush.bf16.msra.mxu0 %v903
  %2380 = vmatpush.bf16.msra.mxu0 %v899
  %2381 = vmatpush.bf16.msra.mxu0 %v895
  %2382 = vmatpush.bf16.msra.mxu0 %v891
  %2383 = vmatpush.bf16.msra.mxu0 %v887
  %2384 = vmatmul.bf16.gmra.mxu0 %v2336
  %v2385 = vpop.f32.mrf.mxu0
  %v2386 = vadd.f32 0.0, %v2385
  %v2387 = vpop.f32.mrf.mxu0
  %2388 = vdwg.mxu0
  %v2389 = vadd.f32 %v514, %v2347
  %v2390 = vadd.f32 %v543, %v2360
  %v2391 = vadd.f32 %v572, %v2373
  %v2392 = vadd.f32 %v601, %v2386
  %v2393 = vxor.u32 %v2389, 2147483648
  %v2394 = vmul.f32 %v2393, 1.442695
  %v2395 = vpow.pop %v2394
  %v2396 = vadd.f32 %v2395, 1.0
  %v2397 = vrcp.pop %v2396
  %v2398 = vmul.f32 %v2396, %v2397
  %v2399 = vsub.f32 1.0, %v2398
  %v2400 = vmul.f32 %v2397, %v2399
  %v2401 = vadd.f32 %v2397, %v2400
  %vm2402 = vweird.f32 %v2396
  %vm2403 = vweird.f32 %v2397
  %vm2404 = vmor %vm2402, %vm2403
  %v2405 = vsel %vm2404, %v2397, %v2401
  %v2406 = vand.u32 2147483647, %v2396
  %vm2407 = vcmp.eq.f32.partialorder %v2406, 8.507059e+37
  %v2408 = vand.u32 %v2396, 2147483648
  %v2409 = vor.u32 1.1754944e-38, %v2408
  %v2410 = vsel %vm2407, %v2409, %v2405
  %v2411 = vmul.f32 1.0, %v2410
  %v2412 = vxor.u32 %v2390, 2147483648
  %v2413 = vmul.f32 %v2412, 1.442695
  %v2414 = vpow.pop %v2413
  %v2415 = vadd.f32 %v2414, 1.0
  %v2416 = vrcp.pop %v2415
  %v2417 = vmul.f32 %v2415, %v2416
  %v2418 = vsub.f32 1.0, %v2417
  %v2419 = vmul.f32 %v2416, %v2418
  %v2420 = vadd.f32 %v2416, %v2419
  %vm2421 = vweird.f32 %v2415
  %vm2422 = vweird.f32 %v2416
  %vm2423 = vmor %vm2421, %vm2422
  %v2424 = vsel %vm2423, %v2416, %v2420
  %v2425 = vand.u32 2147483647, %v2415
  %vm2426 = vcmp.eq.f32.partialorder %v2425, 8.507059e+37
  %v2427 = vand.u32 %v2415, 2147483648
  %v2428 = vor.u32 1.1754944e-38, %v2427
  %v2429 = vsel %vm2426, %v2428, %v2424
  %v2430 = vmul.f32 1.0, %v2429
  %v2431 = vtanh.pop %v2391
  %v2432 = vxor.u32 %v2392, 2147483648
  %v2433 = vmul.f32 %v2432, 1.442695
  %v2434 = vpow.pop %v2433
  %v2435 = vadd.f32 %v2434, 1.0
  %v2436 = vrcp.pop %v2435
  %v2437 = vmul.f32 %v2435, %v2436
  %v2438 = vsub.f32 1.0, %v2437
  %v2439 = vmul.f32 %v2436, %v2438
  %v2440 = vadd.f32 %v2436, %v2439
  %vm2441 = vweird.f32 %v2435
  %vm2442 = vweird.f32 %v2436
  %vm2443 = vmor %vm2441, %vm2442
  %v2444 = vsel %vm2443, %v2436, %v2440
  %v2445 = vand.u32 2147483647, %v2435
  %vm2446 = vcmp.eq.f32.partialorder %v2445, 8.507059e+37
  %v2447 = vand.u32 %v2435, 2147483648
  %v2448 = vor.u32 1.1754944e-38, %v2447
  %v2449 = vsel %vm2446, %v2448, %v2444
  %v2450 = vmul.f32 1.0, %v2449
  %v2451 = vmul.f32 %v2430, %v2211
  %v2452 = vmul.f32 %v2411, %v2431
  %v2453 = vadd.f32 %v2451, %v2452
  %v2454 = vtanh.pop %v2453
  %v2455 = vmul.f32 %v2450, %v2454
  %v2456 = vsel %vm55, %v2455, %v2210
  %v2457 = vsel %vm55, %v2453, %v2211
  %v2458 = vpack.c.bf16 %v2332, %v2332
  %2459 = vmatpush.bf16.msra.mxu0 %v1193
  %2460 = vmatpush.bf16.msra.mxu0 %v1189
  %2461 = vmatpush.bf16.msra.mxu0 %v1185
  %2462 = vmatpush.bf16.msra.mxu0 %v1181
  %2463 = vmatpush.bf16.msra.mxu0 %v1177
  %2464 = vmatpush.bf16.msra.mxu0 %v1173
  %2465 = vmatpush.bf16.msra.mxu0 %v1169
  %2466 = vmatpush.bf16.msra.mxu0 %v1165
  %2467 = vmatmul.bf16.gmra.mxu0 %v2458
  %v2468 = vpop.f32.mrf.mxu0
  %v2469 = vadd.f32 0.0, %v2468
  %v2470 = vpop.f32.mrf.mxu0
  %2471 = vdwg.mxu0
  %2472 = vmatpush.bf16.msra.mxu0 %v1194
  %2473 = vmatpush.bf16.msra.mxu0 %v1190
  %2474 = vmatpush.bf16.msra.mxu0 %v1186
  %2475 = vmatpush.bf16.msra.mxu0 %v1182
  %2476 = vmatpush.bf16.msra.mxu0 %v1178
  %2477 = vmatpush.bf16.msra.mxu0 %v1174
  %2478 = vmatpush.bf16.msra.mxu0 %v1170
  %2479 = vmatpush.bf16.msra.mxu0 %v1166
  %2480 = vmatmul.bf16.gmra.mxu0 %v2458
  %v2481 = vpop.f32.mrf.mxu0
  %v2482 = vadd.f32 0.0, %v2481
  %v2483 = vpop.f32.mrf.mxu0
  %2484 = vdwg.mxu0
  %2485 = vmatpush.bf16.msra.mxu0 %v1195
  %2486 = vmatpush.bf16.msra.mxu0 %v1191
  %2487 = vmatpush.bf16.msra.mxu0 %v1187
  %2488 = vmatpush.bf16.msra.mxu0 %v1183
  %2489 = vmatpush.bf16.msra.mxu0 %v1179
  %2490 = vmatpush.bf16.msra.mxu0 %v1175
  %2491 = vmatpush.bf16.msra.mxu0 %v1171
  %2492 = vmatpush.bf16.msra.mxu0 %v1167
  %2493 = vmatmul.bf16.gmra.mxu0 %v2458
  %v2494 = vpop.f32.mrf.mxu0
  %v2495 = vadd.f32 0.0, %v2494
  %v2496 = vpop.f32.mrf.mxu0
  %2497 = vdwg.mxu0
  %2498 = vmatpush.bf16.msra.mxu0 %v1196
  %2499 = vmatpush.bf16.msra.mxu0 %v1192
  %2500 = vmatpush.bf16.msra.mxu0 %v1188
  %2501 = vmatpush.bf16.msra.mxu0 %v1184
  %2502 = vmatpush.bf16.msra.mxu0 %v1180
  %2503 = vmatpush.bf16.msra.mxu0 %v1176
  %2504 = vmatpush.bf16.msra.mxu0 %v1172
  %2505 = vmatpush.bf16.msra.mxu0 %v1168
  %2506 = vmatmul.bf16.gmra.mxu0 %v2458
  %v2507 = vpop.f32.mrf.mxu0
  %v2508 = vadd.f32 0.0, %v2507
  %v2509 = vpop.f32.mrf.mxu0
  %2510 = vdwg.mxu0
  %v2511 = vadd.f32 %v623, %v2469
  %v2512 = vadd.f32 %v652, %v2482
  %v2513 = vadd.f32 %v681, %v2495
  %v2514 = vadd.f32 %v710, %v2508
  %v2515 = vxor.u32 %v2511, 2147483648
  %v2516 = vmul.f32 %v2515, 1.442695
  %v2517 = vpow.pop %v2516
  %v2518 = vadd.f32 %v2517, 1.0
  %v2519 = vrcp.pop %v2518
  %v2520 = vmul.f32 %v2518, %v2519
  %v2521 = vsub.f32 1.0, %v2520
  %v2522 = vmul.f32 %v2519, %v2521
  %v2523 = vadd.f32 %v2519, %v2522
  %vm2524 = vweird.f32 %v2518
  %vm2525 = vweird.f32 %v2519
  %vm2526 = vmor %vm2524, %vm2525
  %v2527 = vsel %vm2526, %v2519, %v2523
  %v2528 = vand.u32 2147483647, %v2518
  %vm2529 = vcmp.eq.f32.partialorder %v2528, 8.507059e+37
  %v2530 = vand.u32 %v2518, 2147483648
  %v2531 = vor.u32 1.1754944e-38, %v2530
  %v2532 = vsel %vm2529, %v2531, %v2527
  %v2533 = vmul.f32 1.0, %v2532
  %v2534 = vxor.u32 %v2512, 2147483648
  %v2535 = vmul.f32 %v2534, 1.442695
  %v2536 = vpow.pop %v2535
  %v2537 = vadd.f32 %v2536, 1.0
  %v2538 = vrcp.pop %v2537
  %v2539 = vmul.f32 %v2537, %v2538
  %v2540 = vsub.f32 1.0, %v2539
  %v2541 = vmul.f32 %v2538, %v2540
  %v2542 = vadd.f32 %v2538, %v2541
  %vm2543 = vweird.f32 %v2537
  %vm2544 = vweird.f32 %v2538
  %vm2545 = vmor %vm2543, %vm2544
  %v2546 = vsel %vm2545, %v2538, %v2542
  %v2547 = vand.u32 2147483647, %v2537
  %vm2548 = vcmp.eq.f32.partialorder %v2547, 8.507059e+37
  %v2549 = vand.u32 %v2537, 2147483648
  %v2550 = vor.u32 1.1754944e-38, %v2549
  %v2551 = vsel %vm2548, %v2550, %v2546
  %v2552 = vmul.f32 1.0, %v2551
  %v2553 = vtanh.pop %v2513
  %v2554 = vxor.u32 %v2514, 2147483648
  %v2555 = vmul.f32 %v2554, 1.442695
  %v2556 = vpow.pop %v2555
  %v2557 = vadd.f32 %v2556, 1.0
  %v2558 = vrcp.pop %v2557
  %v2559 = vmul.f32 %v2557, %v2558
  %v2560 = vsub.f32 1.0, %v2559
  %v2561 = vmul.f32 %v2558, %v2560
  %v2562 = vadd.f32 %v2558, %v2561
  %vm2563 = vweird.f32 %v2557
  %vm2564 = vweird.f32 %v2558
  %vm2565 = vmor %vm2563, %vm2564
  %v2566 = vsel %vm2565, %v2558, %v2562
  %v2567 = vand.u32 2147483647, %v2557
  %vm2568 = vcmp.eq.f32.partialorder %v2567, 8.507059e+37
  %v2569 = vand.u32 %v2557, 2147483648
  %v2570 = vor.u32 1.1754944e-38, %v2569
  %v2571 = vsel %vm2568, %v2570, %v2566
  %v2572 = vmul.f32 1.0, %v2571
  %v2573 = vmul.f32 %v2552, %v2333
  %v2574 = vmul.f32 %v2533, %v2553
  %v2575 = vadd.f32 %v2573, %v2574
  %v2576 = vtanh.pop %v2575
  %v2577 = vmul.f32 %v2572, %v2576
  %v2578 = vsel %vm52, %v2577, %v2332
  %v2579 = vsel %vm52, %v2575, %v2333
  %2580 = vst [vmem:[#allocation2 + $0x50] sm:$0xff] %v2456
  %2581 = vst [vmem:[#allocation2 + $0x28] sm:$0xff] %v2578
  %v2582 = vpack.c.bf16 %v2456, %v2456
  %2583 = vmatpush.bf16.msra.mxu0 %v912
  %2584 = vmatpush.bf16.msra.mxu0 %v908
  %2585 = vmatpush.bf16.msra.mxu0 %v904
  %2586 = vmatpush.bf16.msra.mxu0 %v900
  %2587 = vmatpush.bf16.msra.mxu0 %v896
  %2588 = vmatpush.bf16.msra.mxu0 %v892
  %2589 = vmatpush.bf16.msra.mxu0 %v888
  %2590 = vmatpush.bf16.msra.mxu0 %v884
  %2591 = vmatmul.bf16.gmra.mxu0 %v2582
  %v2592 = vpop.f32.mrf.mxu0
  %v2593 = vadd.f32 0.0, %v2592
  %v2594 = vpop.f32.mrf.mxu0
  %2595 = vdwg.mxu0
  %2596 = vmatpush.bf16.msra.mxu0 %v913
  %2597 = vmatpush.bf16.msra.mxu0 %v909
  %2598 = vmatpush.bf16.msra.mxu0 %v905
  %2599 = vmatpush.bf16.msra.mxu0 %v901
  %2600 = vmatpush.bf16.msra.mxu0 %v897
  %2601 = vmatpush.bf16.msra.mxu0 %v893
  %2602 = vmatpush.bf16.msra.mxu0 %v889
  %2603 = vmatpush.bf16.msra.mxu0 %v885
  %2604 = vmatmul.bf16.gmra.mxu0 %v2582
  %v2605 = vpop.f32.mrf.mxu0
  %v2606 = vadd.f32 0.0, %v2605
  %v2607 = vpop.f32.mrf.mxu0
  %2608 = vdwg.mxu0
  %2609 = vmatpush.bf16.msra.mxu0 %v914
  %2610 = vmatpush.bf16.msra.mxu0 %v910
  %2611 = vmatpush.bf16.msra.mxu0 %v906
  %2612 = vmatpush.bf16.msra.mxu0 %v902
  %2613 = vmatpush.bf16.msra.mxu0 %v898
  %2614 = vmatpush.bf16.msra.mxu0 %v894
  %2615 = vmatpush.bf16.msra.mxu0 %v890
  %2616 = vmatpush.bf16.msra.mxu0 %v886
  %2617 = vmatmul.bf16.gmra.mxu0 %v2582
  %v2618 = vpop.f32.mrf.mxu0
  %v2619 = vadd.f32 0.0, %v2618
  %v2620 = vpop.f32.mrf.mxu0
  %2621 = vdwg.mxu0
  %2622 = vmatpush.bf16.msra.mxu0 %v915
  %2623 = vmatpush.bf16.msra.mxu0 %v911
  %2624 = vmatpush.bf16.msra.mxu0 %v907
  %2625 = vmatpush.bf16.msra.mxu0 %v903
  %2626 = vmatpush.bf16.msra.mxu0 %v899
  %2627 = vmatpush.bf16.msra.mxu0 %v895
  %2628 = vmatpush.bf16.msra.mxu0 %v891
  %2629 = vmatpush.bf16.msra.mxu0 %v887
  %2630 = vmatmul.bf16.gmra.mxu0 %v2582
  %v2631 = vpop.f32.mrf.mxu0
  %v2632 = vadd.f32 0.0, %v2631
  %v2633 = vpop.f32.mrf.mxu0
  %2634 = vdwg.mxu0
  %v2635 = vadd.f32 %v517, %v2593
  %v2636 = vadd.f32 %v546, %v2606
  %v2637 = vadd.f32 %v575, %v2619
  %v2638 = vadd.f32 %v604, %v2632
  %v2639 = vxor.u32 %v2635, 2147483648
  %v2640 = vmul.f32 %v2639, 1.442695
  %v2641 = vpow.pop %v2640
  %v2642 = vadd.f32 %v2641, 1.0
  %v2643 = vrcp.pop %v2642
  %v2644 = vmul.f32 %v2642, %v2643
  %v2645 = vsub.f32 1.0, %v2644
  %v2646 = vmul.f32 %v2643, %v2645
  %v2647 = vadd.f32 %v2643, %v2646
  %vm2648 = vweird.f32 %v2642
  %vm2649 = vweird.f32 %v2643
  %vm2650 = vmor %vm2648, %vm2649
  %v2651 = vsel %vm2650, %v2643, %v2647
  %v2652 = vand.u32 2147483647, %v2642
  %vm2653 = vcmp.eq.f32.partialorder %v2652, 8.507059e+37
  %v2654 = vand.u32 %v2642, 2147483648
  %v2655 = vor.u32 1.1754944e-38, %v2654
  %v2656 = vsel %vm2653, %v2655, %v2651
  %v2657 = vmul.f32 1.0, %v2656
  %v2658 = vxor.u32 %v2636, 2147483648
  %v2659 = vmul.f32 %v2658, 1.442695
  %v2660 = vpow.pop %v2659
  %v2661 = vadd.f32 %v2660, 1.0
  %v2662 = vrcp.pop %v2661
  %v2663 = vmul.f32 %v2661, %v2662
  %v2664 = vsub.f32 1.0, %v2663
  %v2665 = vmul.f32 %v2662, %v2664
  %v2666 = vadd.f32 %v2662, %v2665
  %vm2667 = vweird.f32 %v2661
  %vm2668 = vweird.f32 %v2662
  %vm2669 = vmor %vm2667, %vm2668
  %v2670 = vsel %vm2669, %v2662, %v2666
  %v2671 = vand.u32 2147483647, %v2661
  %vm2672 = vcmp.eq.f32.partialorder %v2671, 8.507059e+37
  %v2673 = vand.u32 %v2661, 2147483648
  %v2674 = vor.u32 1.1754944e-38, %v2673
  %v2675 = vsel %vm2672, %v2674, %v2670
  %v2676 = vmul.f32 1.0, %v2675
  %v2677 = vtanh.pop %v2637
  %v2678 = vxor.u32 %v2638, 2147483648
  %v2679 = vmul.f32 %v2678, 1.442695
  %v2680 = vpow.pop %v2679
  %v2681 = vadd.f32 %v2680, 1.0
  %v2682 = vrcp.pop %v2681
  %v2683 = vmul.f32 %v2681, %v2682
  %v2684 = vsub.f32 1.0, %v2683
  %v2685 = vmul.f32 %v2682, %v2684
  %v2686 = vadd.f32 %v2682, %v2685
  %vm2687 = vweird.f32 %v2681
  %vm2688 = vweird.f32 %v2682
  %vm2689 = vmor %vm2687, %vm2688
  %v2690 = vsel %vm2689, %v2682, %v2686
  %v2691 = vand.u32 2147483647, %v2681
  %vm2692 = vcmp.eq.f32.partialorder %v2691, 8.507059e+37
  %v2693 = vand.u32 %v2681, 2147483648
  %v2694 = vor.u32 1.1754944e-38, %v2693
  %v2695 = vsel %vm2692, %v2694, %v2690
  %v2696 = vmul.f32 1.0, %v2695
  %v2697 = vmul.f32 %v2676, %v2457
  %v2698 = vmul.f32 %v2657, %v2677
  %v2699 = vadd.f32 %v2697, %v2698
  %v2700 = vtanh.pop %v2699
  %v2701 = vmul.f32 %v2696, %v2700
  %v2702 = vsel %vm56, %v2701, %v2456
  %v2703 = vsel %vm56, %v2699, %v2457
  %v2704 = vpack.c.bf16 %v2578, %v2578
  %2705 = vmatpush.bf16.msra.mxu0 %v1193
  %2706 = vmatpush.bf16.msra.mxu0 %v1189
  %2707 = vmatpush.bf16.msra.mxu0 %v1185
  %2708 = vmatpush.bf16.msra.mxu0 %v1181
  %2709 = vmatpush.bf16.msra.mxu0 %v1177
  %2710 = vmatpush.bf16.msra.mxu0 %v1173
  %2711 = vmatpush.bf16.msra.mxu0 %v1169
  %2712 = vmatpush.bf16.msra.mxu0 %v1165
  %2713 = vmatmul.bf16.gmra.mxu0 %v2704
  %v2714 = vpop.f32.mrf.mxu0
  %v2715 = vadd.f32 0.0, %v2714
  %v2716 = vpop.f32.mrf.mxu0
  %2717 = vdwg.mxu0
  %2718 = vmatpush.bf16.msra.mxu0 %v1194
  %2719 = vmatpush.bf16.msra.mxu0 %v1190
  %2720 = vmatpush.bf16.msra.mxu0 %v1186
  %2721 = vmatpush.bf16.msra.mxu0 %v1182
  %2722 = vmatpush.bf16.msra.mxu0 %v1178
  %2723 = vmatpush.bf16.msra.mxu0 %v1174
  %2724 = vmatpush.bf16.msra.mxu0 %v1170
  %2725 = vmatpush.bf16.msra.mxu0 %v1166
  %2726 = vmatmul.bf16.gmra.mxu0 %v2704
  %v2727 = vpop.f32.mrf.mxu0
  %v2728 = vadd.f32 0.0, %v2727
  %v2729 = vpop.f32.mrf.mxu0
  %2730 = vdwg.mxu0
  %2731 = vmatpush.bf16.msra.mxu0 %v1195
  %2732 = vmatpush.bf16.msra.mxu0 %v1191
  %2733 = vmatpush.bf16.msra.mxu0 %v1187
  %2734 = vmatpush.bf16.msra.mxu0 %v1183
  %2735 = vmatpush.bf16.msra.mxu0 %v1179
  %2736 = vmatpush.bf16.msra.mxu0 %v1175
  %2737 = vmatpush.bf16.msra.mxu0 %v1171
  %2738 = vmatpush.bf16.msra.mxu0 %v1167
  %2739 = vmatmul.bf16.gmra.mxu0 %v2704
  %v2740 = vpop.f32.mrf.mxu0
  %v2741 = vadd.f32 0.0, %v2740
  %v2742 = vpop.f32.mrf.mxu0
  %2743 = vdwg.mxu0
  %2744 = vmatpush.bf16.msra.mxu0 %v1196
  %2745 = vmatpush.bf16.msra.mxu0 %v1192
  %2746 = vmatpush.bf16.msra.mxu0 %v1188
  %2747 = vmatpush.bf16.msra.mxu0 %v1184
  %2748 = vmatpush.bf16.msra.mxu0 %v1180
  %2749 = vmatpush.bf16.msra.mxu0 %v1176
  %2750 = vmatpush.bf16.msra.mxu0 %v1172
  %2751 = vmatpush.bf16.msra.mxu0 %v1168
  %2752 = vmatmul.bf16.gmra.mxu0 %v2704
  %v2753 = vpop.f32.mrf.mxu0
  %v2754 = vadd.f32 0.0, %v2753
  %v2755 = vpop.f32.mrf.mxu0
  %2756 = vdwg.mxu0
  %v2757 = vadd.f32 %v620, %v2715
  %v2758 = vadd.f32 %v649, %v2728
  %v2759 = vadd.f32 %v678, %v2741
  %v2760 = vadd.f32 %v707, %v2754
  %v2761 = vxor.u32 %v2757, 2147483648
  %v2762 = vmul.f32 %v2761, 1.442695
  %v2763 = vpow.pop %v2762
  %v2764 = vadd.f32 %v2763, 1.0
  %v2765 = vrcp.pop %v2764
  %v2766 = vmul.f32 %v2764, %v2765
  %v2767 = vsub.f32 1.0, %v2766
  %v2768 = vmul.f32 %v2765, %v2767
  %v2769 = vadd.f32 %v2765, %v2768
  %vm2770 = vweird.f32 %v2764
  %vm2771 = vweird.f32 %v2765
  %vm2772 = vmor %vm2770, %vm2771
  %v2773 = vsel %vm2772, %v2765, %v2769
  %v2774 = vand.u32 2147483647, %v2764
  %vm2775 = vcmp.eq.f32.partialorder %v2774, 8.507059e+37
  %v2776 = vand.u32 %v2764, 2147483648
  %v2777 = vor.u32 1.1754944e-38, %v2776
  %v2778 = vsel %vm2775, %v2777, %v2773
  %v2779 = vmul.f32 1.0, %v2778
  %v2780 = vxor.u32 %v2758, 2147483648
  %v2781 = vmul.f32 %v2780, 1.442695
  %v2782 = vpow.pop %v2781
  %v2783 = vadd.f32 %v2782, 1.0
  %v2784 = vrcp.pop %v2783
  %v2785 = vmul.f32 %v2783, %v2784
  %v2786 = vsub.f32 1.0, %v2785
  %v2787 = vmul.f32 %v2784, %v2786
  %v2788 = vadd.f32 %v2784, %v2787
  %vm2789 = vweird.f32 %v2783
  %vm2790 = vweird.f32 %v2784
  %vm2791 = vmor %vm2789, %vm2790
  %v2792 = vsel %vm2791, %v2784, %v2788
  %v2793 = vand.u32 2147483647, %v2783
  %vm2794 = vcmp.eq.f32.partialorder %v2793, 8.507059e+37
  %v2795 = vand.u32 %v2783, 2147483648
  %v2796 = vor.u32 1.1754944e-38, %v2795
  %v2797 = vsel %vm2794, %v2796, %v2792
  %v2798 = vmul.f32 1.0, %v2797
  %v2799 = vtanh.pop %v2759
  %v2800 = vxor.u32 %v2760, 2147483648
  %v2801 = vmul.f32 %v2800, 1.442695
  %v2802 = vpow.pop %v2801
  %v2803 = vadd.f32 %v2802, 1.0
  %v2804 = vrcp.pop %v2803
  %v2805 = vmul.f32 %v2803, %v2804
  %v2806 = vsub.f32 1.0, %v2805
  %v2807 = vmul.f32 %v2804, %v2806
  %v2808 = vadd.f32 %v2804, %v2807
  %vm2809 = vweird.f32 %v2803
  %vm2810 = vweird.f32 %v2804
  %vm2811 = vmor %vm2809, %vm2810
  %v2812 = vsel %vm2811, %v2804, %v2808
  %v2813 = vand.u32 2147483647, %v2803
  %vm2814 = vcmp.eq.f32.partialorder %v2813, 8.507059e+37
  %v2815 = vand.u32 %v2803, 2147483648
  %v2816 = vor.u32 1.1754944e-38, %v2815
  %v2817 = vsel %vm2814, %v2816, %v2812
  %v2818 = vmul.f32 1.0, %v2817
  %v2819 = vmul.f32 %v2798, %v2579
  %v2820 = vmul.f32 %v2779, %v2799
  %v2821 = vadd.f32 %v2819, %v2820
  %v2822 = vtanh.pop %v2821
  %v2823 = vmul.f32 %v2818, %v2822
  %v2824 = vsel %vm51, %v2823, %v2578
  %v2825 = vsel %vm51, %v2821, %v2579
  %2826 = vst [vmem:[#allocation2 + $0x60] sm:$0xff] %v2702
  %2827 = vst [vmem:[#allocation2 + $0x18] sm:$0xff] %v2824
  %v2828 = vpack.c.bf16 %v2702, %v2702
  %2829 = vmatpush.bf16.msra.mxu0 %v912
  %2830 = vmatpush.bf16.msra.mxu0 %v908
  %2831 = vmatpush.bf16.msra.mxu0 %v904
  %2832 = vmatpush.bf16.msra.mxu0 %v900
  %2833 = vmatpush.bf16.msra.mxu0 %v896
  %2834 = vmatpush.bf16.msra.mxu0 %v892
  %2835 = vmatpush.bf16.msra.mxu0 %v888
  %2836 = vmatpush.bf16.msra.mxu0 %v884
  %2837 = vmatmul.bf16.gmra.mxu0 %v2828
  %v2838 = vpop.f32.mrf.mxu0
  %v2839 = vadd.f32 0.0, %v2838
  %v2840 = vpop.f32.mrf.mxu0
  %2841 = vdwg.mxu0
  %2842 = vmatpush.bf16.msra.mxu0 %v913
  %2843 = vmatpush.bf16.msra.mxu0 %v909
  %2844 = vmatpush.bf16.msra.mxu0 %v905
  %2845 = vmatpush.bf16.msra.mxu0 %v901
  %2846 = vmatpush.bf16.msra.mxu0 %v897
  %2847 = vmatpush.bf16.msra.mxu0 %v893
  %2848 = vmatpush.bf16.msra.mxu0 %v889
  %2849 = vmatpush.bf16.msra.mxu0 %v885
  %2850 = vmatmul.bf16.gmra.mxu0 %v2828
  %v2851 = vpop.f32.mrf.mxu0
  %v2852 = vadd.f32 0.0, %v2851
  %v2853 = vpop.f32.mrf.mxu0
  %2854 = vdwg.mxu0
  %2855 = vmatpush.bf16.msra.mxu0 %v914
  %2856 = vmatpush.bf16.msra.mxu0 %v910
  %2857 = vmatpush.bf16.msra.mxu0 %v906
  %2858 = vmatpush.bf16.msra.mxu0 %v902
  %2859 = vmatpush.bf16.msra.mxu0 %v898
  %2860 = vmatpush.bf16.msra.mxu0 %v894
  %2861 = vmatpush.bf16.msra.mxu0 %v890
  %2862 = vmatpush.bf16.msra.mxu0 %v886
  %2863 = vmatmul.bf16.gmra.mxu0 %v2828
  %v2864 = vpop.f32.mrf.mxu0
  %v2865 = vadd.f32 0.0, %v2864
  %v2866 = vpop.f32.mrf.mxu0
  %2867 = vdwg.mxu0
  %2868 = vmatpush.bf16.msra.mxu0 %v915
  %2869 = vmatpush.bf16.msra.mxu0 %v911
  %2870 = vmatpush.bf16.msra.mxu0 %v907
  %2871 = vmatpush.bf16.msra.mxu0 %v903
  %2872 = vmatpush.bf16.msra.mxu0 %v899
  %2873 = vmatpush.bf16.msra.mxu0 %v895
  %2874 = vmatpush.bf16.msra.mxu0 %v891
  %2875 = vmatpush.bf16.msra.mxu0 %v887
  %2876 = vmatmul.bf16.gmra.mxu0 %v2828
  %v2877 = vpop.f32.mrf.mxu0
  %v2878 = vadd.f32 0.0, %v2877
  %v2879 = vpop.f32.mrf.mxu0
  %2880 = vdwg.mxu0
  %v2881 = vadd.f32 %v519, %v2839
  %v2882 = vadd.f32 %v548, %v2852
  %v2883 = vadd.f32 %v577, %v2865
  %v2884 = vadd.f32 %v606, %v2878
  %v2885 = vxor.u32 %v2881, 2147483648
  %v2886 = vmul.f32 %v2885, 1.442695
  %v2887 = vpow.pop %v2886
  %v2888 = vadd.f32 %v2887, 1.0
  %v2889 = vrcp.pop %v2888
  %v2890 = vmul.f32 %v2888, %v2889
  %v2891 = vsub.f32 1.0, %v2890
  %v2892 = vmul.f32 %v2889, %v2891
  %v2893 = vadd.f32 %v2889, %v2892
  %vm2894 = vweird.f32 %v2888
  %vm2895 = vweird.f32 %v2889
  %vm2896 = vmor %vm2894, %vm2895
  %v2897 = vsel %vm2896, %v2889, %v2893
  %v2898 = vand.u32 2147483647, %v2888
  %vm2899 = vcmp.eq.f32.partialorder %v2898, 8.507059e+37
  %v2900 = vand.u32 %v2888, 2147483648
  %v2901 = vor.u32 1.1754944e-38, %v2900
  %v2902 = vsel %vm2899, %v2901, %v2897
  %v2903 = vmul.f32 1.0, %v2902
  %v2904 = vxor.u32 %v2882, 2147483648
  %v2905 = vmul.f32 %v2904, 1.442695
  %v2906 = vpow.pop %v2905
  %v2907 = vadd.f32 %v2906, 1.0
  %v2908 = vrcp.pop %v2907
  %v2909 = vmul.f32 %v2907, %v2908
  %v2910 = vsub.f32 1.0, %v2909
  %v2911 = vmul.f32 %v2908, %v2910
  %v2912 = vadd.f32 %v2908, %v2911
  %vm2913 = vweird.f32 %v2907
  %vm2914 = vweird.f32 %v2908
  %vm2915 = vmor %vm2913, %vm2914
  %v2916 = vsel %vm2915, %v2908, %v2912
  %v2917 = vand.u32 2147483647, %v2907
  %vm2918 = vcmp.eq.f32.partialorder %v2917, 8.507059e+37
  %v2919 = vand.u32 %v2907, 2147483648
  %v2920 = vor.u32 1.1754944e-38, %v2919
  %v2921 = vsel %vm2918, %v2920, %v2916
  %v2922 = vmul.f32 1.0, %v2921
  %v2923 = vtanh.pop %v2883
  %v2924 = vxor.u32 %v2884, 2147483648
  %v2925 = vmul.f32 %v2924, 1.442695
  %v2926 = vpow.pop %v2925
  %v2927 = vadd.f32 %v2926, 1.0
  %v2928 = vrcp.pop %v2927
  %v2929 = vmul.f32 %v2927, %v2928
  %v2930 = vsub.f32 1.0, %v2929
  %v2931 = vmul.f32 %v2928, %v2930
  %v2932 = vadd.f32 %v2928, %v2931
  %vm2933 = vweird.f32 %v2927
  %vm2934 = vweird.f32 %v2928
  %vm2935 = vmor %vm2933, %vm2934
  %v2936 = vsel %vm2935, %v2928, %v2932
  %v2937 = vand.u32 2147483647, %v2927
  %vm2938 = vcmp.eq.f32.partialorder %v2937, 8.507059e+37
  %v2939 = vand.u32 %v2927, 2147483648
  %v2940 = vor.u32 1.1754944e-38, %v2939
  %v2941 = vsel %vm2938, %v2940, %v2936
  %v2942 = vmul.f32 1.0, %v2941
  %v2943 = vmul.f32 %v2922, %v2703
  %v2944 = vmul.f32 %v2903, %v2923
  %v2945 = vadd.f32 %v2943, %v2944
  %v2946 = vtanh.pop %v2945
  %v2947 = vmul.f32 %v2942, %v2946
  %v2948 = vsel %vm57, %v2947, %v2702
  %v2949 = vpack.c.bf16 %v2824, %v2824
  %2950 = vmatpush.bf16.msra.mxu0 %v1193
  %2951 = vmatpush.bf16.msra.mxu0 %v1189
  %2952 = vmatpush.bf16.msra.mxu0 %v1185
  %2953 = vmatpush.bf16.msra.mxu0 %v1181
  %2954 = vmatpush.bf16.msra.mxu0 %v1177
  %2955 = vmatpush.bf16.msra.mxu0 %v1173
  %2956 = vmatpush.bf16.msra.mxu0 %v1169
  %2957 = vmatpush.bf16.msra.mxu0 %v1165
  %2958 = vmatmul.bf16.gmra.mxu0 %v2949
  %v2959 = vpop.f32.mrf.mxu0
  %v2960 = vadd.f32 0.0, %v2959
  %v2961 = vpop.f32.mrf.mxu0
  %2962 = vdwg.mxu0
  %2963 = vmatpush.bf16.msra.mxu0 %v1194
  %2964 = vmatpush.bf16.msra.mxu0 %v1190
  %2965 = vmatpush.bf16.msra.mxu0 %v1186
  %2966 = vmatpush.bf16.msra.mxu0 %v1182
  %2967 = vmatpush.bf16.msra.mxu0 %v1178
  %2968 = vmatpush.bf16.msra.mxu0 %v1174
  %2969 = vmatpush.bf16.msra.mxu0 %v1170
  %2970 = vmatpush.bf16.msra.mxu0 %v1166
  %2971 = vmatmul.bf16.gmra.mxu0 %v2949
  %v2972 = vpop.f32.mrf.mxu0
  %v2973 = vadd.f32 0.0, %v2972
  %v2974 = vpop.f32.mrf.mxu0
  %2975 = vdwg.mxu0
  %2976 = vmatpush.bf16.msra.mxu0 %v1195
  %2977 = vmatpush.bf16.msra.mxu0 %v1191
  %2978 = vmatpush.bf16.msra.mxu0 %v1187
  %2979 = vmatpush.bf16.msra.mxu0 %v1183
  %2980 = vmatpush.bf16.msra.mxu0 %v1179
  %2981 = vmatpush.bf16.msra.mxu0 %v1175
  %2982 = vmatpush.bf16.msra.mxu0 %v1171
  %2983 = vmatpush.bf16.msra.mxu0 %v1167
  %2984 = vmatmul.bf16.gmra.mxu0 %v2949
  %v2985 = vpop.f32.mrf.mxu0
  %v2986 = vadd.f32 0.0, %v2985
  %v2987 = vpop.f32.mrf.mxu0
  %2988 = vdwg.mxu0
  %2989 = vmatpush.bf16.msra.mxu0 %v1196
  %2990 = vmatpush.bf16.msra.mxu0 %v1192
  %2991 = vmatpush.bf16.msra.mxu0 %v1188
  %2992 = vmatpush.bf16.msra.mxu0 %v1184
  %2993 = vmatpush.bf16.msra.mxu0 %v1180
  %2994 = vmatpush.bf16.msra.mxu0 %v1176
  %2995 = vmatpush.bf16.msra.mxu0 %v1172
  %2996 = vmatpush.bf16.msra.mxu0 %v1168
  %2997 = vmatmul.bf16.gmra.mxu0 %v2949
  %v2998 = vpop.f32.mrf.mxu0
  %v2999 = vadd.f32 0.0, %v2998
  %v3000 = vpop.f32.mrf.mxu0
  %3001 = vdwg.mxu0
  %v3002 = vadd.f32 %v618, %v2960
  %v3003 = vadd.f32 %v647, %v2973
  %v3004 = vadd.f32 %v676, %v2986
  %v3005 = vadd.f32 %v705, %v2999
  %v3006 = vxor.u32 %v3002, 2147483648
  %v3007 = vmul.f32 %v3006, 1.442695
  %v3008 = vpow.pop %v3007
  %v3009 = vadd.f32 %v3008, 1.0
  %v3010 = vrcp.pop %v3009
  %v3011 = vmul.f32 %v3009, %v3010
  %v3012 = vsub.f32 1.0, %v3011
  %v3013 = vmul.f32 %v3010, %v3012
  %v3014 = vadd.f32 %v3010, %v3013
  %vm3015 = vweird.f32 %v3009
  %vm3016 = vweird.f32 %v3010
  %vm3017 = vmor %vm3015, %vm3016
  %v3018 = vsel %vm3017, %v3010, %v3014
  %v3019 = vand.u32 2147483647, %v3009
  %vm3020 = vcmp.eq.f32.partialorder %v3019, 8.507059e+37
  %v3021 = vand.u32 %v3009, 2147483648
  %v3022 = vor.u32 1.1754944e-38, %v3021
  %v3023 = vsel %vm3020, %v3022, %v3018
  %v3024 = vmul.f32 1.0, %v3023
  %v3025 = vxor.u32 %v3003, 2147483648
  %v3026 = vmul.f32 %v3025, 1.442695
  %v3027 = vpow.pop %v3026
  %v3028 = vadd.f32 %v3027, 1.0
  %v3029 = vrcp.pop %v3028
  %v3030 = vmul.f32 %v3028, %v3029
  %v3031 = vsub.f32 1.0, %v3030
  %v3032 = vmul.f32 %v3029, %v3031
  %v3033 = vadd.f32 %v3029, %v3032
  %vm3034 = vweird.f32 %v3028
  %vm3035 = vweird.f32 %v3029
  %vm3036 = vmor %vm3034, %vm3035
  %v3037 = vsel %vm3036, %v3029, %v3033
  %v3038 = vand.u32 2147483647, %v3028
  %vm3039 = vcmp.eq.f32.partialorder %v3038, 8.507059e+37
  %v3040 = vand.u32 %v3028, 2147483648
  %v3041 = vor.u32 1.1754944e-38, %v3040
  %v3042 = vsel %vm3039, %v3041, %v3037
  %v3043 = vmul.f32 1.0, %v3042
  %v3044 = vtanh.pop %v3004
  %v3045 = vxor.u32 %v3005, 2147483648
  %v3046 = vmul.f32 %v3045, 1.442695
  %v3047 = vpow.pop %v3046
  %v3048 = vadd.f32 %v3047, 1.0
  %v3049 = vrcp.pop %v3048
  %v3050 = vmul.f32 %v3048, %v3049
  %v3051 = vsub.f32 1.0, %v3050
  %v3052 = vmul.f32 %v3049, %v3051
  %v3053 = vadd.f32 %v3049, %v3052
  %vm3054 = vweird.f32 %v3048
  %vm3055 = vweird.f32 %v3049
  %vm3056 = vmor %vm3054, %vm3055
  %v3057 = vsel %vm3056, %v3049, %v3053
  %v3058 = vand.u32 2147483647, %v3048
  %vm3059 = vcmp.eq.f32.partialorder %v3058, 8.507059e+37
  %v3060 = vand.u32 %v3048, 2147483648
  %v3061 = vor.u32 1.1754944e-38, %v3060
  %v3062 = vsel %vm3059, %v3061, %v3057
  %v3063 = vmul.f32 1.0, %v3062
  %v3064 = vmul.f32 %v3043, %v2825
  %v3065 = vmul.f32 %v3024, %v3044
  %v3066 = vadd.f32 %v3064, %v3065
  %v3067 = vtanh.pop %v3066
  %v3068 = vmul.f32 %v3063, %v3067
  %v3069 = vsel %vm50, %v3068, %v2824
  %3070 = vst [vmem:[#allocation2 + $0x70] sm:$0xff] %v2948
  %3071 = vst [vmem:[#allocation2 + $0x8] sm:$0xff] %v3069
  %v3072 = vld [vmem:[#allocation2] sm:$0xff]
  %v3073 = vld [vmem:[#allocation2 + $0x8] sm:$0xff]
  %v3074 = vld [vmem:[#allocation2 + $0x10] sm:$0xff]
  %v3075 = vld [vmem:[#allocation2 + $0x18] sm:$0xff]
  %v3076 = vld [vmem:[#allocation2 + $0x20] sm:$0xff]
  %v3077 = vld [vmem:[#allocation2 + $0x28] sm:$0xff]
  %v3078 = vld [vmem:[#allocation2 + $0x30] sm:$0xff]
  %v3079 = vld [vmem:[#allocation2 + $0x38] sm:$0xff]
  %v3080 = vld [vmem:[#allocation2 + $0x40] sm:$0xff]
  %v3081 = vld [vmem:[#allocation2 + $0x48] sm:$0xff]
  %v3082 = vld [vmem:[#allocation2 + $0x50] sm:$0xff]
  %v3083 = vld [vmem:[#allocation2 + $0x58] sm:$0xff]
  %v3084 = vld [vmem:[#allocation2 + $0x60] sm:$0xff]
  %v3085 = vld [vmem:[#allocation2 + $0x68] sm:$0xff]
  %v3086 = vld [vmem:[#allocation2 + $0x70] sm:$0xff]
  %v3087 = vld [vmem:[#allocation2 + $0x78] sm:$0xff]
  %v3088 = vpack.c.bf16 %v3074, %v3072
  %v3089 = vpack.c.bf16 %v3075, %v3073
  %v3090 = vpack.c.bf16 %v3078, %v3076
  %v3091 = vpack.c.bf16 %v3079, %v3077
  %v3092 = vpack.c.bf16 %v3082, %v3080
  %v3093 = vpack.c.bf16 %v3083, %v3081
  %v3094 = vpack.c.bf16 %v3086, %v3084
  %v3095 = vpack.c.bf16 %v3087, %v3085
  %v3096 = vld [vmem:[%s6] sm:$0xff]
  %v3097 = vld [vmem:[%s6 + $0x8] sm:$0xff]
  %v3098 = vld [vmem:[%s6 + $0x10] sm:$0xff]
  %v3099 = vld [vmem:[%s6 + $0x18] sm:$0xff]
  %v3100 = vld [vmem:[%s6 + $0x20] sm:$0xff]
  %v3101 = vld [vmem:[%s6 + $0x28] sm:$0xff]
  %v3102 = vld [vmem:[%s6 + $0x30] sm:$0xff]
  %v3103 = vld [vmem:[%s6 + $0x38] sm:$0xff]
  %v3104 = vld [vmem:[%s6 + $0x40] sm:$0xff]
  %v3105 = vld [vmem:[%s6 + $0x48] sm:$0xff]
  %v3106 = vld [vmem:[%s6 + $0x50] sm:$0xff]
  %v3107 = vld [vmem:[%s6 + $0x58] sm:$0xff]
  %v3108 = vld [vmem:[%s6 + $0x60] sm:$0xff]
  %v3109 = vld [vmem:[%s6 + $0x68] sm:$0xff]
  %v3110 = vld [vmem:[%s6 + $0x70] sm:$0xff]
  %v3111 = vld [vmem:[%s6 + $0x78] sm:$0xff]
  %v3112 = vld [vmem:[%s6 + $0x80] sm:$0xff]
  %v3113 = vld [vmem:[%s6 + $0x88] sm:$0xff]
  %v3114 = vld [vmem:[%s6 + $0x90] sm:$0xff]
  %v3115 = vld [vmem:[%s6 + $0x98] sm:$0xff]
  %v3116 = vld [vmem:[%s6 + $0xa0] sm:$0xff]
  %v3117 = vld [vmem:[%s6 + $0xa8] sm:$0xff]
  %v3118 = vld [vmem:[%s6 + $0xb0] sm:$0xff]
  %v3119 = vld [vmem:[%s6 + $0xb8] sm:$0xff]
  %v3120 = vld [vmem:[%s6 + $0xc0] sm:$0xff]
  %v3121 = vld [vmem:[%s6 + $0xc8] sm:$0xff]
  %v3122 = vld [vmem:[%s6 + $0xd0] sm:$0xff]
  %v3123 = vld [vmem:[%s6 + $0xd8] sm:$0xff]
  %v3124 = vld [vmem:[%s6 + $0xe0] sm:$0xff]
  %v3125 = vld [vmem:[%s6 + $0xe8] sm:$0xff]
  %v3126 = vld [vmem:[%s6 + $0xf0] sm:$0xff]
  %v3127 = vld [vmem:[%s6 + $0xf8] sm:$0xff]
  %v3128 = vld [vmem:[%s6 + $0x100] sm:$0xff]
  %v3129 = vld [vmem:[%s6 + $0x108] sm:$0xff]
  %v3130 = vld [vmem:[%s6 + $0x110] sm:$0xff]
  %v3131 = vld [vmem:[%s6 + $0x118] sm:$0xff]
  %v3132 = vld [vmem:[%s6 + $0x120] sm:$0xff]
  %v3133 = vld [vmem:[%s6 + $0x128] sm:$0xff]
  %v3134 = vld [vmem:[%s6 + $0x130] sm:$0xff]
  %v3135 = vld [vmem:[%s6 + $0x138] sm:$0xff]
  %v3136 = vld [vmem:[%s6 + $0x140] sm:$0xff]
  %v3137 = vld [vmem:[%s6 + $0x148] sm:$0xff]
  %v3138 = vld [vmem:[%s6 + $0x150] sm:$0xff]
  %v3139 = vld [vmem:[%s6 + $0x158] sm:$0xff]
  %v3140 = vld [vmem:[%s6 + $0x160] sm:$0xff]
  %v3141 = vld [vmem:[%s6 + $0x168] sm:$0xff]
  %v3142 = vld [vmem:[%s6 + $0x170] sm:$0xff]
  %v3143 = vld [vmem:[%s6 + $0x178] sm:$0xff]
  %v3144 = vld [vmem:[%s6 + $0x180] sm:$0xff]
  %v3145 = vld [vmem:[%s6 + $0x188] sm:$0xff]
  %v3146 = vld [vmem:[%s6 + $0x190] sm:$0xff]
  %v3147 = vld [vmem:[%s6 + $0x198] sm:$0xff]
  %v3148 = vld [vmem:[%s6 + $0x1a0] sm:$0xff]
  %v3149 = vld [vmem:[%s6 + $0x1a8] sm:$0xff]
  %v3150 = vld [vmem:[%s6 + $0x1b0] sm:$0xff]
  %v3151 = vld [vmem:[%s6 + $0x1b8] sm:$0xff]
  %v3152 = vld [vmem:[%s6 + $0x1c0] sm:$0xff]
  %v3153 = vld [vmem:[%s6 + $0x1c8] sm:$0xff]
  %v3154 = vld [vmem:[%s6 + $0x1d0] sm:$0xff]
  %v3155 = vld [vmem:[%s6 + $0x1d8] sm:$0xff]
  %v3156 = vld [vmem:[%s6 + $0x1e0] sm:$0xff]
  %v3157 = vld [vmem:[%s6 + $0x1e8] sm:$0xff]
  %v3158 = vld [vmem:[%s6 + $0x1f0] sm:$0xff]
  %v3159 = vld [vmem:[%s6 + $0x1f8] sm:$0xff]
  %v3160 = vld [vmem:[%s6 + $0x200] sm:$0xff]
  %v3161 = vld [vmem:[%s6 + $0x208] sm:$0xff]
  %v3162 = vld [vmem:[%s6 + $0x210] sm:$0xff]
  %v3163 = vld [vmem:[%s6 + $0x218] sm:$0xff]
  %v3164 = vld [vmem:[%s6 + $0x220] sm:$0xff]
  %v3165 = vld [vmem:[%s6 + $0x228] sm:$0xff]
  %v3166 = vld [vmem:[%s6 + $0x230] sm:$0xff]
  %v3167 = vld [vmem:[%s6 + $0x238] sm:$0xff]
  %v3168 = vld [vmem:[%s6 + $0x240] sm:$0xff]
  %v3169 = vld [vmem:[%s6 + $0x248] sm:$0xff]
  %v3170 = vld [vmem:[%s6 + $0x250] sm:$0xff]
  %v3171 = vld [vmem:[%s6 + $0x258] sm:$0xff]
  %v3172 = vld [vmem:[%s6 + $0x260] sm:$0xff]
  %v3173 = vld [vmem:[%s6 + $0x268] sm:$0xff]
  %v3174 = vld [vmem:[%s6 + $0x270] sm:$0xff]
  %v3175 = vld [vmem:[%s6 + $0x278] sm:$0xff]
  %v3176 = vld [vmem:[%s6 + $0x280] sm:$0xff]
  %v3177 = vld [vmem:[%s6 + $0x288] sm:$0xff]
  %v3178 = vld [vmem:[%s6 + $0x290] sm:$0xff]
  %v3179 = vld [vmem:[%s6 + $0x298] sm:$0xff]
  %v3180 = vld [vmem:[%s6 + $0x2a0] sm:$0xff]
  %v3181 = vld [vmem:[%s6 + $0x2a8] sm:$0xff]
  %v3182 = vld [vmem:[%s6 + $0x2b0] sm:$0xff]
  %v3183 = vld [vmem:[%s6 + $0x2b8] sm:$0xff]
  %v3184 = vld [vmem:[%s6 + $0x2c0] sm:$0xff]
  %v3185 = vld [vmem:[%s6 + $0x2c8] sm:$0xff]
  %v3186 = vld [vmem:[%s6 + $0x2d0] sm:$0xff]
  %v3187 = vld [vmem:[%s6 + $0x2d8] sm:$0xff]
  %v3188 = vld [vmem:[%s6 + $0x2e0] sm:$0xff]
  %v3189 = vld [vmem:[%s6 + $0x2e8] sm:$0xff]
  %v3190 = vld [vmem:[%s6 + $0x2f0] sm:$0xff]
  %v3191 = vld [vmem:[%s6 + $0x2f8] sm:$0xff]
  %v3192 = vld [vmem:[%s6 + $0x300] sm:$0xff]
  %v3193 = vld [vmem:[%s6 + $0x308] sm:$0xff]
  %v3194 = vld [vmem:[%s6 + $0x310] sm:$0xff]
  %v3195 = vld [vmem:[%s6 + $0x318] sm:$0xff]
  %v3196 = vld [vmem:[%s6 + $0x320] sm:$0xff]
  %v3197 = vld [vmem:[%s6 + $0x328] sm:$0xff]
  %v3198 = vld [vmem:[%s6 + $0x330] sm:$0xff]
  %v3199 = vld [vmem:[%s6 + $0x338] sm:$0xff]
  %v3200 = vld [vmem:[%s6 + $0x340] sm:$0xff]
  %v3201 = vld [vmem:[%s6 + $0x348] sm:$0xff]
  %v3202 = vld [vmem:[%s6 + $0x350] sm:$0xff]
  %v3203 = vld [vmem:[%s6 + $0x358] sm:$0xff]
  %v3204 = vld [vmem:[%s6 + $0x360] sm:$0xff]
  %v3205 = vld [vmem:[%s6 + $0x368] sm:$0xff]
  %v3206 = vld [vmem:[%s6 + $0x370] sm:$0xff]
  %v3207 = vld [vmem:[%s6 + $0x378] sm:$0xff]
  %v3208 = vld [vmem:[%s6 + $0x380] sm:$0xff]
  %v3209 = vld [vmem:[%s6 + $0x388] sm:$0xff]
  %v3210 = vld [vmem:[%s6 + $0x390] sm:$0xff]
  %v3211 = vld [vmem:[%s6 + $0x398] sm:$0xff]
  %v3212 = vld [vmem:[%s6 + $0x3a0] sm:$0xff]
  %v3213 = vld [vmem:[%s6 + $0x3a8] sm:$0xff]
  %v3214 = vld [vmem:[%s6 + $0x3b0] sm:$0xff]
  %v3215 = vld [vmem:[%s6 + $0x3b8] sm:$0xff]
  %v3216 = vld [vmem:[%s6 + $0x3c0] sm:$0xff]
  %v3217 = vld [vmem:[%s6 + $0x3c8] sm:$0xff]
  %v3218 = vld [vmem:[%s6 + $0x3d0] sm:$0xff]
  %v3219 = vld [vmem:[%s6 + $0x3d8] sm:$0xff]
  %v3220 = vld [vmem:[%s6 + $0x3e0] sm:$0xff]
  %v3221 = vld [vmem:[%s6 + $0x3e8] sm:$0xff]
  %v3222 = vld [vmem:[%s6 + $0x3f0] sm:$0xff]
  %v3223 = vld [vmem:[%s6 + $0x3f8] sm:$0xff]
  %v3224 = vld [vmem:[%s7] sm:$0xff]
  %v3226 = vperm.slane %v3224, 0
  %v3227 = vperm.slane %v3224, 1
  %v3228 = vperm.slane %v3224, 2
  %v3229 = vperm.slane %v3224, 3
  %v3230 = vperm.slane %v3224, 4
  %v3231 = vperm.slane %v3224, 5
  %v3232 = vperm.slane %v3224, 6
  %v3233 = vperm.slane %v3224, 7
  %v3370 = vunpack.c.l.b16 %v3096
  %v3371 = vunpack.c.h.b16 %v3096
  %v3372 = vunpack.c.l.b16 %v3097
  %v3373 = vunpack.c.h.b16 %v3097
  %v3374 = vunpack.c.l.b16 %v3098
  %v3375 = vunpack.c.h.b16 %v3098
  %v3376 = vunpack.c.l.b16 %v3099
  %v3377 = vunpack.c.h.b16 %v3099
  %v3378 = vunpack.c.l.b16 %v3100
  %v3379 = vunpack.c.h.b16 %v3100
  %v3380 = vunpack.c.l.b16 %v3101
  %v3381 = vunpack.c.h.b16 %v3101
  %v3382 = vunpack.c.l.b16 %v3102
  %v3383 = vunpack.c.h.b16 %v3102
  %v3384 = vunpack.c.l.b16 %v3103
  %v3385 = vunpack.c.h.b16 %v3103
  %v3386 = vunpack.c.l.b16 %v3104
  %v3387 = vunpack.c.h.b16 %v3104
  %v3388 = vunpack.c.l.b16 %v3105
  %v3389 = vunpack.c.h.b16 %v3105
  %v3390 = vunpack.c.l.b16 %v3106
  %v3391 = vunpack.c.h.b16 %v3106
  %v3392 = vunpack.c.l.b16 %v3107
  %v3393 = vunpack.c.h.b16 %v3107
  %v3394 = vunpack.c.l.b16 %v3108
  %v3395 = vunpack.c.h.b16 %v3108
  %v3396 = vunpack.c.l.b16 %v3109
  %v3397 = vunpack.c.h.b16 %v3109
  %v3398 = vunpack.c.l.b16 %v3110
  %v3399 = vunpack.c.h.b16 %v3110
  %v3400 = vunpack.c.l.b16 %v3111
  %v3401 = vunpack.c.h.b16 %v3111
  %v3402 = vunpack.c.l.b16 %v3112
  %v3403 = vunpack.c.h.b16 %v3112
  %v3404 = vunpack.c.l.b16 %v3113
  %v3405 = vunpack.c.h.b16 %v3113
  %v3406 = vunpack.c.l.b16 %v3114
  %v3407 = vunpack.c.h.b16 %v3114
  %v3408 = vunpack.c.l.b16 %v3115
  %v3409 = vunpack.c.h.b16 %v3115
  %v3410 = vunpack.c.l.b16 %v3116
  %v3411 = vunpack.c.h.b16 %v3116
  %v3412 = vunpack.c.l.b16 %v3117
  %v3413 = vunpack.c.h.b16 %v3117
  %v3414 = vunpack.c.l.b16 %v3118
  %v3415 = vunpack.c.h.b16 %v3118
  %v3416 = vunpack.c.l.b16 %v3119
  %v3417 = vunpack.c.h.b16 %v3119
  %v3418 = vunpack.c.l.b16 %v3120
  %v3419 = vunpack.c.h.b16 %v3120
  %v3420 = vunpack.c.l.b16 %v3121
  %v3421 = vunpack.c.h.b16 %v3121
  %v3422 = vunpack.c.l.b16 %v3122
  %v3423 = vunpack.c.h.b16 %v3122
  %v3424 = vunpack.c.l.b16 %v3123
  %v3425 = vunpack.c.h.b16 %v3123
  %v3426 = vunpack.c.l.b16 %v3124
  %v3427 = vunpack.c.h.b16 %v3124
  %v3428 = vunpack.c.l.b16 %v3125
  %v3429 = vunpack.c.h.b16 %v3125
  %v3430 = vunpack.c.l.b16 %v3126
  %v3431 = vunpack.c.h.b16 %v3126
  %v3432 = vunpack.c.l.b16 %v3127
  %v3433 = vunpack.c.h.b16 %v3127
  %v3434 = vunpack.c.l.b16 %v3128
  %v3435 = vunpack.c.h.b16 %v3128
  %v3436 = vunpack.c.l.b16 %v3129
  %v3437 = vunpack.c.h.b16 %v3129
  %v3438 = vunpack.c.l.b16 %v3130
  %v3439 = vunpack.c.h.b16 %v3130
  %v3440 = vunpack.c.l.b16 %v3131
  %v3441 = vunpack.c.h.b16 %v3131
  %v3442 = vunpack.c.l.b16 %v3132
  %v3443 = vunpack.c.h.b16 %v3132
  %v3444 = vunpack.c.l.b16 %v3133
  %v3445 = vunpack.c.h.b16 %v3133
  %v3446 = vunpack.c.l.b16 %v3134
  %v3447 = vunpack.c.h.b16 %v3134
  %v3448 = vunpack.c.l.b16 %v3135
  %v3449 = vunpack.c.h.b16 %v3135
  %v3450 = vunpack.c.l.b16 %v3136
  %v3451 = vunpack.c.h.b16 %v3136
  %v3452 = vunpack.c.l.b16 %v3137
  %v3453 = vunpack.c.h.b16 %v3137
  %v3454 = vunpack.c.l.b16 %v3138
  %v3455 = vunpack.c.h.b16 %v3138
  %v3456 = vunpack.c.l.b16 %v3139
  %v3457 = vunpack.c.h.b16 %v3139
  %v3458 = vunpack.c.l.b16 %v3140
  %v3459 = vunpack.c.h.b16 %v3140
  %v3460 = vunpack.c.l.b16 %v3141
  %v3461 = vunpack.c.h.b16 %v3141
  %v3462 = vunpack.c.l.b16 %v3142
  %v3463 = vunpack.c.h.b16 %v3142
  %v3464 = vunpack.c.l.b16 %v3143
  %v3465 = vunpack.c.h.b16 %v3143
  %v3466 = vunpack.c.l.b16 %v3144
  %v3467 = vunpack.c.h.b16 %v3144
  %v3468 = vunpack.c.l.b16 %v3145
  %v3469 = vunpack.c.h.b16 %v3145
  %v3470 = vunpack.c.l.b16 %v3146
  %v3471 = vunpack.c.h.b16 %v3146
  %v3472 = vunpack.c.l.b16 %v3147
  %v3473 = vunpack.c.h.b16 %v3147
  %v3474 = vunpack.c.l.b16 %v3148
  %v3475 = vunpack.c.h.b16 %v3148
  %v3476 = vunpack.c.l.b16 %v3149
  %v3477 = vunpack.c.h.b16 %v3149
  %v3478 = vunpack.c.l.b16 %v3150
  %v3479 = vunpack.c.h.b16 %v3150
  %v3480 = vunpack.c.l.b16 %v3151
  %v3481 = vunpack.c.h.b16 %v3151
  %v3482 = vunpack.c.l.b16 %v3152
  %v3483 = vunpack.c.h.b16 %v3152
  %v3484 = vunpack.c.l.b16 %v3153
  %v3485 = vunpack.c.h.b16 %v3153
  %v3486 = vunpack.c.l.b16 %v3154
  %v3487 = vunpack.c.h.b16 %v3154
  %v3488 = vunpack.c.l.b16 %v3155
  %v3489 = vunpack.c.h.b16 %v3155
  %v3490 = vunpack.c.l.b16 %v3156
  %v3491 = vunpack.c.h.b16 %v3156
  %v3492 = vunpack.c.l.b16 %v3157
  %v3493 = vunpack.c.h.b16 %v3157
  %v3494 = vunpack.c.l.b16 %v3158
  %v3495 = vunpack.c.h.b16 %v3158
  %v3496 = vunpack.c.l.b16 %v3159
  %v3497 = vunpack.c.h.b16 %v3159
  %v3498 = vunpack.c.l.b16 %v3160
  %v3499 = vunpack.c.h.b16 %v3160
  %v3500 = vunpack.c.l.b16 %v3161
  %v3501 = vunpack.c.h.b16 %v3161
  %v3502 = vunpack.c.l.b16 %v3162
  %v3503 = vunpack.c.h.b16 %v3162
  %v3504 = vunpack.c.l.b16 %v3163
  %v3505 = vunpack.c.h.b16 %v3163
  %v3506 = vunpack.c.l.b16 %v3164
  %v3507 = vunpack.c.h.b16 %v3164
  %v3508 = vunpack.c.l.b16 %v3165
  %v3509 = vunpack.c.h.b16 %v3165
  %v3510 = vunpack.c.l.b16 %v3166
  %v3511 = vunpack.c.h.b16 %v3166
  %v3512 = vunpack.c.l.b16 %v3167
  %v3513 = vunpack.c.h.b16 %v3167
  %v3514 = vunpack.c.l.b16 %v3168
  %v3515 = vunpack.c.h.b16 %v3168
  %v3516 = vunpack.c.l.b16 %v3169
  %v3517 = vunpack.c.h.b16 %v3169
  %v3518 = vunpack.c.l.b16 %v3170
  %v3519 = vunpack.c.h.b16 %v3170
  %v3520 = vunpack.c.l.b16 %v3171
  %v3521 = vunpack.c.h.b16 %v3171
  %v3522 = vunpack.c.l.b16 %v3172
  %v3523 = vunpack.c.h.b16 %v3172
  %v3524 = vunpack.c.l.b16 %v3173
  %v3525 = vunpack.c.h.b16 %v3173
  %v3526 = vunpack.c.l.b16 %v3174
  %v3527 = vunpack.c.h.b16 %v3174
  %v3528 = vunpack.c.l.b16 %v3175
  %v3529 = vunpack.c.h.b16 %v3175
  %v3530 = vunpack.c.l.b16 %v3176
  %v3531 = vunpack.c.h.b16 %v3176
  %v3532 = vunpack.c.l.b16 %v3177
  %v3533 = vunpack.c.h.b16 %v3177
  %v3534 = vunpack.c.l.b16 %v3178
  %v3535 = vunpack.c.h.b16 %v3178
  %v3536 = vunpack.c.l.b16 %v3179
  %v3537 = vunpack.c.h.b16 %v3179
  %v3538 = vunpack.c.l.b16 %v3180
  %v3539 = vunpack.c.h.b16 %v3180
  %v3540 = vunpack.c.l.b16 %v3181
  %v3541 = vunpack.c.h.b16 %v3181
  %v3542 = vunpack.c.l.b16 %v3182
  %v3543 = vunpack.c.h.b16 %v3182
  %v3544 = vunpack.c.l.b16 %v3183
  %v3545 = vunpack.c.h.b16 %v3183
  %v3546 = vunpack.c.l.b16 %v3184
  %v3547 = vunpack.c.h.b16 %v3184
  %v3548 = vunpack.c.l.b16 %v3185
  %v3549 = vunpack.c.h.b16 %v3185
  %v3550 = vunpack.c.l.b16 %v3186
  %v3551 = vunpack.c.h.b16 %v3186
  %v3552 = vunpack.c.l.b16 %v3187
  %v3553 = vunpack.c.h.b16 %v3187
  %v3554 = vunpack.c.l.b16 %v3188
  %v3555 = vunpack.c.h.b16 %v3188
  %v3556 = vunpack.c.l.b16 %v3189
  %v3557 = vunpack.c.h.b16 %v3189
  %v3558 = vunpack.c.l.b16 %v3190
  %v3559 = vunpack.c.h.b16 %v3190
  %v3560 = vunpack.c.l.b16 %v3191
  %v3561 = vunpack.c.h.b16 %v3191
  %v3562 = vunpack.c.l.b16 %v3192
  %v3563 = vunpack.c.h.b16 %v3192
  %v3564 = vunpack.c.l.b16 %v3193
  %v3565 = vunpack.c.h.b16 %v3193
  %v3566 = vunpack.c.l.b16 %v3194
  %v3567 = vunpack.c.h.b16 %v3194
  %v3568 = vunpack.c.l.b16 %v3195
  %v3569 = vunpack.c.h.b16 %v3195
  %v3570 = vunpack.c.l.b16 %v3196
  %v3571 = vunpack.c.h.b16 %v3196
  %v3572 = vunpack.c.l.b16 %v3197
  %v3573 = vunpack.c.h.b16 %v3197
  %v3574 = vunpack.c.l.b16 %v3198
  %v3575 = vunpack.c.h.b16 %v3198
  %v3576 = vunpack.c.l.b16 %v3199
  %v3577 = vunpack.c.h.b16 %v3199
  %v3578 = vunpack.c.l.b16 %v3200
  %v3579 = vunpack.c.h.b16 %v3200
  %v3580 = vunpack.c.l.b16 %v3201
  %v3581 = vunpack.c.h.b16 %v3201
  %v3582 = vunpack.c.l.b16 %v3202
  %v3583 = vunpack.c.h.b16 %v3202
  %v3584 = vunpack.c.l.b16 %v3203
  %v3585 = vunpack.c.h.b16 %v3203
  %v3586 = vunpack.c.l.b16 %v3204
  %v3587 = vunpack.c.h.b16 %v3204
  %v3588 = vunpack.c.l.b16 %v3205
  %v3589 = vunpack.c.h.b16 %v3205
  %v3590 = vunpack.c.l.b16 %v3206
  %v3591 = vunpack.c.h.b16 %v3206
  %v3592 = vunpack.c.l.b16 %v3207
  %v3593 = vunpack.c.h.b16 %v3207
  %v3594 = vunpack.c.l.b16 %v3208
  %v3595 = vunpack.c.h.b16 %v3208
  %v3596 = vunpack.c.l.b16 %v3209
  %v3597 = vunpack.c.h.b16 %v3209
  %v3598 = vunpack.c.l.b16 %v3210
  %v3599 = vunpack.c.h.b16 %v3210
  %v3600 = vunpack.c.l.b16 %v3211
  %v3601 = vunpack.c.h.b16 %v3211
  %v3602 = vunpack.c.l.b16 %v3212
  %v3603 = vunpack.c.h.b16 %v3212
  %v3604 = vunpack.c.l.b16 %v3213
  %v3605 = vunpack.c.h.b16 %v3213
  %v3606 = vunpack.c.l.b16 %v3214
  %v3607 = vunpack.c.h.b16 %v3214
  %v3608 = vunpack.c.l.b16 %v3215
  %v3609 = vunpack.c.h.b16 %v3215
  %v3610 = vunpack.c.l.b16 %v3216
  %v3611 = vunpack.c.h.b16 %v3216
  %v3612 = vunpack.c.l.b16 %v3217
  %v3613 = vunpack.c.h.b16 %v3217
  %v3614 = vunpack.c.l.b16 %v3218
  %v3615 = vunpack.c.h.b16 %v3218
  %v3616 = vunpack.c.l.b16 %v3219
  %v3617 = vunpack.c.h.b16 %v3219
  %v3618 = vunpack.c.l.b16 %v3220
  %v3619 = vunpack.c.h.b16 %v3220
  %v3620 = vunpack.c.l.b16 %v3221
  %v3621 = vunpack.c.h.b16 %v3221
  %v3622 = vunpack.c.l.b16 %v3222
  %v3623 = vunpack.c.h.b16 %v3222
  %v3624 = vunpack.c.l.b16 %v3223
  %v3625 = vunpack.c.h.b16 %v3223
  %v3626 = vpack.c.b16 %v3378, %v3370
  %v3627 = vpack.c.b16 %v3379, %v3371
  %v3628 = vpack.c.b16 %v3380, %v3372
  %v3629 = vpack.c.b16 %v3381, %v3373
  %v3630 = vpack.c.b16 %v3382, %v3374
  %v3631 = vpack.c.b16 %v3383, %v3375
  %v3632 = vpack.c.b16 %v3384, %v3376
  %v3633 = vpack.c.b16 %v3385, %v3377
  %v3634 = vpack.c.b16 %v3394, %v3386
  %v3635 = vpack.c.b16 %v3395, %v3387
  %v3636 = vpack.c.b16 %v3396, %v3388
  %v3637 = vpack.c.b16 %v3397, %v3389
  %v3638 = vpack.c.b16 %v3398, %v3390
  %v3639 = vpack.c.b16 %v3399, %v3391
  %v3640 = vpack.c.b16 %v3400, %v3392
  %v3641 = vpack.c.b16 %v3401, %v3393
  %v3642 = vpack.c.b16 %v3410, %v3402
  %v3643 = vpack.c.b16 %v3411, %v3403
  %v3644 = vpack.c.b16 %v3412, %v3404
  %v3645 = vpack.c.b16 %v3413, %v3405
  %v3646 = vpack.c.b16 %v3414, %v3406
  %v3647 = vpack.c.b16 %v3415, %v3407
  %v3648 = vpack.c.b16 %v3416, %v3408
  %v3649 = vpack.c.b16 %v3417, %v3409
  %v3650 = vpack.c.b16 %v3426, %v3418
  %v3651 = vpack.c.b16 %v3427, %v3419
  %v3652 = vpack.c.b16 %v3428, %v3420
  %v3653 = vpack.c.b16 %v3429, %v3421
  %v3654 = vpack.c.b16 %v3430, %v3422
  %v3655 = vpack.c.b16 %v3431, %v3423
  %v3656 = vpack.c.b16 %v3432, %v3424
  %v3657 = vpack.c.b16 %v3433, %v3425
  %v3658 = vpack.c.b16 %v3442, %v3434
  %v3659 = vpack.c.b16 %v3443, %v3435
  %v3660 = vpack.c.b16 %v3444, %v3436
  %v3661 = vpack.c.b16 %v3445, %v3437
  %v3662 = vpack.c.b16 %v3446, %v3438
  %v3663 = vpack.c.b16 %v3447, %v3439
  %v3664 = vpack.c.b16 %v3448, %v3440
  %v3665 = vpack.c.b16 %v3449, %v3441
  %v3666 = vpack.c.b16 %v3458, %v3450
  %v3667 = vpack.c.b16 %v3459, %v3451
  %v3668 = vpack.c.b16 %v3460, %v3452
  %v3669 = vpack.c.b16 %v3461, %v3453
  %v3670 = vpack.c.b16 %v3462, %v3454
  %v3671 = vpack.c.b16 %v3463, %v3455
  %v3672 = vpack.c.b16 %v3464, %v3456
  %v3673 = vpack.c.b16 %v3465, %v3457
  %v3674 = vpack.c.b16 %v3474, %v3466
  %v3675 = vpack.c.b16 %v3475, %v3467
  %v3676 = vpack.c.b16 %v3476, %v3468
  %v3677 = vpack.c.b16 %v3477, %v3469
  %v3678 = vpack.c.b16 %v3478, %v3470
  %v3679 = vpack.c.b16 %v3479, %v3471
  %v3680 = vpack.c.b16 %v3480, %v3472
  %v3681 = vpack.c.b16 %v3481, %v3473
  %v3682 = vpack.c.b16 %v3490, %v3482
  %v3683 = vpack.c.b16 %v3491, %v3483
  %v3684 = vpack.c.b16 %v3492, %v3484
  %v3685 = vpack.c.b16 %v3493, %v3485
  %v3686 = vpack.c.b16 %v3494, %v3486
  %v3687 = vpack.c.b16 %v3495, %v3487
  %v3688 = vpack.c.b16 %v3496, %v3488
  %v3689 = vpack.c.b16 %v3497, %v3489
  %v3690 = vpack.c.b16 %v3506, %v3498
  %v3691 = vpack.c.b16 %v3507, %v3499
  %v3692 = vpack.c.b16 %v3508, %v3500
  %v3693 = vpack.c.b16 %v3509, %v3501
  %v3694 = vpack.c.b16 %v3510, %v3502
  %v3695 = vpack.c.b16 %v3511, %v3503
  %v3696 = vpack.c.b16 %v3512, %v3504
  %v3697 = vpack.c.b16 %v3513, %v3505
  %v3698 = vpack.c.b16 %v3522, %v3514
  %v3699 = vpack.c.b16 %v3523, %v3515
  %v3700 = vpack.c.b16 %v3524, %v3516
  %v3701 = vpack.c.b16 %v3525, %v3517
  %v3702 = vpack.c.b16 %v3526, %v3518
  %v3703 = vpack.c.b16 %v3527, %v3519
  %v3704 = vpack.c.b16 %v3528, %v3520
  %v3705 = vpack.c.b16 %v3529, %v3521
  %v3706 = vpack.c.b16 %v3538, %v3530
  %v3707 = vpack.c.b16 %v3539, %v3531
  %v3708 = vpack.c.b16 %v3540, %v3532
  %v3709 = vpack.c.b16 %v3541, %v3533
  %v3710 = vpack.c.b16 %v3542, %v3534
  %v3711 = vpack.c.b16 %v3543, %v3535
  %v3712 = vpack.c.b16 %v3544, %v3536
  %v3713 = vpack.c.b16 %v3545, %v3537
  %v3714 = vpack.c.b16 %v3554, %v3546
  %v3715 = vpack.c.b16 %v3555, %v3547
  %v3716 = vpack.c.b16 %v3556, %v3548
  %v3717 = vpack.c.b16 %v3557, %v3549
  %v3718 = vpack.c.b16 %v3558, %v3550
  %v3719 = vpack.c.b16 %v3559, %v3551
  %v3720 = vpack.c.b16 %v3560, %v3552
  %v3721 = vpack.c.b16 %v3561, %v3553
  %v3722 = vpack.c.b16 %v3570, %v3562
  %v3723 = vpack.c.b16 %v3571, %v3563
  %v3724 = vpack.c.b16 %v3572, %v3564
  %v3725 = vpack.c.b16 %v3573, %v3565
  %v3726 = vpack.c.b16 %v3574, %v3566
  %v3727 = vpack.c.b16 %v3575, %v3567
  %v3728 = vpack.c.b16 %v3576, %v3568
  %v3729 = vpack.c.b16 %v3577, %v3569
  %v3730 = vpack.c.b16 %v3586, %v3578
  %v3731 = vpack.c.b16 %v3587, %v3579
  %v3732 = vpack.c.b16 %v3588, %v3580
  %v3733 = vpack.c.b16 %v3589, %v3581
  %v3734 = vpack.c.b16 %v3590, %v3582
  %v3735 = vpack.c.b16 %v3591, %v3583
  %v3736 = vpack.c.b16 %v3592, %v3584
  %v3737 = vpack.c.b16 %v3593, %v3585
  %v3738 = vpack.c.b16 %v3602, %v3594
  %v3739 = vpack.c.b16 %v3603, %v3595
  %v3740 = vpack.c.b16 %v3604, %v3596
  %v3741 = vpack.c.b16 %v3605, %v3597
  %v3742 = vpack.c.b16 %v3606, %v3598
  %v3743 = vpack.c.b16 %v3607, %v3599
  %v3744 = vpack.c.b16 %v3608, %v3600
  %v3745 = vpack.c.b16 %v3609, %v3601
  %v3746 = vpack.c.b16 %v3618, %v3610
  %v3747 = vpack.c.b16 %v3619, %v3611
  %v3748 = vpack.c.b16 %v3620, %v3612
  %v3749 = vpack.c.b16 %v3621, %v3613
  %v3750 = vpack.c.b16 %v3622, %v3614
  %v3751 = vpack.c.b16 %v3623, %v3615
  %v3752 = vpack.c.b16 %v3624, %v3616
  %v3753 = vpack.c.b16 %v3625, %v3617
  %3882 = vmatpush.bf16.msra.mxu0 %v3682
  %3883 = vmatpush.bf16.msra.mxu0 %v3674
  %3884 = vmatpush.bf16.msra.mxu0 %v3666
  %3885 = vmatpush.bf16.msra.mxu0 %v3658
  %3886 = vmatpush.bf16.msra.mxu0 %v3650
  %3887 = vmatpush.bf16.msra.mxu0 %v3642
  %3888 = vmatpush.bf16.msra.mxu0 %v3634
  %3889 = vmatpush.bf16.msra.mxu0 %v3626
  %3890 = vmatmul.bf16.gmra.mxu0 %v3088
  %v3891 = vpop.f32.mrf.mxu0
  %v3892 = vadd.f32 %v3226, %v3891
  %v3893 = vpop.f32.mrf.mxu0
  %v3894 = vadd.f32 %v3226, %v3893
  %3895 = vmatmul.bf16.gmra.mxu0 %v3090
  %v3896 = vpop.f32.mrf.mxu0
  %v3897 = vadd.f32 %v3226, %v3896
  %v3898 = vpop.f32.mrf.mxu0
  %v3899 = vadd.f32 %v3226, %v3898
  %3900 = vmatmul.bf16.gmra.mxu0 %v3092
  %v3901 = vpop.f32.mrf.mxu0
  %v3902 = vadd.f32 %v3226, %v3901
  %v3903 = vpop.f32.mrf.mxu0
  %v3904 = vadd.f32 %v3226, %v3903
  %3905 = vmatmul.bf16.gmra.mxu0 %v3094
  %v3906 = vpop.f32.mrf.mxu0
  %v3907 = vadd.f32 %v3226, %v3906
  %v3908 = vpop.f32.mrf.mxu0
  %v3909 = vadd.f32 %v3226, %v3908
  %3910 = vdwg.mxu0
  %3911 = vmatpush.bf16.msra.mxu0 %v3746
  %3912 = vmatpush.bf16.msra.mxu0 %v3738
  %3913 = vmatpush.bf16.msra.mxu0 %v3730
  %3914 = vmatpush.bf16.msra.mxu0 %v3722
  %3915 = vmatpush.bf16.msra.mxu0 %v3714
  %3916 = vmatpush.bf16.msra.mxu0 %v3706
  %3917 = vmatpush.bf16.msra.mxu0 %v3698
  %3918 = vmatpush.bf16.msra.mxu0 %v3690
  %3919 = vmatmul.bf16.gmra.mxu0 %v3089
  %v3920 = vpop.f32.mrf.mxu0
  %v3921 = vadd.f32 %v3892, %v3920
  %v3922 = vpop.f32.mrf.mxu0
  %v3923 = vadd.f32 %v3894, %v3922
  %3924 = vmatmul.bf16.gmra.mxu0 %v3091
  %v3925 = vpop.f32.mrf.mxu0
  %v3926 = vadd.f32 %v3897, %v3925
  %v3927 = vpop.f32.mrf.mxu0
  %v3928 = vadd.f32 %v3899, %v3927
  %3929 = vmatmul.bf16.gmra.mxu0 %v3093
  %v3930 = vpop.f32.mrf.mxu0
  %v3931 = vadd.f32 %v3902, %v3930
  %v3932 = vpop.f32.mrf.mxu0
  %v3933 = vadd.f32 %v3904, %v3932
  %3934 = vmatmul.bf16.gmra.mxu0 %v3095
  %v3935 = vpop.f32.mrf.mxu0
  %v3936 = vadd.f32 %v3907, %v3935
  %v3937 = vpop.f32.mrf.mxu0
  %v3938 = vadd.f32 %v3909, %v3937
  %3939 = vdwg.mxu0
  %3940 = vmatpush.bf16.msra.mxu0 %v3683
  %3941 = vmatpush.bf16.msra.mxu0 %v3675
  %3942 = vmatpush.bf16.msra.mxu0 %v3667
  %3943 = vmatpush.bf16.msra.mxu0 %v3659
  %3944 = vmatpush.bf16.msra.mxu0 %v3651
  %3945 = vmatpush.bf16.msra.mxu0 %v3643
  %3946 = vmatpush.bf16.msra.mxu0 %v3635
  %3947 = vmatpush.bf16.msra.mxu0 %v3627
  %3948 = vmatmul.bf16.gmra.mxu0 %v3088
  %v3949 = vpop.f32.mrf.mxu0
  %v3950 = vadd.f32 %v3227, %v3949
  %v3951 = vpop.f32.mrf.mxu0
  %v3952 = vadd.f32 %v3227, %v3951
  %3953 = vmatmul.bf16.gmra.mxu0 %v3090
  %v3954 = vpop.f32.mrf.mxu0
  %v3955 = vadd.f32 %v3227, %v3954
  %v3956 = vpop.f32.mrf.mxu0
  %v3957 = vadd.f32 %v3227, %v3956
  %3958 = vmatmul.bf16.gmra.mxu0 %v3092
  %v3959 = vpop.f32.mrf.mxu0
  %v3960 = vadd.f32 %v3227, %v3959
  %v3961 = vpop.f32.mrf.mxu0
  %v3962 = vadd.f32 %v3227, %v3961
  %3963 = vmatmul.bf16.gmra.mxu0 %v3094
  %v3964 = vpop.f32.mrf.mxu0
  %v3965 = vadd.f32 %v3227, %v3964
  %v3966 = vpop.f32.mrf.mxu0
  %v3967 = vadd.f32 %v3227, %v3966
  %3968 = vdwg.mxu0
  %3969 = vmatpush.bf16.msra.mxu0 %v3747
  %3970 = vmatpush.bf16.msra.mxu0 %v3739
  %3971 = vmatpush.bf16.msra.mxu0 %v3731
  %3972 = vmatpush.bf16.msra.mxu0 %v3723
  %3973 = vmatpush.bf16.msra.mxu0 %v3715
  %3974 = vmatpush.bf16.msra.mxu0 %v3707
  %3975 = vmatpush.bf16.msra.mxu0 %v3699
  %3976 = vmatpush.bf16.msra.mxu0 %v3691
  %3977 = vmatmul.bf16.gmra.mxu0 %v3089
  %v3978 = vpop.f32.mrf.mxu0
  %v3979 = vadd.f32 %v3950, %v3978
  %v3980 = vpop.f32.mrf.mxu0
  %v3981 = vadd.f32 %v3952, %v3980
  %3982 = vmatmul.bf16.gmra.mxu0 %v3091
  %v3983 = vpop.f32.mrf.mxu0
  %v3984 = vadd.f32 %v3955, %v3983
  %v3985 = vpop.f32.mrf.mxu0
  %v3986 = vadd.f32 %v3957, %v3985
  %3987 = vmatmul.bf16.gmra.mxu0 %v3093
  %v3988 = vpop.f32.mrf.mxu0
  %v3989 = vadd.f32 %v3960, %v3988
  %v3990 = vpop.f32.mrf.mxu0
  %v3991 = vadd.f32 %v3962, %v3990
  %3992 = vmatmul.bf16.gmra.mxu0 %v3095
  %v3993 = vpop.f32.mrf.mxu0
  %v3994 = vadd.f32 %v3965, %v3993
  %v3995 = vpop.f32.mrf.mxu0
  %v3996 = vadd.f32 %v3967, %v3995
  %3997 = vdwg.mxu0
  %3998 = vmatpush.bf16.msra.mxu0 %v3684
  %3999 = vmatpush.bf16.msra.mxu0 %v3676
  %4000 = vmatpush.bf16.msra.mxu0 %v3668
  %4001 = vmatpush.bf16.msra.mxu0 %v3660
  %4002 = vmatpush.bf16.msra.mxu0 %v3652
  %4003 = vmatpush.bf16.msra.mxu0 %v3644
  %4004 = vmatpush.bf16.msra.mxu0 %v3636
  %4005 = vmatpush.bf16.msra.mxu0 %v3628
  %4006 = vmatmul.bf16.gmra.mxu0 %v3088
  %v4007 = vpop.f32.mrf.mxu0
  %v4008 = vadd.f32 %v3228, %v4007
  %v4009 = vpop.f32.mrf.mxu0
  %v4010 = vadd.f32 %v3228, %v4009
  %4011 = vmatmul.bf16.gmra.mxu0 %v3090
  %v4012 = vpop.f32.mrf.mxu0
  %v4013 = vadd.f32 %v3228, %v4012
  %v4014 = vpop.f32.mrf.mxu0
  %v4015 = vadd.f32 %v3228, %v4014
  %4016 = vmatmul.bf16.gmra.mxu0 %v3092
  %v4017 = vpop.f32.mrf.mxu0
  %v4018 = vadd.f32 %v3228, %v4017
  %v4019 = vpop.f32.mrf.mxu0
  %v4020 = vadd.f32 %v3228, %v4019
  %4021 = vmatmul.bf16.gmra.mxu0 %v3094
  %v4022 = vpop.f32.mrf.mxu0
  %v4023 = vadd.f32 %v3228, %v4022
  %v4024 = vpop.f32.mrf.mxu0
  %v4025 = vadd.f32 %v3228, %v4024
  %4026 = vdwg.mxu0
  %4027 = vmatpush.bf16.msra.mxu0 %v3748
  %4028 = vmatpush.bf16.msra.mxu0 %v3740
  %4029 = vmatpush.bf16.msra.mxu0 %v3732
  %4030 = vmatpush.bf16.msra.mxu0 %v3724
  %4031 = vmatpush.bf16.msra.mxu0 %v3716
  %4032 = vmatpush.bf16.msra.mxu0 %v3708
  %4033 = vmatpush.bf16.msra.mxu0 %v3700
  %4034 = vmatpush.bf16.msra.mxu0 %v3692
  %4035 = vmatmul.bf16.gmra.mxu0 %v3089
  %v4036 = vpop.f32.mrf.mxu0
  %v4037 = vadd.f32 %v4008, %v4036
  %v4038 = vpop.f32.mrf.mxu0
  %v4039 = vadd.f32 %v4010, %v4038
  %4040 = vmatmul.bf16.gmra.mxu0 %v3091
  %v4041 = vpop.f32.mrf.mxu0
  %v4042 = vadd.f32 %v4013, %v4041
  %v4043 = vpop.f32.mrf.mxu0
  %v4044 = vadd.f32 %v4015, %v4043
  %4045 = vmatmul.bf16.gmra.mxu0 %v3093
  %v4046 = vpop.f32.mrf.mxu0
  %v4047 = vadd.f32 %v4018, %v4046
  %v4048 = vpop.f32.mrf.mxu0
  %v4049 = vadd.f32 %v4020, %v4048
  %4050 = vmatmul.bf16.gmra.mxu0 %v3095
  %v4051 = vpop.f32.mrf.mxu0
  %v4052 = vadd.f32 %v4023, %v4051
  %v4053 = vpop.f32.mrf.mxu0
  %v4054 = vadd.f32 %v4025, %v4053
  %4055 = vdwg.mxu0
  %4056 = vmatpush.bf16.msra.mxu0 %v3685
  %4057 = vmatpush.bf16.msra.mxu0 %v3677
  %4058 = vmatpush.bf16.msra.mxu0 %v3669
  %4059 = vmatpush.bf16.msra.mxu0 %v3661
  %4060 = vmatpush.bf16.msra.mxu0 %v3653
  %4061 = vmatpush.bf16.msra.mxu0 %v3645
  %4062 = vmatpush.bf16.msra.mxu0 %v3637
  %4063 = vmatpush.bf16.msra.mxu0 %v3629
  %4064 = vmatmul.bf16.gmra.mxu0 %v3088
  %v4065 = vpop.f32.mrf.mxu0
  %v4066 = vadd.f32 %v3229, %v4065
  %v4067 = vpop.f32.mrf.mxu0
  %v4068 = vadd.f32 %v3229, %v4067
  %4069 = vmatmul.bf16.gmra.mxu0 %v3090
  %v4070 = vpop.f32.mrf.mxu0
  %v4071 = vadd.f32 %v3229, %v4070
  %v4072 = vpop.f32.mrf.mxu0
  %v4073 = vadd.f32 %v3229, %v4072
  %4074 = vmatmul.bf16.gmra.mxu0 %v3092
  %v4075 = vpop.f32.mrf.mxu0
  %v4076 = vadd.f32 %v3229, %v4075
  %v4077 = vpop.f32.mrf.mxu0
  %v4078 = vadd.f32 %v3229, %v4077
  %4079 = vmatmul.bf16.gmra.mxu0 %v3094
  %v4080 = vpop.f32.mrf.mxu0
  %v4081 = vadd.f32 %v3229, %v4080
  %v4082 = vpop.f32.mrf.mxu0
  %v4083 = vadd.f32 %v3229, %v4082
  %4084 = vdwg.mxu0
  %4085 = vmatpush.bf16.msra.mxu0 %v3749
  %4086 = vmatpush.bf16.msra.mxu0 %v3741
  %4087 = vmatpush.bf16.msra.mxu0 %v3733
  %4088 = vmatpush.bf16.msra.mxu0 %v3725
  %4089 = vmatpush.bf16.msra.mxu0 %v3717
  %4090 = vmatpush.bf16.msra.mxu0 %v3709
  %4091 = vmatpush.bf16.msra.mxu0 %v3701
  %4092 = vmatpush.bf16.msra.mxu0 %v3693
  %4093 = vmatmul.bf16.gmra.mxu0 %v3089
  %v4094 = vpop.f32.mrf.mxu0
  %v4095 = vadd.f32 %v4066, %v4094
  %v4096 = vpop.f32.mrf.mxu0
  %v4097 = vadd.f32 %v4068, %v4096
  %4098 = vmatmul.bf16.gmra.mxu0 %v3091
  %v4099 = vpop.f32.mrf.mxu0
  %v4100 = vadd.f32 %v4071, %v4099
  %v4101 = vpop.f32.mrf.mxu0
  %v4102 = vadd.f32 %v4073, %v4101
  %4103 = vmatmul.bf16.gmra.mxu0 %v3093
  %v4104 = vpop.f32.mrf.mxu0
  %v4105 = vadd.f32 %v4076, %v4104
  %v4106 = vpop.f32.mrf.mxu0
  %v4107 = vadd.f32 %v4078, %v4106
  %4108 = vmatmul.bf16.gmra.mxu0 %v3095
  %v4109 = vpop.f32.mrf.mxu0
  %v4110 = vadd.f32 %v4081, %v4109
  %v4111 = vpop.f32.mrf.mxu0
  %v4112 = vadd.f32 %v4083, %v4111
  %4113 = vdwg.mxu0
  %4114 = vmatpush.bf16.msra.mxu0 %v3686
  %4115 = vmatpush.bf16.msra.mxu0 %v3678
  %4116 = vmatpush.bf16.msra.mxu0 %v3670
  %4117 = vmatpush.bf16.msra.mxu0 %v3662
  %4118 = vmatpush.bf16.msra.mxu0 %v3654
  %4119 = vmatpush.bf16.msra.mxu0 %v3646
  %4120 = vmatpush.bf16.msra.mxu0 %v3638
  %4121 = vmatpush.bf16.msra.mxu0 %v3630
  %4122 = vmatmul.bf16.gmra.mxu0 %v3088
  %v4123 = vpop.f32.mrf.mxu0
  %v4124 = vadd.f32 %v3230, %v4123
  %v4125 = vpop.f32.mrf.mxu0
  %v4126 = vadd.f32 %v3230, %v4125
  %4127 = vmatmul.bf16.gmra.mxu0 %v3090
  %v4128 = vpop.f32.mrf.mxu0
  %v4129 = vadd.f32 %v3230, %v4128
  %v4130 = vpop.f32.mrf.mxu0
  %v4131 = vadd.f32 %v3230, %v4130
  %4132 = vmatmul.bf16.gmra.mxu0 %v3092
  %v4133 = vpop.f32.mrf.mxu0
  %v4134 = vadd.f32 %v3230, %v4133
  %v4135 = vpop.f32.mrf.mxu0
  %v4136 = vadd.f32 %v3230, %v4135
  %4137 = vmatmul.bf16.gmra.mxu0 %v3094
  %v4138 = vpop.f32.mrf.mxu0
  %v4139 = vadd.f32 %v3230, %v4138
  %v4140 = vpop.f32.mrf.mxu0
  %v4141 = vadd.f32 %v3230, %v4140
  %4142 = vdwg.mxu0
  %4143 = vmatpush.bf16.msra.mxu0 %v3750
  %4144 = vmatpush.bf16.msra.mxu0 %v3742
  %4145 = vmatpush.bf16.msra.mxu0 %v3734
  %4146 = vmatpush.bf16.msra.mxu0 %v3726
  %4147 = vmatpush.bf16.msra.mxu0 %v3718
  %4148 = vmatpush.bf16.msra.mxu0 %v3710
  %4149 = vmatpush.bf16.msra.mxu0 %v3702
  %4150 = vmatpush.bf16.msra.mxu0 %v3694
  %4151 = vmatmul.bf16.gmra.mxu0 %v3089
  %v4152 = vpop.f32.mrf.mxu0
  %v4153 = vadd.f32 %v4124, %v4152
  %v4154 = vpop.f32.mrf.mxu0
  %v4155 = vadd.f32 %v4126, %v4154
  %4156 = vmatmul.bf16.gmra.mxu0 %v3091
  %v4157 = vpop.f32.mrf.mxu0
  %v4158 = vadd.f32 %v4129, %v4157
  %v4159 = vpop.f32.mrf.mxu0
  %v4160 = vadd.f32 %v4131, %v4159
  %4161 = vmatmul.bf16.gmra.mxu0 %v3093
  %v4162 = vpop.f32.mrf.mxu0
  %v4163 = vadd.f32 %v4134, %v4162
  %v4164 = vpop.f32.mrf.mxu0
  %v4165 = vadd.f32 %v4136, %v4164
  %4166 = vmatmul.bf16.gmra.mxu0 %v3095
  %v4167 = vpop.f32.mrf.mxu0
  %v4168 = vadd.f32 %v4139, %v4167
  %v4169 = vpop.f32.mrf.mxu0
  %v4170 = vadd.f32 %v4141, %v4169
  %4171 = vdwg.mxu0
  %4172 = vmatpush.bf16.msra.mxu0 %v3687
  %4173 = vmatpush.bf16.msra.mxu0 %v3679
  %4174 = vmatpush.bf16.msra.mxu0 %v3671
  %4175 = vmatpush.bf16.msra.mxu0 %v3663
  %4176 = vmatpush.bf16.msra.mxu0 %v3655
  %4177 = vmatpush.bf16.msra.mxu0 %v3647
  %4178 = vmatpush.bf16.msra.mxu0 %v3639
  %4179 = vmatpush.bf16.msra.mxu0 %v3631
  %4180 = vmatmul.bf16.gmra.mxu0 %v3088
  %v4181 = vpop.f32.mrf.mxu0
  %v4182 = vadd.f32 %v3231, %v4181
  %v4183 = vpop.f32.mrf.mxu0
  %v4184 = vadd.f32 %v3231, %v4183
  %4185 = vmatmul.bf16.gmra.mxu0 %v3090
  %v4186 = vpop.f32.mrf.mxu0
  %v4187 = vadd.f32 %v3231, %v4186
  %v4188 = vpop.f32.mrf.mxu0
  %v4189 = vadd.f32 %v3231, %v4188
  %4190 = vmatmul.bf16.gmra.mxu0 %v3092
  %v4191 = vpop.f32.mrf.mxu0
  %v4192 = vadd.f32 %v3231, %v4191
  %v4193 = vpop.f32.mrf.mxu0
  %v4194 = vadd.f32 %v3231, %v4193
  %4195 = vmatmul.bf16.gmra.mxu0 %v3094
  %v4196 = vpop.f32.mrf.mxu0
  %v4197 = vadd.f32 %v3231, %v4196
  %v4198 = vpop.f32.mrf.mxu0
  %v4199 = vadd.f32 %v3231, %v4198
  %4200 = vdwg.mxu0
  %4201 = vmatpush.bf16.msra.mxu0 %v3751
  %4202 = vmatpush.bf16.msra.mxu0 %v3743
  %4203 = vmatpush.bf16.msra.mxu0 %v3735
  %4204 = vmatpush.bf16.msra.mxu0 %v3727
  %4205 = vmatpush.bf16.msra.mxu0 %v3719
  %4206 = vmatpush.bf16.msra.mxu0 %v3711
  %4207 = vmatpush.bf16.msra.mxu0 %v3703
  %4208 = vmatpush.bf16.msra.mxu0 %v3695
  %4209 = vmatmul.bf16.gmra.mxu0 %v3089
  %v4210 = vpop.f32.mrf.mxu0
  %v4211 = vadd.f32 %v4182, %v4210
  %v4212 = vpop.f32.mrf.mxu0
  %v4213 = vadd.f32 %v4184, %v4212
  %4214 = vmatmul.bf16.gmra.mxu0 %v3091
  %v4215 = vpop.f32.mrf.mxu0
  %v4216 = vadd.f32 %v4187, %v4215
  %v4217 = vpop.f32.mrf.mxu0
  %v4218 = vadd.f32 %v4189, %v4217
  %4219 = vmatmul.bf16.gmra.mxu0 %v3093
  %v4220 = vpop.f32.mrf.mxu0
  %v4221 = vadd.f32 %v4192, %v4220
  %v4222 = vpop.f32.mrf.mxu0
  %v4223 = vadd.f32 %v4194, %v4222
  %4224 = vmatmul.bf16.gmra.mxu0 %v3095
  %v4225 = vpop.f32.mrf.mxu0
  %v4226 = vadd.f32 %v4197, %v4225
  %v4227 = vpop.f32.mrf.mxu0
  %v4228 = vadd.f32 %v4199, %v4227
  %4229 = vdwg.mxu0
  %4230 = vmatpush.bf16.msra.mxu0 %v3688
  %4231 = vmatpush.bf16.msra.mxu0 %v3680
  %4232 = vmatpush.bf16.msra.mxu0 %v3672
  %4233 = vmatpush.bf16.msra.mxu0 %v3664
  %4234 = vmatpush.bf16.msra.mxu0 %v3656
  %4235 = vmatpush.bf16.msra.mxu0 %v3648
  %4236 = vmatpush.bf16.msra.mxu0 %v3640
  %4237 = vmatpush.bf16.msra.mxu0 %v3632
  %4238 = vmatmul.bf16.gmra.mxu0 %v3088
  %v4239 = vpop.f32.mrf.mxu0
  %v4240 = vadd.f32 %v3232, %v4239
  %v4241 = vpop.f32.mrf.mxu0
  %v4242 = vadd.f32 %v3232, %v4241
  %4243 = vmatmul.bf16.gmra.mxu0 %v3090
  %v4244 = vpop.f32.mrf.mxu0
  %v4245 = vadd.f32 %v3232, %v4244
  %v4246 = vpop.f32.mrf.mxu0
  %v4247 = vadd.f32 %v3232, %v4246
  %4248 = vmatmul.bf16.gmra.mxu0 %v3092
  %v4249 = vpop.f32.mrf.mxu0
  %v4250 = vadd.f32 %v3232, %v4249
  %v4251 = vpop.f32.mrf.mxu0
  %v4252 = vadd.f32 %v3232, %v4251
  %4253 = vmatmul.bf16.gmra.mxu0 %v3094
  %v4254 = vpop.f32.mrf.mxu0
  %v4255 = vadd.f32 %v3232, %v4254
  %v4256 = vpop.f32.mrf.mxu0
  %v4257 = vadd.f32 %v3232, %v4256
  %4258 = vdwg.mxu0
  %4259 = vmatpush.bf16.msra.mxu0 %v3752
  %4260 = vmatpush.bf16.msra.mxu0 %v3744
  %4261 = vmatpush.bf16.msra.mxu0 %v3736
  %4262 = vmatpush.bf16.msra.mxu0 %v3728
  %4263 = vmatpush.bf16.msra.mxu0 %v3720
  %4264 = vmatpush.bf16.msra.mxu0 %v3712
  %4265 = vmatpush.bf16.msra.mxu0 %v3704
  %4266 = vmatpush.bf16.msra.mxu0 %v3696
  %4267 = vmatmul.bf16.gmra.mxu0 %v3089
  %v4268 = vpop.f32.mrf.mxu0
  %v4269 = vadd.f32 %v4240, %v4268
  %v4270 = vpop.f32.mrf.mxu0
  %v4271 = vadd.f32 %v4242, %v4270
  %4272 = vmatmul.bf16.gmra.mxu0 %v3091
  %v4273 = vpop.f32.mrf.mxu0
  %v4274 = vadd.f32 %v4245, %v4273
  %v4275 = vpop.f32.mrf.mxu0
  %v4276 = vadd.f32 %v4247, %v4275
  %4277 = vmatmul.bf16.gmra.mxu0 %v3093
  %v4278 = vpop.f32.mrf.mxu0
  %v4279 = vadd.f32 %v4250, %v4278
  %v4280 = vpop.f32.mrf.mxu0
  %v4281 = vadd.f32 %v4252, %v4280
  %4282 = vmatmul.bf16.gmra.mxu0 %v3095
  %v4283 = vpop.f32.mrf.mxu0
  %v4284 = vadd.f32 %v4255, %v4283
  %v4285 = vpop.f32.mrf.mxu0
  %v4286 = vadd.f32 %v4257, %v4285
  %4287 = vdwg.mxu0
  %4288 = vmatpush.bf16.msra.mxu0 %v3689
  %4289 = vmatpush.bf16.msra.mxu0 %v3681
  %4290 = vmatpush.bf16.msra.mxu0 %v3673
  %4291 = vmatpush.bf16.msra.mxu0 %v3665
  %4292 = vmatpush.bf16.msra.mxu0 %v3657
  %4293 = vmatpush.bf16.msra.mxu0 %v3649
  %4294 = vmatpush.bf16.msra.mxu0 %v3641
  %4295 = vmatpush.bf16.msra.mxu0 %v3633
  %4296 = vmatmul.bf16.gmra.mxu0 %v3088
  %v4297 = vpop.f32.mrf.mxu0
  %v4298 = vadd.f32 %v3233, %v4297
  %v4299 = vpop.f32.mrf.mxu0
  %v4300 = vadd.f32 %v3233, %v4299
  %4301 = vmatmul.bf16.gmra.mxu0 %v3090
  %v4302 = vpop.f32.mrf.mxu0
  %v4303 = vadd.f32 %v3233, %v4302
  %v4304 = vpop.f32.mrf.mxu0
  %v4305 = vadd.f32 %v3233, %v4304
  %4306 = vmatmul.bf16.gmra.mxu0 %v3092
  %v4307 = vpop.f32.mrf.mxu0
  %v4308 = vadd.f32 %v3233, %v4307
  %v4309 = vpop.f32.mrf.mxu0
  %v4310 = vadd.f32 %v3233, %v4309
  %4311 = vmatmul.bf16.gmra.mxu0 %v3094
  %v4312 = vpop.f32.mrf.mxu0
  %v4313 = vadd.f32 %v3233, %v4312
  %v4314 = vpop.f32.mrf.mxu0
  %v4315 = vadd.f32 %v3233, %v4314
  %4316 = vdwg.mxu0
  %4317 = vmatpush.bf16.msra.mxu0 %v3753
  %4318 = vmatpush.bf16.msra.mxu0 %v3745
  %4319 = vmatpush.bf16.msra.mxu0 %v3737
  %4320 = vmatpush.bf16.msra.mxu0 %v3729
  %4321 = vmatpush.bf16.msra.mxu0 %v3721
  %4322 = vmatpush.bf16.msra.mxu0 %v3713
  %4323 = vmatpush.bf16.msra.mxu0 %v3705
  %4324 = vmatpush.bf16.msra.mxu0 %v3697
  %4325 = vmatmul.bf16.gmra.mxu0 %v3089
  %v4326 = vpop.f32.mrf.mxu0
  %v4327 = vadd.f32 %v4298, %v4326
  %v4328 = vpop.f32.mrf.mxu0
  %v4329 = vadd.f32 %v4300, %v4328
  %4330 = vmatmul.bf16.gmra.mxu0 %v3091
  %v4331 = vpop.f32.mrf.mxu0
  %v4332 = vadd.f32 %v4303, %v4331
  %v4333 = vpop.f32.mrf.mxu0
  %v4334 = vadd.f32 %v4305, %v4333
  %4335 = vmatmul.bf16.gmra.mxu0 %v3093
  %v4336 = vpop.f32.mrf.mxu0
  %v4337 = vadd.f32 %v4308, %v4336
  %v4338 = vpop.f32.mrf.mxu0
  %v4339 = vadd.f32 %v4310, %v4338
  %4340 = vmatmul.bf16.gmra.mxu0 %v3095
  %v4341 = vpop.f32.mrf.mxu0
  %v4342 = vadd.f32 %v4313, %v4341
  %v4343 = vpop.f32.mrf.mxu0
  %v4344 = vadd.f32 %v4315, %v4343
  %4345 = vdwg.mxu0
  %v4346 = vld [vmem:[%s8] sm:$0xff]
  %v4347 = vld [vmem:[%s8 + $0x8] sm:$0xff]
  %v4348 = vld [vmem:[%s8 + $0x10] sm:$0xff]
  %v4349 = vld [vmem:[%s8 + $0x18] sm:$0xff]
  %v4350 = vld [vmem:[%s8 + $0x20] sm:$0xff]
  %v4351 = vld [vmem:[%s8 + $0x28] sm:$0xff]
  %v4352 = vld [vmem:[%s8 + $0x30] sm:$0xff]
  %v4353 = vld [vmem:[%s8 + $0x38] sm:$0xff]
  %v4354 = vld [vmem:[%s8 + $0x40] sm:$0xff]
  %v4355 = vld [vmem:[%s8 + $0x48] sm:$0xff]
  %v4356 = vld [vmem:[%s8 + $0x50] sm:$0xff]
  %v4357 = vld [vmem:[%s8 + $0x58] sm:$0xff]
  %v4358 = vld [vmem:[%s8 + $0x60] sm:$0xff]
  %v4359 = vld [vmem:[%s8 + $0x68] sm:$0xff]
  %v4360 = vld [vmem:[%s8 + $0x70] sm:$0xff]
  %v4361 = vld [vmem:[%s8 + $0x78] sm:$0xff]
  %v4362 = vld [vmem:[%s8 + $0x80] sm:$0xff]
  %v4363 = vld [vmem:[%s8 + $0x88] sm:$0xff]
  %v4364 = vld [vmem:[%s8 + $0x90] sm:$0xff]
  %v4365 = vld [vmem:[%s8 + $0x98] sm:$0xff]
  %v4366 = vld [vmem:[%s8 + $0xa0] sm:$0xff]
  %v4367 = vld [vmem:[%s8 + $0xa8] sm:$0xff]
  %v4368 = vld [vmem:[%s8 + $0xb0] sm:$0xff]
  %v4369 = vld [vmem:[%s8 + $0xb8] sm:$0xff]
  %v4370 = vld [vmem:[%s8 + $0xc0] sm:$0xff]
  %v4371 = vld [vmem:[%s8 + $0xc8] sm:$0xff]
  %v4372 = vld [vmem:[%s8 + $0xd0] sm:$0xff]
  %v4373 = vld [vmem:[%s8 + $0xd8] sm:$0xff]
  %v4374 = vld [vmem:[%s8 + $0xe0] sm:$0xff]
  %v4375 = vld [vmem:[%s8 + $0xe8] sm:$0xff]
  %v4376 = vld [vmem:[%s8 + $0xf0] sm:$0xff]
  %v4377 = vld [vmem:[%s8 + $0xf8] sm:$0xff]
  %v4378 = vld [vmem:[%s9] sm:$0xff]
  %v4379 = vld [vmem:[%s9 + $0x8] sm:$0xff]
  %v4380 = vld [vmem:[%s9 + $0x10] sm:$0xff]
  %v4381 = vld [vmem:[%s9 + $0x18] sm:$0xff]
  %v4382 = vld [vmem:[%s9 + $0x20] sm:$0xff]
  %v4383 = vld [vmem:[%s9 + $0x28] sm:$0xff]
  %v4384 = vld [vmem:[%s9 + $0x30] sm:$0xff]
  %v4385 = vld [vmem:[%s9 + $0x38] sm:$0xff]
  %v4386 = vld [vmem:[%s9 + $0x40] sm:$0xff]
  %v4387 = vld [vmem:[%s9 + $0x48] sm:$0xff]
  %v4388 = vld [vmem:[%s9 + $0x50] sm:$0xff]
  %v4389 = vld [vmem:[%s9 + $0x58] sm:$0xff]
  %v4390 = vld [vmem:[%s9 + $0x60] sm:$0xff]
  %v4391 = vld [vmem:[%s9 + $0x68] sm:$0xff]
  %v4392 = vld [vmem:[%s9 + $0x70] sm:$0xff]
  %v4393 = vld [vmem:[%s9 + $0x78] sm:$0xff]
  %v4394 = vld [vmem:[%s9 + $0x80] sm:$0xff]
  %v4395 = vld [vmem:[%s9 + $0x88] sm:$0xff]
  %v4396 = vld [vmem:[%s9 + $0x90] sm:$0xff]
  %v4397 = vld [vmem:[%s9 + $0x98] sm:$0xff]
  %v4398 = vld [vmem:[%s9 + $0xa0] sm:$0xff]
  %v4399 = vld [vmem:[%s9 + $0xa8] sm:$0xff]
  %v4400 = vld [vmem:[%s9 + $0xb0] sm:$0xff]
  %v4401 = vld [vmem:[%s9 + $0xb8] sm:$0xff]
  %v4402 = vld [vmem:[%s9 + $0xc0] sm:$0xff]
  %v4403 = vld [vmem:[%s9 + $0xc8] sm:$0xff]
  %v4404 = vld [vmem:[%s9 + $0xd0] sm:$0xff]
  %v4405 = vld [vmem:[%s9 + $0xd8] sm:$0xff]
  %v4406 = vld [vmem:[%s9 + $0xe0] sm:$0xff]
  %v4407 = vld [vmem:[%s9 + $0xe8] sm:$0xff]
  %v4408 = vld [vmem:[%s9 + $0xf0] sm:$0xff]
  %v4409 = vld [vmem:[%s9 + $0xf8] sm:$0xff]
  %v4442 = vunpack.c.l.b16 %v4346
  %v4443 = vunpack.c.h.b16 %v4346
  %v4444 = vunpack.c.l.b16 %v4347
  %v4445 = vunpack.c.h.b16 %v4347
  %v4446 = vunpack.c.l.b16 %v4348
  %v4447 = vunpack.c.h.b16 %v4348
  %v4448 = vunpack.c.l.b16 %v4349
  %v4449 = vunpack.c.h.b16 %v4349
  %v4450 = vunpack.c.l.b16 %v4350
  %v4451 = vunpack.c.h.b16 %v4350
  %v4452 = vunpack.c.l.b16 %v4351
  %v4453 = vunpack.c.h.b16 %v4351
  %v4454 = vunpack.c.l.b16 %v4352
  %v4455 = vunpack.c.h.b16 %v4352
  %v4456 = vunpack.c.l.b16 %v4353
  %v4457 = vunpack.c.h.b16 %v4353
  %v4458 = vunpack.c.l.b16 %v4354
  %v4459 = vunpack.c.h.b16 %v4354
  %v4460 = vunpack.c.l.b16 %v4355
  %v4461 = vunpack.c.h.b16 %v4355
  %v4462 = vunpack.c.l.b16 %v4356
  %v4463 = vunpack.c.h.b16 %v4356
  %v4464 = vunpack.c.l.b16 %v4357
  %v4465 = vunpack.c.h.b16 %v4357
  %v4466 = vunpack.c.l.b16 %v4358
  %v4467 = vunpack.c.h.b16 %v4358
  %v4468 = vunpack.c.l.b16 %v4359
  %v4469 = vunpack.c.h.b16 %v4359
  %v4470 = vunpack.c.l.b16 %v4360
  %v4471 = vunpack.c.h.b16 %v4360
  %v4472 = vunpack.c.l.b16 %v4361
  %v4473 = vunpack.c.h.b16 %v4361
  %v4474 = vunpack.c.l.b16 %v4362
  %v4475 = vunpack.c.h.b16 %v4362
  %v4476 = vunpack.c.l.b16 %v4363
  %v4477 = vunpack.c.h.b16 %v4363
  %v4478 = vunpack.c.l.b16 %v4364
  %v4479 = vunpack.c.h.b16 %v4364
  %v4480 = vunpack.c.l.b16 %v4365
  %v4481 = vunpack.c.h.b16 %v4365
  %v4482 = vunpack.c.l.b16 %v4366
  %v4483 = vunpack.c.h.b16 %v4366
  %v4484 = vunpack.c.l.b16 %v4367
  %v4485 = vunpack.c.h.b16 %v4367
  %v4486 = vunpack.c.l.b16 %v4368
  %v4487 = vunpack.c.h.b16 %v4368
  %v4488 = vunpack.c.l.b16 %v4369
  %v4489 = vunpack.c.h.b16 %v4369
  %v4490 = vunpack.c.l.b16 %v4370
  %v4491 = vunpack.c.h.b16 %v4370
  %v4492 = vunpack.c.l.b16 %v4371
  %v4493 = vunpack.c.h.b16 %v4371
  %v4494 = vunpack.c.l.b16 %v4372
  %v4495 = vunpack.c.h.b16 %v4372
  %v4496 = vunpack.c.l.b16 %v4373
  %v4497 = vunpack.c.h.b16 %v4373
  %v4498 = vunpack.c.l.b16 %v4374
  %v4499 = vunpack.c.h.b16 %v4374
  %v4500 = vunpack.c.l.b16 %v4375
  %v4501 = vunpack.c.h.b16 %v4375
  %v4502 = vunpack.c.l.b16 %v4376
  %v4503 = vunpack.c.h.b16 %v4376
  %v4504 = vunpack.c.l.b16 %v4377
  %v4505 = vunpack.c.h.b16 %v4377
  %v4506 = vpack.c.b16 %v4446, %v4442
  %v4507 = vpack.c.b16 %v4447, %v4443
  %v4508 = vpack.c.b16 %v4448, %v4444
  %v4509 = vpack.c.b16 %v4449, %v4445
  %v4510 = vpack.c.b16 %v4454, %v4450
  %v4511 = vpack.c.b16 %v4455, %v4451
  %v4512 = vpack.c.b16 %v4456, %v4452
  %v4513 = vpack.c.b16 %v4457, %v4453
  %v4514 = vpack.c.b16 %v4462, %v4458
  %v4515 = vpack.c.b16 %v4463, %v4459
  %v4516 = vpack.c.b16 %v4464, %v4460
  %v4517 = vpack.c.b16 %v4465, %v4461
  %v4518 = vpack.c.b16 %v4470, %v4466
  %v4519 = vpack.c.b16 %v4471, %v4467
  %v4520 = vpack.c.b16 %v4472, %v4468
  %v4521 = vpack.c.b16 %v4473, %v4469
  %v4522 = vpack.c.b16 %v4478, %v4474
  %v4523 = vpack.c.b16 %v4479, %v4475
  %v4524 = vpack.c.b16 %v4480, %v4476
  %v4525 = vpack.c.b16 %v4481, %v4477
  %v4526 = vpack.c.b16 %v4486, %v4482
  %v4527 = vpack.c.b16 %v4487, %v4483
  %v4528 = vpack.c.b16 %v4488, %v4484
  %v4529 = vpack.c.b16 %v4489, %v4485
  %v4530 = vpack.c.b16 %v4494, %v4490
  %v4531 = vpack.c.b16 %v4495, %v4491
  %v4532 = vpack.c.b16 %v4496, %v4492
  %v4533 = vpack.c.b16 %v4497, %v4493
  %v4534 = vpack.c.b16 %v4502, %v4498
  %v4535 = vpack.c.b16 %v4503, %v4499
  %v4536 = vpack.c.b16 %v4504, %v4500
  %v4537 = vpack.c.b16 %v4505, %v4501
  %4570 = vmatpush.bf16.msra.mxu0 %v4534
  %4571 = vmatpush.bf16.msra.mxu0 %v4530
  %4572 = vmatpush.bf16.msra.mxu0 %v4526
  %4573 = vmatpush.bf16.msra.mxu0 %v4522
  %4574 = vmatpush.bf16.msra.mxu0 %v4518
  %4575 = vmatpush.bf16.msra.mxu0 %v4514
  %4576 = vmatpush.bf16.msra.mxu0 %v4510
  %4577 = vmatpush.bf16.msra.mxu0 %v4506
  %4578 = vmatmul.bf16.gmra.mxu0 0
  %v4579 = vpop.f32.mrf.mxu0
  %v4580 = vadd.f32 0.0, %v4579
  %v4581 = vpop.f32.mrf.mxu0
  %4582 = vdwg.mxu0
  %4583 = vmatpush.bf16.msra.mxu0 %v4535
  %4584 = vmatpush.bf16.msra.mxu0 %v4531
  %4585 = vmatpush.bf16.msra.mxu0 %v4527
  %4586 = vmatpush.bf16.msra.mxu0 %v4523
  %4587 = vmatpush.bf16.msra.mxu0 %v4519
  %4588 = vmatpush.bf16.msra.mxu0 %v4515
  %4589 = vmatpush.bf16.msra.mxu0 %v4511
  %4590 = vmatpush.bf16.msra.mxu0 %v4507
  %4591 = vmatmul.bf16.gmra.mxu0 0
  %v4592 = vpop.f32.mrf.mxu0
  %v4593 = vadd.f32 0.0, %v4592
  %v4594 = vpop.f32.mrf.mxu0
  %4595 = vdwg.mxu0
  %4596 = vmatpush.bf16.msra.mxu0 %v4536
  %4597 = vmatpush.bf16.msra.mxu0 %v4532
  %4598 = vmatpush.bf16.msra.mxu0 %v4528
  %4599 = vmatpush.bf16.msra.mxu0 %v4524
  %4600 = vmatpush.bf16.msra.mxu0 %v4520
  %4601 = vmatpush.bf16.msra.mxu0 %v4516
  %4602 = vmatpush.bf16.msra.mxu0 %v4512
  %4603 = vmatpush.bf16.msra.mxu0 %v4508
  %4604 = vmatmul.bf16.gmra.mxu0 0
  %v4605 = vpop.f32.mrf.mxu0
  %v4606 = vadd.f32 0.0, %v4605
  %v4607 = vpop.f32.mrf.mxu0
  %4608 = vdwg.mxu0
  %4609 = vmatpush.bf16.msra.mxu0 %v4537
  %4610 = vmatpush.bf16.msra.mxu0 %v4533
  %4611 = vmatpush.bf16.msra.mxu0 %v4529
  %4612 = vmatpush.bf16.msra.mxu0 %v4525
  %4613 = vmatpush.bf16.msra.mxu0 %v4521
  %4614 = vmatpush.bf16.msra.mxu0 %v4517
  %4615 = vmatpush.bf16.msra.mxu0 %v4513
  %4616 = vmatpush.bf16.msra.mxu0 %v4509
  %4617 = vmatmul.bf16.gmra.mxu0 0
  %v4618 = vpop.f32.mrf.mxu0
  %v4619 = vadd.f32 0.0, %v4618
  %v4620 = vpop.f32.mrf.mxu0
  %4621 = vdwg.mxu0
  %v4622 = vadd.f32 %v3921, %v4580
  %v4623 = vadd.f32 %v3979, %v4593
  %v4624 = vadd.f32 %v4037, %v4606
  %v4625 = vadd.f32 %v4095, %v4619
  %v4626 = vxor.u32 %v4622, 2147483648
  %v4627 = vmul.f32 %v4626, 1.442695
  %v4628 = vpow.pop %v4627
  %v4629 = vadd.f32 %v4628, 1.0
  %v4630 = vrcp.pop %v4629
  %v4631 = vmul.f32 %v4629, %v4630
  %v4632 = vsub.f32 1.0, %v4631
  %v4633 = vmul.f32 %v4630, %v4632
  %v4634 = vadd.f32 %v4630, %v4633
  %vm4635 = vweird.f32 %v4629
  %vm4636 = vweird.f32 %v4630
  %vm4637 = vmor %vm4635, %vm4636
  %v4638 = vsel %vm4637, %v4630, %v4634
  %v4639 = vand.u32 2147483647, %v4629
  %vm4640 = vcmp.eq.f32.partialorder %v4639, 8.507059e+37
  %v4641 = vand.u32 %v4629, 2147483648
  %v4642 = vor.u32 1.1754944e-38, %v4641
  %v4643 = vsel %vm4640, %v4642, %v4638
  %v4644 = vmul.f32 1.0, %v4643
  %v4645 = vxor.u32 %v4623, 2147483648
  %v4646 = vmul.f32 %v4645, 1.442695
  %v4647 = vpow.pop %v4646
  %v4648 = vadd.f32 %v4647, 1.0
  %v4649 = vrcp.pop %v4648
  %v4650 = vmul.f32 %v4648, %v4649
  %v4651 = vsub.f32 1.0, %v4650
  %v4652 = vmul.f32 %v4649, %v4651
  %v4653 = vadd.f32 %v4649, %v4652
  %vm4654 = vweird.f32 %v4648
  %vm4655 = vweird.f32 %v4649
  %vm4656 = vmor %vm4654, %vm4655
  %v4657 = vsel %vm4656, %v4649, %v4653
  %v4658 = vand.u32 2147483647, %v4648
  %vm4659 = vcmp.eq.f32.partialorder %v4658, 8.507059e+37
  %v4660 = vand.u32 %v4648, 2147483648
  %v4661 = vor.u32 1.1754944e-38, %v4660
  %v4662 = vsel %vm4659, %v4661, %v4657
  %v4663 = vmul.f32 1.0, %v4662
  %v4664 = vtanh.pop %v4624
  %v4665 = vxor.u32 %v4625, 2147483648
  %v4666 = vmul.f32 %v4665, 1.442695
  %v4667 = vpow.pop %v4666
  %v4668 = vadd.f32 %v4667, 1.0
  %v4669 = vrcp.pop %v4668
  %v4670 = vmul.f32 %v4668, %v4669
  %v4671 = vsub.f32 1.0, %v4670
  %v4672 = vmul.f32 %v4669, %v4671
  %v4673 = vadd.f32 %v4669, %v4672
  %vm4674 = vweird.f32 %v4668
  %vm4675 = vweird.f32 %v4669
  %vm4676 = vmor %vm4674, %vm4675
  %v4677 = vsel %vm4676, %v4669, %v4673
  %v4678 = vand.u32 2147483647, %v4668
  %vm4679 = vcmp.eq.f32.partialorder %v4678, 8.507059e+37
  %v4680 = vand.u32 %v4668, 2147483648
  %v4681 = vor.u32 1.1754944e-38, %v4680
  %v4682 = vsel %vm4679, %v4681, %v4677
  %v4683 = vmul.f32 1.0, %v4682
  %v4684 = vmul.f32 %v4663, 0.0
  %v4685 = vmul.f32 %v4644, %v4664
  %v4686 = vadd.f32 %v4684, %v4685
  %v4687 = vtanh.pop %v4686
  %v4688 = vmul.f32 %v4683, %v4687
  %v4689 = vsel %vm50, %v4688, 0.0
  %v4690 = vsel %vm50, %v4686, 0.0
  %v4723 = vunpack.c.l.b16 %v4378
  %v4724 = vunpack.c.h.b16 %v4378
  %v4725 = vunpack.c.l.b16 %v4379
  %v4726 = vunpack.c.h.b16 %v4379
  %v4727 = vunpack.c.l.b16 %v4380
  %v4728 = vunpack.c.h.b16 %v4380
  %v4729 = vunpack.c.l.b16 %v4381
  %v4730 = vunpack.c.h.b16 %v4381
  %v4731 = vunpack.c.l.b16 %v4382
  %v4732 = vunpack.c.h.b16 %v4382
  %v4733 = vunpack.c.l.b16 %v4383
  %v4734 = vunpack.c.h.b16 %v4383
  %v4735 = vunpack.c.l.b16 %v4384
  %v4736 = vunpack.c.h.b16 %v4384
  %v4737 = vunpack.c.l.b16 %v4385
  %v4738 = vunpack.c.h.b16 %v4385
  %v4739 = vunpack.c.l.b16 %v4386
  %v4740 = vunpack.c.h.b16 %v4386
  %v4741 = vunpack.c.l.b16 %v4387
  %v4742 = vunpack.c.h.b16 %v4387
  %v4743 = vunpack.c.l.b16 %v4388
  %v4744 = vunpack.c.h.b16 %v4388
  %v4745 = vunpack.c.l.b16 %v4389
  %v4746 = vunpack.c.h.b16 %v4389
  %v4747 = vunpack.c.l.b16 %v4390
  %v4748 = vunpack.c.h.b16 %v4390
  %v4749 = vunpack.c.l.b16 %v4391
  %v4750 = vunpack.c.h.b16 %v4391
  %v4751 = vunpack.c.l.b16 %v4392
  %v4752 = vunpack.c.h.b16 %v4392
  %v4753 = vunpack.c.l.b16 %v4393
  %v4754 = vunpack.c.h.b16 %v4393
  %v4755 = vunpack.c.l.b16 %v4394
  %v4756 = vunpack.c.h.b16 %v4394
  %v4757 = vunpack.c.l.b16 %v4395
  %v4758 = vunpack.c.h.b16 %v4395
  %v4759 = vunpack.c.l.b16 %v4396
  %v4760 = vunpack.c.h.b16 %v4396
  %v4761 = vunpack.c.l.b16 %v4397
  %v4762 = vunpack.c.h.b16 %v4397
  %v4763 = vunpack.c.l.b16 %v4398
  %v4764 = vunpack.c.h.b16 %v4398
  %v4765 = vunpack.c.l.b16 %v4399
  %v4766 = vunpack.c.h.b16 %v4399
  %v4767 = vunpack.c.l.b16 %v4400
  %v4768 = vunpack.c.h.b16 %v4400
  %v4769 = vunpack.c.l.b16 %v4401
  %v4770 = vunpack.c.h.b16 %v4401
  %v4771 = vunpack.c.l.b16 %v4402
  %v4772 = vunpack.c.h.b16 %v4402
  %v4773 = vunpack.c.l.b16 %v4403
  %v4774 = vunpack.c.h.b16 %v4403
  %v4775 = vunpack.c.l.b16 %v4404
  %v4776 = vunpack.c.h.b16 %v4404
  %v4777 = vunpack.c.l.b16 %v4405
  %v4778 = vunpack.c.h.b16 %v4405
  %v4779 = vunpack.c.l.b16 %v4406
  %v4780 = vunpack.c.h.b16 %v4406
  %v4781 = vunpack.c.l.b16 %v4407
  %v4782 = vunpack.c.h.b16 %v4407
  %v4783 = vunpack.c.l.b16 %v4408
  %v4784 = vunpack.c.h.b16 %v4408
  %v4785 = vunpack.c.l.b16 %v4409
  %v4786 = vunpack.c.h.b16 %v4409
  %v4787 = vpack.c.b16 %v4727, %v4723
  %v4788 = vpack.c.b16 %v4728, %v4724
  %v4789 = vpack.c.b16 %v4729, %v4725
  %v4790 = vpack.c.b16 %v4730, %v4726
  %v4791 = vpack.c.b16 %v4735, %v4731
  %v4792 = vpack.c.b16 %v4736, %v4732
  %v4793 = vpack.c.b16 %v4737, %v4733
  %v4794 = vpack.c.b16 %v4738, %v4734
  %v4795 = vpack.c.b16 %v4743, %v4739
  %v4796 = vpack.c.b16 %v4744, %v4740
  %v4797 = vpack.c.b16 %v4745, %v4741
  %v4798 = vpack.c.b16 %v4746, %v4742
  %v4799 = vpack.c.b16 %v4751, %v4747
  %v4800 = vpack.c.b16 %v4752, %v4748
  %v4801 = vpack.c.b16 %v4753, %v4749
  %v4802 = vpack.c.b16 %v4754, %v4750
  %v4803 = vpack.c.b16 %v4759, %v4755
  %v4804 = vpack.c.b16 %v4760, %v4756
  %v4805 = vpack.c.b16 %v4761, %v4757
  %v4806 = vpack.c.b16 %v4762, %v4758
  %v4807 = vpack.c.b16 %v4767, %v4763
  %v4808 = vpack.c.b16 %v4768, %v4764
  %v4809 = vpack.c.b16 %v4769, %v4765
  %v4810 = vpack.c.b16 %v4770, %v4766
  %v4811 = vpack.c.b16 %v4775, %v4771
  %v4812 = vpack.c.b16 %v4776, %v4772
  %v4813 = vpack.c.b16 %v4777, %v4773
  %v4814 = vpack.c.b16 %v4778, %v4774
  %v4815 = vpack.c.b16 %v4783, %v4779
  %v4816 = vpack.c.b16 %v4784, %v4780
  %v4817 = vpack.c.b16 %v4785, %v4781
  %v4818 = vpack.c.b16 %v4786, %v4782
  %4851 = vmatpush.bf16.msra.mxu0 %v4815
  %4852 = vmatpush.bf16.msra.mxu0 %v4811
  %4853 = vmatpush.bf16.msra.mxu0 %v4807
  %4854 = vmatpush.bf16.msra.mxu0 %v4803
  %4855 = vmatpush.bf16.msra.mxu0 %v4799
  %4856 = vmatpush.bf16.msra.mxu0 %v4795
  %4857 = vmatpush.bf16.msra.mxu0 %v4791
  %4858 = vmatpush.bf16.msra.mxu0 %v4787
  %4859 = vmatmul.bf16.gmra.mxu0 0
  %v4860 = vpop.f32.mrf.mxu0
  %v4861 = vadd.f32 0.0, %v4860
  %v4862 = vpop.f32.mrf.mxu0
  %4863 = vdwg.mxu0
  %4864 = vmatpush.bf16.msra.mxu0 %v4816
  %4865 = vmatpush.bf16.msra.mxu0 %v4812
  %4866 = vmatpush.bf16.msra.mxu0 %v4808
  %4867 = vmatpush.bf16.msra.mxu0 %v4804
  %4868 = vmatpush.bf16.msra.mxu0 %v4800
  %4869 = vmatpush.bf16.msra.mxu0 %v4796
  %4870 = vmatpush.bf16.msra.mxu0 %v4792
  %4871 = vmatpush.bf16.msra.mxu0 %v4788
  %4872 = vmatmul.bf16.gmra.mxu0 0
  %v4873 = vpop.f32.mrf.mxu0
  %v4874 = vadd.f32 0.0, %v4873
  %v4875 = vpop.f32.mrf.mxu0
  %4876 = vdwg.mxu0
  %4877 = vmatpush.bf16.msra.mxu0 %v4817
  %4878 = vmatpush.bf16.msra.mxu0 %v4813
  %4879 = vmatpush.bf16.msra.mxu0 %v4809
  %4880 = vmatpush.bf16.msra.mxu0 %v4805
  %4881 = vmatpush.bf16.msra.mxu0 %v4801
  %4882 = vmatpush.bf16.msra.mxu0 %v4797
  %4883 = vmatpush.bf16.msra.mxu0 %v4793
  %4884 = vmatpush.bf16.msra.mxu0 %v4789
  %4885 = vmatmul.bf16.gmra.mxu0 0
  %v4886 = vpop.f32.mrf.mxu0
  %v4887 = vadd.f32 0.0, %v4886
  %v4888 = vpop.f32.mrf.mxu0
  %4889 = vdwg.mxu0
  %4890 = vmatpush.bf16.msra.mxu0 %v4818
  %4891 = vmatpush.bf16.msra.mxu0 %v4814
  %4892 = vmatpush.bf16.msra.mxu0 %v4810
  %4893 = vmatpush.bf16.msra.mxu0 %v4806
  %4894 = vmatpush.bf16.msra.mxu0 %v4802
  %4895 = vmatpush.bf16.msra.mxu0 %v4798
  %4896 = vmatpush.bf16.msra.mxu0 %v4794
  %4897 = vmatpush.bf16.msra.mxu0 %v4790
  %4898 = vmatmul.bf16.gmra.mxu0 0
  %v4899 = vpop.f32.mrf.mxu0
  %v4900 = vadd.f32 0.0, %v4899
  %v4901 = vpop.f32.mrf.mxu0
  %4902 = vdwg.mxu0
  %v4903 = vadd.f32 %v4170, %v4861
  %v4904 = vadd.f32 %v4228, %v4874
  %v4905 = vadd.f32 %v4286, %v4887
  %v4906 = vadd.f32 %v4344, %v4900
  %v4907 = vxor.u32 %v4903, 2147483648
  %v4908 = vmul.f32 %v4907, 1.442695
  %v4909 = vpow.pop %v4908
  %v4910 = vadd.f32 %v4909, 1.0
  %v4911 = vrcp.pop %v4910
  %v4912 = vmul.f32 %v4910, %v4911
  %v4913 = vsub.f32 1.0, %v4912
  %v4914 = vmul.f32 %v4911, %v4913
  %v4915 = vadd.f32 %v4911, %v4914
  %vm4916 = vweird.f32 %v4910
  %vm4917 = vweird.f32 %v4911
  %vm4918 = vmor %vm4916, %vm4917
  %v4919 = vsel %vm4918, %v4911, %v4915
  %v4920 = vand.u32 2147483647, %v4910
  %vm4921 = vcmp.eq.f32.partialorder %v4920, 8.507059e+37
  %v4922 = vand.u32 %v4910, 2147483648
  %v4923 = vor.u32 1.1754944e-38, %v4922
  %v4924 = vsel %vm4921, %v4923, %v4919
  %v4925 = vmul.f32 1.0, %v4924
  %v4926 = vxor.u32 %v4904, 2147483648
  %v4927 = vmul.f32 %v4926, 1.442695
  %v4928 = vpow.pop %v4927
  %v4929 = vadd.f32 %v4928, 1.0
  %v4930 = vrcp.pop %v4929
  %v4931 = vmul.f32 %v4929, %v4930
  %v4932 = vsub.f32 1.0, %v4931
  %v4933 = vmul.f32 %v4930, %v4932
  %v4934 = vadd.f32 %v4930, %v4933
  %vm4935 = vweird.f32 %v4929
  %vm4936 = vweird.f32 %v4930
  %vm4937 = vmor %vm4935, %vm4936
  %v4938 = vsel %vm4937, %v4930, %v4934
  %v4939 = vand.u32 2147483647, %v4929
  %vm4940 = vcmp.eq.f32.partialorder %v4939, 8.507059e+37
  %v4941 = vand.u32 %v4929, 2147483648
  %v4942 = vor.u32 1.1754944e-38, %v4941
  %v4943 = vsel %vm4940, %v4942, %v4938
  %v4944 = vmul.f32 1.0, %v4943
  %v4945 = vtanh.pop %v4905
  %v4946 = vxor.u32 %v4906, 2147483648
  %v4947 = vmul.f32 %v4946, 1.442695
  %v4948 = vpow.pop %v4947
  %v4949 = vadd.f32 %v4948, 1.0
  %v4950 = vrcp.pop %v4949
  %v4951 = vmul.f32 %v4949, %v4950
  %v4952 = vsub.f32 1.0, %v4951
  %v4953 = vmul.f32 %v4950, %v4952
  %v4954 = vadd.f32 %v4950, %v4953
  %vm4955 = vweird.f32 %v4949
  %vm4956 = vweird.f32 %v4950
  %vm4957 = vmor %vm4955, %vm4956
  %v4958 = vsel %vm4957, %v4950, %v4954
  %v4959 = vand.u32 2147483647, %v4949
  %vm4960 = vcmp.eq.f32.partialorder %v4959, 8.507059e+37
  %v4961 = vand.u32 %v4949, 2147483648
  %v4962 = vor.u32 1.1754944e-38, %v4961
  %v4963 = vsel %vm4960, %v4962, %v4958
  %v4964 = vmul.f32 1.0, %v4963
  %v4965 = vmul.f32 %v4944, 0.0
  %v4966 = vmul.f32 %v4925, %v4945
  %v4967 = vadd.f32 %v4965, %v4966
  %v4968 = vtanh.pop %v4967
  %v4969 = vmul.f32 %v4964, %v4968
  %v4970 = vsel %vm57, %v4969, 0.0
  %v4971 = vsel %vm57, %v4967, 0.0
  %v4972 = vpack.c.bf16 %v4689, %v4689
  %4973 = vmatpush.bf16.msra.mxu0 %v4534
  %4974 = vmatpush.bf16.msra.mxu0 %v4530
  %4975 = vmatpush.bf16.msra.mxu0 %v4526
  %4976 = vmatpush.bf16.msra.mxu0 %v4522
  %4977 = vmatpush.bf16.msra.mxu0 %v4518
  %4978 = vmatpush.bf16.msra.mxu0 %v4514
  %4979 = vmatpush.bf16.msra.mxu0 %v4510
  %4980 = vmatpush.bf16.msra.mxu0 %v4506
  %4981 = vmatmul.bf16.gmra.mxu0 %v4972
  %v4982 = vpop.f32.mrf.mxu0
  %v4983 = vadd.f32 0.0, %v4982
  %v4984 = vpop.f32.mrf.mxu0
  %4985 = vdwg.mxu0
  %4986 = vmatpush.bf16.msra.mxu0 %v4535
  %4987 = vmatpush.bf16.msra.mxu0 %v4531
  %4988 = vmatpush.bf16.msra.mxu0 %v4527
  %4989 = vmatpush.bf16.msra.mxu0 %v4523
  %4990 = vmatpush.bf16.msra.mxu0 %v4519
  %4991 = vmatpush.bf16.msra.mxu0 %v4515
  %4992 = vmatpush.bf16.msra.mxu0 %v4511
  %4993 = vmatpush.bf16.msra.mxu0 %v4507
  %4994 = vmatmul.bf16.gmra.mxu0 %v4972
  %v4995 = vpop.f32.mrf.mxu0
  %v4996 = vadd.f32 0.0, %v4995
  %v4997 = vpop.f32.mrf.mxu0
  %4998 = vdwg.mxu0
  %4999 = vmatpush.bf16.msra.mxu0 %v4536
  %5000 = vmatpush.bf16.msra.mxu0 %v4532
  %5001 = vmatpush.bf16.msra.mxu0 %v4528
  %5002 = vmatpush.bf16.msra.mxu0 %v4524
  %5003 = vmatpush.bf16.msra.mxu0 %v4520
  %5004 = vmatpush.bf16.msra.mxu0 %v4516
  %5005 = vmatpush.bf16.msra.mxu0 %v4512
  %5006 = vmatpush.bf16.msra.mxu0 %v4508
  %5007 = vmatmul.bf16.gmra.mxu0 %v4972
  %v5008 = vpop.f32.mrf.mxu0
  %v5009 = vadd.f32 0.0, %v5008
  %v5010 = vpop.f32.mrf.mxu0
  %5011 = vdwg.mxu0
  %5012 = vmatpush.bf16.msra.mxu0 %v4537
  %5013 = vmatpush.bf16.msra.mxu0 %v4533
  %5014 = vmatpush.bf16.msra.mxu0 %v4529
  %5015 = vmatpush.bf16.msra.mxu0 %v4525
  %5016 = vmatpush.bf16.msra.mxu0 %v4521
  %5017 = vmatpush.bf16.msra.mxu0 %v4517
  %5018 = vmatpush.bf16.msra.mxu0 %v4513
  %5019 = vmatpush.bf16.msra.mxu0 %v4509
  %5020 = vmatmul.bf16.gmra.mxu0 %v4972
  %v5021 = vpop.f32.mrf.mxu0
  %v5022 = vadd.f32 0.0, %v5021
  %v5023 = vpop.f32.mrf.mxu0
  %5024 = vdwg.mxu0
  %v5025 = vadd.f32 %v3923, %v4983
  %v5026 = vadd.f32 %v3981, %v4996
  %v5027 = vadd.f32 %v4039, %v5009
  %v5028 = vadd.f32 %v4097, %v5022
  %v5029 = vxor.u32 %v5025, 2147483648
  %v5030 = vmul.f32 %v5029, 1.442695
  %v5031 = vpow.pop %v5030
  %v5032 = vadd.f32 %v5031, 1.0
  %v5033 = vrcp.pop %v5032
  %v5034 = vmul.f32 %v5032, %v5033
  %v5035 = vsub.f32 1.0, %v5034
  %v5036 = vmul.f32 %v5033, %v5035
  %v5037 = vadd.f32 %v5033, %v5036
  %vm5038 = vweird.f32 %v5032
  %vm5039 = vweird.f32 %v5033
  %vm5040 = vmor %vm5038, %vm5039
  %v5041 = vsel %vm5040, %v5033, %v5037
  %v5042 = vand.u32 2147483647, %v5032
  %vm5043 = vcmp.eq.f32.partialorder %v5042, 8.507059e+37
  %v5044 = vand.u32 %v5032, 2147483648
  %v5045 = vor.u32 1.1754944e-38, %v5044
  %v5046 = vsel %vm5043, %v5045, %v5041
  %v5047 = vmul.f32 1.0, %v5046
  %v5048 = vxor.u32 %v5026, 2147483648
  %v5049 = vmul.f32 %v5048, 1.442695
  %v5050 = vpow.pop %v5049
  %v5051 = vadd.f32 %v5050, 1.0
  %v5052 = vrcp.pop %v5051
  %v5053 = vmul.f32 %v5051, %v5052
  %v5054 = vsub.f32 1.0, %v5053
  %v5055 = vmul.f32 %v5052, %v5054
  %v5056 = vadd.f32 %v5052, %v5055
  %vm5057 = vweird.f32 %v5051
  %vm5058 = vweird.f32 %v5052
  %vm5059 = vmor %vm5057, %vm5058
  %v5060 = vsel %vm5059, %v5052, %v5056
  %v5061 = vand.u32 2147483647, %v5051
  %vm5062 = vcmp.eq.f32.partialorder %v5061, 8.507059e+37
  %v5063 = vand.u32 %v5051, 2147483648
  %v5064 = vor.u32 1.1754944e-38, %v5063
  %v5065 = vsel %vm5062, %v5064, %v5060
  %v5066 = vmul.f32 1.0, %v5065
  %v5067 = vtanh.pop %v5027
  %v5068 = vxor.u32 %v5028, 2147483648
  %v5069 = vmul.f32 %v5068, 1.442695
  %v5070 = vpow.pop %v5069
  %v5071 = vadd.f32 %v5070, 1.0
  %v5072 = vrcp.pop %v5071
  %v5073 = vmul.f32 %v5071, %v5072
  %v5074 = vsub.f32 1.0, %v5073
  %v5075 = vmul.f32 %v5072, %v5074
  %v5076 = vadd.f32 %v5072, %v5075
  %vm5077 = vweird.f32 %v5071
  %vm5078 = vweird.f32 %v5072
  %vm5079 = vmor %vm5077, %vm5078
  %v5080 = vsel %vm5079, %v5072, %v5076
  %v5081 = vand.u32 2147483647, %v5071
  %vm5082 = vcmp.eq.f32.partialorder %v5081, 8.507059e+37
  %v5083 = vand.u32 %v5071, 2147483648
  %v5084 = vor.u32 1.1754944e-38, %v5083
  %v5085 = vsel %vm5082, %v5084, %v5080
  %v5086 = vmul.f32 1.0, %v5085
  %v5087 = vmul.f32 %v5066, %v4690
  %v5088 = vmul.f32 %v5047, %v5067
  %v5089 = vadd.f32 %v5087, %v5088
  %v5090 = vtanh.pop %v5089
  %v5091 = vmul.f32 %v5086, %v5090
  %v5092 = vsel %vm51, %v5091, %v4689
  %v5093 = vsel %vm51, %v5089, %v4690
  %v5094 = vpack.c.bf16 %v4970, %v4970
  %5095 = vmatpush.bf16.msra.mxu0 %v4815
  %5096 = vmatpush.bf16.msra.mxu0 %v4811
  %5097 = vmatpush.bf16.msra.mxu0 %v4807
  %5098 = vmatpush.bf16.msra.mxu0 %v4803
  %5099 = vmatpush.bf16.msra.mxu0 %v4799
  %5100 = vmatpush.bf16.msra.mxu0 %v4795
  %5101 = vmatpush.bf16.msra.mxu0 %v4791
  %5102 = vmatpush.bf16.msra.mxu0 %v4787
  %5103 = vmatmul.bf16.gmra.mxu0 %v5094
  %v5104 = vpop.f32.mrf.mxu0
  %v5105 = vadd.f32 0.0, %v5104
  %v5106 = vpop.f32.mrf.mxu0
  %5107 = vdwg.mxu0
  %5108 = vmatpush.bf16.msra.mxu0 %v4816
  %5109 = vmatpush.bf16.msra.mxu0 %v4812
  %5110 = vmatpush.bf16.msra.mxu0 %v4808
  %5111 = vmatpush.bf16.msra.mxu0 %v4804
  %5112 = vmatpush.bf16.msra.mxu0 %v4800
  %5113 = vmatpush.bf16.msra.mxu0 %v4796
  %5114 = vmatpush.bf16.msra.mxu0 %v4792
  %5115 = vmatpush.bf16.msra.mxu0 %v4788
  %5116 = vmatmul.bf16.gmra.mxu0 %v5094
  %v5117 = vpop.f32.mrf.mxu0
  %v5118 = vadd.f32 0.0, %v5117
  %v5119 = vpop.f32.mrf.mxu0
  %5120 = vdwg.mxu0
  %5121 = vmatpush.bf16.msra.mxu0 %v4817
  %5122 = vmatpush.bf16.msra.mxu0 %v4813
  %5123 = vmatpush.bf16.msra.mxu0 %v4809
  %5124 = vmatpush.bf16.msra.mxu0 %v4805
  %5125 = vmatpush.bf16.msra.mxu0 %v4801
  %5126 = vmatpush.bf16.msra.mxu0 %v4797
  %5127 = vmatpush.bf16.msra.mxu0 %v4793
  %5128 = vmatpush.bf16.msra.mxu0 %v4789
  %5129 = vmatmul.bf16.gmra.mxu0 %v5094
  %v5130 = vpop.f32.mrf.mxu0
  %v5131 = vadd.f32 0.0, %v5130
  %v5132 = vpop.f32.mrf.mxu0
  %5133 = vdwg.mxu0
  %5134 = vmatpush.bf16.msra.mxu0 %v4818
  %5135 = vmatpush.bf16.msra.mxu0 %v4814
  %5136 = vmatpush.bf16.msra.mxu0 %v4810
  %5137 = vmatpush.bf16.msra.mxu0 %v4806
  %5138 = vmatpush.bf16.msra.mxu0 %v4802
  %5139 = vmatpush.bf16.msra.mxu0 %v4798
  %5140 = vmatpush.bf16.msra.mxu0 %v4794
  %5141 = vmatpush.bf16.msra.mxu0 %v4790
  %5142 = vmatmul.bf16.gmra.mxu0 %v5094
  %v5143 = vpop.f32.mrf.mxu0
  %v5144 = vadd.f32 0.0, %v5143
  %v5145 = vpop.f32.mrf.mxu0
  %5146 = vdwg.mxu0
  %v5147 = vadd.f32 %v4168, %v5105
  %v5148 = vadd.f32 %v4226, %v5118
  %v5149 = vadd.f32 %v4284, %v5131
  %v5150 = vadd.f32 %v4342, %v5144
  %v5151 = vxor.u32 %v5147, 2147483648
  %v5152 = vmul.f32 %v5151, 1.442695
  %v5153 = vpow.pop %v5152
  %v5154 = vadd.f32 %v5153, 1.0
  %v5155 = vrcp.pop %v5154
  %v5156 = vmul.f32 %v5154, %v5155
  %v5157 = vsub.f32 1.0, %v5156
  %v5158 = vmul.f32 %v5155, %v5157
  %v5159 = vadd.f32 %v5155, %v5158
  %vm5160 = vweird.f32 %v5154
  %vm5161 = vweird.f32 %v5155
  %vm5162 = vmor %vm5160, %vm5161
  %v5163 = vsel %vm5162, %v5155, %v5159
  %v5164 = vand.u32 2147483647, %v5154
  %vm5165 = vcmp.eq.f32.partialorder %v5164, 8.507059e+37
  %v5166 = vand.u32 %v5154, 2147483648
  %v5167 = vor.u32 1.1754944e-38, %v5166
  %v5168 = vsel %vm5165, %v5167, %v5163
  %v5169 = vmul.f32 1.0, %v5168
  %v5170 = vxor.u32 %v5148, 2147483648
  %v5171 = vmul.f32 %v5170, 1.442695
  %v5172 = vpow.pop %v5171
  %v5173 = vadd.f32 %v5172, 1.0
  %v5174 = vrcp.pop %v5173
  %v5175 = vmul.f32 %v5173, %v5174
  %v5176 = vsub.f32 1.0, %v5175
  %v5177 = vmul.f32 %v5174, %v5176
  %v5178 = vadd.f32 %v5174, %v5177
  %vm5179 = vweird.f32 %v5173
  %vm5180 = vweird.f32 %v5174
  %vm5181 = vmor %vm5179, %vm5180
  %v5182 = vsel %vm5181, %v5174, %v5178
  %v5183 = vand.u32 2147483647, %v5173
  %vm5184 = vcmp.eq.f32.partialorder %v5183, 8.507059e+37
  %v5185 = vand.u32 %v5173, 2147483648
  %v5186 = vor.u32 1.1754944e-38, %v5185
  %v5187 = vsel %vm5184, %v5186, %v5182
  %v5188 = vmul.f32 1.0, %v5187
  %v5189 = vtanh.pop %v5149
  %v5190 = vxor.u32 %v5150, 2147483648
  %v5191 = vmul.f32 %v5190, 1.442695
  %v5192 = vpow.pop %v5191
  %v5193 = vadd.f32 %v5192, 1.0
  %v5194 = vrcp.pop %v5193
  %v5195 = vmul.f32 %v5193, %v5194
  %v5196 = vsub.f32 1.0, %v5195
  %v5197 = vmul.f32 %v5194, %v5196
  %v5198 = vadd.f32 %v5194, %v5197
  %vm5199 = vweird.f32 %v5193
  %vm5200 = vweird.f32 %v5194
  %vm5201 = vmor %vm5199, %vm5200
  %v5202 = vsel %vm5201, %v5194, %v5198
  %v5203 = vand.u32 2147483647, %v5193
  %vm5204 = vcmp.eq.f32.partialorder %v5203, 8.507059e+37
  %v5205 = vand.u32 %v5193, 2147483648
  %v5206 = vor.u32 1.1754944e-38, %v5205
  %v5207 = vsel %vm5204, %v5206, %v5202
  %v5208 = vmul.f32 1.0, %v5207
  %v5209 = vmul.f32 %v5188, %v4971
  %v5210 = vmul.f32 %v5169, %v5189
  %v5211 = vadd.f32 %v5209, %v5210
  %v5212 = vtanh.pop %v5211
  %v5213 = vmul.f32 %v5208, %v5212
  %v5214 = vsel %vm56, %v5213, %v4970
  %v5215 = vsel %vm56, %v5211, %v4971
  %v5216 = vpack.c.bf16 %v5092, %v5092
  %5217 = vmatpush.bf16.msra.mxu0 %v4534
  %5218 = vmatpush.bf16.msra.mxu0 %v4530
  %5219 = vmatpush.bf16.msra.mxu0 %v4526
  %5220 = vmatpush.bf16.msra.mxu0 %v4522
  %5221 = vmatpush.bf16.msra.mxu0 %v4518
  %5222 = vmatpush.bf16.msra.mxu0 %v4514
  %5223 = vmatpush.bf16.msra.mxu0 %v4510
  %5224 = vmatpush.bf16.msra.mxu0 %v4506
  %5225 = vmatmul.bf16.gmra.mxu0 %v5216
  %v5226 = vpop.f32.mrf.mxu0
  %v5227 = vadd.f32 0.0, %v5226
  %v5228 = vpop.f32.mrf.mxu0
  %5229 = vdwg.mxu0
  %5230 = vmatpush.bf16.msra.mxu0 %v4535
  %5231 = vmatpush.bf16.msra.mxu0 %v4531
  %5232 = vmatpush.bf16.msra.mxu0 %v4527
  %5233 = vmatpush.bf16.msra.mxu0 %v4523
  %5234 = vmatpush.bf16.msra.mxu0 %v4519
  %5235 = vmatpush.bf16.msra.mxu0 %v4515
  %5236 = vmatpush.bf16.msra.mxu0 %v4511
  %5237 = vmatpush.bf16.msra.mxu0 %v4507
  %5238 = vmatmul.bf16.gmra.mxu0 %v5216
  %v5239 = vpop.f32.mrf.mxu0
  %v5240 = vadd.f32 0.0, %v5239
  %v5241 = vpop.f32.mrf.mxu0
  %5242 = vdwg.mxu0
  %5243 = vmatpush.bf16.msra.mxu0 %v4536
  %5244 = vmatpush.bf16.msra.mxu0 %v4532
  %5245 = vmatpush.bf16.msra.mxu0 %v4528
  %5246 = vmatpush.bf16.msra.mxu0 %v4524
  %5247 = vmatpush.bf16.msra.mxu0 %v4520
  %5248 = vmatpush.bf16.msra.mxu0 %v4516
  %5249 = vmatpush.bf16.msra.mxu0 %v4512
  %5250 = vmatpush.bf16.msra.mxu0 %v4508
  %5251 = vmatmul.bf16.gmra.mxu0 %v5216
  %v5252 = vpop.f32.mrf.mxu0
  %v5253 = vadd.f32 0.0, %v5252
  %v5254 = vpop.f32.mrf.mxu0
  %5255 = vdwg.mxu0
  %5256 = vmatpush.bf16.msra.mxu0 %v4537
  %5257 = vmatpush.bf16.msra.mxu0 %v4533
  %5258 = vmatpush.bf16.msra.mxu0 %v4529
  %5259 = vmatpush.bf16.msra.mxu0 %v4525
  %5260 = vmatpush.bf16.msra.mxu0 %v4521
  %5261 = vmatpush.bf16.msra.mxu0 %v4517
  %5262 = vmatpush.bf16.msra.mxu0 %v4513
  %5263 = vmatpush.bf16.msra.mxu0 %v4509
  %5264 = vmatmul.bf16.gmra.mxu0 %v5216
  %v5265 = vpop.f32.mrf.mxu0
  %v5266 = vadd.f32 0.0, %v5265
  %v5267 = vpop.f32.mrf.mxu0
  %5268 = vdwg.mxu0
  %v5269 = vadd.f32 %v3926, %v5227
  %v5270 = vadd.f32 %v3984, %v5240
  %v5271 = vadd.f32 %v4042, %v5253
  %v5272 = vadd.f32 %v4100, %v5266
  %v5273 = vxor.u32 %v5269, 2147483648
  %v5274 = vmul.f32 %v5273, 1.442695
  %v5275 = vpow.pop %v5274
  %v5276 = vadd.f32 %v5275, 1.0
  %v5277 = vrcp.pop %v5276
  %v5278 = vmul.f32 %v5276, %v5277
  %v5279 = vsub.f32 1.0, %v5278
  %v5280 = vmul.f32 %v5277, %v5279
  %v5281 = vadd.f32 %v5277, %v5280
  %vm5282 = vweird.f32 %v5276
  %vm5283 = vweird.f32 %v5277
  %vm5284 = vmor %vm5282, %vm5283
  %v5285 = vsel %vm5284, %v5277, %v5281
  %v5286 = vand.u32 2147483647, %v5276
  %vm5287 = vcmp.eq.f32.partialorder %v5286, 8.507059e+37
  %v5288 = vand.u32 %v5276, 2147483648
  %v5289 = vor.u32 1.1754944e-38, %v5288
  %v5290 = vsel %vm5287, %v5289, %v5285
  %v5291 = vmul.f32 1.0, %v5290
  %v5292 = vxor.u32 %v5270, 2147483648
  %v5293 = vmul.f32 %v5292, 1.442695
  %v5294 = vpow.pop %v5293
  %v5295 = vadd.f32 %v5294, 1.0
  %v5296 = vrcp.pop %v5295
  %v5297 = vmul.f32 %v5295, %v5296
  %v5298 = vsub.f32 1.0, %v5297
  %v5299 = vmul.f32 %v5296, %v5298
  %v5300 = vadd.f32 %v5296, %v5299
  %vm5301 = vweird.f32 %v5295
  %vm5302 = vweird.f32 %v5296
  %vm5303 = vmor %vm5301, %vm5302
  %v5304 = vsel %vm5303, %v5296, %v5300
  %v5305 = vand.u32 2147483647, %v5295
  %vm5306 = vcmp.eq.f32.partialorder %v5305, 8.507059e+37
  %v5307 = vand.u32 %v5295, 2147483648
  %v5308 = vor.u32 1.1754944e-38, %v5307
  %v5309 = vsel %vm5306, %v5308, %v5304
  %v5310 = vmul.f32 1.0, %v5309
  %v5311 = vtanh.pop %v5271
  %v5312 = vxor.u32 %v5272, 2147483648
  %v5313 = vmul.f32 %v5312, 1.442695
  %v5314 = vpow.pop %v5313
  %v5315 = vadd.f32 %v5314, 1.0
  %v5316 = vrcp.pop %v5315
  %v5317 = vmul.f32 %v5315, %v5316
  %v5318 = vsub.f32 1.0, %v5317
  %v5319 = vmul.f32 %v5316, %v5318
  %v5320 = vadd.f32 %v5316, %v5319
  %vm5321 = vweird.f32 %v5315
  %vm5322 = vweird.f32 %v5316
  %vm5323 = vmor %vm5321, %vm5322
  %v5324 = vsel %vm5323, %v5316, %v5320
  %v5325 = vand.u32 2147483647, %v5315
  %vm5326 = vcmp.eq.f32.partialorder %v5325, 8.507059e+37
  %v5327 = vand.u32 %v5315, 2147483648
  %v5328 = vor.u32 1.1754944e-38, %v5327
  %v5329 = vsel %vm5326, %v5328, %v5324
  %v5330 = vmul.f32 1.0, %v5329
  %v5331 = vmul.f32 %v5310, %v5093
  %v5332 = vmul.f32 %v5291, %v5311
  %v5333 = vadd.f32 %v5331, %v5332
  %v5334 = vtanh.pop %v5333
  %v5335 = vmul.f32 %v5330, %v5334
  %v5336 = vsel %vm52, %v5335, %v5092
  %v5337 = vsel %vm52, %v5333, %v5093
  %v5338 = vpack.c.bf16 %v5214, %v5214
  %5339 = vmatpush.bf16.msra.mxu0 %v4815
  %5340 = vmatpush.bf16.msra.mxu0 %v4811
  %5341 = vmatpush.bf16.msra.mxu0 %v4807
  %5342 = vmatpush.bf16.msra.mxu0 %v4803
  %5343 = vmatpush.bf16.msra.mxu0 %v4799
  %5344 = vmatpush.bf16.msra.mxu0 %v4795
  %5345 = vmatpush.bf16.msra.mxu0 %v4791
  %5346 = vmatpush.bf16.msra.mxu0 %v4787
  %5347 = vmatmul.bf16.gmra.mxu0 %v5338
  %v5348 = vpop.f32.mrf.mxu0
  %v5349 = vadd.f32 0.0, %v5348
  %v5350 = vpop.f32.mrf.mxu0
  %5351 = vdwg.mxu0
  %5352 = vmatpush.bf16.msra.mxu0 %v4816
  %5353 = vmatpush.bf16.msra.mxu0 %v4812
  %5354 = vmatpush.bf16.msra.mxu0 %v4808
  %5355 = vmatpush.bf16.msra.mxu0 %v4804
  %5356 = vmatpush.bf16.msra.mxu0 %v4800
  %5357 = vmatpush.bf16.msra.mxu0 %v4796
  %5358 = vmatpush.bf16.msra.mxu0 %v4792
  %5359 = vmatpush.bf16.msra.mxu0 %v4788
  %5360 = vmatmul.bf16.gmra.mxu0 %v5338
  %v5361 = vpop.f32.mrf.mxu0
  %v5362 = vadd.f32 0.0, %v5361
  %v5363 = vpop.f32.mrf.mxu0
  %5364 = vdwg.mxu0
  %5365 = vmatpush.bf16.msra.mxu0 %v4817
  %5366 = vmatpush.bf16.msra.mxu0 %v4813
  %5367 = vmatpush.bf16.msra.mxu0 %v4809
  %5368 = vmatpush.bf16.msra.mxu0 %v4805
  %5369 = vmatpush.bf16.msra.mxu0 %v4801
  %5370 = vmatpush.bf16.msra.mxu0 %v4797
  %5371 = vmatpush.bf16.msra.mxu0 %v4793
  %5372 = vmatpush.bf16.msra.mxu0 %v4789
  %5373 = vmatmul.bf16.gmra.mxu0 %v5338
  %v5374 = vpop.f32.mrf.mxu0
  %v5375 = vadd.f32 0.0, %v5374
  %v5376 = vpop.f32.mrf.mxu0
  %5377 = vdwg.mxu0
  %5378 = vmatpush.bf16.msra.mxu0 %v4818
  %5379 = vmatpush.bf16.msra.mxu0 %v4814
  %5380 = vmatpush.bf16.msra.mxu0 %v4810
  %5381 = vmatpush.bf16.msra.mxu0 %v4806
  %5382 = vmatpush.bf16.msra.mxu0 %v4802
  %5383 = vmatpush.bf16.msra.mxu0 %v4798
  %5384 = vmatpush.bf16.msra.mxu0 %v4794
  %5385 = vmatpush.bf16.msra.mxu0 %v4790
  %5386 = vmatmul.bf16.gmra.mxu0 %v5338
  %v5387 = vpop.f32.mrf.mxu0
  %v5388 = vadd.f32 0.0, %v5387
  %v5389 = vpop.f32.mrf.mxu0
  %5390 = vdwg.mxu0
  %v5391 = vadd.f32 %v4165, %v5349
  %v5392 = vadd.f32 %v4223, %v5362
  %v5393 = vadd.f32 %v4281, %v5375
  %v5394 = vadd.f32 %v4339, %v5388
  %v5395 = vxor.u32 %v5391, 2147483648
  %v5396 = vmul.f32 %v5395, 1.442695
  %v5397 = vpow.pop %v5396
  %v5398 = vadd.f32 %v5397, 1.0
  %v5399 = vrcp.pop %v5398
  %v5400 = vmul.f32 %v5398, %v5399
  %v5401 = vsub.f32 1.0, %v5400
  %v5402 = vmul.f32 %v5399, %v5401
  %v5403 = vadd.f32 %v5399, %v5402
  %vm5404 = vweird.f32 %v5398
  %vm5405 = vweird.f32 %v5399
  %vm5406 = vmor %vm5404, %vm5405
  %v5407 = vsel %vm5406, %v5399, %v5403
  %v5408 = vand.u32 2147483647, %v5398
  %vm5409 = vcmp.eq.f32.partialorder %v5408, 8.507059e+37
  %v5410 = vand.u32 %v5398, 2147483648
  %v5411 = vor.u32 1.1754944e-38, %v5410
  %v5412 = vsel %vm5409, %v5411, %v5407
  %v5413 = vmul.f32 1.0, %v5412
  %v5414 = vxor.u32 %v5392, 2147483648
  %v5415 = vmul.f32 %v5414, 1.442695
  %v5416 = vpow.pop %v5415
  %v5417 = vadd.f32 %v5416, 1.0
  %v5418 = vrcp.pop %v5417
  %v5419 = vmul.f32 %v5417, %v5418
  %v5420 = vsub.f32 1.0, %v5419
  %v5421 = vmul.f32 %v5418, %v5420
  %v5422 = vadd.f32 %v5418, %v5421
  %vm5423 = vweird.f32 %v5417
  %vm5424 = vweird.f32 %v5418
  %vm5425 = vmor %vm5423, %vm5424
  %v5426 = vsel %vm5425, %v5418, %v5422
  %v5427 = vand.u32 2147483647, %v5417
  %vm5428 = vcmp.eq.f32.partialorder %v5427, 8.507059e+37
  %v5429 = vand.u32 %v5417, 2147483648
  %v5430 = vor.u32 1.1754944e-38, %v5429
  %v5431 = vsel %vm5428, %v5430, %v5426
  %v5432 = vmul.f32 1.0, %v5431
  %v5433 = vtanh.pop %v5393
  %v5434 = vxor.u32 %v5394, 2147483648
  %v5435 = vmul.f32 %v5434, 1.442695
  %v5436 = vpow.pop %v5435
  %v5437 = vadd.f32 %v5436, 1.0
  %v5438 = vrcp.pop %v5437
  %v5439 = vmul.f32 %v5437, %v5438
  %v5440 = vsub.f32 1.0, %v5439
  %v5441 = vmul.f32 %v5438, %v5440
  %v5442 = vadd.f32 %v5438, %v5441
  %vm5443 = vweird.f32 %v5437
  %vm5444 = vweird.f32 %v5438
  %vm5445 = vmor %vm5443, %vm5444
  %v5446 = vsel %vm5445, %v5438, %v5442
  %v5447 = vand.u32 2147483647, %v5437
  %vm5448 = vcmp.eq.f32.partialorder %v5447, 8.507059e+37
  %v5449 = vand.u32 %v5437, 2147483648
  %v5450 = vor.u32 1.1754944e-38, %v5449
  %v5451 = vsel %vm5448, %v5450, %v5446
  %v5452 = vmul.f32 1.0, %v5451
  %v5453 = vmul.f32 %v5432, %v5215
  %v5454 = vmul.f32 %v5413, %v5433
  %v5455 = vadd.f32 %v5453, %v5454
  %v5456 = vtanh.pop %v5455
  %v5457 = vmul.f32 %v5452, %v5456
  %v5458 = vsel %vm55, %v5457, %v5214
  %v5459 = vsel %vm55, %v5455, %v5215
  %v5460 = vpack.c.bf16 %v5336, %v5336
  %5461 = vmatpush.bf16.msra.mxu0 %v4534
  %5462 = vmatpush.bf16.msra.mxu0 %v4530
  %5463 = vmatpush.bf16.msra.mxu0 %v4526
  %5464 = vmatpush.bf16.msra.mxu0 %v4522
  %5465 = vmatpush.bf16.msra.mxu0 %v4518
  %5466 = vmatpush.bf16.msra.mxu0 %v4514
  %5467 = vmatpush.bf16.msra.mxu0 %v4510
  %5468 = vmatpush.bf16.msra.mxu0 %v4506
  %5469 = vmatmul.bf16.gmra.mxu0 %v5460
  %v5470 = vpop.f32.mrf.mxu0
  %v5471 = vadd.f32 0.0, %v5470
  %v5472 = vpop.f32.mrf.mxu0
  %5473 = vdwg.mxu0
  %5474 = vmatpush.bf16.msra.mxu0 %v4535
  %5475 = vmatpush.bf16.msra.mxu0 %v4531
  %5476 = vmatpush.bf16.msra.mxu0 %v4527
  %5477 = vmatpush.bf16.msra.mxu0 %v4523
  %5478 = vmatpush.bf16.msra.mxu0 %v4519
  %5479 = vmatpush.bf16.msra.mxu0 %v4515
  %5480 = vmatpush.bf16.msra.mxu0 %v4511
  %5481 = vmatpush.bf16.msra.mxu0 %v4507
  %5482 = vmatmul.bf16.gmra.mxu0 %v5460
  %v5483 = vpop.f32.mrf.mxu0
  %v5484 = vadd.f32 0.0, %v5483
  %v5485 = vpop.f32.mrf.mxu0
  %5486 = vdwg.mxu0
  %5487 = vmatpush.bf16.msra.mxu0 %v4536
  %5488 = vmatpush.bf16.msra.mxu0 %v4532
  %5489 = vmatpush.bf16.msra.mxu0 %v4528
  %5490 = vmatpush.bf16.msra.mxu0 %v4524
  %5491 = vmatpush.bf16.msra.mxu0 %v4520
  %5492 = vmatpush.bf16.msra.mxu0 %v4516
  %5493 = vmatpush.bf16.msra.mxu0 %v4512
  %5494 = vmatpush.bf16.msra.mxu0 %v4508
  %5495 = vmatmul.bf16.gmra.mxu0 %v5460
  %v5496 = vpop.f32.mrf.mxu0
  %v5497 = vadd.f32 0.0, %v5496
  %v5498 = vpop.f32.mrf.mxu0
  %5499 = vdwg.mxu0
  %5500 = vmatpush.bf16.msra.mxu0 %v4537
  %5501 = vmatpush.bf16.msra.mxu0 %v4533
  %5502 = vmatpush.bf16.msra.mxu0 %v4529
  %5503 = vmatpush.bf16.msra.mxu0 %v4525
  %5504 = vmatpush.bf16.msra.mxu0 %v4521
  %5505 = vmatpush.bf16.msra.mxu0 %v4517
  %5506 = vmatpush.bf16.msra.mxu0 %v4513
  %5507 = vmatpush.bf16.msra.mxu0 %v4509
  %5508 = vmatmul.bf16.gmra.mxu0 %v5460
  %v5509 = vpop.f32.mrf.mxu0
  %v5510 = vadd.f32 0.0, %v5509
  %v5511 = vpop.f32.mrf.mxu0
  %5512 = vdwg.mxu0
  %v5513 = vadd.f32 %v3928, %v5471
  %v5514 = vadd.f32 %v3986, %v5484
  %v5515 = vadd.f32 %v4044, %v5497
  %v5516 = vadd.f32 %v4102, %v5510
  %v5517 = vxor.u32 %v5513, 2147483648
  %v5518 = vmul.f32 %v5517, 1.442695
  %v5519 = vpow.pop %v5518
  %v5520 = vadd.f32 %v5519, 1.0
  %v5521 = vrcp.pop %v5520
  %v5522 = vmul.f32 %v5520, %v5521
  %v5523 = vsub.f32 1.0, %v5522
  %v5524 = vmul.f32 %v5521, %v5523
  %v5525 = vadd.f32 %v5521, %v5524
  %vm5526 = vweird.f32 %v5520
  %vm5527 = vweird.f32 %v5521
  %vm5528 = vmor %vm5526, %vm5527
  %v5529 = vsel %vm5528, %v5521, %v5525
  %v5530 = vand.u32 2147483647, %v5520
  %vm5531 = vcmp.eq.f32.partialorder %v5530, 8.507059e+37
  %v5532 = vand.u32 %v5520, 2147483648
  %v5533 = vor.u32 1.1754944e-38, %v5532
  %v5534 = vsel %vm5531, %v5533, %v5529
  %v5535 = vmul.f32 1.0, %v5534
  %v5536 = vxor.u32 %v5514, 2147483648
  %v5537 = vmul.f32 %v5536, 1.442695
  %v5538 = vpow.pop %v5537
  %v5539 = vadd.f32 %v5538, 1.0
  %v5540 = vrcp.pop %v5539
  %v5541 = vmul.f32 %v5539, %v5540
  %v5542 = vsub.f32 1.0, %v5541
  %v5543 = vmul.f32 %v5540, %v5542
  %v5544 = vadd.f32 %v5540, %v5543
  %vm5545 = vweird.f32 %v5539
  %vm5546 = vweird.f32 %v5540
  %vm5547 = vmor %vm5545, %vm5546
  %v5548 = vsel %vm5547, %v5540, %v5544
  %v5549 = vand.u32 2147483647, %v5539
  %vm5550 = vcmp.eq.f32.partialorder %v5549, 8.507059e+37
  %v5551 = vand.u32 %v5539, 2147483648
  %v5552 = vor.u32 1.1754944e-38, %v5551
  %v5553 = vsel %vm5550, %v5552, %v5548
  %v5554 = vmul.f32 1.0, %v5553
  %v5555 = vtanh.pop %v5515
  %v5556 = vxor.u32 %v5516, 2147483648
  %v5557 = vmul.f32 %v5556, 1.442695
  %v5558 = vpow.pop %v5557
  %v5559 = vadd.f32 %v5558, 1.0
  %v5560 = vrcp.pop %v5559
  %v5561 = vmul.f32 %v5559, %v5560
  %v5562 = vsub.f32 1.0, %v5561
  %v5563 = vmul.f32 %v5560, %v5562
  %v5564 = vadd.f32 %v5560, %v5563
  %vm5565 = vweird.f32 %v5559
  %vm5566 = vweird.f32 %v5560
  %vm5567 = vmor %vm5565, %vm5566
  %v5568 = vsel %vm5567, %v5560, %v5564
  %v5569 = vand.u32 2147483647, %v5559
  %vm5570 = vcmp.eq.f32.partialorder %v5569, 8.507059e+37
  %v5571 = vand.u32 %v5559, 2147483648
  %v5572 = vor.u32 1.1754944e-38, %v5571
  %v5573 = vsel %vm5570, %v5572, %v5568
  %v5574 = vmul.f32 1.0, %v5573
  %v5575 = vmul.f32 %v5554, %v5337
  %v5576 = vmul.f32 %v5535, %v5555
  %v5577 = vadd.f32 %v5575, %v5576
  %v5578 = vtanh.pop %v5577
  %v5579 = vmul.f32 %v5574, %v5578
  %v5580 = vsel %vm53, %v5579, %v5336
  %v5581 = vsel %vm53, %v5577, %v5337
  %v5582 = vpack.c.bf16 %v5458, %v5458
  %5583 = vmatpush.bf16.msra.mxu0 %v4815
  %5584 = vmatpush.bf16.msra.mxu0 %v4811
  %5585 = vmatpush.bf16.msra.mxu0 %v4807
  %5586 = vmatpush.bf16.msra.mxu0 %v4803
  %5587 = vmatpush.bf16.msra.mxu0 %v4799
  %5588 = vmatpush.bf16.msra.mxu0 %v4795
  %5589 = vmatpush.bf16.msra.mxu0 %v4791
  %5590 = vmatpush.bf16.msra.mxu0 %v4787
  %5591 = vmatmul.bf16.gmra.mxu0 %v5582
  %v5592 = vpop.f32.mrf.mxu0
  %v5593 = vadd.f32 0.0, %v5592
  %v5594 = vpop.f32.mrf.mxu0
  %5595 = vdwg.mxu0
  %5596 = vmatpush.bf16.msra.mxu0 %v4816
  %5597 = vmatpush.bf16.msra.mxu0 %v4812
  %5598 = vmatpush.bf16.msra.mxu0 %v4808
  %5599 = vmatpush.bf16.msra.mxu0 %v4804
  %5600 = vmatpush.bf16.msra.mxu0 %v4800
  %5601 = vmatpush.bf16.msra.mxu0 %v4796
  %5602 = vmatpush.bf16.msra.mxu0 %v4792
  %5603 = vmatpush.bf16.msra.mxu0 %v4788
  %5604 = vmatmul.bf16.gmra.mxu0 %v5582
  %v5605 = vpop.f32.mrf.mxu0
  %v5606 = vadd.f32 0.0, %v5605
  %v5607 = vpop.f32.mrf.mxu0
  %5608 = vdwg.mxu0
  %5609 = vmatpush.bf16.msra.mxu0 %v4817
  %5610 = vmatpush.bf16.msra.mxu0 %v4813
  %5611 = vmatpush.bf16.msra.mxu0 %v4809
  %5612 = vmatpush.bf16.msra.mxu0 %v4805
  %5613 = vmatpush.bf16.msra.mxu0 %v4801
  %5614 = vmatpush.bf16.msra.mxu0 %v4797
  %5615 = vmatpush.bf16.msra.mxu0 %v4793
  %5616 = vmatpush.bf16.msra.mxu0 %v4789
  %5617 = vmatmul.bf16.gmra.mxu0 %v5582
  %v5618 = vpop.f32.mrf.mxu0
  %v5619 = vadd.f32 0.0, %v5618
  %v5620 = vpop.f32.mrf.mxu0
  %5621 = vdwg.mxu0
  %5622 = vmatpush.bf16.msra.mxu0 %v4818
  %5623 = vmatpush.bf16.msra.mxu0 %v4814
  %5624 = vmatpush.bf16.msra.mxu0 %v4810
  %5625 = vmatpush.bf16.msra.mxu0 %v4806
  %5626 = vmatpush.bf16.msra.mxu0 %v4802
  %5627 = vmatpush.bf16.msra.mxu0 %v4798
  %5628 = vmatpush.bf16.msra.mxu0 %v4794
  %5629 = vmatpush.bf16.msra.mxu0 %v4790
  %5630 = vmatmul.bf16.gmra.mxu0 %v5582
  %v5631 = vpop.f32.mrf.mxu0
  %v5632 = vadd.f32 0.0, %v5631
  %v5633 = vpop.f32.mrf.mxu0
  %5634 = vdwg.mxu0
  %v5635 = vadd.f32 %v4163, %v5593
  %v5636 = vadd.f32 %v4221, %v5606
  %v5637 = vadd.f32 %v4279, %v5619
  %v5638 = vadd.f32 %v4337, %v5632
  %v5639 = vxor.u32 %v5635, 2147483648
  %v5640 = vmul.f32 %v5639, 1.442695
  %v5641 = vpow.pop %v5640
  %v5642 = vadd.f32 %v5641, 1.0
  %v5643 = vrcp.pop %v5642
  %v5644 = vmul.f32 %v5642, %v5643
  %v5645 = vsub.f32 1.0, %v5644
  %v5646 = vmul.f32 %v5643, %v5645
  %v5647 = vadd.f32 %v5643, %v5646
  %vm5648 = vweird.f32 %v5642
  %vm5649 = vweird.f32 %v5643
  %vm5650 = vmor %vm5648, %vm5649
  %v5651 = vsel %vm5650, %v5643, %v5647
  %v5652 = vand.u32 2147483647, %v5642
  %vm5653 = vcmp.eq.f32.partialorder %v5652, 8.507059e+37
  %v5654 = vand.u32 %v5642, 2147483648
  %v5655 = vor.u32 1.1754944e-38, %v5654
  %v5656 = vsel %vm5653, %v5655, %v5651
  %v5657 = vmul.f32 1.0, %v5656
  %v5658 = vxor.u32 %v5636, 2147483648
  %v5659 = vmul.f32 %v5658, 1.442695
  %v5660 = vpow.pop %v5659
  %v5661 = vadd.f32 %v5660, 1.0
  %v5662 = vrcp.pop %v5661
  %v5663 = vmul.f32 %v5661, %v5662
  %v5664 = vsub.f32 1.0, %v5663
  %v5665 = vmul.f32 %v5662, %v5664
  %v5666 = vadd.f32 %v5662, %v5665
  %vm5667 = vweird.f32 %v5661
  %vm5668 = vweird.f32 %v5662
  %vm5669 = vmor %vm5667, %vm5668
  %v5670 = vsel %vm5669, %v5662, %v5666
  %v5671 = vand.u32 2147483647, %v5661
  %vm5672 = vcmp.eq.f32.partialorder %v5671, 8.507059e+37
  %v5673 = vand.u32 %v5661, 2147483648
  %v5674 = vor.u32 1.1754944e-38, %v5673
  %v5675 = vsel %vm5672, %v5674, %v5670
  %v5676 = vmul.f32 1.0, %v5675
  %v5677 = vtanh.pop %v5637
  %v5678 = vxor.u32 %v5638, 2147483648
  %v5679 = vmul.f32 %v5678, 1.442695
  %v5680 = vpow.pop %v5679
  %v5681 = vadd.f32 %v5680, 1.0
  %v5682 = vrcp.pop %v5681
  %v5683 = vmul.f32 %v5681, %v5682
  %v5684 = vsub.f32 1.0, %v5683
  %v5685 = vmul.f32 %v5682, %v5684
  %v5686 = vadd.f32 %v5682, %v5685
  %vm5687 = vweird.f32 %v5681
  %vm5688 = vweird.f32 %v5682
  %vm5689 = vmor %vm5687, %vm5688
  %v5690 = vsel %vm5689, %v5682, %v5686
  %v5691 = vand.u32 2147483647, %v5681
  %vm5692 = vcmp.eq.f32.partialorder %v5691, 8.507059e+37
  %v5693 = vand.u32 %v5681, 2147483648
  %v5694 = vor.u32 1.1754944e-38, %v5693
  %v5695 = vsel %vm5692, %v5694, %v5690
  %v5696 = vmul.f32 1.0, %v5695
  %v5697 = vmul.f32 %v5676, %v5459
  %v5698 = vmul.f32 %v5657, %v5677
  %v5699 = vadd.f32 %v5697, %v5698
  %v5700 = vtanh.pop %v5699
  %v5701 = vmul.f32 %v5696, %v5700
  %v5702 = vsel %vm54, %v5701, %v5458
  %v5703 = vsel %vm54, %v5699, %v5459
  %v5704 = vpack.c.bf16 %v5580, %v5580
  %5705 = vmatpush.bf16.msra.mxu0 %v4534
  %5706 = vmatpush.bf16.msra.mxu0 %v4530
  %5707 = vmatpush.bf16.msra.mxu0 %v4526
  %5708 = vmatpush.bf16.msra.mxu0 %v4522
  %5709 = vmatpush.bf16.msra.mxu0 %v4518
  %5710 = vmatpush.bf16.msra.mxu0 %v4514
  %5711 = vmatpush.bf16.msra.mxu0 %v4510
  %5712 = vmatpush.bf16.msra.mxu0 %v4506
  %5713 = vmatmul.bf16.gmra.mxu0 %v5704
  %v5714 = vpop.f32.mrf.mxu0
  %v5715 = vadd.f32 0.0, %v5714
  %v5716 = vpop.f32.mrf.mxu0
  %5717 = vdwg.mxu0
  %5718 = vmatpush.bf16.msra.mxu0 %v4535
  %5719 = vmatpush.bf16.msra.mxu0 %v4531
  %5720 = vmatpush.bf16.msra.mxu0 %v4527
  %5721 = vmatpush.bf16.msra.mxu0 %v4523
  %5722 = vmatpush.bf16.msra.mxu0 %v4519
  %5723 = vmatpush.bf16.msra.mxu0 %v4515
  %5724 = vmatpush.bf16.msra.mxu0 %v4511
  %5725 = vmatpush.bf16.msra.mxu0 %v4507
  %5726 = vmatmul.bf16.gmra.mxu0 %v5704
  %v5727 = vpop.f32.mrf.mxu0
  %v5728 = vadd.f32 0.0, %v5727
  %v5729 = vpop.f32.mrf.mxu0
  %5730 = vdwg.mxu0
  %5731 = vmatpush.bf16.msra.mxu0 %v4536
  %5732 = vmatpush.bf16.msra.mxu0 %v4532
  %5733 = vmatpush.bf16.msra.mxu0 %v4528
  %5734 = vmatpush.bf16.msra.mxu0 %v4524
  %5735 = vmatpush.bf16.msra.mxu0 %v4520
  %5736 = vmatpush.bf16.msra.mxu0 %v4516
  %5737 = vmatpush.bf16.msra.mxu0 %v4512
  %5738 = vmatpush.bf16.msra.mxu0 %v4508
  %5739 = vmatmul.bf16.gmra.mxu0 %v5704
  %v5740 = vpop.f32.mrf.mxu0
  %v5741 = vadd.f32 0.0, %v5740
  %v5742 = vpop.f32.mrf.mxu0
  %5743 = vdwg.mxu0
  %5744 = vmatpush.bf16.msra.mxu0 %v4537
  %5745 = vmatpush.bf16.msra.mxu0 %v4533
  %5746 = vmatpush.bf16.msra.mxu0 %v4529
  %5747 = vmatpush.bf16.msra.mxu0 %v4525
  %5748 = vmatpush.bf16.msra.mxu0 %v4521
  %5749 = vmatpush.bf16.msra.mxu0 %v4517
  %5750 = vmatpush.bf16.msra.mxu0 %v4513
  %5751 = vmatpush.bf16.msra.mxu0 %v4509
  %5752 = vmatmul.bf16.gmra.mxu0 %v5704
  %v5753 = vpop.f32.mrf.mxu0
  %v5754 = vadd.f32 0.0, %v5753
  %v5755 = vpop.f32.mrf.mxu0
  %5756 = vdwg.mxu0
  %v5757 = vadd.f32 %v3931, %v5715
  %v5758 = vadd.f32 %v3989, %v5728
  %v5759 = vadd.f32 %v4047, %v5741
  %v5760 = vadd.f32 %v4105, %v5754
  %v5761 = vxor.u32 %v5757, 2147483648
  %v5762 = vmul.f32 %v5761, 1.442695
  %v5763 = vpow.pop %v5762
  %v5764 = vadd.f32 %v5763, 1.0
  %v5765 = vrcp.pop %v5764
  %v5766 = vmul.f32 %v5764, %v5765
  %v5767 = vsub.f32 1.0, %v5766
  %v5768 = vmul.f32 %v5765, %v5767
  %v5769 = vadd.f32 %v5765, %v5768
  %vm5770 = vweird.f32 %v5764
  %vm5771 = vweird.f32 %v5765
  %vm5772 = vmor %vm5770, %vm5771
  %v5773 = vsel %vm5772, %v5765, %v5769
  %v5774 = vand.u32 2147483647, %v5764
  %vm5775 = vcmp.eq.f32.partialorder %v5774, 8.507059e+37
  %v5776 = vand.u32 %v5764, 2147483648
  %v5777 = vor.u32 1.1754944e-38, %v5776
  %v5778 = vsel %vm5775, %v5777, %v5773
  %v5779 = vmul.f32 1.0, %v5778
  %v5780 = vxor.u32 %v5758, 2147483648
  %v5781 = vmul.f32 %v5780, 1.442695
  %v5782 = vpow.pop %v5781
  %v5783 = vadd.f32 %v5782, 1.0
  %v5784 = vrcp.pop %v5783
  %v5785 = vmul.f32 %v5783, %v5784
  %v5786 = vsub.f32 1.0, %v5785
  %v5787 = vmul.f32 %v5784, %v5786
  %v5788 = vadd.f32 %v5784, %v5787
  %vm5789 = vweird.f32 %v5783
  %vm5790 = vweird.f32 %v5784
  %vm5791 = vmor %vm5789, %vm5790
  %v5792 = vsel %vm5791, %v5784, %v5788
  %v5793 = vand.u32 2147483647, %v5783
  %vm5794 = vcmp.eq.f32.partialorder %v5793, 8.507059e+37
  %v5795 = vand.u32 %v5783, 2147483648
  %v5796 = vor.u32 1.1754944e-38, %v5795
  %v5797 = vsel %vm5794, %v5796, %v5792
  %v5798 = vmul.f32 1.0, %v5797
  %v5799 = vtanh.pop %v5759
  %v5800 = vxor.u32 %v5760, 2147483648
  %v5801 = vmul.f32 %v5800, 1.442695
  %v5802 = vpow.pop %v5801
  %v5803 = vadd.f32 %v5802, 1.0
  %v5804 = vrcp.pop %v5803
  %v5805 = vmul.f32 %v5803, %v5804
  %v5806 = vsub.f32 1.0, %v5805
  %v5807 = vmul.f32 %v5804, %v5806
  %v5808 = vadd.f32 %v5804, %v5807
  %vm5809 = vweird.f32 %v5803
  %vm5810 = vweird.f32 %v5804
  %vm5811 = vmor %vm5809, %vm5810
  %v5812 = vsel %vm5811, %v5804, %v5808
  %v5813 = vand.u32 2147483647, %v5803
  %vm5814 = vcmp.eq.f32.partialorder %v5813, 8.507059e+37
  %v5815 = vand.u32 %v5803, 2147483648
  %v5816 = vor.u32 1.1754944e-38, %v5815
  %v5817 = vsel %vm5814, %v5816, %v5812
  %v5818 = vmul.f32 1.0, %v5817
  %v5819 = vmul.f32 %v5798, %v5581
  %v5820 = vmul.f32 %v5779, %v5799
  %v5821 = vadd.f32 %v5819, %v5820
  %v5822 = vtanh.pop %v5821
  %v5823 = vmul.f32 %v5818, %v5822
  %v5824 = vsel %vm54, %v5823, %v5580
  %v5825 = vsel %vm54, %v5821, %v5581
  %v5826 = vpack.c.bf16 %v5702, %v5702
  %5827 = vmatpush.bf16.msra.mxu0 %v4815
  %5828 = vmatpush.bf16.msra.mxu0 %v4811
  %5829 = vmatpush.bf16.msra.mxu0 %v4807
  %5830 = vmatpush.bf16.msra.mxu0 %v4803
  %5831 = vmatpush.bf16.msra.mxu0 %v4799
  %5832 = vmatpush.bf16.msra.mxu0 %v4795
  %5833 = vmatpush.bf16.msra.mxu0 %v4791
  %5834 = vmatpush.bf16.msra.mxu0 %v4787
  %5835 = vmatmul.bf16.gmra.mxu0 %v5826
  %v5836 = vpop.f32.mrf.mxu0
  %v5837 = vadd.f32 0.0, %v5836
  %v5838 = vpop.f32.mrf.mxu0
  %5839 = vdwg.mxu0
  %5840 = vmatpush.bf16.msra.mxu0 %v4816
  %5841 = vmatpush.bf16.msra.mxu0 %v4812
  %5842 = vmatpush.bf16.msra.mxu0 %v4808
  %5843 = vmatpush.bf16.msra.mxu0 %v4804
  %5844 = vmatpush.bf16.msra.mxu0 %v4800
  %5845 = vmatpush.bf16.msra.mxu0 %v4796
  %5846 = vmatpush.bf16.msra.mxu0 %v4792
  %5847 = vmatpush.bf16.msra.mxu0 %v4788
  %5848 = vmatmul.bf16.gmra.mxu0 %v5826
  %v5849 = vpop.f32.mrf.mxu0
  %v5850 = vadd.f32 0.0, %v5849
  %v5851 = vpop.f32.mrf.mxu0
  %5852 = vdwg.mxu0
  %5853 = vmatpush.bf16.msra.mxu0 %v4817
  %5854 = vmatpush.bf16.msra.mxu0 %v4813
  %5855 = vmatpush.bf16.msra.mxu0 %v4809
  %5856 = vmatpush.bf16.msra.mxu0 %v4805
  %5857 = vmatpush.bf16.msra.mxu0 %v4801
  %5858 = vmatpush.bf16.msra.mxu0 %v4797
  %5859 = vmatpush.bf16.msra.mxu0 %v4793
  %5860 = vmatpush.bf16.msra.mxu0 %v4789
  %5861 = vmatmul.bf16.gmra.mxu0 %v5826
  %v5862 = vpop.f32.mrf.mxu0
  %v5863 = vadd.f32 0.0, %v5862
  %v5864 = vpop.f32.mrf.mxu0
  %5865 = vdwg.mxu0
  %5866 = vmatpush.bf16.msra.mxu0 %v4818
  %5867 = vmatpush.bf16.msra.mxu0 %v4814
  %5868 = vmatpush.bf16.msra.mxu0 %v4810
  %5869 = vmatpush.bf16.msra.mxu0 %v4806
  %5870 = vmatpush.bf16.msra.mxu0 %v4802
  %5871 = vmatpush.bf16.msra.mxu0 %v4798
  %5872 = vmatpush.bf16.msra.mxu0 %v4794
  %5873 = vmatpush.bf16.msra.mxu0 %v4790
  %5874 = vmatmul.bf16.gmra.mxu0 %v5826
  %v5875 = vpop.f32.mrf.mxu0
  %v5876 = vadd.f32 0.0, %v5875
  %v5877 = vpop.f32.mrf.mxu0
  %5878 = vdwg.mxu0
  %v5879 = vadd.f32 %v4160, %v5837
  %v5880 = vadd.f32 %v4218, %v5850
  %v5881 = vadd.f32 %v4276, %v5863
  %v5882 = vadd.f32 %v4334, %v5876
  %v5883 = vxor.u32 %v5879, 2147483648
  %v5884 = vmul.f32 %v5883, 1.442695
  %v5885 = vpow.pop %v5884
  %v5886 = vadd.f32 %v5885, 1.0
  %v5887 = vrcp.pop %v5886
  %v5888 = vmul.f32 %v5886, %v5887
  %v5889 = vsub.f32 1.0, %v5888
  %v5890 = vmul.f32 %v5887, %v5889
  %v5891 = vadd.f32 %v5887, %v5890
  %vm5892 = vweird.f32 %v5886
  %vm5893 = vweird.f32 %v5887
  %vm5894 = vmor %vm5892, %vm5893
  %v5895 = vsel %vm5894, %v5887, %v5891
  %v5896 = vand.u32 2147483647, %v5886
  %vm5897 = vcmp.eq.f32.partialorder %v5896, 8.507059e+37
  %v5898 = vand.u32 %v5886, 2147483648
  %v5899 = vor.u32 1.1754944e-38, %v5898
  %v5900 = vsel %vm5897, %v5899, %v5895
  %v5901 = vmul.f32 1.0, %v5900
  %v5902 = vxor.u32 %v5880, 2147483648
  %v5903 = vmul.f32 %v5902, 1.442695
  %v5904 = vpow.pop %v5903
  %v5905 = vadd.f32 %v5904, 1.0
  %v5906 = vrcp.pop %v5905
  %v5907 = vmul.f32 %v5905, %v5906
  %v5908 = vsub.f32 1.0, %v5907
  %v5909 = vmul.f32 %v5906, %v5908
  %v5910 = vadd.f32 %v5906, %v5909
  %vm5911 = vweird.f32 %v5905
  %vm5912 = vweird.f32 %v5906
  %vm5913 = vmor %vm5911, %vm5912
  %v5914 = vsel %vm5913, %v5906, %v5910
  %v5915 = vand.u32 2147483647, %v5905
  %vm5916 = vcmp.eq.f32.partialorder %v5915, 8.507059e+37
  %v5917 = vand.u32 %v5905, 2147483648
  %v5918 = vor.u32 1.1754944e-38, %v5917
  %v5919 = vsel %vm5916, %v5918, %v5914
  %v5920 = vmul.f32 1.0, %v5919
  %v5921 = vtanh.pop %v5881
  %v5922 = vxor.u32 %v5882, 2147483648
  %v5923 = vmul.f32 %v5922, 1.442695
  %v5924 = vpow.pop %v5923
  %v5925 = vadd.f32 %v5924, 1.0
  %v5926 = vrcp.pop %v5925
  %v5927 = vmul.f32 %v5925, %v5926
  %v5928 = vsub.f32 1.0, %v5927
  %v5929 = vmul.f32 %v5926, %v5928
  %v5930 = vadd.f32 %v5926, %v5929
  %vm5931 = vweird.f32 %v5925
  %vm5932 = vweird.f32 %v5926
  %vm5933 = vmor %vm5931, %vm5932
  %v5934 = vsel %vm5933, %v5926, %v5930
  %v5935 = vand.u32 2147483647, %v5925
  %vm5936 = vcmp.eq.f32.partialorder %v5935, 8.507059e+37
  %v5937 = vand.u32 %v5925, 2147483648
  %v5938 = vor.u32 1.1754944e-38, %v5937
  %v5939 = vsel %vm5936, %v5938, %v5934
  %v5940 = vmul.f32 1.0, %v5939
  %v5941 = vmul.f32 %v5920, %v5703
  %v5942 = vmul.f32 %v5901, %v5921
  %v5943 = vadd.f32 %v5941, %v5942
  %v5944 = vtanh.pop %v5943
  %v5945 = vmul.f32 %v5940, %v5944
  %v5946 = vsel %vm53, %v5945, %v5702
  %v5947 = vsel %vm53, %v5943, %v5703
  %v5948 = vpack.c.bf16 %v5824, %v5824
  %5949 = vmatpush.bf16.msra.mxu0 %v4534
  %5950 = vmatpush.bf16.msra.mxu0 %v4530
  %5951 = vmatpush.bf16.msra.mxu0 %v4526
  %5952 = vmatpush.bf16.msra.mxu0 %v4522
  %5953 = vmatpush.bf16.msra.mxu0 %v4518
  %5954 = vmatpush.bf16.msra.mxu0 %v4514
  %5955 = vmatpush.bf16.msra.mxu0 %v4510
  %5956 = vmatpush.bf16.msra.mxu0 %v4506
  %5957 = vmatmul.bf16.gmra.mxu0 %v5948
  %v5958 = vpop.f32.mrf.mxu0
  %v5959 = vadd.f32 0.0, %v5958
  %v5960 = vpop.f32.mrf.mxu0
  %5961 = vdwg.mxu0
  %5962 = vmatpush.bf16.msra.mxu0 %v4535
  %5963 = vmatpush.bf16.msra.mxu0 %v4531
  %5964 = vmatpush.bf16.msra.mxu0 %v4527
  %5965 = vmatpush.bf16.msra.mxu0 %v4523
  %5966 = vmatpush.bf16.msra.mxu0 %v4519
  %5967 = vmatpush.bf16.msra.mxu0 %v4515
  %5968 = vmatpush.bf16.msra.mxu0 %v4511
  %5969 = vmatpush.bf16.msra.mxu0 %v4507
  %5970 = vmatmul.bf16.gmra.mxu0 %v5948
  %v5971 = vpop.f32.mrf.mxu0
  %v5972 = vadd.f32 0.0, %v5971
  %v5973 = vpop.f32.mrf.mxu0
  %5974 = vdwg.mxu0
  %5975 = vmatpush.bf16.msra.mxu0 %v4536
  %5976 = vmatpush.bf16.msra.mxu0 %v4532
  %5977 = vmatpush.bf16.msra.mxu0 %v4528
  %5978 = vmatpush.bf16.msra.mxu0 %v4524
  %5979 = vmatpush.bf16.msra.mxu0 %v4520
  %5980 = vmatpush.bf16.msra.mxu0 %v4516
  %5981 = vmatpush.bf16.msra.mxu0 %v4512
  %5982 = vmatpush.bf16.msra.mxu0 %v4508
  %5983 = vmatmul.bf16.gmra.mxu0 %v5948
  %v5984 = vpop.f32.mrf.mxu0
  %v5985 = vadd.f32 0.0, %v5984
  %v5986 = vpop.f32.mrf.mxu0
  %5987 = vdwg.mxu0
  %5988 = vmatpush.bf16.msra.mxu0 %v4537
  %5989 = vmatpush.bf16.msra.mxu0 %v4533
  %5990 = vmatpush.bf16.msra.mxu0 %v4529
  %5991 = vmatpush.bf16.msra.mxu0 %v4525
  %5992 = vmatpush.bf16.msra.mxu0 %v4521
  %5993 = vmatpush.bf16.msra.mxu0 %v4517
  %5994 = vmatpush.bf16.msra.mxu0 %v4513
  %5995 = vmatpush.bf16.msra.mxu0 %v4509
  %5996 = vmatmul.bf16.gmra.mxu0 %v5948
  %v5997 = vpop.f32.mrf.mxu0
  %v5998 = vadd.f32 0.0, %v5997
  %v5999 = vpop.f32.mrf.mxu0
  %6000 = vdwg.mxu0
  %v6001 = vadd.f32 %v3933, %v5959
  %v6002 = vadd.f32 %v3991, %v5972
  %v6003 = vadd.f32 %v4049, %v5985
  %v6004 = vadd.f32 %v4107, %v5998
  %v6005 = vxor.u32 %v6001, 2147483648
  %v6006 = vmul.f32 %v6005, 1.442695
  %v6007 = vpow.pop %v6006
  %v6008 = vadd.f32 %v6007, 1.0
  %v6009 = vrcp.pop %v6008
  %v6010 = vmul.f32 %v6008, %v6009
  %v6011 = vsub.f32 1.0, %v6010
  %v6012 = vmul.f32 %v6009, %v6011
  %v6013 = vadd.f32 %v6009, %v6012
  %vm6014 = vweird.f32 %v6008
  %vm6015 = vweird.f32 %v6009
  %vm6016 = vmor %vm6014, %vm6015
  %v6017 = vsel %vm6016, %v6009, %v6013
  %v6018 = vand.u32 2147483647, %v6008
  %vm6019 = vcmp.eq.f32.partialorder %v6018, 8.507059e+37
  %v6020 = vand.u32 %v6008, 2147483648
  %v6021 = vor.u32 1.1754944e-38, %v6020
  %v6022 = vsel %vm6019, %v6021, %v6017
  %v6023 = vmul.f32 1.0, %v6022
  %v6024 = vxor.u32 %v6002, 2147483648
  %v6025 = vmul.f32 %v6024, 1.442695
  %v6026 = vpow.pop %v6025
  %v6027 = vadd.f32 %v6026, 1.0
  %v6028 = vrcp.pop %v6027
  %v6029 = vmul.f32 %v6027, %v6028
  %v6030 = vsub.f32 1.0, %v6029
  %v6031 = vmul.f32 %v6028, %v6030
  %v6032 = vadd.f32 %v6028, %v6031
  %vm6033 = vweird.f32 %v6027
  %vm6034 = vweird.f32 %v6028
  %vm6035 = vmor %vm6033, %vm6034
  %v6036 = vsel %vm6035, %v6028, %v6032
  %v6037 = vand.u32 2147483647, %v6027
  %vm6038 = vcmp.eq.f32.partialorder %v6037, 8.507059e+37
  %v6039 = vand.u32 %v6027, 2147483648
  %v6040 = vor.u32 1.1754944e-38, %v6039
  %v6041 = vsel %vm6038, %v6040, %v6036
  %v6042 = vmul.f32 1.0, %v6041
  %v6043 = vtanh.pop %v6003
  %v6044 = vxor.u32 %v6004, 2147483648
  %v6045 = vmul.f32 %v6044, 1.442695
  %v6046 = vpow.pop %v6045
  %v6047 = vadd.f32 %v6046, 1.0
  %v6048 = vrcp.pop %v6047
  %v6049 = vmul.f32 %v6047, %v6048
  %v6050 = vsub.f32 1.0, %v6049
  %v6051 = vmul.f32 %v6048, %v6050
  %v6052 = vadd.f32 %v6048, %v6051
  %vm6053 = vweird.f32 %v6047
  %vm6054 = vweird.f32 %v6048
  %vm6055 = vmor %vm6053, %vm6054
  %v6056 = vsel %vm6055, %v6048, %v6052
  %v6057 = vand.u32 2147483647, %v6047
  %vm6058 = vcmp.eq.f32.partialorder %v6057, 8.507059e+37
  %v6059 = vand.u32 %v6047, 2147483648
  %v6060 = vor.u32 1.1754944e-38, %v6059
  %v6061 = vsel %vm6058, %v6060, %v6056
  %v6062 = vmul.f32 1.0, %v6061
  %v6063 = vmul.f32 %v6042, %v5825
  %v6064 = vmul.f32 %v6023, %v6043
  %v6065 = vadd.f32 %v6063, %v6064
  %v6066 = vtanh.pop %v6065
  %v6067 = vmul.f32 %v6062, %v6066
  %v6068 = vsel %vm55, %v6067, %v5824
  %v6069 = vsel %vm55, %v6065, %v5825
  %v6070 = vpack.c.bf16 %v5946, %v5946
  %6071 = vmatpush.bf16.msra.mxu0 %v4815
  %6072 = vmatpush.bf16.msra.mxu0 %v4811
  %6073 = vmatpush.bf16.msra.mxu0 %v4807
  %6074 = vmatpush.bf16.msra.mxu0 %v4803
  %6075 = vmatpush.bf16.msra.mxu0 %v4799
  %6076 = vmatpush.bf16.msra.mxu0 %v4795
  %6077 = vmatpush.bf16.msra.mxu0 %v4791
  %6078 = vmatpush.bf16.msra.mxu0 %v4787
  %6079 = vmatmul.bf16.gmra.mxu0 %v6070
  %v6080 = vpop.f32.mrf.mxu0
  %v6081 = vadd.f32 0.0, %v6080
  %v6082 = vpop.f32.mrf.mxu0
  %6083 = vdwg.mxu0
  %6084 = vmatpush.bf16.msra.mxu0 %v4816
  %6085 = vmatpush.bf16.msra.mxu0 %v4812
  %6086 = vmatpush.bf16.msra.mxu0 %v4808
  %6087 = vmatpush.bf16.msra.mxu0 %v4804
  %6088 = vmatpush.bf16.msra.mxu0 %v4800
  %6089 = vmatpush.bf16.msra.mxu0 %v4796
  %6090 = vmatpush.bf16.msra.mxu0 %v4792
  %6091 = vmatpush.bf16.msra.mxu0 %v4788
  %6092 = vmatmul.bf16.gmra.mxu0 %v6070
  %v6093 = vpop.f32.mrf.mxu0
  %v6094 = vadd.f32 0.0, %v6093
  %v6095 = vpop.f32.mrf.mxu0
  %6096 = vdwg.mxu0
  %6097 = vmatpush.bf16.msra.mxu0 %v4817
  %6098 = vmatpush.bf16.msra.mxu0 %v4813
  %6099 = vmatpush.bf16.msra.mxu0 %v4809
  %6100 = vmatpush.bf16.msra.mxu0 %v4805
  %6101 = vmatpush.bf16.msra.mxu0 %v4801
  %6102 = vmatpush.bf16.msra.mxu0 %v4797
  %6103 = vmatpush.bf16.msra.mxu0 %v4793
  %6104 = vmatpush.bf16.msra.mxu0 %v4789
  %6105 = vmatmul.bf16.gmra.mxu0 %v6070
  %v6106 = vpop.f32.mrf.mxu0
  %v6107 = vadd.f32 0.0, %v6106
  %v6108 = vpop.f32.mrf.mxu0
  %6109 = vdwg.mxu0
  %6110 = vmatpush.bf16.msra.mxu0 %v4818
  %6111 = vmatpush.bf16.msra.mxu0 %v4814
  %6112 = vmatpush.bf16.msra.mxu0 %v4810
  %6113 = vmatpush.bf16.msra.mxu0 %v4806
  %6114 = vmatpush.bf16.msra.mxu0 %v4802
  %6115 = vmatpush.bf16.msra.mxu0 %v4798
  %6116 = vmatpush.bf16.msra.mxu0 %v4794
  %6117 = vmatpush.bf16.msra.mxu0 %v4790
  %6118 = vmatmul.bf16.gmra.mxu0 %v6070
  %v6119 = vpop.f32.mrf.mxu0
  %v6120 = vadd.f32 0.0, %v6119
  %v6121 = vpop.f32.mrf.mxu0
  %6122 = vdwg.mxu0
  %v6123 = vadd.f32 %v4158, %v6081
  %v6124 = vadd.f32 %v4216, %v6094
  %v6125 = vadd.f32 %v4274, %v6107
  %v6126 = vadd.f32 %v4332, %v6120
  %v6127 = vxor.u32 %v6123, 2147483648
  %v6128 = vmul.f32 %v6127, 1.442695
  %v6129 = vpow.pop %v6128
  %v6130 = vadd.f32 %v6129, 1.0
  %v6131 = vrcp.pop %v6130
  %v6132 = vmul.f32 %v6130, %v6131
  %v6133 = vsub.f32 1.0, %v6132
  %v6134 = vmul.f32 %v6131, %v6133
  %v6135 = vadd.f32 %v6131, %v6134
  %vm6136 = vweird.f32 %v6130
  %vm6137 = vweird.f32 %v6131
  %vm6138 = vmor %vm6136, %vm6137
  %v6139 = vsel %vm6138, %v6131, %v6135
  %v6140 = vand.u32 2147483647, %v6130
  %vm6141 = vcmp.eq.f32.partialorder %v6140, 8.507059e+37
  %v6142 = vand.u32 %v6130, 2147483648
  %v6143 = vor.u32 1.1754944e-38, %v6142
  %v6144 = vsel %vm6141, %v6143, %v6139
  %v6145 = vmul.f32 1.0, %v6144
  %v6146 = vxor.u32 %v6124, 2147483648
  %v6147 = vmul.f32 %v6146, 1.442695
  %v6148 = vpow.pop %v6147
  %v6149 = vadd.f32 %v6148, 1.0
  %v6150 = vrcp.pop %v6149
  %v6151 = vmul.f32 %v6149, %v6150
  %v6152 = vsub.f32 1.0, %v6151
  %v6153 = vmul.f32 %v6150, %v6152
  %v6154 = vadd.f32 %v6150, %v6153
  %vm6155 = vweird.f32 %v6149
  %vm6156 = vweird.f32 %v6150
  %vm6157 = vmor %vm6155, %vm6156
  %v6158 = vsel %vm6157, %v6150, %v6154
  %v6159 = vand.u32 2147483647, %v6149
  %vm6160 = vcmp.eq.f32.partialorder %v6159, 8.507059e+37
  %v6161 = vand.u32 %v6149, 2147483648
  %v6162 = vor.u32 1.1754944e-38, %v6161
  %v6163 = vsel %vm6160, %v6162, %v6158
  %v6164 = vmul.f32 1.0, %v6163
  %v6165 = vtanh.pop %v6125
  %v6166 = vxor.u32 %v6126, 2147483648
  %v6167 = vmul.f32 %v6166, 1.442695
  %v6168 = vpow.pop %v6167
  %v6169 = vadd.f32 %v6168, 1.0
  %v6170 = vrcp.pop %v6169
  %v6171 = vmul.f32 %v6169, %v6170
  %v6172 = vsub.f32 1.0, %v6171
  %v6173 = vmul.f32 %v6170, %v6172
  %v6174 = vadd.f32 %v6170, %v6173
  %vm6175 = vweird.f32 %v6169
  %vm6176 = vweird.f32 %v6170
  %vm6177 = vmor %vm6175, %vm6176
  %v6178 = vsel %vm6177, %v6170, %v6174
  %v6179 = vand.u32 2147483647, %v6169
  %vm6180 = vcmp.eq.f32.partialorder %v6179, 8.507059e+37
  %v6181 = vand.u32 %v6169, 2147483648
  %v6182 = vor.u32 1.1754944e-38, %v6181
  %v6183 = vsel %vm6180, %v6182, %v6178
  %v6184 = vmul.f32 1.0, %v6183
  %v6185 = vmul.f32 %v6164, %v5947
  %v6186 = vmul.f32 %v6145, %v6165
  %v6187 = vadd.f32 %v6185, %v6186
  %v6188 = vtanh.pop %v6187
  %v6189 = vmul.f32 %v6184, %v6188
  %v6190 = vsel %vm52, %v6189, %v5946
  %v6191 = vsel %vm52, %v6187, %v5947
  %v6192 = vpack.c.bf16 %v6068, %v6068
  %6193 = vmatpush.bf16.msra.mxu0 %v4534
  %6194 = vmatpush.bf16.msra.mxu0 %v4530
  %6195 = vmatpush.bf16.msra.mxu0 %v4526
  %6196 = vmatpush.bf16.msra.mxu0 %v4522
  %6197 = vmatpush.bf16.msra.mxu0 %v4518
  %6198 = vmatpush.bf16.msra.mxu0 %v4514
  %6199 = vmatpush.bf16.msra.mxu0 %v4510
  %6200 = vmatpush.bf16.msra.mxu0 %v4506
  %6201 = vmatmul.bf16.gmra.mxu0 %v6192
  %v6202 = vpop.f32.mrf.mxu0
  %v6203 = vadd.f32 0.0, %v6202
  %v6204 = vpop.f32.mrf.mxu0
  %6205 = vdwg.mxu0
  %6206 = vmatpush.bf16.msra.mxu0 %v4535
  %6207 = vmatpush.bf16.msra.mxu0 %v4531
  %6208 = vmatpush.bf16.msra.mxu0 %v4527
  %6209 = vmatpush.bf16.msra.mxu0 %v4523
  %6210 = vmatpush.bf16.msra.mxu0 %v4519
  %6211 = vmatpush.bf16.msra.mxu0 %v4515
  %6212 = vmatpush.bf16.msra.mxu0 %v4511
  %6213 = vmatpush.bf16.msra.mxu0 %v4507
  %6214 = vmatmul.bf16.gmra.mxu0 %v6192
  %v6215 = vpop.f32.mrf.mxu0
  %v6216 = vadd.f32 0.0, %v6215
  %v6217 = vpop.f32.mrf.mxu0
  %6218 = vdwg.mxu0
  %6219 = vmatpush.bf16.msra.mxu0 %v4536
  %6220 = vmatpush.bf16.msra.mxu0 %v4532
  %6221 = vmatpush.bf16.msra.mxu0 %v4528
  %6222 = vmatpush.bf16.msra.mxu0 %v4524
  %6223 = vmatpush.bf16.msra.mxu0 %v4520
  %6224 = vmatpush.bf16.msra.mxu0 %v4516
  %6225 = vmatpush.bf16.msra.mxu0 %v4512
  %6226 = vmatpush.bf16.msra.mxu0 %v4508
  %6227 = vmatmul.bf16.gmra.mxu0 %v6192
  %v6228 = vpop.f32.mrf.mxu0
  %v6229 = vadd.f32 0.0, %v6228
  %v6230 = vpop.f32.mrf.mxu0
  %6231 = vdwg.mxu0
  %6232 = vmatpush.bf16.msra.mxu0 %v4537
  %6233 = vmatpush.bf16.msra.mxu0 %v4533
  %6234 = vmatpush.bf16.msra.mxu0 %v4529
  %6235 = vmatpush.bf16.msra.mxu0 %v4525
  %6236 = vmatpush.bf16.msra.mxu0 %v4521
  %6237 = vmatpush.bf16.msra.mxu0 %v4517
  %6238 = vmatpush.bf16.msra.mxu0 %v4513
  %6239 = vmatpush.bf16.msra.mxu0 %v4509
  %6240 = vmatmul.bf16.gmra.mxu0 %v6192
  %v6241 = vpop.f32.mrf.mxu0
  %v6242 = vadd.f32 0.0, %v6241
  %v6243 = vpop.f32.mrf.mxu0
  %6244 = vdwg.mxu0
  %v6245 = vadd.f32 %v3936, %v6203
  %v6246 = vadd.f32 %v3994, %v6216
  %v6247 = vadd.f32 %v4052, %v6229
  %v6248 = vadd.f32 %v4110, %v6242
  %v6249 = vxor.u32 %v6245, 2147483648
  %v6250 = vmul.f32 %v6249, 1.442695
  %v6251 = vpow.pop %v6250
  %v6252 = vadd.f32 %v6251, 1.0
  %v6253 = vrcp.pop %v6252
  %v6254 = vmul.f32 %v6252, %v6253
  %v6255 = vsub.f32 1.0, %v6254
  %v6256 = vmul.f32 %v6253, %v6255
  %v6257 = vadd.f32 %v6253, %v6256
  %vm6258 = vweird.f32 %v6252
  %vm6259 = vweird.f32 %v6253
  %vm6260 = vmor %vm6258, %vm6259
  %v6261 = vsel %vm6260, %v6253, %v6257
  %v6262 = vand.u32 2147483647, %v6252
  %vm6263 = vcmp.eq.f32.partialorder %v6262, 8.507059e+37
  %v6264 = vand.u32 %v6252, 2147483648
  %v6265 = vor.u32 1.1754944e-38, %v6264
  %v6266 = vsel %vm6263, %v6265, %v6261
  %v6267 = vmul.f32 1.0, %v6266
  %v6268 = vxor.u32 %v6246, 2147483648
  %v6269 = vmul.f32 %v6268, 1.442695
  %v6270 = vpow.pop %v6269
  %v6271 = vadd.f32 %v6270, 1.0
  %v6272 = vrcp.pop %v6271
  %v6273 = vmul.f32 %v6271, %v6272
  %v6274 = vsub.f32 1.0, %v6273
  %v6275 = vmul.f32 %v6272, %v6274
  %v6276 = vadd.f32 %v6272, %v6275
  %vm6277 = vweird.f32 %v6271
  %vm6278 = vweird.f32 %v6272
  %vm6279 = vmor %vm6277, %vm6278
  %v6280 = vsel %vm6279, %v6272, %v6276
  %v6281 = vand.u32 2147483647, %v6271
  %vm6282 = vcmp.eq.f32.partialorder %v6281, 8.507059e+37
  %v6283 = vand.u32 %v6271, 2147483648
  %v6284 = vor.u32 1.1754944e-38, %v6283
  %v6285 = vsel %vm6282, %v6284, %v6280
  %v6286 = vmul.f32 1.0, %v6285
  %v6287 = vtanh.pop %v6247
  %v6288 = vxor.u32 %v6248, 2147483648
  %v6289 = vmul.f32 %v6288, 1.442695
  %v6290 = vpow.pop %v6289
  %v6291 = vadd.f32 %v6290, 1.0
  %v6292 = vrcp.pop %v6291
  %v6293 = vmul.f32 %v6291, %v6292
  %v6294 = vsub.f32 1.0, %v6293
  %v6295 = vmul.f32 %v6292, %v6294
  %v6296 = vadd.f32 %v6292, %v6295
  %vm6297 = vweird.f32 %v6291
  %vm6298 = vweird.f32 %v6292
  %vm6299 = vmor %vm6297, %vm6298
  %v6300 = vsel %vm6299, %v6292, %v6296
  %v6301 = vand.u32 2147483647, %v6291
  %vm6302 = vcmp.eq.f32.partialorder %v6301, 8.507059e+37
  %v6303 = vand.u32 %v6291, 2147483648
  %v6304 = vor.u32 1.1754944e-38, %v6303
  %v6305 = vsel %vm6302, %v6304, %v6300
  %v6306 = vmul.f32 1.0, %v6305
  %v6307 = vmul.f32 %v6286, %v6069
  %v6308 = vmul.f32 %v6267, %v6287
  %v6309 = vadd.f32 %v6307, %v6308
  %v6310 = vtanh.pop %v6309
  %v6311 = vmul.f32 %v6306, %v6310
  %v6312 = vsel %vm56, %v6311, %v6068
  %v6313 = vsel %vm56, %v6309, %v6069
  %v6314 = vpack.c.bf16 %v6190, %v6190
  %6315 = vmatpush.bf16.msra.mxu0 %v4815
  %6316 = vmatpush.bf16.msra.mxu0 %v4811
  %6317 = vmatpush.bf16.msra.mxu0 %v4807
  %6318 = vmatpush.bf16.msra.mxu0 %v4803
  %6319 = vmatpush.bf16.msra.mxu0 %v4799
  %6320 = vmatpush.bf16.msra.mxu0 %v4795
  %6321 = vmatpush.bf16.msra.mxu0 %v4791
  %6322 = vmatpush.bf16.msra.mxu0 %v4787
  %6323 = vmatmul.bf16.gmra.mxu0 %v6314
  %v6324 = vpop.f32.mrf.mxu0
  %v6325 = vadd.f32 0.0, %v6324
  %v6326 = vpop.f32.mrf.mxu0
  %6327 = vdwg.mxu0
  %6328 = vmatpush.bf16.msra.mxu0 %v4816
  %6329 = vmatpush.bf16.msra.mxu0 %v4812
  %6330 = vmatpush.bf16.msra.mxu0 %v4808
  %6331 = vmatpush.bf16.msra.mxu0 %v4804
  %6332 = vmatpush.bf16.msra.mxu0 %v4800
  %6333 = vmatpush.bf16.msra.mxu0 %v4796
  %6334 = vmatpush.bf16.msra.mxu0 %v4792
  %6335 = vmatpush.bf16.msra.mxu0 %v4788
  %6336 = vmatmul.bf16.gmra.mxu0 %v6314
  %v6337 = vpop.f32.mrf.mxu0
  %v6338 = vadd.f32 0.0, %v6337
  %v6339 = vpop.f32.mrf.mxu0
  %6340 = vdwg.mxu0
  %6341 = vmatpush.bf16.msra.mxu0 %v4817
  %6342 = vmatpush.bf16.msra.mxu0 %v4813
  %6343 = vmatpush.bf16.msra.mxu0 %v4809
  %6344 = vmatpush.bf16.msra.mxu0 %v4805
  %6345 = vmatpush.bf16.msra.mxu0 %v4801
  %6346 = vmatpush.bf16.msra.mxu0 %v4797
  %6347 = vmatpush.bf16.msra.mxu0 %v4793
  %6348 = vmatpush.bf16.msra.mxu0 %v4789
  %6349 = vmatmul.bf16.gmra.mxu0 %v6314
  %v6350 = vpop.f32.mrf.mxu0
  %v6351 = vadd.f32 0.0, %v6350
  %v6352 = vpop.f32.mrf.mxu0
  %6353 = vdwg.mxu0
  %6354 = vmatpush.bf16.msra.mxu0 %v4818
  %6355 = vmatpush.bf16.msra.mxu0 %v4814
  %6356 = vmatpush.bf16.msra.mxu0 %v4810
  %6357 = vmatpush.bf16.msra.mxu0 %v4806
  %6358 = vmatpush.bf16.msra.mxu0 %v4802
  %6359 = vmatpush.bf16.msra.mxu0 %v4798
  %6360 = vmatpush.bf16.msra.mxu0 %v4794
  %6361 = vmatpush.bf16.msra.mxu0 %v4790
  %6362 = vmatmul.bf16.gmra.mxu0 %v6314
  %v6363 = vpop.f32.mrf.mxu0
  %v6364 = vadd.f32 0.0, %v6363
  %v6365 = vpop.f32.mrf.mxu0
  %6366 = vdwg.mxu0
  %v6367 = vadd.f32 %v4155, %v6325
  %v6368 = vadd.f32 %v4213, %v6338
  %v6369 = vadd.f32 %v4271, %v6351
  %v6370 = vadd.f32 %v4329, %v6364
  %v6371 = vxor.u32 %v6367, 2147483648
  %v6372 = vmul.f32 %v6371, 1.442695
  %v6373 = vpow.pop %v6372
  %v6374 = vadd.f32 %v6373, 1.0
  %v6375 = vrcp.pop %v6374
  %v6376 = vmul.f32 %v6374, %v6375
  %v6377 = vsub.f32 1.0, %v6376
  %v6378 = vmul.f32 %v6375, %v6377
  %v6379 = vadd.f32 %v6375, %v6378
  %vm6380 = vweird.f32 %v6374
  %vm6381 = vweird.f32 %v6375
  %vm6382 = vmor %vm6380, %vm6381
  %v6383 = vsel %vm6382, %v6375, %v6379
  %v6384 = vand.u32 2147483647, %v6374
  %vm6385 = vcmp.eq.f32.partialorder %v6384, 8.507059e+37
  %v6386 = vand.u32 %v6374, 2147483648
  %v6387 = vor.u32 1.1754944e-38, %v6386
  %v6388 = vsel %vm6385, %v6387, %v6383
  %v6389 = vmul.f32 1.0, %v6388
  %v6390 = vxor.u32 %v6368, 2147483648
  %v6391 = vmul.f32 %v6390, 1.442695
  %v6392 = vpow.pop %v6391
  %v6393 = vadd.f32 %v6392, 1.0
  %v6394 = vrcp.pop %v6393
  %v6395 = vmul.f32 %v6393, %v6394
  %v6396 = vsub.f32 1.0, %v6395
  %v6397 = vmul.f32 %v6394, %v6396
  %v6398 = vadd.f32 %v6394, %v6397
  %vm6399 = vweird.f32 %v6393
  %vm6400 = vweird.f32 %v6394
  %vm6401 = vmor %vm6399, %vm6400
  %v6402 = vsel %vm6401, %v6394, %v6398
  %v6403 = vand.u32 2147483647, %v6393
  %vm6404 = vcmp.eq.f32.partialorder %v6403, 8.507059e+37
  %v6405 = vand.u32 %v6393, 2147483648
  %v6406 = vor.u32 1.1754944e-38, %v6405
  %v6407 = vsel %vm6404, %v6406, %v6402
  %v6408 = vmul.f32 1.0, %v6407
  %v6409 = vtanh.pop %v6369
  %v6410 = vxor.u32 %v6370, 2147483648
  %v6411 = vmul.f32 %v6410, 1.442695
  %v6412 = vpow.pop %v6411
  %v6413 = vadd.f32 %v6412, 1.0
  %v6414 = vrcp.pop %v6413
  %v6415 = vmul.f32 %v6413, %v6414
  %v6416 = vsub.f32 1.0, %v6415
  %v6417 = vmul.f32 %v6414, %v6416
  %v6418 = vadd.f32 %v6414, %v6417
  %vm6419 = vweird.f32 %v6413
  %vm6420 = vweird.f32 %v6414
  %vm6421 = vmor %vm6419, %vm6420
  %v6422 = vsel %vm6421, %v6414, %v6418
  %v6423 = vand.u32 2147483647, %v6413
  %vm6424 = vcmp.eq.f32.partialorder %v6423, 8.507059e+37
  %v6425 = vand.u32 %v6413, 2147483648
  %v6426 = vor.u32 1.1754944e-38, %v6425
  %v6427 = vsel %vm6424, %v6426, %v6422
  %v6428 = vmul.f32 1.0, %v6427
  %v6429 = vmul.f32 %v6408, %v6191
  %v6430 = vmul.f32 %v6389, %v6409
  %v6431 = vadd.f32 %v6429, %v6430
  %v6432 = vtanh.pop %v6431
  %v6433 = vmul.f32 %v6428, %v6432
  %v6434 = vsel %vm51, %v6433, %v6190
  %v6435 = vsel %vm51, %v6431, %v6191
  %v6436 = vpack.c.bf16 %v6312, %v6312
  %6437 = vmatpush.bf16.msra.mxu0 %v4534
  %6438 = vmatpush.bf16.msra.mxu0 %v4530
  %6439 = vmatpush.bf16.msra.mxu0 %v4526
  %6440 = vmatpush.bf16.msra.mxu0 %v4522
  %6441 = vmatpush.bf16.msra.mxu0 %v4518
  %6442 = vmatpush.bf16.msra.mxu0 %v4514
  %6443 = vmatpush.bf16.msra.mxu0 %v4510
  %6444 = vmatpush.bf16.msra.mxu0 %v4506
  %6445 = vmatmul.bf16.gmra.mxu0 %v6436
  %v6446 = vpop.f32.mrf.mxu0
  %v6447 = vadd.f32 0.0, %v6446
  %v6448 = vpop.f32.mrf.mxu0
  %6449 = vdwg.mxu0
  %6450 = vmatpush.bf16.msra.mxu0 %v4535
  %6451 = vmatpush.bf16.msra.mxu0 %v4531
  %6452 = vmatpush.bf16.msra.mxu0 %v4527
  %6453 = vmatpush.bf16.msra.mxu0 %v4523
  %6454 = vmatpush.bf16.msra.mxu0 %v4519
  %6455 = vmatpush.bf16.msra.mxu0 %v4515
  %6456 = vmatpush.bf16.msra.mxu0 %v4511
  %6457 = vmatpush.bf16.msra.mxu0 %v4507
  %6458 = vmatmul.bf16.gmra.mxu0 %v6436
  %v6459 = vpop.f32.mrf.mxu0
  %v6460 = vadd.f32 0.0, %v6459
  %v6461 = vpop.f32.mrf.mxu0
  %6462 = vdwg.mxu0
  %6463 = vmatpush.bf16.msra.mxu0 %v4536
  %6464 = vmatpush.bf16.msra.mxu0 %v4532
  %6465 = vmatpush.bf16.msra.mxu0 %v4528
  %6466 = vmatpush.bf16.msra.mxu0 %v4524
  %6467 = vmatpush.bf16.msra.mxu0 %v4520
  %6468 = vmatpush.bf16.msra.mxu0 %v4516
  %6469 = vmatpush.bf16.msra.mxu0 %v4512
  %6470 = vmatpush.bf16.msra.mxu0 %v4508
  %6471 = vmatmul.bf16.gmra.mxu0 %v6436
  %v6472 = vpop.f32.mrf.mxu0
  %v6473 = vadd.f32 0.0, %v6472
  %v6474 = vpop.f32.mrf.mxu0
  %6475 = vdwg.mxu0
  %6476 = vmatpush.bf16.msra.mxu0 %v4537
  %6477 = vmatpush.bf16.msra.mxu0 %v4533
  %6478 = vmatpush.bf16.msra.mxu0 %v4529
  %6479 = vmatpush.bf16.msra.mxu0 %v4525
  %6480 = vmatpush.bf16.msra.mxu0 %v4521
  %6481 = vmatpush.bf16.msra.mxu0 %v4517
  %6482 = vmatpush.bf16.msra.mxu0 %v4513
  %6483 = vmatpush.bf16.msra.mxu0 %v4509
  %6484 = vmatmul.bf16.gmra.mxu0 %v6436
  %v6485 = vpop.f32.mrf.mxu0
  %v6486 = vadd.f32 0.0, %v6485
  %v6487 = vpop.f32.mrf.mxu0
  %6488 = vdwg.mxu0
  %v6489 = vadd.f32 %v3938, %v6447
  %v6490 = vadd.f32 %v3996, %v6460
  %v6491 = vadd.f32 %v4054, %v6473
  %v6492 = vadd.f32 %v4112, %v6486
  %v6493 = vxor.u32 %v6489, 2147483648
  %v6494 = vmul.f32 %v6493, 1.442695
  %v6495 = vpow.pop %v6494
  %v6496 = vadd.f32 %v6495, 1.0
  %v6497 = vrcp.pop %v6496
  %v6498 = vmul.f32 %v6496, %v6497
  %v6499 = vsub.f32 1.0, %v6498
  %v6500 = vmul.f32 %v6497, %v6499
  %v6501 = vadd.f32 %v6497, %v6500
  %vm6502 = vweird.f32 %v6496
  %vm6503 = vweird.f32 %v6497
  %vm6504 = vmor %vm6502, %vm6503
  %v6505 = vsel %vm6504, %v6497, %v6501
  %v6506 = vand.u32 2147483647, %v6496
  %vm6507 = vcmp.eq.f32.partialorder %v6506, 8.507059e+37
  %v6508 = vand.u32 %v6496, 2147483648
  %v6509 = vor.u32 1.1754944e-38, %v6508
  %v6510 = vsel %vm6507, %v6509, %v6505
  %v6511 = vmul.f32 1.0, %v6510
  %v6512 = vxor.u32 %v6490, 2147483648
  %v6513 = vmul.f32 %v6512, 1.442695
  %v6514 = vpow.pop %v6513
  %v6515 = vadd.f32 %v6514, 1.0
  %v6516 = vrcp.pop %v6515
  %v6517 = vmul.f32 %v6515, %v6516
  %v6518 = vsub.f32 1.0, %v6517
  %v6519 = vmul.f32 %v6516, %v6518
  %v6520 = vadd.f32 %v6516, %v6519
  %vm6521 = vweird.f32 %v6515
  %vm6522 = vweird.f32 %v6516
  %vm6523 = vmor %vm6521, %vm6522
  %v6524 = vsel %vm6523, %v6516, %v6520
  %v6525 = vand.u32 2147483647, %v6515
  %vm6526 = vcmp.eq.f32.partialorder %v6525, 8.507059e+37
  %v6527 = vand.u32 %v6515, 2147483648
  %v6528 = vor.u32 1.1754944e-38, %v6527
  %v6529 = vsel %vm6526, %v6528, %v6524
  %v6530 = vmul.f32 1.0, %v6529
  %v6531 = vtanh.pop %v6491
  %v6532 = vxor.u32 %v6492, 2147483648
  %v6533 = vmul.f32 %v6532, 1.442695
  %v6534 = vpow.pop %v6533
  %v6535 = vadd.f32 %v6534, 1.0
  %v6536 = vrcp.pop %v6535
  %v6537 = vmul.f32 %v6535, %v6536
  %v6538 = vsub.f32 1.0, %v6537
  %v6539 = vmul.f32 %v6536, %v6538
  %v6540 = vadd.f32 %v6536, %v6539
  %vm6541 = vweird.f32 %v6535
  %vm6542 = vweird.f32 %v6536
  %vm6543 = vmor %vm6541, %vm6542
  %v6544 = vsel %vm6543, %v6536, %v6540
  %v6545 = vand.u32 2147483647, %v6535
  %vm6546 = vcmp.eq.f32.partialorder %v6545, 8.507059e+37
  %v6547 = vand.u32 %v6535, 2147483648
  %v6548 = vor.u32 1.1754944e-38, %v6547
  %v6549 = vsel %vm6546, %v6548, %v6544
  %v6550 = vmul.f32 1.0, %v6549
  %v6551 = vmul.f32 %v6530, %v6313
  %v6552 = vmul.f32 %v6511, %v6531
  %v6553 = vadd.f32 %v6551, %v6552
  %v6554 = vtanh.pop %v6553
  %v6555 = vmul.f32 %v6550, %v6554
  %v6556 = vsel %vm57, %v6555, %v6312
  %v6557 = vpack.c.bf16 %v6434, %v6434
  %6558 = vmatpush.bf16.msra.mxu0 %v4815
  %6559 = vmatpush.bf16.msra.mxu0 %v4811
  %6560 = vmatpush.bf16.msra.mxu0 %v4807
  %6561 = vmatpush.bf16.msra.mxu0 %v4803
  %6562 = vmatpush.bf16.msra.mxu0 %v4799
  %6563 = vmatpush.bf16.msra.mxu0 %v4795
  %6564 = vmatpush.bf16.msra.mxu0 %v4791
  %6565 = vmatpush.bf16.msra.mxu0 %v4787
  %6566 = vmatmul.bf16.gmra.mxu0 %v6557
  %v6567 = vpop.f32.mrf.mxu0
  %v6568 = vadd.f32 0.0, %v6567
  %v6569 = vpop.f32.mrf.mxu0
  %6570 = vdwg.mxu0
  %6571 = vmatpush.bf16.msra.mxu0 %v4816
  %6572 = vmatpush.bf16.msra.mxu0 %v4812
  %6573 = vmatpush.bf16.msra.mxu0 %v4808
  %6574 = vmatpush.bf16.msra.mxu0 %v4804
  %6575 = vmatpush.bf16.msra.mxu0 %v4800
  %6576 = vmatpush.bf16.msra.mxu0 %v4796
  %6577 = vmatpush.bf16.msra.mxu0 %v4792
  %6578 = vmatpush.bf16.msra.mxu0 %v4788
  %6579 = vmatmul.bf16.gmra.mxu0 %v6557
  %v6580 = vpop.f32.mrf.mxu0
  %v6581 = vadd.f32 0.0, %v6580
  %v6582 = vpop.f32.mrf.mxu0
  %6583 = vdwg.mxu0
  %6584 = vmatpush.bf16.msra.mxu0 %v4817
  %6585 = vmatpush.bf16.msra.mxu0 %v4813
  %6586 = vmatpush.bf16.msra.mxu0 %v4809
  %6587 = vmatpush.bf16.msra.mxu0 %v4805
  %6588 = vmatpush.bf16.msra.mxu0 %v4801
  %6589 = vmatpush.bf16.msra.mxu0 %v4797
  %6590 = vmatpush.bf16.msra.mxu0 %v4793
  %6591 = vmatpush.bf16.msra.mxu0 %v4789
  %6592 = vmatmul.bf16.gmra.mxu0 %v6557
  %v6593 = vpop.f32.mrf.mxu0
  %v6594 = vadd.f32 0.0, %v6593
  %v6595 = vpop.f32.mrf.mxu0
  %6596 = vdwg.mxu0
  %6597 = vmatpush.bf16.msra.mxu0 %v4818
  %6598 = vmatpush.bf16.msra.mxu0 %v4814
  %6599 = vmatpush.bf16.msra.mxu0 %v4810
  %6600 = vmatpush.bf16.msra.mxu0 %v4806
  %6601 = vmatpush.bf16.msra.mxu0 %v4802
  %6602 = vmatpush.bf16.msra.mxu0 %v4798
  %6603 = vmatpush.bf16.msra.mxu0 %v4794
  %6604 = vmatpush.bf16.msra.mxu0 %v4790
  %6605 = vmatmul.bf16.gmra.mxu0 %v6557
  %v6606 = vpop.f32.mrf.mxu0
  %v6607 = vadd.f32 0.0, %v6606
  %v6608 = vpop.f32.mrf.mxu0
  %6609 = vdwg.mxu0
  %v6610 = vadd.f32 %v4153, %v6568
  %v6611 = vadd.f32 %v4211, %v6581
  %v6612 = vadd.f32 %v4269, %v6594
  %v6613 = vadd.f32 %v4327, %v6607
  %v6614 = vxor.u32 %v6610, 2147483648
  %v6615 = vmul.f32 %v6614, 1.442695
  %v6616 = vpow.pop %v6615
  %v6617 = vadd.f32 %v6616, 1.0
  %v6618 = vrcp.pop %v6617
  %v6619 = vmul.f32 %v6617, %v6618
  %v6620 = vsub.f32 1.0, %v6619
  %v6621 = vmul.f32 %v6618, %v6620
  %v6622 = vadd.f32 %v6618, %v6621
  %vm6623 = vweird.f32 %v6617
  %vm6624 = vweird.f32 %v6618
  %vm6625 = vmor %vm6623, %vm6624
  %v6626 = vsel %vm6625, %v6618, %v6622
  %v6627 = vand.u32 2147483647, %v6617
  %vm6628 = vcmp.eq.f32.partialorder %v6627, 8.507059e+37
  %v6629 = vand.u32 %v6617, 2147483648
  %v6630 = vor.u32 1.1754944e-38, %v6629
  %v6631 = vsel %vm6628, %v6630, %v6626
  %v6632 = vmul.f32 1.0, %v6631
  %v6633 = vxor.u32 %v6611, 2147483648
  %v6634 = vmul.f32 %v6633, 1.442695
  %v6635 = vpow.pop %v6634
  %v6636 = vadd.f32 %v6635, 1.0
  %v6637 = vrcp.pop %v6636
  %v6638 = vmul.f32 %v6636, %v6637
  %v6639 = vsub.f32 1.0, %v6638
  %v6640 = vmul.f32 %v6637, %v6639
  %v6641 = vadd.f32 %v6637, %v6640
  %vm6642 = vweird.f32 %v6636
  %vm6643 = vweird.f32 %v6637
  %vm6644 = vmor %vm6642, %vm6643
  %v6645 = vsel %vm6644, %v6637, %v6641
  %v6646 = vand.u32 2147483647, %v6636
  %vm6647 = vcmp.eq.f32.partialorder %v6646, 8.507059e+37
  %v6648 = vand.u32 %v6636, 2147483648
  %v6649 = vor.u32 1.1754944e-38, %v6648
  %v6650 = vsel %vm6647, %v6649, %v6645
  %v6651 = vmul.f32 1.0, %v6650
  %v6652 = vtanh.pop %v6612
  %v6653 = vxor.u32 %v6613, 2147483648
  %v6654 = vmul.f32 %v6653, 1.442695
  %v6655 = vpow.pop %v6654
  %v6656 = vadd.f32 %v6655, 1.0
  %v6657 = vrcp.pop %v6656
  %v6658 = vmul.f32 %v6656, %v6657
  %v6659 = vsub.f32 1.0, %v6658
  %v6660 = vmul.f32 %v6657, %v6659
  %v6661 = vadd.f32 %v6657, %v6660
  %vm6662 = vweird.f32 %v6656
  %vm6663 = vweird.f32 %v6657
  %vm6664 = vmor %vm6662, %vm6663
  %v6665 = vsel %vm6664, %v6657, %v6661
  %v6666 = vand.u32 2147483647, %v6656
  %vm6667 = vcmp.eq.f32.partialorder %v6666, 8.507059e+37
  %v6668 = vand.u32 %v6656, 2147483648
  %v6669 = vor.u32 1.1754944e-38, %v6668
  %v6670 = vsel %vm6667, %v6669, %v6665
  %v6671 = vmul.f32 1.0, %v6670
  %v6672 = vmul.f32 %v6651, %v6435
  %v6673 = vmul.f32 %v6632, %v6652
  %v6674 = vadd.f32 %v6672, %v6673
  %v6675 = vtanh.pop %v6674
  %v6676 = vmul.f32 %v6671, %v6675
  %v6677 = vsel %vm50, %v6676, %v6434
  %v6678 = vpack.c.bf16 %v6556, %v6556
  %v6679 = vpack.c.bf16 %v6677, %v6677
  %v6680 = vld [vmem:[%s10] sm:$0xf]
  %v6681 = vld [vmem:[%s10 + $0x4] sm:$0xf]
  %v6682 = vld [vmem:[%s10 + $0x8] sm:$0xf]
  %v6683 = vld [vmem:[%s10 + $0xc] sm:$0xf]
  %v6684 = vld [vmem:[%s10 + $0x10] sm:$0xf]
  %v6685 = vld [vmem:[%s10 + $0x14] sm:$0xf]
  %v6686 = vld [vmem:[%s10 + $0x18] sm:$0xf]
  %v6687 = vld [vmem:[%s10 + $0x1c] sm:$0xf]
  %v6688 = vld [vmem:[%s10 + $0x20] sm:$0xf]
  %v6689 = vld [vmem:[%s10 + $0x24] sm:$0xf]
  %v6690 = vld [vmem:[%s10 + $0x28] sm:$0xf]
  %v6691 = vld [vmem:[%s10 + $0x2c] sm:$0xf]
  %v6692 = vld [vmem:[%s10 + $0x30] sm:$0xf]
  %v6693 = vld [vmem:[%s10 + $0x34] sm:$0xf]
  %v6694 = vld [vmem:[%s10 + $0x38] sm:$0xf]
  %v6695 = vld [vmem:[%s10 + $0x3c] sm:$0xf]
  %v6696 = vld [vmem:[%s10 + $0x40] sm:$0xf]
  %v6697 = vld [vmem:[%s10 + $0x44] sm:$0xf]
  %v6698 = vld [vmem:[%s10 + $0x48] sm:$0xf]
  %v6699 = vld [vmem:[%s10 + $0x4c] sm:$0xf]
  %v6700 = vld [vmem:[%s10 + $0x50] sm:$0xf]
  %v6701 = vld [vmem:[%s10 + $0x54] sm:$0xf]
  %v6702 = vld [vmem:[%s10 + $0x58] sm:$0xf]
  %v6703 = vld [vmem:[%s10 + $0x5c] sm:$0xf]
  %v6704 = vld [vmem:[%s10 + $0x60] sm:$0xf]
  %v6705 = vld [vmem:[%s10 + $0x64] sm:$0xf]
  %v6706 = vld [vmem:[%s10 + $0x68] sm:$0xf]
  %v6707 = vld [vmem:[%s10 + $0x6c] sm:$0xf]
  %v6708 = vld [vmem:[%s10 + $0x70] sm:$0xf]
  %v6709 = vld [vmem:[%s10 + $0x74] sm:$0xf]
  %v6710 = vld [vmem:[%s10 + $0x78] sm:$0xf]
  %v6711 = vld [vmem:[%s10 + $0x7c] sm:$0xf]
  %v6712 = vld [vmem:[%s11] sm:$0x1]
  %v6714 = vperm.slane %v6712, 0
  %v6748 = vunpack.c.l.b16 %v6680
  %v6749 = vunpack.c.l.b16 %v6681
  %v6750 = vunpack.c.l.b16 %v6682
  %v6751 = vunpack.c.l.b16 %v6683
  %v6752 = vunpack.c.l.b16 %v6684
  %v6753 = vunpack.c.l.b16 %v6685
  %v6754 = vunpack.c.l.b16 %v6686
  %v6755 = vunpack.c.l.b16 %v6687
  %v6756 = vunpack.c.l.b16 %v6688
  %v6757 = vunpack.c.l.b16 %v6689
  %v6758 = vunpack.c.l.b16 %v6690
  %v6759 = vunpack.c.l.b16 %v6691
  %v6760 = vunpack.c.l.b16 %v6692
  %v6761 = vunpack.c.l.b16 %v6693
  %v6762 = vunpack.c.l.b16 %v6694
  %v6763 = vunpack.c.l.b16 %v6695
  %v6764 = vunpack.c.l.b16 %v6696
  %v6765 = vunpack.c.l.b16 %v6697
  %v6766 = vunpack.c.l.b16 %v6698
  %v6767 = vunpack.c.l.b16 %v6699
  %v6768 = vunpack.c.l.b16 %v6700
  %v6769 = vunpack.c.l.b16 %v6701
  %v6770 = vunpack.c.l.b16 %v6702
  %v6771 = vunpack.c.l.b16 %v6703
  %v6772 = vunpack.c.l.b16 %v6704
  %v6773 = vunpack.c.l.b16 %v6705
  %v6774 = vunpack.c.l.b16 %v6706
  %v6775 = vunpack.c.l.b16 %v6707
  %v6776 = vunpack.c.l.b16 %v6708
  %v6777 = vunpack.c.l.b16 %v6709
  %v6778 = vunpack.c.l.b16 %v6710
  %v6779 = vunpack.c.l.b16 %v6711
  %v6780 = vpack.c.b16 %v6749, %v6748
  %v6781 = vpack.c.b16 %v6751, %v6750
  %v6782 = vpack.c.b16 %v6753, %v6752
  %v6783 = vpack.c.b16 %v6755, %v6754
  %v6784 = vpack.c.b16 %v6757, %v6756
  %v6785 = vpack.c.b16 %v6759, %v6758
  %v6786 = vpack.c.b16 %v6761, %v6760
  %v6787 = vpack.c.b16 %v6763, %v6762
  %v6788 = vpack.c.b16 %v6765, %v6764
  %v6789 = vpack.c.b16 %v6767, %v6766
  %v6790 = vpack.c.b16 %v6769, %v6768
  %v6791 = vpack.c.b16 %v6771, %v6770
  %v6792 = vpack.c.b16 %v6773, %v6772
  %v6793 = vpack.c.b16 %v6775, %v6774
  %v6794 = vpack.c.b16 %v6777, %v6776
  %v6795 = vpack.c.b16 %v6779, %v6778
  %6812 = vmatpush.bf16.msra.mxu0 %v6787
  %6813 = vmatpush.bf16.msra.mxu0 %v6786
  %6814 = vmatpush.bf16.msra.mxu0 %v6785
  %6815 = vmatpush.bf16.msra.mxu0 %v6784
  %6816 = vmatpush.bf16.msra.mxu0 %v6783
  %6817 = vmatpush.bf16.msra.mxu0 %v6782
  %6818 = vmatpush.bf16.msra.mxu0 %v6781
  %6819 = vmatpush.bf16.msra.mxu0 %v6780
  %6820 = vmatmul.bf16.gmra.mxu0 %v6678
  %v6821 = vpop.f32.mrf.mxu0
  %v6822 = vadd.f32 %v6714, %v6821
  %v6823 = vpop.f32.mrf.mxu0
  %6824 = vdwg.mxu0
  %6825 = vmatpush.bf16.msra.mxu0 %v6795
  %6826 = vmatpush.bf16.msra.mxu0 %v6794
  %6827 = vmatpush.bf16.msra.mxu0 %v6793
  %6828 = vmatpush.bf16.msra.mxu0 %v6792
  %6829 = vmatpush.bf16.msra.mxu0 %v6791
  %6830 = vmatpush.bf16.msra.mxu0 %v6790
  %6831 = vmatpush.bf16.msra.mxu0 %v6789
  %6832 = vmatpush.bf16.msra.mxu0 %v6788
  %6833 = vmatmul.bf16.gmra.mxu0 %v6679
  %v6834 = vpop.f32.mrf.mxu0
  %v6835 = vadd.f32 %v6822, %v6834
  %v6836 = vpop.f32.mrf.mxu0
  %6837 = vdwg.mxu0
  %6838 = vst [vmem:[%s12] sm:$0xff] %v6835
  // Predicated region
  $region50: #{bilstm_forward.1} parent=0 // pred_check
    _
  $region51: #{bilstm_forward.1} parent=0 // pred_check_branch
    %6840 = sbr.rel (0) target = $region53
  $region52: #{bilstm_forward.1} parent=0 // pred_region
    _
  $region53: #{bilstm_forward.1} parent=0 // pred_fallthru
    _
  // Predicated region
  $region54: #{bilstm_forward.1} parent=0 // pred_check
    _
  $region55: #{bilstm_forward.1} parent=0 // pred_check_branch
    %6842 = sbr.rel (0) target = $region57
  $region56: #{bilstm_forward.1} parent=0 // pred_region
    _
  $region57: #{bilstm_forward.1} parent=0 // pred_fallthru
    _

</llo_original>
